<compile_context>
chip_gen: v7x
topology: tpu7x:2x2x1
jax: 0.10.0
libtpu: 0.0.40
codegen_flags: <defaults>
</compile_context>

<pallas_src>
import functools

import jax
import jax.numpy as jnp
from jax import lax
from jax.experimental import pallas as pl
from jax.experimental.pallas import tpu as pltpu


# ----------------------------------------------------------------------------
# Pallas kernel 1: fused  out = act((X @ W) * scale + shift)   (conv layers)
# ----------------------------------------------------------------------------
def _matmul_affine_act_kernel(x_ref, w_ref, s_ref, t_ref, o_ref, *, act):
    y = jnp.dot(x_ref[...], w_ref[...], preferred_element_type=jnp.float32)
    y = y * s_ref[...] + t_ref[...]
    if act == "relu":
        y = jnp.maximum(y, 0.0)
    elif act == "relu6":
        y = jnp.clip(y, 0.0, 6.0)
    o_ref[...] = y.astype(o_ref.dtype)


def _pick_tm(m, max_tm=4096):
    """Largest tile <= max_tm that divides m exactly and is a multiple of 8."""
    if m <= max_tm:
        return m
    nblk = -(-m // max_tm)
    while m % nblk != 0 or (m // nblk) % 8 != 0:
        nblk += 1
        if m // nblk < 8:
            return m
    return m // nblk


def matmul_affine_act(x, w, scale, shift, act="none", max_tm=4096):
    """x: (M, K), w: (K, N), scale/shift: (N,) -> (M, N) float32."""
    M, K = x.shape
    Kw, N = w.shape
    assert K == Kw
    m_pad = ((M + 7) // 8) * 8
    if m_pad != M:                      # never hit by the Encoder shapes
        x = jnp.pad(x, ((0, m_pad - M), (0, 0)))
    tm = _pick_tm(m_pad, max_tm)
    nblk = m_pad // tm
    scale2 = scale.reshape(1, N).astype(jnp.float32)
    shift2 = shift.reshape(1, N).astype(jnp.float32)
    cost = pl.CostEstimate(
        flops=2 * m_pad * K * N,
        transcendentals=0,
        bytes_accessed=4 * (m_pad * K + K * N + 2 * N + m_pad * N),
    )
    out = pl.pallas_call(
        functools.partial(_matmul_affine_act_kernel, act=act),
        out_shape=jax.ShapeDtypeStruct((m_pad, N), jnp.float32),
        grid_spec=pltpu.PrefetchScalarGridSpec(
            num_scalar_prefetch=0,
            grid=(nblk,),
            in_specs=[
                pl.BlockSpec((tm, K), lambda i: (i, 0)),
                pl.BlockSpec((K, N), lambda i: (0, 0)),
                pl.BlockSpec((1, N), lambda i: (0, 0)),
                pl.BlockSpec((1, N), lambda i: (0, 0)),
            ],
            out_specs=pl.BlockSpec((tm, N), lambda i: (i, 0)),
        ),
        compiler_params=pltpu.CompilerParams(
            dimension_semantics=("parallel",)),   # independent blocks -> 2 TCs on v7x
        cost_estimate=cost,
    )(x.astype(jnp.float32), w.astype(jnp.float32), scale2, shift2)
    return out if m_pad == M else out[:M]


# ----------------------------------------------------------------------------
# Pallas kernel 2: fused FC head  softmax(relu(x@W1 + b1) @ W2 + b2)
# ----------------------------------------------------------------------------
def _mlp_head_kernel(x_ref, w1_ref, b1_ref, w2_ref, b2_ref, o_ref):
    h = jnp.dot(x_ref[...], w1_ref[...], preferred_element_type=jnp.float32)
    h = jnp.maximum(h + b1_ref[...], 0.0)
    y = jnp.dot(h, w2_ref[...], preferred_element_type=jnp.float32) + b2_ref[...]
    y = y - jnp.max(y, axis=-1, keepdims=True)
    e = jnp.exp(y)
    o_ref[...] = (e / jnp.sum(e, axis=-1, keepdims=True)).astype(o_ref.dtype)


def mlp_head(x, w1, b1, w2, b2):
    """Single pallas_call for Linear->ReLU->Linear->Softmax."""
    M, K1 = x.shape
    H = w1.shape[1]
    N = w2.shape[1]
    m_pad = ((max(M, 8) + 7) // 8) * 8
    if m_pad != M:
        x = jnp.pad(x, ((0, m_pad - M), (0, 0)))   # 8-row min tile; a few KB
    cost = pl.CostEstimate(
        flops=2 * m_pad * (K1 * H + H * N),
        transcendentals=m_pad * N,
        bytes_accessed=4 * (m_pad * K1 + K1 * H + H + H * N + N + m_pad * N),
    )
    out = pl.pallas_call(
        _mlp_head_kernel,
        out_shape=jax.ShapeDtypeStruct((m_pad, N), jnp.float32),
        grid_spec=pltpu.PrefetchScalarGridSpec(
            num_scalar_prefetch=0,
            grid=(1,),
            in_specs=[
                pl.BlockSpec((m_pad, K1), lambda i: (0, 0)),
                pl.BlockSpec((K1, H), lambda i: (0, 0)),
                pl.BlockSpec((1, H), lambda i: (0, 0)),
                pl.BlockSpec((H, N), lambda i: (0, 0)),
                pl.BlockSpec((1, N), lambda i: (0, 0)),
            ],
            out_specs=pl.BlockSpec((m_pad, N), lambda i: (0, 0)),
        ),
        compiler_params=pltpu.CompilerParams(
            dimension_semantics=("arbitrary",)),
        cost_estimate=cost,
    )(x.astype(jnp.float32), w1.astype(jnp.float32),
      b1.reshape(1, H).astype(jnp.float32),
      w2.astype(jnp.float32), b2.reshape(1, N).astype(jnp.float32))
    return out[:M]


# ----------------------------------------------------------------------------
# im2col glue (plain JAX, fused by XLA under jit) + conv/BN/act wrapper
# ----------------------------------------------------------------------------
def im2col(x, ksize, stride, pad):
    """x: NHWC -> patches (N*Hout*Wout, ksize*ksize*Cin), order (kh, kw, cin)."""
    x = jnp.pad(x, ((0, 0), (pad, pad), (pad, pad), (0, 0)))
    n, h, w, c = x.shape
    hout = (h - ksize) // stride + 1
    wout = (w - ksize) // stride + 1
    cols = []
    for kh in range(ksize):
        for kw in range(ksize):
            cols.append(
                lax.slice(
                    x,
                    (0, kh, kw, 0),
                    (n, kh + (hout - 1) * stride + 1,
                     kw + (wout - 1) * stride + 1, c),
                    (1, stride, stride, 1),
                )
            )
    p = jnp.stack(cols, axis=3)                    # (N, Hout, Wout, k*k, C)
    return p.reshape(n * hout * wout, ksize * ksize * c), (n, hout, wout)


def conv_bn_act(x, w_flat, scale, shift, ksize, stride, pad, act):
    """x: NHWC; w_flat: (k*k*Cin, Cout) in (kh, kw, cin) row order."""
    patches, (n, hout, wout) = im2col(x, ksize, stride, pad)
    cout = w_flat.shape[1]
    out = matmul_affine_act(patches, w_flat, scale, shift, act=act)
    return out.reshape(n, hout, wout, cout)


# ----------------------------------------------------------------------------
# Parameter construction (deterministic, synthetic).
# Conv2d weights built directly in (KH, KW, Cin, Cout); eval-mode BatchNorm2d
# folded with the conv bias (first layer only) into (scale, shift).
# ----------------------------------------------------------------------------
def build_params(key, channels_img, features):
    eps = 1e-5
    cfg = [
        # (cin, cout, ksize, stride, pad, has_bias, act)
        (channels_img, features * 8, 4, 2, 1, True, "relu"),
        (features * 8, features * 16, 4, 2, 1, False, "relu6"),
        (features * 16, features * 16, 4, 2, 1, False, "relu6"),
        (features * 16, features * 32, 4, 2, 2, False, "relu6"),
        (features * 32, features * 16, 4, 2, 1, False, "relu6"),
    ]
    conv_params = []
    for (cin, cout, ks, st, pd, has_bias, act) in cfg:
        key, kw_, kb_, kg_, kbe_, km_, kv_ = jax.random.split(key, 7)
        fan_in = ks * ks * cin
        w = jax.random.normal(kw_, (ks, ks, cin, cout), jnp.float32)
        w = w * jnp.sqrt(2.0 / fan_in)
        bias = (0.05 * jax.random.normal(kb_, (cout,), jnp.float32)
                if has_bias else jnp.zeros((cout,), jnp.float32))
        gamma = 1.0 + 0.1 * jax.random.normal(kg_, (cout,), jnp.float32)
        beta = 0.1 * jax.random.normal(kbe_, (cout,), jnp.float32)
        rmean = 0.1 * jax.random.normal(km_, (cout,), jnp.float32)
        rvar = 1.0 + 0.1 * jax.random.uniform(kv_, (cout,), jnp.float32)
        inv = gamma / jnp.sqrt(rvar + eps)
        scale = inv
        shift = beta - rmean * inv + bias * inv
        conv_params.append(dict(
            w4d=w, w_flat=w.reshape(ks * ks * cin, cout),
            scale=scale, shift=shift,
            ksize=ks, stride=st, pad=pd, act=act,
            bias=bias, gamma=gamma, beta=beta, rmean=rmean, rvar=rvar,
        ))

    flat_dim = features * 16 * 4 * 4
    key, k1, k2, k3, k4 = jax.random.split(key, 5)
    fc1_w = jax.random.normal(k1, (flat_dim, 1024), jnp.float32) * jnp.sqrt(2.0 / flat_dim)
    fc1_b = 0.05 * jax.random.normal(k2, (1024,), jnp.float32)
    fc2_w = jax.random.normal(k3, (1024, 128), jnp.float32) * jnp.sqrt(2.0 / 1024)
    fc2_b = 0.05 * jax.random.normal(k4, (128,), jnp.float32)
    fc_params = ((fc1_w, fc1_b), (fc2_w, fc2_b))
    return conv_params, fc_params


# ----------------------------------------------------------------------------
# Full Encoder forward (Pallas path).  conv_cfg is static (baked via partial).
# ----------------------------------------------------------------------------
def encoder_forward(images_nchw, conv_arrays, fc_params, *, conv_cfg):
    x = jnp.transpose(images_nchw, (0, 2, 3, 1))  # NCHW -> NHWC
    for (w_flat, scale, shift), (ks, st, pd, act) in zip(conv_arrays, conv_cfg):
        x = conv_bn_act(x, w_flat, scale, shift, ks, st, pd, act)
        # nn.Dropout(0.1) is identity in eval mode.
        # TODO(synk): training-mode stochastic dropout not implemented.
    n = x.shape[0]
    # nn.Flatten on NCHW -> (N, C*H*W) with (c, h, w) ordering.
    x = jnp.transpose(x, (0, 3, 1, 2)).reshape(n, -1)
    (w1, b1), (w2, b2) = fc_params
    return mlp_head(x, w1, b1, w2, b2)


# ----------------------------------------------------------------------------
# Pure-JAX reference (eval-mode semantics of the PyTorch module).
# ----------------------------------------------------------------------------
def encoder_reference(images_nchw, conv_params, fc_params):
    eps = 1e-5
    x = jnp.transpose(images_nchw, (0, 2, 3, 1))  # NHWC
    for p in conv_params:
        y = lax.conv_general_dilated(
            x, p["w4d"], (p["stride"], p["stride"]),
            [(p["pad"], p["pad"]), (p["pad"], p["pad"])],
            dimension_numbers=("NHWC", "HWIO", "NHWC"),
            precision=lax.Precision.HIGHEST)
        y = y + p["bias"]
        y = (y - p["rmean"]) * (p["gamma"] / jnp.sqrt(p["rvar"] + eps)) + p["beta"]
        if p["act"] == "relu":
            y = jnp.maximum(y, 0.0)
        else:
            y = jnp.clip(y, 0.0, 6.0)
        x = y
    n = x.shape[0]
    x = jnp.transpose(x, (0, 3, 1, 2)).reshape(n, -1)
    (w1, b1), (w2, b2) = fc_params
    x = jnp.maximum(jnp.dot(x, w1, precision=lax.Precision.HIGHEST) + b1, 0.0)
    x = jnp.dot(x, w2, precision=lax.Precision.HIGHEST) + b2
    return jax.nn.softmax(x, axis=1)


# ----------------------------------------------------------------------------
if __name__ == "__main__":
    # img_size must be 112 so the last conv output is 4x4, matching
    # nn.Linear(features*16*4*4, 1024).
    CHANNELS_IMG, FEATURES, IMG_SIZE, BATCH = 3, 1, 112, 2

    key = jax.random.PRNGKey(0)
    key, kx = jax.random.split(key)
    images = jax.random.normal(kx, (BATCH, CHANNELS_IMG, IMG_SIZE, IMG_SIZE),
                               jnp.float32)

    conv_params, fc_params = build_params(key, CHANNELS_IMG, FEATURES)
    conv_arrays = tuple((p["w_flat"], p["scale"], p["shift"]) for p in conv_params)
    conv_cfg = tuple((p["ksize"], p["stride"], p["pad"], p["act"]) for p in conv_params)

    fwd = jax.jit(functools.partial(encoder_forward, conv_cfg=conv_cfg))
    out = jax.block_until_ready(fwd(images, conv_arrays, fc_params))

    assert out.shape == (BATCH, 128), out.shape
    # Softmax rows must sum to 1.
    assert jnp.allclose(jnp.sum(out, axis=1), 1.0, atol=1e-4)

    ref = jax.block_until_ready(encoder_reference(images, conv_params, fc_params))
    assert jnp.allclose(out, ref, atol=1e-3, rtol=1e-2), (
        float(jnp.max(jnp.abs(out - ref))))

    print("KERNEL_OK")
</pallas_src>

<mosaic_0001>
module attributes {stable_mosaic.version = 11 : i64} {
  func.func @_matmul_affine_act_kernel(%arg0: i32, %arg1: memref<3136x48xf32, #tpu.memory_space<vmem>>, %arg2: memref<48x8xf32, #tpu.memory_space<vmem>>, %arg3: memref<1x8xf32, #tpu.memory_space<vmem>>, %arg4: memref<1x8xf32, #tpu.memory_space<vmem>>, %arg5: memref<3136x8xf32, #tpu.memory_space<vmem>>) attributes {dimension_semantics = [#tpu.dimension_semantics<parallel>], iteration_bounds = array<i64: 2>, scalar_prefetch = 0 : i64, scratch_operands = 0 : i64, tpu.core_type = #tpu.core_type<tc>, window_params = [{transform_indices = @transform_0, window_bounds = array<i64: 3136, 48>}, {pipeline_mode = #tpu.pipeline_mode<synchronous>, transform_indices = @transform_1, window_bounds = array<i64: 48, 8>}, {pipeline_mode = #tpu.pipeline_mode<synchronous>, transform_indices = @transform_2, window_bounds = array<i64: 1, 8>}, {pipeline_mode = #tpu.pipeline_mode<synchronous>, transform_indices = @transform_3, window_bounds = array<i64: 1, 8>}, {transform_indices = @transform_4, window_bounds = array<i64: 3136, 8>}]} {
    %c0 = arith.constant 0 : index
    %c0_0 = arith.constant 0 : index
    %0 = vector.load %arg1[%c0, %c0_0] : memref<3136x48xf32, #tpu.memory_space<vmem>>, vector<3136x48xf32>
    %c0_1 = arith.constant 0 : index
    %c0_2 = arith.constant 0 : index
    %1 = vector.load %arg2[%c0_1, %c0_2] : memref<48x8xf32, #tpu.memory_space<vmem>>, vector<48x8xf32>
    %cst = arith.constant dense<0.000000e+00> : vector<3136x8xf32>
    %2 = tpu.matmul %0, %1, %cst {dimension_numbers = #tpu.dot_dimension_numbers<[1], [0], [0], [1], [0, 0, 1, 1], [], []>} : vector<3136x48xf32>, vector<48x8xf32>, vector<3136x8xf32> -> vector<3136x8xf32>
    %c0_3 = arith.constant 0 : index
    %c0_4 = arith.constant 0 : index
    %3 = vector.load %arg3[%c0_3, %c0_4] : memref<1x8xf32, #tpu.memory_space<vmem>>, vector<1x8xf32>
    %4 = vector.broadcast %3 : vector<1x8xf32> to vector<3136x8xf32>
    %5 = arith.mulf %2, %4 : vector<3136x8xf32>
    %c0_5 = arith.constant 0 : index
    %c0_6 = arith.constant 0 : index
    %6 = vector.load %arg4[%c0_5, %c0_6] : memref<1x8xf32, #tpu.memory_space<vmem>>, vector<1x8xf32>
    %7 = vector.broadcast %6 : vector<1x8xf32> to vector<3136x8xf32>
    %8 = arith.addf %5, %7 : vector<3136x8xf32>
    %cst_7 = arith.constant 0.000000e+00 : f32
    %9 = vector.broadcast %cst_7 : f32 to vector<3136x8xf32>
    %10 = arith.maximumf %8, %9 : vector<3136x8xf32>
    %c0_8 = arith.constant 0 : index
    %c0_9 = arith.constant 0 : index
    %11 = vector.load %arg5[%c0_8, %c0_9] : memref<3136x8xf32, #tpu.memory_space<vmem>>, vector<3136x8xf32>
    tpu.vector_store %arg5[%c0_8, %c0_9], %10 {strides = array<i32>} : memref<3136x8xf32, #tpu.memory_space<vmem>>, vector<3136x8xf32>,
    return
  }
  func.func @transform_0(%arg0: i32) -> (i32, i32) {
    %c0_i32 = arith.constant 0 : i32
    %c0_i32_0 = arith.constant 0 : i32
    return %arg0, %c0_i32 : i32, i32
  }
  func.func @transform_1(%arg0: i32) -> (i32, i32) {
    %c0_i32 = arith.constant 0 : i32
    %c0_i32_0 = arith.constant 0 : i32
    %c0_i32_1 = arith.constant 0 : i32
    return %c0_i32, %c0_i32_0 : i32, i32
  }
  func.func @transform_2(%arg0: i32) -> (i32, i32) {
    %c0_i32 = arith.constant 0 : i32
    %c0_i32_0 = arith.constant 0 : i32
    %c0_i32_1 = arith.constant 0 : i32
    return %c0_i32, %c0_i32_0 : i32, i32
  }
  func.func @transform_3(%arg0: i32) -> (i32, i32) {
    %c0_i32 = arith.constant 0 : i32
    %c0_i32_0 = arith.constant 0 : i32
    %c0_i32_1 = arith.constant 0 : i32
    return %c0_i32, %c0_i32_0 : i32, i32
  }
  func.func @transform_4(%arg0: i32) -> (i32, i32) {
    %c0_i32 = arith.constant 0 : i32
    %c0_i32_0 = arith.constant 0 : i32
    return %arg0, %c0_i32 : i32, i32
  }
}

module attributes {stable_mosaic.version = 11 : i64} {
  func.func @_matmul_affine_act_kernel(%arg0: i32, %arg1: memref<1568x128xf32, #tpu.memory_space<vmem>>, %arg2: memref<128x16xf32, #tpu.memory_space<vmem>>, %arg3: memref<1x16xf32, #tpu.memory_space<vmem>>, %arg4: memref<1x16xf32, #tpu.memory_space<vmem>>, %arg5: memref<1568x16xf32, #tpu.memory_space<vmem>>) attributes {dimension_semantics = [#tpu.dimension_semantics<parallel>], iteration_bounds = array<i64: 1>, scalar_prefetch = 0 : i64, scratch_operands = 0 : i64, tpu.core_type = #tpu.core_type<tc>, window_params = [{transform_indices = @transform_0, window_bounds = array<i64: 1568, 128>}, {pipeline_mode = #tpu.pipeline_mode<synchronous>, transform_indices = @transform_1, window_bounds = array<i64: 128, 16>}, {pipeline_mode = #tpu.pipeline_mode<synchronous>, transform_indices = @transform_2, window_bounds = array<i64: 1, 16>}, {pipeline_mode = #tpu.pipeline_mode<synchronous>, transform_indices = @transform_3, window_bounds = array<i64: 1, 16>}, {transform_indices = @transform_4, window_bounds = array<i64: 1568, 16>}]} {
    %c0 = arith.constant 0 : index
    %c0_0 = arith.constant 0 : index
    %0 = vector.load %arg1[%c0, %c0_0] : memref<1568x128xf32, #tpu.memory_space<vmem>>, vector<1568x128xf32>
    %c0_1 = arith.constant 0 : index
    %c0_2 = arith.constant 0 : index
    %1 = vector.load %arg2[%c0_1, %c0_2] : memref<128x16xf32, #tpu.memory_space<vmem>>, vector<128x16xf32>
    %cst = arith.constant dense<0.000000e+00> : vector<1568x16xf32>
    %2 = tpu.matmul %0, %1, %cst {dimension_numbers = #tpu.dot_dimension_numbers<[1], [0], [0], [1], [0, 0, 1, 1], [], []>} : vector<1568x128xf32>, vector<128x16xf32>, vector<1568x16xf32> -> vector<1568x16xf32>
    %c0_3 = arith.constant 0 : index
    %c0_4 = arith.constant 0 : index
    %3 = vector.load %arg3[%c0_3, %c0_4] : memref<1x16xf32, #tpu.memory_space<vmem>>, vector<1x16xf32>
    %4 = vector.broadcast %3 : vector<1x16xf32> to vector<1568x16xf32>
    %5 = arith.mulf %2, %4 : vector<1568x16xf32>
    %c0_5 = arith.constant 0 : index
    %c0_6 = arith.constant 0 : index
    %6 = vector.load %arg4[%c0_5, %c0_6] : memref<1x16xf32, #tpu.memory_space<vmem>>, vector<1x16xf32>
    %7 = vector.broadcast %6 : vector<1x16xf32> to vector<1568x16xf32>
    %8 = arith.addf %5, %7 : vector<1568x16xf32>
    %cst_7 = arith.constant 0.000000e+00 : f32
    %cst_8 = arith.constant 6.000000e+00 : f32
    %9 = vector.broadcast %cst_7 : f32 to vector<1568x16xf32>
    %10 = arith.maximumf %9, %8 : vector<1568x16xf32>
    %11 = vector.broadcast %cst_8 : f32 to vector<1568x16xf32>
    %12 = arith.minimumf %11, %10 : vector<1568x16xf32>
    %c0_9 = arith.constant 0 : index
    %c0_10 = arith.constant 0 : index
    %13 = vector.load %arg5[%c0_9, %c0_10] : memref<1568x16xf32, #tpu.memory_space<vmem>>, vector<1568x16xf32>
    tpu.vector_store %arg5[%c0_9, %c0_10], %12 {strides = array<i32>} : memref<1568x16xf32, #tpu.memory_space<vmem>>, vector<1568x16xf32>,
    return
  }
  func.func @transform_0(%arg0: i32) -> (i32, i32) {
    %c0_i32 = arith.constant 0 : i32
    %c0_i32_0 = arith.constant 0 : i32
    return %arg0, %c0_i32 : i32, i32
  }
  func.func @transform_1(%arg0: i32) -> (i32, i32) {
    %c0_i32 = arith.constant 0 : i32
    %c0_i32_0 = arith.constant 0 : i32
    %c0_i32_1 = arith.constant 0 : i32
    return %c0_i32, %c0_i32_0 : i32, i32
  }
  func.func @transform_2(%arg0: i32) -> (i32, i32) {
    %c0_i32 = arith.constant 0 : i32
    %c0_i32_0 = arith.constant 0 : i32
    %c0_i32_1 = arith.constant 0 : i32
    return %c0_i32, %c0_i32_0 : i32, i32
  }
  func.func @transform_3(%arg0: i32) -> (i32, i32) {
    %c0_i32 = arith.constant 0 : i32
    %c0_i32_0 = arith.constant 0 : i32
    %c0_i32_1 = arith.constant 0 : i32
    return %c0_i32, %c0_i32_0 : i32, i32
  }
  func.func @transform_4(%arg0: i32) -> (i32, i32) {
    %c0_i32 = arith.constant 0 : i32
    %c0_i32_0 = arith.constant 0 : i32
    return %arg0, %c0_i32 : i32, i32
  }
}

module attributes {stable_mosaic.version = 11 : i64} {
  func.func @_matmul_affine_act_kernel(%arg0: i32, %arg1: memref<392x256xf32, #tpu.memory_space<vmem>>, %arg2: memref<256x16xf32, #tpu.memory_space<vmem>>, %arg3: memref<1x16xf32, #tpu.memory_space<vmem>>, %arg4: memref<1x16xf32, #tpu.memory_space<vmem>>, %arg5: memref<392x16xf32, #tpu.memory_space<vmem>>) attributes {dimension_semantics = [#tpu.dimension_semantics<parallel>], iteration_bounds = array<i64: 1>, scalar_prefetch = 0 : i64, scratch_operands = 0 : i64, tpu.core_type = #tpu.core_type<tc>, window_params = [{transform_indices = @transform_0, window_bounds = array<i64: 392, 256>}, {pipeline_mode = #tpu.pipeline_mode<synchronous>, transform_indices = @transform_1, window_bounds = array<i64: 256, 16>}, {pipeline_mode = #tpu.pipeline_mode<synchronous>, transform_indices = @transform_2, window_bounds = array<i64: 1, 16>}, {pipeline_mode = #tpu.pipeline_mode<synchronous>, transform_indices = @transform_3, window_bounds = array<i64: 1, 16>}, {transform_indices = @transform_4, window_bounds = array<i64: 392, 16>}]} {
    %c0 = arith.constant 0 : index
    %c0_0 = arith.constant 0 : index
    %0 = vector.load %arg1[%c0, %c0_0] : memref<392x256xf32, #tpu.memory_space<vmem>>, vector<392x256xf32>
    %c0_1 = arith.constant 0 : index
    %c0_2 = arith.constant 0 : index
    %1 = vector.load %arg2[%c0_1, %c0_2] : memref<256x16xf32, #tpu.memory_space<vmem>>, vector<256x16xf32>
    %cst = arith.constant dense<0.000000e+00> : vector<392x16xf32>
    %2 = tpu.matmul %0, %1, %cst {dimension_numbers = #tpu.dot_dimension_numbers<[1], [0], [0], [1], [0, 0, 1, 1], [], []>} : vector<392x256xf32>, vector<256x16xf32>, vector<392x16xf32> -> vector<392x16xf32>
    %c0_3 = arith.constant 0 : index
    %c0_4 = arith.constant 0 : index
    %3 = vector.load %arg3[%c0_3, %c0_4] : memref<1x16xf32, #tpu.memory_space<vmem>>, vector<1x16xf32>
    %4 = vector.broadcast %3 : vector<1x16xf32> to vector<392x16xf32>
    %5 = arith.mulf %2, %4 : vector<392x16xf32>
    %c0_5 = arith.constant 0 : index
    %c0_6 = arith.constant 0 : index
    %6 = vector.load %arg4[%c0_5, %c0_6] : memref<1x16xf32, #tpu.memory_space<vmem>>, vector<1x16xf32>
    %7 = vector.broadcast %6 : vector<1x16xf32> to vector<392x16xf32>
    %8 = arith.addf %5, %7 : vector<392x16xf32>
    %cst_7 = arith.constant 0.000000e+00 : f32
    %cst_8 = arith.constant 6.000000e+00 : f32
    %9 = vector.broadcast %cst_7 : f32 to vector<392x16xf32>
    %10 = arith.maximumf %9, %8 : vector<392x16xf32>
    %11 = vector.broadcast %cst_8 : f32 to vector<392x16xf32>
    %12 = arith.minimumf %11, %10 : vector<392x16xf32>
    %c0_9 = arith.constant 0 : index
    %c0_10 = arith.constant 0 : index
    %13 = vector.load %arg5[%c0_9, %c0_10] : memref<392x16xf32, #tpu.memory_space<vmem>>, vector<392x16xf32>
    tpu.vector_store %arg5[%c0_9, %c0_10], %12 {strides = array<i32>} : memref<392x16xf32, #tpu.memory_space<vmem>>, vector<392x16xf32>,
    return
  }
  func.func @transform_0(%arg0: i32) -> (i32, i32) {
    %c0_i32 = arith.constant 0 : i32
    %c0_i32_0 = arith.constant 0 : i32
    return %arg0, %c0_i32 : i32, i32
  }
  func.func @transform_1(%arg0: i32) -> (i32, i32) {
    %c0_i32 = arith.constant 0 : i32
    %c0_i32_0 = arith.constant 0 : i32
    %c0_i32_1 = arith.constant 0 : i32
    return %c0_i32, %c0_i32_0 : i32, i32
  }
  func.func @transform_2(%arg0: i32) -> (i32, i32) {
    %c0_i32 = arith.constant 0 : i32
    %c0_i32_0 = arith.constant 0 : i32
    %c0_i32_1 = arith.constant 0 : i32
    return %c0_i32, %c0_i32_0 : i32, i32
  }
  func.func @transform_3(%arg0: i32) -> (i32, i32) {
    %c0_i32 = arith.constant 0 : i32
    %c0_i32_0 = arith.constant 0 : i32
    %c0_i32_1 = arith.constant 0 : i32
    return %c0_i32, %c0_i32_0 : i32, i32
  }
  func.func @transform_4(%arg0: i32) -> (i32, i32) {
    %c0_i32 = arith.constant 0 : i32
    %c0_i32_0 = arith.constant 0 : i32
    return %arg0, %c0_i32 : i32, i32
  }
}

module attributes {stable_mosaic.version = 11 : i64} {
  func.func @_matmul_affine_act_kernel(%arg0: i32, %arg1: memref<128x256xf32, #tpu.memory_space<vmem>>, %arg2: memref<256x32xf32, #tpu.memory_space<vmem>>, %arg3: memref<1x32xf32, #tpu.memory_space<vmem>>, %arg4: memref<1x32xf32, #tpu.memory_space<vmem>>, %arg5: memref<128x32xf32, #tpu.memory_space<vmem>>) attributes {dimension_semantics = [#tpu.dimension_semantics<parallel>], iteration_bounds = array<i64: 1>, scalar_prefetch = 0 : i64, scratch_operands = 0 : i64, tpu.core_type = #tpu.core_type<tc>, window_params = [{transform_indices = @transform_0, window_bounds = array<i64: 128, 256>}, {pipeline_mode = #tpu.pipeline_mode<synchronous>, transform_indices = @transform_1, window_bounds = array<i64: 256, 32>}, {pipeline_mode = #tpu.pipeline_mode<synchronous>, transform_indices = @transform_2, window_bounds = array<i64: 1, 32>}, {pipeline_mode = #tpu.pipeline_mode<synchronous>, transform_indices = @transform_3, window_bounds = array<i64: 1, 32>}, {transform_indices = @transform_4, window_bounds = array<i64: 128, 32>}]} {
    %c0 = arith.constant 0 : index
    %c0_0 = arith.constant 0 : index
    %0 = vector.load %arg1[%c0, %c0_0] : memref<128x256xf32, #tpu.memory_space<vmem>>, vector<128x256xf32>
    %c0_1 = arith.constant 0 : index
    %c0_2 = arith.constant 0 : index
    %1 = vector.load %arg2[%c0_1, %c0_2] : memref<256x32xf32, #tpu.memory_space<vmem>>, vector<256x32xf32>
    %cst = arith.constant dense<0.000000e+00> : vector<128x32xf32>
    %2 = tpu.matmul %0, %1, %cst {dimension_numbers = #tpu.dot_dimension_numbers<[1], [0], [0], [1], [0, 0, 1, 1], [], []>} : vector<128x256xf32>, vector<256x32xf32>, vector<128x32xf32> -> vector<128x32xf32>
    %c0_3 = arith.constant 0 : index
    %c0_4 = arith.constant 0 : index
    %3 = vector.load %arg3[%c0_3, %c0_4] : memref<1x32xf32, #tpu.memory_space<vmem>>, vector<1x32xf32>
    %4 = vector.broadcast %3 : vector<1x32xf32> to vector<128x32xf32>
    %5 = arith.mulf %2, %4 : vector<128x32xf32>
    %c0_5 = arith.constant 0 : index
    %c0_6 = arith.constant 0 : index
    %6 = vector.load %arg4[%c0_5, %c0_6] : memref<1x32xf32, #tpu.memory_space<vmem>>, vector<1x32xf32>
    %7 = vector.broadcast %6 : vector<1x32xf32> to vector<128x32xf32>
    %8 = arith.addf %5, %7 : vector<128x32xf32>
    %cst_7 = arith.constant 0.000000e+00 : f32
    %cst_8 = arith.constant 6.000000e+00 : f32
    %9 = vector.broadcast %cst_7 : f32 to vector<128x32xf32>
    %10 = arith.maximumf %9, %8 : vector<128x32xf32>
    %11 = vector.broadcast %cst_8 : f32 to vector<128x32xf32>
    %12 = arith.minimumf %11, %10 : vector<128x32xf32>
    %c0_9 = arith.constant 0 : index
    %c0_10 = arith.constant 0 : index
    %13 = vector.load %arg5[%c0_9, %c0_10] : memref<128x32xf32, #tpu.memory_space<vmem>>, vector<128x32xf32>
    tpu.vector_store %arg5[%c0_9, %c0_10], %12 {strides = array<i32>} : memref<128x32xf32, #tpu.memory_space<vmem>>, vector<128x32xf32>,
    return
  }
  func.func @transform_0(%arg0: i32) -> (i32, i32) {
    %c0_i32 = arith.constant 0 : i32
    %c0_i32_0 = arith.constant 0 : i32
    return %arg0, %c0_i32 : i32, i32
  }
  func.func @transform_1(%arg0: i32) -> (i32, i32) {
    %c0_i32 = arith.constant 0 : i32
    %c0_i32_0 = arith.constant 0 : i32
    %c0_i32_1 = arith.constant 0 : i32
    return %c0_i32, %c0_i32_0 : i32, i32
  }
  func.func @transform_2(%arg0: i32) -> (i32, i32) {
    %c0_i32 = arith.constant 0 : i32
    %c0_i32_0 = arith.constant 0 : i32
    %c0_i32_1 = arith.constant 0 : i32
    return %c0_i32, %c0_i32_0 : i32, i32
  }
  func.func @transform_3(%arg0: i32) -> (i32, i32) {
    %c0_i32 = arith.constant 0 : i32
    %c0_i32_0 = arith.constant 0 : i32
    %c0_i32_1 = arith.constant 0 : i32
    return %c0_i32, %c0_i32_0 : i32, i32
  }
  func.func @transform_4(%arg0: i32) -> (i32, i32) {
    %c0_i32 = arith.constant 0 : i32
    %c0_i32_0 = arith.constant 0 : i32
    return %arg0, %c0_i32 : i32, i32
  }
}

module attributes {stable_mosaic.version = 11 : i64} {
  func.func @_matmul_affine_act_kernel(%arg0: i32, %arg1: memref<32x512xf32, #tpu.memory_space<vmem>>, %arg2: memref<512x16xf32, #tpu.memory_space<vmem>>, %arg3: memref<1x16xf32, #tpu.memory_space<vmem>>, %arg4: memref<1x16xf32, #tpu.memory_space<vmem>>, %arg5: memref<32x16xf32, #tpu.memory_space<vmem>>) attributes {dimension_semantics = [#tpu.dimension_semantics<parallel>], iteration_bounds = array<i64: 1>, scalar_prefetch = 0 : i64, scratch_operands = 0 : i64, tpu.core_type = #tpu.core_type<tc>, window_params = [{transform_indices = @transform_0, window_bounds = array<i64: 32, 512>}, {pipeline_mode = #tpu.pipeline_mode<synchronous>, transform_indices = @transform_1, window_bounds = array<i64: 512, 16>}, {pipeline_mode = #tpu.pipeline_mode<synchronous>, transform_indices = @transform_2, window_bounds = array<i64: 1, 16>}, {pipeline_mode = #tpu.pipeline_mode<synchronous>, transform_indices = @transform_3, window_bounds = array<i64: 1, 16>}, {transform_indices = @transform_4, window_bounds = array<i64: 32, 16>}]} {
    %c0 = arith.constant 0 : index
    %c0_0 = arith.constant 0 : index
    %0 = vector.load %arg1[%c0, %c0_0] : memref<32x512xf32, #tpu.memory_space<vmem>>, vector<32x512xf32>
    %c0_1 = arith.constant 0 : index
    %c0_2 = arith.constant 0 : index
    %1 = vector.load %arg2[%c0_1, %c0_2] : memref<512x16xf32, #tpu.memory_space<vmem>>, vector<512x16xf32>
    %cst = arith.constant dense<0.000000e+00> : vector<32x16xf32>
    %2 = tpu.matmul %0, %1, %cst {dimension_numbers = #tpu.dot_dimension_numbers<[1], [0], [0], [1], [0, 0, 1, 1], [], []>} : vector<32x512xf32>, vector<512x16xf32>, vector<32x16xf32> -> vector<32x16xf32>
    %c0_3 = arith.constant 0 : index
    %c0_4 = arith.constant 0 : index
    %3 = vector.load %arg3[%c0_3, %c0_4] : memref<1x16xf32, #tpu.memory_space<vmem>>, vector<1x16xf32>
    %4 = vector.broadcast %3 : vector<1x16xf32> to vector<32x16xf32>
    %5 = arith.mulf %2, %4 : vector<32x16xf32>
    %c0_5 = arith.constant 0 : index
    %c0_6 = arith.constant 0 : index
    %6 = vector.load %arg4[%c0_5, %c0_6] : memref<1x16xf32, #tpu.memory_space<vmem>>, vector<1x16xf32>
    %7 = vector.broadcast %6 : vector<1x16xf32> to vector<32x16xf32>
    %8 = arith.addf %5, %7 : vector<32x16xf32>
    %cst_7 = arith.constant 0.000000e+00 : f32
    %cst_8 = arith.constant 6.000000e+00 : f32
    %9 = vector.broadcast %cst_7 : f32 to vector<32x16xf32>
    %10 = arith.maximumf %9, %8 : vector<32x16xf32>
    %11 = vector.broadcast %cst_8 : f32 to vector<32x16xf32>
    %12 = arith.minimumf %11, %10 : vector<32x16xf32>
    %c0_9 = arith.constant 0 : index
    %c0_10 = arith.constant 0 : index
    %13 = vector.load %arg5[%c0_9, %c0_10] : memref<32x16xf32, #tpu.memory_space<vmem>>, vector<32x16xf32>
    tpu.vector_store %arg5[%c0_9, %c0_10], %12 {strides = array<i32>} : memref<32x16xf32, #tpu.memory_space<vmem>>, vector<32x16xf32>,
    return
  }
  func.func @transform_0(%arg0: i32) -> (i32, i32) {
    %c0_i32 = arith.constant 0 : i32
    %c0_i32_0 = arith.constant 0 : i32
    return %arg0, %c0_i32 : i32, i32
  }
  func.func @transform_1(%arg0: i32) -> (i32, i32) {
    %c0_i32 = arith.constant 0 : i32
    %c0_i32_0 = arith.constant 0 : i32
    %c0_i32_1 = arith.constant 0 : i32
    return %c0_i32, %c0_i32_0 : i32, i32
  }
  func.func @transform_2(%arg0: i32) -> (i32, i32) {
    %c0_i32 = arith.constant 0 : i32
    %c0_i32_0 = arith.constant 0 : i32
    %c0_i32_1 = arith.constant 0 : i32
    return %c0_i32, %c0_i32_0 : i32, i32
  }
  func.func @transform_3(%arg0: i32) -> (i32, i32) {
    %c0_i32 = arith.constant 0 : i32
    %c0_i32_0 = arith.constant 0 : i32
    %c0_i32_1 = arith.constant 0 : i32
    return %c0_i32, %c0_i32_0 : i32, i32
  }
  func.func @transform_4(%arg0: i32) -> (i32, i32) {
    %c0_i32 = arith.constant 0 : i32
    %c0_i32_0 = arith.constant 0 : i32
    return %arg0, %c0_i32 : i32, i32
  }
}

module attributes {stable_mosaic.version = 11 : i64} {
  func.func @_mlp_head_kernel(%arg0: i32, %arg1: memref<8x256xf32, #tpu.memory_space<vmem>>, %arg2: memref<256x1024xf32, #tpu.memory_space<vmem>>, %arg3: memref<1x1024xf32, #tpu.memory_space<vmem>>, %arg4: memref<1024x128xf32, #tpu.memory_space<vmem>>, %arg5: memref<1x128xf32, #tpu.memory_space<vmem>>, %arg6: memref<8x128xf32, #tpu.memory_space<vmem>>) attributes {dimension_semantics = [#tpu.dimension_semantics<arbitrary>], iteration_bounds = array<i64: 1>, scalar_prefetch = 0 : i64, scratch_operands = 0 : i64, tpu.core_type = #tpu.core_type<tc>, window_params = [{pipeline_mode = #tpu.pipeline_mode<synchronous>, transform_indices = @transform_0, window_bounds = array<i64: 8, 256>}, {pipeline_mode = #tpu.pipeline_mode<synchronous>, transform_indices = @transform_1, window_bounds = array<i64: 256, 1024>}, {pipeline_mode = #tpu.pipeline_mode<synchronous>, transform_indices = @transform_2, window_bounds = array<i64: 1, 1024>}, {pipeline_mode = #tpu.pipeline_mode<synchronous>, transform_indices = @transform_3, window_bounds = array<i64: 1024, 128>}, {pipeline_mode = #tpu.pipeline_mode<synchronous>, transform_indices = @transform_4, window_bounds = array<i64: 1, 128>}, {pipeline_mode = #tpu.pipeline_mode<synchronous>, transform_indices = @transform_5, window_bounds = array<i64: 8, 128>}]} {
    %c0 = arith.constant 0 : index
    %c0_0 = arith.constant 0 : index
    %0 = vector.load %arg1[%c0, %c0_0] : memref<8x256xf32, #tpu.memory_space<vmem>>, vector<8x256xf32>
    %c0_1 = arith.constant 0 : index
    %c0_2 = arith.constant 0 : index
    %1 = vector.load %arg2[%c0_1, %c0_2] : memref<256x1024xf32, #tpu.memory_space<vmem>>, vector<256x1024xf32>
    %cst = arith.constant dense<0.000000e+00> : vector<8x1024xf32>
    %2 = tpu.matmul %0, %1, %cst {dimension_numbers = #tpu.dot_dimension_numbers<[1], [0], [0], [1], [0, 0, 1, 1], [], []>} : vector<8x256xf32>, vector<256x1024xf32>, vector<8x1024xf32> -> vector<8x1024xf32>
    %c0_3 = arith.constant 0 : index
    %c0_4 = arith.constant 0 : index
    %3 = vector.load %arg3[%c0_3, %c0_4] : memref<1x1024xf32, #tpu.memory_space<vmem>>, vector<1x1024xf32>
    %4 = vector.broadcast %3 : vector<1x1024xf32> to vector<8x1024xf32>
    %5 = arith.addf %2, %4 : vector<8x1024xf32>
    %cst_5 = arith.constant 0.000000e+00 : f32
    %6 = vector.broadcast %cst_5 : f32 to vector<8x1024xf32>
    %7 = arith.maximumf %5, %6 : vector<8x1024xf32>
    %c0_6 = arith.constant 0 : index
    %c0_7 = arith.constant 0 : index
    %8 = vector.load %arg4[%c0_6, %c0_7] : memref<1024x128xf32, #tpu.memory_space<vmem>>, vector<1024x128xf32>
    %cst_8 = arith.constant dense<0.000000e+00> : vector<8x128xf32>
    %9 = tpu.matmul %7, %8, %cst_8 {dimension_numbers = #tpu.dot_dimension_numbers<[1], [0], [0], [1], [0, 0, 1, 1], [], []>} : vector<8x1024xf32>, vector<1024x128xf32>, vector<8x128xf32> -> vector<8x128xf32>
    %c0_9 = arith.constant 0 : index
    %c0_10 = arith.constant 0 : index
    %10 = vector.load %arg5[%c0_9, %c0_10] : memref<1x128xf32, #tpu.memory_space<vmem>>, vector<1x128xf32>
    %11 = vector.broadcast %10 : vector<1x128xf32> to vector<8x128xf32>
    %12 = arith.addf %9, %11 : vector<8x128xf32>
    %cst_11 = arith.constant dense<0xFF800000> : vector<8xf32>
    %13 = vector.multi_reduction <maximumf>, %12, %cst_11 [1] : vector<8x128xf32> to vector<8xf32>
    %14 = vector.shape_cast %13 : vector<8xf32> to vector<8x1xf32>
    %15 = vector.broadcast %14 : vector<8x1xf32> to vector<8x128xf32>
    %16 = arith.subf %12, %15 : vector<8x128xf32>
    %17 = math.exp %16 : vector<8x128xf32>
    %cst_12 = arith.constant dense<0.000000e+00> : vector<8xf32>
    %18 = vector.multi_reduction <add>, %17, %cst_12 [1] : vector<8x128xf32> to vector<8xf32>
    %19 = vector.shape_cast %18 : vector<8xf32> to vector<8x1xf32>
    %20 = vector.broadcast %19 : vector<8x1xf32> to vector<8x128xf32>
    %21 = arith.divf %17, %20 : vector<8x128xf32>
    %c0_13 = arith.constant 0 : index
    %c0_14 = arith.constant 0 : index
    %22 = vector.load %arg6[%c0_13, %c0_14] : memref<8x128xf32, #tpu.memory_space<vmem>>, vector<8x128xf32>
    tpu.vector_store %arg6[%c0_13, %c0_14], %21 {strides = array<i32>} : memref<8x128xf32, #tpu.memory_space<vmem>>, vector<8x128xf32>,
    return
  }
  func.func @transform_0(%arg0: i32) -> (i32, i32) {
    %c0_i32 = arith.constant 0 : i32
    %c0_i32_0 = arith.constant 0 : i32
    %c0_i32_1 = arith.constant 0 : i32
    return %c0_i32, %c0_i32_0 : i32, i32
  }
  func.func @transform_1(%arg0: i32) -> (i32, i32) {
    %c0_i32 = arith.constant 0 : i32
    %c0_i32_0 = arith.constant 0 : i32
    %c0_i32_1 = arith.constant 0 : i32
    return %c0_i32, %c0_i32_0 : i32, i32
  }
  func.func @transform_2(%arg0: i32) -> (i32, i32) {
    %c0_i32 = arith.constant 0 : i32
    %c0_i32_0 = arith.constant 0 : i32
    %c0_i32_1 = arith.constant 0 : i32
    return %c0_i32, %c0_i32_0 : i32, i32
  }
  func.func @transform_3(%arg0: i32) -> (i32, i32) {
    %c0_i32 = arith.constant 0 : i32
    %c0_i32_0 = arith.constant 0 : i32
    %c0_i32_1 = arith.constant 0 : i32
    return %c0_i32, %c0_i32_0 : i32, i32
  }
  func.func @transform_4(%arg0: i32) -> (i32, i32) {
    %c0_i32 = arith.constant 0 : i32
    %c0_i32_0 = arith.constant 0 : i32
    %c0_i32_1 = arith.constant 0 : i32
    return %c0_i32, %c0_i32_0 : i32, i32
  }
  func.func @transform_5(%arg0: i32) -> (i32, i32) {
    %c0_i32 = arith.constant 0 : i32
    %c0_i32_0 = arith.constant 0 : i32
    %c0_i32_1 = arith.constant 0 : i32
    return %c0_i32, %c0_i32_0 : i32, i32
  }
}

</mosaic_0001>

<llo_original>
// kernel: encoder_forward.6
$region0: #{encoder_forward.6}
  #allocation0 [shape = 'u32[]', space=smem, size = 0x4, offset = 0x4, fixed_abs, tag = 'smem constant byte address 0x4 - core index']
  #allocation1 [shape = 'u32[144,128]{1,0:T(1,128)}', space=vmem, size = 0x12000, scoped, tag = 'internal scratch']
  %s0 = inlined_call_operand.vmem [shape: f32[6272,48], index: 0, kind: input, shape index: {}]
  %s1 = inlined_call_operand.vmem [shape: f32[48,8], index: 1, kind: input, shape index: {}]
  %s2 = inlined_call_operand.vmem [shape: f32[1,8], index: 2, kind: input, shape index: {}]
  %s3 = inlined_call_operand.vmem [shape: f32[1,8], index: 3, kind: input, shape index: {}]
  %s4 = inlined_call_operand.vmem [shape: f32[6272,8], index: 4, kind: output, shape index: {}]
  %s5 = sld [smem:[#allocation0]]
  $region49: #{encoder_forward.6} parent=0
    _
  %s7 = ssub.s32 1, %s5
  %s8 = scalar_select 0, %s7, %s5
  loop: start=0, step=1, limit=4
  $region2: #{encoder_forward.6} parent=0 // loop_pre_header
    _
  $region3: #{encoder_forward.6} parent=0 // loop_header
    %s10 = sphi 0, %s14
    %p11 = scmp.ge.s32.totalorder %s10, 4
    %s20 = sphi 0, %s22
    %s23 = sphi 0, %s20
    %s24 = sphi 0, %s23
    %s40 = sphi 0, %s24
    %s44 = sphi 0, %s44
    %s46 = sphi 0, %s44
    %s47 = sphi 0, %s46
    %s61 = sphi 0, %s47
    %s65 = sphi 0, %s65
    %s67 = sphi 0, %s65
    %s68 = sphi 0, %s67
    %s82 = sphi 0, %s68
    %s86 = sphi 0, %s86
    %s88 = sphi 0, %s86
    %s89 = sphi 0, %s88
    %s103 = sphi 0, %s89
    %s109 = sphi 0, %s111
    %s112 = sphi 0, %s109
    %s113 = sphi 0, %s112
    %s129 = sphi 0, %s113
  $region4: #{encoder_forward.6} parent=0 // loop_header_branch
    %13 = sbr.rel (%p11) target = $region8
  $region5: #{encoder_forward.6} parent=0 // loop_body
    %s15 = ssub.s32 %s10, 1
    %s16 = ssub.s32 %s10, 2
    %s17 = sadd.s32 %s10, 1
    %s18 = ssub.s32 %s10, %s17
    %p19 = scmp.eq.s32.totalorder %s18, 0
    %s21 = sadd.s32 %s20, 1
    %s22 = scalar_select %p19, %s20, %s21
    %p25 = pneg %p19
    %p26 = scmp.eq.s32.totalorder %s10, 1
    %p27 = por %p25, %p26
    %p28 = scmp.ne.s32.totalorder %s20, %s23
    %p29 = scmp.eq.s32.totalorder %s10, 0
    %p30 = por %p28, %p29
    %p31 = scmp.ne.s32.totalorder %s20, %s23
    %p32 = scmp.eq.s32.totalorder %s15, 1
    %p33 = por %p31, %p32
    %p34 = scmp.ne.s32.totalorder %s23, %s24
    %p35 = scmp.eq.s32.totalorder %s15, 0
    %p36 = por %p34, %p35
    %p37 = scmp.ne.s32.totalorder %s23, %s24
    %p38 = scmp.eq.s32.totalorder %s16, 1
    %p39 = por %p37, %p38
    %p41 = scmp.ne.s32.totalorder %s24, %s40
    %p42 = scmp.eq.s32.totalorder %s16, 0
    %p43 = por %p41, %p42
    %s45 = sadd.s32 %s44, 1
    %p48 = scmp.eq.s32.totalorder %s10, 1
    %p49 = scmp.ne.s32.totalorder %s44, %s46
    %p50 = scmp.eq.s32.totalorder %s10, 0
    %p51 = por %p49, %p50
    %p52 = scmp.ne.s32.totalorder %s44, %s46
    %p53 = scmp.eq.s32.totalorder %s15, 1
    %p54 = por %p52, %p53
    %p55 = scmp.ne.s32.totalorder %s46, %s47
    %p56 = scmp.eq.s32.totalorder %s15, 0
    %p57 = por %p55, %p56
    %p58 = scmp.ne.s32.totalorder %s46, %s47
    %p59 = scmp.eq.s32.totalorder %s16, 1
    %p60 = por %p58, %p59
    %p62 = scmp.ne.s32.totalorder %s47, %s61
    %p63 = scmp.eq.s32.totalorder %s16, 0
    %p64 = por %p62, %p63
    %s66 = sadd.s32 %s65, 1
    %p69 = scmp.eq.s32.totalorder %s10, 1
    %p70 = scmp.ne.s32.totalorder %s65, %s67
    %p71 = scmp.eq.s32.totalorder %s10, 0
    %p72 = por %p70, %p71
    %p73 = scmp.ne.s32.totalorder %s65, %s67
    %p74 = scmp.eq.s32.totalorder %s15, 1
    %p75 = por %p73, %p74
    %p76 = scmp.ne.s32.totalorder %s67, %s68
    %p77 = scmp.eq.s32.totalorder %s15, 0
    %p78 = por %p76, %p77
    %p79 = scmp.ne.s32.totalorder %s67, %s68
    %p80 = scmp.eq.s32.totalorder %s16, 1
    %p81 = por %p79, %p80
    %p83 = scmp.ne.s32.totalorder %s68, %s82
    %p84 = scmp.eq.s32.totalorder %s16, 0
    %p85 = por %p83, %p84
    %s87 = sadd.s32 %s86, 1
    %p90 = scmp.eq.s32.totalorder %s10, 1
    %p91 = scmp.ne.s32.totalorder %s86, %s88
    %p92 = scmp.eq.s32.totalorder %s10, 0
    %p93 = por %p91, %p92
    %p94 = scmp.ne.s32.totalorder %s86, %s88
    %p95 = scmp.eq.s32.totalorder %s15, 1
    %p96 = por %p94, %p95
    %p97 = scmp.ne.s32.totalorder %s88, %s89
    %p98 = scmp.eq.s32.totalorder %s15, 0
    %p99 = por %p97, %p98
    %p100 = scmp.ne.s32.totalorder %s88, %s89
    %p101 = scmp.eq.s32.totalorder %s16, 1
    %p102 = por %p100, %p101
    %p104 = scmp.ne.s32.totalorder %s89, %s103
    %p105 = scmp.eq.s32.totalorder %s16, 0
    %p106 = por %p104, %p105
    %s107 = ssub.s32 %s10, %s17
    %p108 = scmp.eq.s32.totalorder %s107, 0
    %s110 = sadd.s32 %s109, 1
    %s111 = scalar_select %p108, %s109, %s110
    %p114 = pneg %p108
    %p115 = scmp.eq.s32.totalorder %s10, 1
    %p116 = por %p114, %p115
    %p117 = scmp.ne.s32.totalorder %s109, %s112
    %p118 = scmp.eq.s32.totalorder %s10, 0
    %p119 = por %p117, %p118
    %p120 = scmp.ne.s32.totalorder %s109, %s112
    %p121 = scmp.eq.s32.totalorder %s15, 1
    %p122 = por %p120, %p121
    %p123 = scmp.ne.s32.totalorder %s112, %s113
    %p124 = scmp.eq.s32.totalorder %s15, 0
    %p125 = por %p123, %p124
    %p126 = scmp.ne.s32.totalorder %s112, %s113
    %p127 = scmp.eq.s32.totalorder %s16, 1
    %p128 = por %p126, %p127
    %p130 = scmp.ne.s32.totalorder %s113, %s129
    %p131 = scmp.eq.s32.totalorder %s16, 0
    %p132 = por %p130, %p131
    %p133 = scmp.le.s32.totalorder 1, %s10
    %p134 = scmp.lt.s32.totalorder %s10, 3
    %p135 = pnand %p133, %p134
    %p136 = pneg %p135
    // Predicated region
    $region9: #{encoder_forward.6} parent=5 // pred_check
      _
    $region10: #{encoder_forward.6} parent=5 // pred_check_branch
      %138 = sbr.rel (%p135) target = $region12
    $region11: #{encoder_forward.6} parent=5 // pred_region
      %s139 = ssub.s32 %s10, 1
      // Predicated region
      $region13: #{encoder_forward.6} parent=11 // pred_check
        %p140 = pneg %p57
      $region14: #{encoder_forward.6} parent=11 // pred_check_branch
        %142 = sbr.rel (%p140) target = $region16
      $region15: #{encoder_forward.6} parent=11 // pred_region
        _
      $region16: #{encoder_forward.6} parent=11 // pred_fallthru
        _
      // Predicated region
      $region17: #{encoder_forward.6} parent=11 // pred_check
        %p143 = pneg %p78
      $region18: #{encoder_forward.6} parent=11 // pred_check_branch
        %145 = sbr.rel (%p143) target = $region20
      $region19: #{encoder_forward.6} parent=11 // pred_region
        _
      $region20: #{encoder_forward.6} parent=11 // pred_fallthru
        _
      // Predicated region
      $region21: #{encoder_forward.6} parent=11 // pred_check
        %p146 = pneg %p99
      $region22: #{encoder_forward.6} parent=11 // pred_check_branch
        %148 = sbr.rel (%p146) target = $region24
      $region23: #{encoder_forward.6} parent=11 // pred_region
        _
      $region24: #{encoder_forward.6} parent=11 // pred_fallthru
        _
    $region12: #{encoder_forward.6} parent=5 // pred_fallthru
      _
    %p149 = scmp.lt.s32.totalorder %s10, 2
    // Predicated region
    $region25: #{encoder_forward.6} parent=5 // pred_check
      %p150 = pneg %p149
    $region26: #{encoder_forward.6} parent=5 // pred_check_branch
      %152 = sbr.rel (%p150) target = $region28
    $region27: #{encoder_forward.6} parent=5 // pred_region
      // Predicated region
      $region29: #{encoder_forward.6} parent=27 // pred_check
        %p153 = pneg %p30
      $region30: #{encoder_forward.6} parent=27 // pred_check_branch
        %155 = sbr.rel (%p153) target = $region32
      $region31: #{encoder_forward.6} parent=27 // pred_region
        %s156 = smul.u32 392, %s10
        %p157 = scmp.lt.s32.totalorder %s156, 783
        %s158 = scalar_select %p157, %s156, 783
        %s159 = smul.addr %s158, 8
        %s160 = scalar_lea.vmem %s0, %s159
        %s161 = smul.u32 392, %s10
      $region32: #{encoder_forward.6} parent=27 // pred_fallthru
        _
    $region28: #{encoder_forward.6} parent=5 // pred_fallthru
      _
    %p162 = scmp.le.s32.totalorder 1, %s10
    %p163 = scmp.lt.s32.totalorder %s10, 3
    %p164 = pnand %p162, %p163
    %p165 = pneg %p164
    // Predicated region
    $region33: #{encoder_forward.6} parent=5 // pred_check
      _
    $region34: #{encoder_forward.6} parent=5 // pred_check_branch
      %167 = sbr.rel (%p164) target = $region36
    $region35: #{encoder_forward.6} parent=5 // pred_region
      %s168 = ssub.s32 %s10, 1
      %s169 = smul.u32 392, %s15
      %p170 = scmp.lt.s32.totalorder %s169, 783
      %s171 = scalar_select %p170, %s169, 783
      %s172 = smul.addr %s171, 8
      %s173 = scalar_lea.vmem %s0, %s172
      %p174 = pneg %p36
      %p175 = pneg %p33
      %p176 = pneg %p57
      %p177 = pneg %p54
      %p178 = pneg %p78
      %p179 = pneg %p75
      %p180 = pneg %p99
      %p181 = pneg %p96
      %p182 = pneg %p125
      %p183 = pneg %p122
      %s184 = smul.u32 392, %s15
      %p185 = scmp.lt.s32.totalorder %s184, 783
      %s186 = scalar_select %p185, %s184, 783
      %s187 = smul.addr %s186, 8
      %s188 = scalar_lea.vmem %s4, %s187
      %s189 = smul.u32 392, %s15
      %p190 = scmp.lt.s32.totalorder %s189, 783
      %s191 = scalar_select %p190, %s189, 783
      %s192 = smul.addr %s191, 8
      %s193 = scalar_lea.vmem %s0, %s192
      %s194 = smul.u32 392, %s15
      %s195 = smul.u32 392, %s15
      %p196 = scmp.lt.s32.totalorder %s195, 783
      %s197 = scalar_select %p196, %s195, 783
      %s198 = smul.addr %s197, 8
      %s199 = scalar_lea.vmem %s4, %s198
      %s200 = smul.u32 392, %s15
      %v201 = vld [vmem:[%s193] sm:$0xff]
      %v202 = vld [vmem:[%s193 + $0x8] sm:$0xff]
      %v203 = vld [vmem:[%s193 + $0x10] sm:$0xff]
      %v204 = vld [vmem:[%s193 + $0x18] sm:$0xff]
      %v205 = vld [vmem:[%s193 + $0x20] sm:$0xff]
      %v206 = vld [vmem:[%s193 + $0x28] sm:$0xff]
      %v207 = vld [vmem:[%s193 + $0x30] sm:$0xff]
      %v208 = vld [vmem:[%s193 + $0x38] sm:$0xff]
      %v209 = vld [vmem:[%s193 + $0x40] sm:$0xff]
      %v210 = vld [vmem:[%s193 + $0x48] sm:$0xff]
      %v211 = vld [vmem:[%s193 + $0x50] sm:$0xff]
      %v212 = vld [vmem:[%s193 + $0x58] sm:$0xff]
      %v213 = vld [vmem:[%s193 + $0x60] sm:$0xff]
      %v214 = vld [vmem:[%s193 + $0x68] sm:$0xff]
      %v215 = vld [vmem:[%s193 + $0x70] sm:$0xff]
      %v216 = vld [vmem:[%s193 + $0x78] sm:$0xff]
      %v217 = vld [vmem:[%s193 + $0x80] sm:$0xff]
      %v218 = vld [vmem:[%s193 + $0x88] sm:$0xff]
      %v219 = vld [vmem:[%s193 + $0x90] sm:$0xff]
      %v220 = vld [vmem:[%s193 + $0x98] sm:$0xff]
      %v221 = vld [vmem:[%s193 + $0xa0] sm:$0xff]
      %v222 = vld [vmem:[%s193 + $0xa8] sm:$0xff]
      %v223 = vld [vmem:[%s193 + $0xb0] sm:$0xff]
      %v224 = vld [vmem:[%s193 + $0xb8] sm:$0xff]
      %v225 = vld [vmem:[%s193 + $0xc0] sm:$0xff]
      %v226 = vld [vmem:[%s193 + $0xc8] sm:$0xff]
      %v227 = vld [vmem:[%s193 + $0xd0] sm:$0xff]
      %v228 = vld [vmem:[%s193 + $0xd8] sm:$0xff]
      %v229 = vld [vmem:[%s193 + $0xe0] sm:$0xff]
      %v230 = vld [vmem:[%s193 + $0xe8] sm:$0xff]
      %v231 = vld [vmem:[%s193 + $0xf0] sm:$0xff]
      %v232 = vld [vmem:[%s193 + $0xf8] sm:$0xff]
      %v233 = vld [vmem:[%s193 + $0x100] sm:$0xff]
      %v234 = vld [vmem:[%s193 + $0x108] sm:$0xff]
      %v235 = vld [vmem:[%s193 + $0x110] sm:$0xff]
      %v236 = vld [vmem:[%s193 + $0x118] sm:$0xff]
      %v237 = vld [vmem:[%s193 + $0x120] sm:$0xff]
      %v238 = vld [vmem:[%s193 + $0x128] sm:$0xff]
      %v239 = vld [vmem:[%s193 + $0x130] sm:$0xff]
      %v240 = vld [vmem:[%s193 + $0x138] sm:$0xff]
      %v241 = vld [vmem:[%s193 + $0x140] sm:$0xff]
      %v242 = vld [vmem:[%s193 + $0x148] sm:$0xff]
      %v243 = vld [vmem:[%s193 + $0x150] sm:$0xff]
      %v244 = vld [vmem:[%s193 + $0x158] sm:$0xff]
      %v245 = vld [vmem:[%s193 + $0x160] sm:$0xff]
      %v246 = vld [vmem:[%s193 + $0x168] sm:$0xff]
      %v247 = vld [vmem:[%s193 + $0x170] sm:$0xff]
      %v248 = vld [vmem:[%s193 + $0x178] sm:$0xff]
      %v249 = vld [vmem:[%s193 + $0x180] sm:$0xff]
      %v250 = vld [vmem:[%s193 + $0x188] sm:$0xff]
      %v251 = vld [vmem:[%s193 + $0x190] sm:$0xff]
      %v252 = vld [vmem:[%s193 + $0x198] sm:$0xff]
      %v253 = vld [vmem:[%s193 + $0x1a0] sm:$0xff]
      %v254 = vld [vmem:[%s193 + $0x1a8] sm:$0xff]
      %v255 = vld [vmem:[%s193 + $0x1b0] sm:$0xff]
      %v256 = vld [vmem:[%s193 + $0x1b8] sm:$0xff]
      %v257 = vld [vmem:[%s193 + $0x1c0] sm:$0xff]
      %v258 = vld [vmem:[%s193 + $0x1c8] sm:$0xff]
      %v259 = vld [vmem:[%s193 + $0x1d0] sm:$0xff]
      %v260 = vld [vmem:[%s193 + $0x1d8] sm:$0xff]
      %v261 = vld [vmem:[%s193 + $0x1e0] sm:$0xff]
      %v262 = vld [vmem:[%s193 + $0x1e8] sm:$0xff]
      %v263 = vld [vmem:[%s193 + $0x1f0] sm:$0xff]
      %v264 = vld [vmem:[%s193 + $0x1f8] sm:$0xff]
      %v265 = vld [vmem:[%s193 + $0x200] sm:$0xff]
      %v266 = vld [vmem:[%s193 + $0x208] sm:$0xff]
      %v267 = vld [vmem:[%s193 + $0x210] sm:$0xff]
      %v268 = vld [vmem:[%s193 + $0x218] sm:$0xff]
      %v269 = vld [vmem:[%s193 + $0x220] sm:$0xff]
      %v270 = vld [vmem:[%s193 + $0x228] sm:$0xff]
      %v271 = vld [vmem:[%s193 + $0x230] sm:$0xff]
      %v272 = vld [vmem:[%s193 + $0x238] sm:$0xff]
      %v273 = vld [vmem:[%s193 + $0x240] sm:$0xff]
      %v274 = vld [vmem:[%s193 + $0x248] sm:$0xff]
      %v275 = vld [vmem:[%s193 + $0x250] sm:$0xff]
      %v276 = vld [vmem:[%s193 + $0x258] sm:$0xff]
      %v277 = vld [vmem:[%s193 + $0x260] sm:$0xff]
      %v278 = vld [vmem:[%s193 + $0x268] sm:$0xff]
      %v279 = vld [vmem:[%s193 + $0x270] sm:$0xff]
      %v280 = vld [vmem:[%s193 + $0x278] sm:$0xff]
      %v281 = vld [vmem:[%s193 + $0x280] sm:$0xff]
      %v282 = vld [vmem:[%s193 + $0x288] sm:$0xff]
      %v283 = vld [vmem:[%s193 + $0x290] sm:$0xff]
      %v284 = vld [vmem:[%s193 + $0x298] sm:$0xff]
      %v285 = vld [vmem:[%s193 + $0x2a0] sm:$0xff]
      %v286 = vld [vmem:[%s193 + $0x2a8] sm:$0xff]
      %v287 = vld [vmem:[%s193 + $0x2b0] sm:$0xff]
      %v288 = vld [vmem:[%s193 + $0x2b8] sm:$0xff]
      %v289 = vld [vmem:[%s193 + $0x2c0] sm:$0xff]
      %v290 = vld [vmem:[%s193 + $0x2c8] sm:$0xff]
      %v291 = vld [vmem:[%s193 + $0x2d0] sm:$0xff]
      %v292 = vld [vmem:[%s193 + $0x2d8] sm:$0xff]
      %v293 = vld [vmem:[%s193 + $0x2e0] sm:$0xff]
      %v294 = vld [vmem:[%s193 + $0x2e8] sm:$0xff]
      %v295 = vld [vmem:[%s193 + $0x2f0] sm:$0xff]
      %v296 = vld [vmem:[%s193 + $0x2f8] sm:$0xff]
      %v297 = vld [vmem:[%s193 + $0x300] sm:$0xff]
      %v298 = vld [vmem:[%s193 + $0x308] sm:$0xff]
      %v299 = vld [vmem:[%s193 + $0x310] sm:$0xff]
      %v300 = vld [vmem:[%s193 + $0x318] sm:$0xff]
      %v301 = vld [vmem:[%s193 + $0x320] sm:$0xff]
      %v302 = vld [vmem:[%s193 + $0x328] sm:$0xff]
      %v303 = vld [vmem:[%s193 + $0x330] sm:$0xff]
      %v304 = vld [vmem:[%s193 + $0x338] sm:$0xff]
      %v305 = vld [vmem:[%s193 + $0x340] sm:$0xff]
      %v306 = vld [vmem:[%s193 + $0x348] sm:$0xff]
      %v307 = vld [vmem:[%s193 + $0x350] sm:$0xff]
      %v308 = vld [vmem:[%s193 + $0x358] sm:$0xff]
      %v309 = vld [vmem:[%s193 + $0x360] sm:$0xff]
      %v310 = vld [vmem:[%s193 + $0x368] sm:$0xff]
      %v311 = vld [vmem:[%s193 + $0x370] sm:$0xff]
      %v312 = vld [vmem:[%s193 + $0x378] sm:$0xff]
      %v313 = vld [vmem:[%s193 + $0x380] sm:$0xff]
      %v314 = vld [vmem:[%s193 + $0x388] sm:$0xff]
      %v315 = vld [vmem:[%s193 + $0x390] sm:$0xff]
      %v316 = vld [vmem:[%s193 + $0x398] sm:$0xff]
      %v317 = vld [vmem:[%s193 + $0x3a0] sm:$0xff]
      %v318 = vld [vmem:[%s193 + $0x3a8] sm:$0xff]
      %v319 = vld [vmem:[%s193 + $0x3b0] sm:$0xff]
      %v320 = vld [vmem:[%s193 + $0x3b8] sm:$0xff]
      %v321 = vld [vmem:[%s193 + $0x3c0] sm:$0xff]
      %v322 = vld [vmem:[%s193 + $0x3c8] sm:$0xff]
      %v323 = vld [vmem:[%s193 + $0x3d0] sm:$0xff]
      %v324 = vld [vmem:[%s193 + $0x3d8] sm:$0xff]
      %v325 = vld [vmem:[%s193 + $0x3e0] sm:$0xff]
      %v326 = vld [vmem:[%s193 + $0x3e8] sm:$0xff]
      %v327 = vld [vmem:[%s193 + $0x3f0] sm:$0xff]
      %v328 = vld [vmem:[%s193 + $0x3f8] sm:$0xff]
      %v329 = vld [vmem:[%s193 + $0x400] sm:$0xff]
      %v330 = vld [vmem:[%s193 + $0x408] sm:$0xff]
      %v331 = vld [vmem:[%s193 + $0x410] sm:$0xff]
      %v332 = vld [vmem:[%s193 + $0x418] sm:$0xff]
      %v333 = vld [vmem:[%s193 + $0x420] sm:$0xff]
      %v334 = vld [vmem:[%s193 + $0x428] sm:$0xff]
      %v335 = vld [vmem:[%s193 + $0x430] sm:$0xff]
      %v336 = vld [vmem:[%s193 + $0x438] sm:$0xff]
      %v337 = vld [vmem:[%s193 + $0x440] sm:$0xff]
      %v338 = vld [vmem:[%s193 + $0x448] sm:$0xff]
      %v339 = vld [vmem:[%s193 + $0x450] sm:$0xff]
      %v340 = vld [vmem:[%s193 + $0x458] sm:$0xff]
      %v341 = vld [vmem:[%s193 + $0x460] sm:$0xff]
      %v342 = vld [vmem:[%s193 + $0x468] sm:$0xff]
      %v343 = vld [vmem:[%s193 + $0x470] sm:$0xff]
      %v344 = vld [vmem:[%s193 + $0x478] sm:$0xff]
      %v345 = vld [vmem:[%s193 + $0x480] sm:$0xff]
      %v346 = vld [vmem:[%s193 + $0x488] sm:$0xff]
      %v347 = vld [vmem:[%s193 + $0x490] sm:$0xff]
      %v348 = vld [vmem:[%s193 + $0x498] sm:$0xff]
      %v349 = vld [vmem:[%s193 + $0x4a0] sm:$0xff]
      %v350 = vld [vmem:[%s193 + $0x4a8] sm:$0xff]
      %v351 = vld [vmem:[%s193 + $0x4b0] sm:$0xff]
      %v352 = vld [vmem:[%s193 + $0x4b8] sm:$0xff]
      %v353 = vld [vmem:[%s193 + $0x4c0] sm:$0xff]
      %v354 = vld [vmem:[%s193 + $0x4c8] sm:$0xff]
      %v355 = vld [vmem:[%s193 + $0x4d0] sm:$0xff]
      %v356 = vld [vmem:[%s193 + $0x4d8] sm:$0xff]
      %v357 = vld [vmem:[%s193 + $0x4e0] sm:$0xff]
      %v358 = vld [vmem:[%s193 + $0x4e8] sm:$0xff]
      %v359 = vld [vmem:[%s193 + $0x4f0] sm:$0xff]
      %v360 = vld [vmem:[%s193 + $0x4f8] sm:$0xff]
      %v361 = vld [vmem:[%s193 + $0x500] sm:$0xff]
      %v362 = vld [vmem:[%s193 + $0x508] sm:$0xff]
      %v363 = vld [vmem:[%s193 + $0x510] sm:$0xff]
      %v364 = vld [vmem:[%s193 + $0x518] sm:$0xff]
      %v365 = vld [vmem:[%s193 + $0x520] sm:$0xff]
      %v366 = vld [vmem:[%s193 + $0x528] sm:$0xff]
      %v367 = vld [vmem:[%s193 + $0x530] sm:$0xff]
      %v368 = vld [vmem:[%s193 + $0x538] sm:$0xff]
      %v369 = vld [vmem:[%s193 + $0x540] sm:$0xff]
      %v370 = vld [vmem:[%s193 + $0x548] sm:$0xff]
      %v371 = vld [vmem:[%s193 + $0x550] sm:$0xff]
      %v372 = vld [vmem:[%s193 + $0x558] sm:$0xff]
      %v373 = vld [vmem:[%s193 + $0x560] sm:$0xff]
      %v374 = vld [vmem:[%s193 + $0x568] sm:$0xff]
      %v375 = vld [vmem:[%s193 + $0x570] sm:$0xff]
      %v376 = vld [vmem:[%s193 + $0x578] sm:$0xff]
      %v377 = vld [vmem:[%s193 + $0x580] sm:$0xff]
      %v378 = vld [vmem:[%s193 + $0x588] sm:$0xff]
      %v379 = vld [vmem:[%s193 + $0x590] sm:$0xff]
      %v380 = vld [vmem:[%s193 + $0x598] sm:$0xff]
      %v381 = vld [vmem:[%s193 + $0x5a0] sm:$0xff]
      %v382 = vld [vmem:[%s193 + $0x5a8] sm:$0xff]
      %v383 = vld [vmem:[%s193 + $0x5b0] sm:$0xff]
      %v384 = vld [vmem:[%s193 + $0x5b8] sm:$0xff]
      %v385 = vld [vmem:[%s193 + $0x5c0] sm:$0xff]
      %v386 = vld [vmem:[%s193 + $0x5c8] sm:$0xff]
      %v387 = vld [vmem:[%s193 + $0x5d0] sm:$0xff]
      %v388 = vld [vmem:[%s193 + $0x5d8] sm:$0xff]
      %v389 = vld [vmem:[%s193 + $0x5e0] sm:$0xff]
      %v390 = vld [vmem:[%s193 + $0x5e8] sm:$0xff]
      %v391 = vld [vmem:[%s193 + $0x5f0] sm:$0xff]
      %v392 = vld [vmem:[%s193 + $0x5f8] sm:$0xff]
      %v393 = vld [vmem:[%s193 + $0x600] sm:$0xff]
      %v394 = vld [vmem:[%s193 + $0x608] sm:$0xff]
      %v395 = vld [vmem:[%s193 + $0x610] sm:$0xff]
      %v396 = vld [vmem:[%s193 + $0x618] sm:$0xff]
      %v397 = vld [vmem:[%s193 + $0x620] sm:$0xff]
      %v398 = vld [vmem:[%s193 + $0x628] sm:$0xff]
      %v399 = vld [vmem:[%s193 + $0x630] sm:$0xff]
      %v400 = vld [vmem:[%s193 + $0x638] sm:$0xff]
      %v401 = vld [vmem:[%s193 + $0x640] sm:$0xff]
      %v402 = vld [vmem:[%s193 + $0x648] sm:$0xff]
      %v403 = vld [vmem:[%s193 + $0x650] sm:$0xff]
      %v404 = vld [vmem:[%s193 + $0x658] sm:$0xff]
      %v405 = vld [vmem:[%s193 + $0x660] sm:$0xff]
      %v406 = vld [vmem:[%s193 + $0x668] sm:$0xff]
      %v407 = vld [vmem:[%s193 + $0x670] sm:$0xff]
      %v408 = vld [vmem:[%s193 + $0x678] sm:$0xff]
      %v409 = vld [vmem:[%s193 + $0x680] sm:$0xff]
      %v410 = vld [vmem:[%s193 + $0x688] sm:$0xff]
      %v411 = vld [vmem:[%s193 + $0x690] sm:$0xff]
      %v412 = vld [vmem:[%s193 + $0x698] sm:$0xff]
      %v413 = vld [vmem:[%s193 + $0x6a0] sm:$0xff]
      %v414 = vld [vmem:[%s193 + $0x6a8] sm:$0xff]
      %v415 = vld [vmem:[%s193 + $0x6b0] sm:$0xff]
      %v416 = vld [vmem:[%s193 + $0x6b8] sm:$0xff]
      %v417 = vld [vmem:[%s193 + $0x6c0] sm:$0xff]
      %v418 = vld [vmem:[%s193 + $0x6c8] sm:$0xff]
      %v419 = vld [vmem:[%s193 + $0x6d0] sm:$0xff]
      %v420 = vld [vmem:[%s193 + $0x6d8] sm:$0xff]
      %v421 = vld [vmem:[%s193 + $0x6e0] sm:$0xff]
      %v422 = vld [vmem:[%s193 + $0x6e8] sm:$0xff]
      %v423 = vld [vmem:[%s193 + $0x6f0] sm:$0xff]
      %v424 = vld [vmem:[%s193 + $0x6f8] sm:$0xff]
      %v425 = vld [vmem:[%s193 + $0x700] sm:$0xff]
      %v426 = vld [vmem:[%s193 + $0x708] sm:$0xff]
      %v427 = vld [vmem:[%s193 + $0x710] sm:$0xff]
      %v428 = vld [vmem:[%s193 + $0x718] sm:$0xff]
      %v429 = vld [vmem:[%s193 + $0x720] sm:$0xff]
      %v430 = vld [vmem:[%s193 + $0x728] sm:$0xff]
      %v431 = vld [vmem:[%s193 + $0x730] sm:$0xff]
      %v432 = vld [vmem:[%s193 + $0x738] sm:$0xff]
      %v433 = vld [vmem:[%s193 + $0x740] sm:$0xff]
      %v434 = vld [vmem:[%s193 + $0x748] sm:$0xff]
      %v435 = vld [vmem:[%s193 + $0x750] sm:$0xff]
      %v436 = vld [vmem:[%s193 + $0x758] sm:$0xff]
      %v437 = vld [vmem:[%s193 + $0x760] sm:$0xff]
      %v438 = vld [vmem:[%s193 + $0x768] sm:$0xff]
      %v439 = vld [vmem:[%s193 + $0x770] sm:$0xff]
      %v440 = vld [vmem:[%s193 + $0x778] sm:$0xff]
      %v441 = vld [vmem:[%s193 + $0x780] sm:$0xff]
      %v442 = vld [vmem:[%s193 + $0x788] sm:$0xff]
      %v443 = vld [vmem:[%s193 + $0x790] sm:$0xff]
      %v444 = vld [vmem:[%s193 + $0x798] sm:$0xff]
      %v445 = vld [vmem:[%s193 + $0x7a0] sm:$0xff]
      %v446 = vld [vmem:[%s193 + $0x7a8] sm:$0xff]
      %v447 = vld [vmem:[%s193 + $0x7b0] sm:$0xff]
      %v448 = vld [vmem:[%s193 + $0x7b8] sm:$0xff]
      %v449 = vld [vmem:[%s193 + $0x7c0] sm:$0xff]
      %v450 = vld [vmem:[%s193 + $0x7c8] sm:$0xff]
      %v451 = vld [vmem:[%s193 + $0x7d0] sm:$0xff]
      %v452 = vld [vmem:[%s193 + $0x7d8] sm:$0xff]
      %v453 = vld [vmem:[%s193 + $0x7e0] sm:$0xff]
      %v454 = vld [vmem:[%s193 + $0x7e8] sm:$0xff]
      %v455 = vld [vmem:[%s193 + $0x7f0] sm:$0xff]
      %v456 = vld [vmem:[%s193 + $0x7f8] sm:$0xff]
      %v457 = vld [vmem:[%s193 + $0x800] sm:$0xff]
      %v458 = vld [vmem:[%s193 + $0x808] sm:$0xff]
      %v459 = vld [vmem:[%s193 + $0x810] sm:$0xff]
      %v460 = vld [vmem:[%s193 + $0x818] sm:$0xff]
      %v461 = vld [vmem:[%s193 + $0x820] sm:$0xff]
      %v462 = vld [vmem:[%s193 + $0x828] sm:$0xff]
      %v463 = vld [vmem:[%s193 + $0x830] sm:$0xff]
      %v464 = vld [vmem:[%s193 + $0x838] sm:$0xff]
      %v465 = vld [vmem:[%s193 + $0x840] sm:$0xff]
      %v466 = vld [vmem:[%s193 + $0x848] sm:$0xff]
      %v467 = vld [vmem:[%s193 + $0x850] sm:$0xff]
      %v468 = vld [vmem:[%s193 + $0x858] sm:$0xff]
      %v469 = vld [vmem:[%s193 + $0x860] sm:$0xff]
      %v470 = vld [vmem:[%s193 + $0x868] sm:$0xff]
      %v471 = vld [vmem:[%s193 + $0x870] sm:$0xff]
      %v472 = vld [vmem:[%s193 + $0x878] sm:$0xff]
      %v473 = vld [vmem:[%s193 + $0x880] sm:$0xff]
      %v474 = vld [vmem:[%s193 + $0x888] sm:$0xff]
      %v475 = vld [vmem:[%s193 + $0x890] sm:$0xff]
      %v476 = vld [vmem:[%s193 + $0x898] sm:$0xff]
      %v477 = vld [vmem:[%s193 + $0x8a0] sm:$0xff]
      %v478 = vld [vmem:[%s193 + $0x8a8] sm:$0xff]
      %v479 = vld [vmem:[%s193 + $0x8b0] sm:$0xff]
      %v480 = vld [vmem:[%s193 + $0x8b8] sm:$0xff]
      %v481 = vld [vmem:[%s193 + $0x8c0] sm:$0xff]
      %v482 = vld [vmem:[%s193 + $0x8c8] sm:$0xff]
      %v483 = vld [vmem:[%s193 + $0x8d0] sm:$0xff]
      %v484 = vld [vmem:[%s193 + $0x8d8] sm:$0xff]
      %v485 = vld [vmem:[%s193 + $0x8e0] sm:$0xff]
      %v486 = vld [vmem:[%s193 + $0x8e8] sm:$0xff]
      %v487 = vld [vmem:[%s193 + $0x8f0] sm:$0xff]
      %v488 = vld [vmem:[%s193 + $0x8f8] sm:$0xff]
      %v489 = vld [vmem:[%s193 + $0x900] sm:$0xff]
      %v490 = vld [vmem:[%s193 + $0x908] sm:$0xff]
      %v491 = vld [vmem:[%s193 + $0x910] sm:$0xff]
      %v492 = vld [vmem:[%s193 + $0x918] sm:$0xff]
      %v493 = vld [vmem:[%s193 + $0x920] sm:$0xff]
      %v494 = vld [vmem:[%s193 + $0x928] sm:$0xff]
      %v495 = vld [vmem:[%s193 + $0x930] sm:$0xff]
      %v496 = vld [vmem:[%s193 + $0x938] sm:$0xff]
      %v497 = vld [vmem:[%s193 + $0x940] sm:$0xff]
      %v498 = vld [vmem:[%s193 + $0x948] sm:$0xff]
      %v499 = vld [vmem:[%s193 + $0x950] sm:$0xff]
      %v500 = vld [vmem:[%s193 + $0x958] sm:$0xff]
      %v501 = vld [vmem:[%s193 + $0x960] sm:$0xff]
      %v502 = vld [vmem:[%s193 + $0x968] sm:$0xff]
      %v503 = vld [vmem:[%s193 + $0x970] sm:$0xff]
      %v504 = vld [vmem:[%s193 + $0x978] sm:$0xff]
      %v505 = vld [vmem:[%s193 + $0x980] sm:$0xff]
      %v506 = vld [vmem:[%s193 + $0x988] sm:$0xff]
      %v507 = vld [vmem:[%s193 + $0x990] sm:$0xff]
      %v508 = vld [vmem:[%s193 + $0x998] sm:$0xff]
      %v509 = vld [vmem:[%s193 + $0x9a0] sm:$0xff]
      %v510 = vld [vmem:[%s193 + $0x9a8] sm:$0xff]
      %v511 = vld [vmem:[%s193 + $0x9b0] sm:$0xff]
      %v512 = vld [vmem:[%s193 + $0x9b8] sm:$0xff]
      %v513 = vld [vmem:[%s193 + $0x9c0] sm:$0xff]
      %v514 = vld [vmem:[%s193 + $0x9c8] sm:$0xff]
      %v515 = vld [vmem:[%s193 + $0x9d0] sm:$0xff]
      %v516 = vld [vmem:[%s193 + $0x9d8] sm:$0xff]
      %v517 = vld [vmem:[%s193 + $0x9e0] sm:$0xff]
      %v518 = vld [vmem:[%s193 + $0x9e8] sm:$0xff]
      %v519 = vld [vmem:[%s193 + $0x9f0] sm:$0xff]
      %v520 = vld [vmem:[%s193 + $0x9f8] sm:$0xff]
      %v521 = vld [vmem:[%s193 + $0xa00] sm:$0xff]
      %v522 = vld [vmem:[%s193 + $0xa08] sm:$0xff]
      %v523 = vld [vmem:[%s193 + $0xa10] sm:$0xff]
      %v524 = vld [vmem:[%s193 + $0xa18] sm:$0xff]
      %v525 = vld [vmem:[%s193 + $0xa20] sm:$0xff]
      %v526 = vld [vmem:[%s193 + $0xa28] sm:$0xff]
      %v527 = vld [vmem:[%s193 + $0xa30] sm:$0xff]
      %v528 = vld [vmem:[%s193 + $0xa38] sm:$0xff]
      %v529 = vld [vmem:[%s193 + $0xa40] sm:$0xff]
      %v530 = vld [vmem:[%s193 + $0xa48] sm:$0xff]
      %v531 = vld [vmem:[%s193 + $0xa50] sm:$0xff]
      %v532 = vld [vmem:[%s193 + $0xa58] sm:$0xff]
      %v533 = vld [vmem:[%s193 + $0xa60] sm:$0xff]
      %v534 = vld [vmem:[%s193 + $0xa68] sm:$0xff]
      %v535 = vld [vmem:[%s193 + $0xa70] sm:$0xff]
      %v536 = vld [vmem:[%s193 + $0xa78] sm:$0xff]
      %v537 = vld [vmem:[%s193 + $0xa80] sm:$0xff]
      %v538 = vld [vmem:[%s193 + $0xa88] sm:$0xff]
      %v539 = vld [vmem:[%s193 + $0xa90] sm:$0xff]
      %v540 = vld [vmem:[%s193 + $0xa98] sm:$0xff]
      %v541 = vld [vmem:[%s193 + $0xaa0] sm:$0xff]
      %v542 = vld [vmem:[%s193 + $0xaa8] sm:$0xff]
      %v543 = vld [vmem:[%s193 + $0xab0] sm:$0xff]
      %v544 = vld [vmem:[%s193 + $0xab8] sm:$0xff]
      %v545 = vld [vmem:[%s193 + $0xac0] sm:$0xff]
      %v546 = vld [vmem:[%s193 + $0xac8] sm:$0xff]
      %v547 = vld [vmem:[%s193 + $0xad0] sm:$0xff]
      %v548 = vld [vmem:[%s193 + $0xad8] sm:$0xff]
      %v549 = vld [vmem:[%s193 + $0xae0] sm:$0xff]
      %v550 = vld [vmem:[%s193 + $0xae8] sm:$0xff]
      %v551 = vld [vmem:[%s193 + $0xaf0] sm:$0xff]
      %v552 = vld [vmem:[%s193 + $0xaf8] sm:$0xff]
      %v553 = vld [vmem:[%s193 + $0xb00] sm:$0xff]
      %v554 = vld [vmem:[%s193 + $0xb08] sm:$0xff]
      %v555 = vld [vmem:[%s193 + $0xb10] sm:$0xff]
      %v556 = vld [vmem:[%s193 + $0xb18] sm:$0xff]
      %v557 = vld [vmem:[%s193 + $0xb20] sm:$0xff]
      %v558 = vld [vmem:[%s193 + $0xb28] sm:$0xff]
      %v559 = vld [vmem:[%s193 + $0xb30] sm:$0xff]
      %v560 = vld [vmem:[%s193 + $0xb38] sm:$0xff]
      %v561 = vld [vmem:[%s193 + $0xb40] sm:$0xff]
      %v562 = vld [vmem:[%s193 + $0xb48] sm:$0xff]
      %v563 = vld [vmem:[%s193 + $0xb50] sm:$0xff]
      %v564 = vld [vmem:[%s193 + $0xb58] sm:$0xff]
      %v565 = vld [vmem:[%s193 + $0xb60] sm:$0xff]
      %v566 = vld [vmem:[%s193 + $0xb68] sm:$0xff]
      %v567 = vld [vmem:[%s193 + $0xb70] sm:$0xff]
      %v568 = vld [vmem:[%s193 + $0xb78] sm:$0xff]
      %v569 = vld [vmem:[%s193 + $0xb80] sm:$0xff]
      %v570 = vld [vmem:[%s193 + $0xb88] sm:$0xff]
      %v571 = vld [vmem:[%s193 + $0xb90] sm:$0xff]
      %v572 = vld [vmem:[%s193 + $0xb98] sm:$0xff]
      %v573 = vld [vmem:[%s193 + $0xba0] sm:$0xff]
      %v574 = vld [vmem:[%s193 + $0xba8] sm:$0xff]
      %v575 = vld [vmem:[%s193 + $0xbb0] sm:$0xff]
      %v576 = vld [vmem:[%s193 + $0xbb8] sm:$0xff]
      %v577 = vld [vmem:[%s193 + $0xbc0] sm:$0xff]
      %v578 = vld [vmem:[%s193 + $0xbc8] sm:$0xff]
      %v579 = vld [vmem:[%s193 + $0xbd0] sm:$0xff]
      %v580 = vld [vmem:[%s193 + $0xbd8] sm:$0xff]
      %v581 = vld [vmem:[%s193 + $0xbe0] sm:$0xff]
      %v582 = vld [vmem:[%s193 + $0xbe8] sm:$0xff]
      %v583 = vld [vmem:[%s193 + $0xbf0] sm:$0xff]
      %v584 = vld [vmem:[%s193 + $0xbf8] sm:$0xff]
      %v585 = vld [vmem:[%s193 + $0xc00] sm:$0xff]
      %v586 = vld [vmem:[%s193 + $0xc08] sm:$0xff]
      %v587 = vld [vmem:[%s193 + $0xc10] sm:$0xff]
      %v588 = vld [vmem:[%s193 + $0xc18] sm:$0xff]
      %v589 = vld [vmem:[%s193 + $0xc20] sm:$0xff]
      %v590 = vld [vmem:[%s193 + $0xc28] sm:$0xff]
      %v591 = vld [vmem:[%s193 + $0xc30] sm:$0xff]
      %v592 = vld [vmem:[%s193 + $0xc38] sm:$0xff]
      %v593 = vld [vmem:[%s1] sm:$0xff]
      %v594 = vld [vmem:[%s1 + $0x8] sm:$0xff]
      %v595 = vld [vmem:[%s1 + $0x10] sm:$0xff]
      %v596 = vld [vmem:[%s1 + $0x18] sm:$0xff]
      %v597 = vld [vmem:[%s1 + $0x20] sm:$0xff]
      %v598 = vld [vmem:[%s1 + $0x28] sm:$0xff]
      %vm599 = vcmask 392192
      %v601 = vsel %vm599, %v201, 0
      %v604 = vsel %vm599, %v202, 0
      %v607 = vsel %vm599, %v203, 0
      %v610 = vsel %vm599, %v204, 0
      %v613 = vsel %vm599, %v205, 0
      %v616 = vsel %vm599, %v206, 0
      %v619 = vsel %vm599, %v207, 0
      %v622 = vsel %vm599, %v208, 0
      %v625 = vsel %vm599, %v209, 0
      %v628 = vsel %vm599, %v210, 0
      %v631 = vsel %vm599, %v211, 0
      %v634 = vsel %vm599, %v212, 0
      %v637 = vsel %vm599, %v213, 0
      %v640 = vsel %vm599, %v214, 0
      %v643 = vsel %vm599, %v215, 0
      %v646 = vsel %vm599, %v216, 0
      %v649 = vsel %vm599, %v217, 0
      %v652 = vsel %vm599, %v218, 0
      %v655 = vsel %vm599, %v219, 0
      %v658 = vsel %vm599, %v220, 0
      %v661 = vsel %vm599, %v221, 0
      %v664 = vsel %vm599, %v222, 0
      %v667 = vsel %vm599, %v223, 0
      %v670 = vsel %vm599, %v224, 0
      %v673 = vsel %vm599, %v225, 0
      %v676 = vsel %vm599, %v226, 0
      %v679 = vsel %vm599, %v227, 0
      %v682 = vsel %vm599, %v228, 0
      %v685 = vsel %vm599, %v229, 0
      %v688 = vsel %vm599, %v230, 0
      %v691 = vsel %vm599, %v231, 0
      %v694 = vsel %vm599, %v232, 0
      %v697 = vsel %vm599, %v233, 0
      %v700 = vsel %vm599, %v234, 0
      %v703 = vsel %vm599, %v235, 0
      %v706 = vsel %vm599, %v236, 0
      %v709 = vsel %vm599, %v237, 0
      %v712 = vsel %vm599, %v238, 0
      %v715 = vsel %vm599, %v239, 0
      %v718 = vsel %vm599, %v240, 0
      %v721 = vsel %vm599, %v241, 0
      %v724 = vsel %vm599, %v242, 0
      %v727 = vsel %vm599, %v243, 0
      %v730 = vsel %vm599, %v244, 0
      %v733 = vsel %vm599, %v245, 0
      %v736 = vsel %vm599, %v246, 0
      %v739 = vsel %vm599, %v247, 0
      %v742 = vsel %vm599, %v248, 0
      %v745 = vsel %vm599, %v249, 0
      %v748 = vsel %vm599, %v250, 0
      %v751 = vsel %vm599, %v251, 0
      %v754 = vsel %vm599, %v252, 0
      %v757 = vsel %vm599, %v253, 0
      %v760 = vsel %vm599, %v254, 0
      %v763 = vsel %vm599, %v255, 0
      %v766 = vsel %vm599, %v256, 0
      %v769 = vsel %vm599, %v257, 0
      %v772 = vsel %vm599, %v258, 0
      %v775 = vsel %vm599, %v259, 0
      %v778 = vsel %vm599, %v260, 0
      %v781 = vsel %vm599, %v261, 0
      %v784 = vsel %vm599, %v262, 0
      %v787 = vsel %vm599, %v263, 0
      %v790 = vsel %vm599, %v264, 0
      %v793 = vsel %vm599, %v265, 0
      %v796 = vsel %vm599, %v266, 0
      %v799 = vsel %vm599, %v267, 0
      %v802 = vsel %vm599, %v268, 0
      %v805 = vsel %vm599, %v269, 0
      %v808 = vsel %vm599, %v270, 0
      %v811 = vsel %vm599, %v271, 0
      %v814 = vsel %vm599, %v272, 0
      %v817 = vsel %vm599, %v273, 0
      %v820 = vsel %vm599, %v274, 0
      %v823 = vsel %vm599, %v275, 0
      %v826 = vsel %vm599, %v276, 0
      %v829 = vsel %vm599, %v277, 0
      %v832 = vsel %vm599, %v278, 0
      %v835 = vsel %vm599, %v279, 0
      %v838 = vsel %vm599, %v280, 0
      %v841 = vsel %vm599, %v281, 0
      %v844 = vsel %vm599, %v282, 0
      %v847 = vsel %vm599, %v283, 0
      %v850 = vsel %vm599, %v284, 0
      %v853 = vsel %vm599, %v285, 0
      %v856 = vsel %vm599, %v286, 0
      %v859 = vsel %vm599, %v287, 0
      %v862 = vsel %vm599, %v288, 0
      %v865 = vsel %vm599, %v289, 0
      %v868 = vsel %vm599, %v290, 0
      %v871 = vsel %vm599, %v291, 0
      %v874 = vsel %vm599, %v292, 0
      %v877 = vsel %vm599, %v293, 0
      %v880 = vsel %vm599, %v294, 0
      %v883 = vsel %vm599, %v295, 0
      %v886 = vsel %vm599, %v296, 0
      %v889 = vsel %vm599, %v297, 0
      %v892 = vsel %vm599, %v298, 0
      %v895 = vsel %vm599, %v299, 0
      %v898 = vsel %vm599, %v300, 0
      %v901 = vsel %vm599, %v301, 0
      %v904 = vsel %vm599, %v302, 0
      %v907 = vsel %vm599, %v303, 0
      %v910 = vsel %vm599, %v304, 0
      %v913 = vsel %vm599, %v305, 0
      %v916 = vsel %vm599, %v306, 0
      %v919 = vsel %vm599, %v307, 0
      %v922 = vsel %vm599, %v308, 0
      %v925 = vsel %vm599, %v309, 0
      %v928 = vsel %vm599, %v310, 0
      %v931 = vsel %vm599, %v311, 0
      %v934 = vsel %vm599, %v312, 0
      %v937 = vsel %vm599, %v313, 0
      %v940 = vsel %vm599, %v314, 0
      %v943 = vsel %vm599, %v315, 0
      %v946 = vsel %vm599, %v316, 0
      %v949 = vsel %vm599, %v317, 0
      %v952 = vsel %vm599, %v318, 0
      %v955 = vsel %vm599, %v319, 0
      %v958 = vsel %vm599, %v320, 0
      %v961 = vsel %vm599, %v321, 0
      %v964 = vsel %vm599, %v322, 0
      %v967 = vsel %vm599, %v323, 0
      %v970 = vsel %vm599, %v324, 0
      %v973 = vsel %vm599, %v325, 0
      %v976 = vsel %vm599, %v326, 0
      %v979 = vsel %vm599, %v327, 0
      %v982 = vsel %vm599, %v328, 0
      %v985 = vsel %vm599, %v329, 0
      %v988 = vsel %vm599, %v330, 0
      %v991 = vsel %vm599, %v331, 0
      %v994 = vsel %vm599, %v332, 0
      %v997 = vsel %vm599, %v333, 0
      %v1000 = vsel %vm599, %v334, 0
      %v1003 = vsel %vm599, %v335, 0
      %v1006 = vsel %vm599, %v336, 0
      %v1009 = vsel %vm599, %v337, 0
      %v1012 = vsel %vm599, %v338, 0
      %v1015 = vsel %vm599, %v339, 0
      %v1018 = vsel %vm599, %v340, 0
      %v1021 = vsel %vm599, %v341, 0
      %v1024 = vsel %vm599, %v342, 0
      %v1027 = vsel %vm599, %v343, 0
      %v1030 = vsel %vm599, %v344, 0
      %v1033 = vsel %vm599, %v345, 0
      %v1036 = vsel %vm599, %v346, 0
      %v1039 = vsel %vm599, %v347, 0
      %v1042 = vsel %vm599, %v348, 0
      %v1045 = vsel %vm599, %v349, 0
      %v1048 = vsel %vm599, %v350, 0
      %v1051 = vsel %vm599, %v351, 0
      %v1054 = vsel %vm599, %v352, 0
      %v1057 = vsel %vm599, %v353, 0
      %v1060 = vsel %vm599, %v354, 0
      %v1063 = vsel %vm599, %v355, 0
      %v1066 = vsel %vm599, %v356, 0
      %v1069 = vsel %vm599, %v357, 0
      %v1072 = vsel %vm599, %v358, 0
      %v1075 = vsel %vm599, %v359, 0
      %v1078 = vsel %vm599, %v360, 0
      %v1081 = vsel %vm599, %v361, 0
      %v1084 = vsel %vm599, %v362, 0
      %v1087 = vsel %vm599, %v363, 0
      %v1090 = vsel %vm599, %v364, 0
      %v1093 = vsel %vm599, %v365, 0
      %v1096 = vsel %vm599, %v366, 0
      %v1099 = vsel %vm599, %v367, 0
      %v1102 = vsel %vm599, %v368, 0
      %v1105 = vsel %vm599, %v369, 0
      %v1108 = vsel %vm599, %v370, 0
      %v1111 = vsel %vm599, %v371, 0
      %v1114 = vsel %vm599, %v372, 0
      %v1117 = vsel %vm599, %v373, 0
      %v1120 = vsel %vm599, %v374, 0
      %v1123 = vsel %vm599, %v375, 0
      %v1126 = vsel %vm599, %v376, 0
      %v1129 = vsel %vm599, %v377, 0
      %v1132 = vsel %vm599, %v378, 0
      %v1135 = vsel %vm599, %v379, 0
      %v1138 = vsel %vm599, %v380, 0
      %v1141 = vsel %vm599, %v381, 0
      %v1144 = vsel %vm599, %v382, 0
      %v1147 = vsel %vm599, %v383, 0
      %v1150 = vsel %vm599, %v384, 0
      %v1153 = vsel %vm599, %v385, 0
      %v1156 = vsel %vm599, %v386, 0
      %v1159 = vsel %vm599, %v387, 0
      %v1162 = vsel %vm599, %v388, 0
      %v1165 = vsel %vm599, %v389, 0
      %v1168 = vsel %vm599, %v390, 0
      %v1171 = vsel %vm599, %v391, 0
      %v1174 = vsel %vm599, %v392, 0
      %v1177 = vsel %vm599, %v393, 0
      %v1180 = vsel %vm599, %v394, 0
      %v1183 = vsel %vm599, %v395, 0
      %v1186 = vsel %vm599, %v396, 0
      %v1189 = vsel %vm599, %v397, 0
      %v1192 = vsel %vm599, %v398, 0
      %v1195 = vsel %vm599, %v399, 0
      %v1198 = vsel %vm599, %v400, 0
      %v1201 = vsel %vm599, %v401, 0
      %v1204 = vsel %vm599, %v402, 0
      %v1207 = vsel %vm599, %v403, 0
      %v1210 = vsel %vm599, %v404, 0
      %v1213 = vsel %vm599, %v405, 0
      %v1216 = vsel %vm599, %v406, 0
      %v1219 = vsel %vm599, %v407, 0
      %v1222 = vsel %vm599, %v408, 0
      %v1225 = vsel %vm599, %v409, 0
      %v1228 = vsel %vm599, %v410, 0
      %v1231 = vsel %vm599, %v411, 0
      %v1234 = vsel %vm599, %v412, 0
      %v1237 = vsel %vm599, %v413, 0
      %v1240 = vsel %vm599, %v414, 0
      %v1243 = vsel %vm599, %v415, 0
      %v1246 = vsel %vm599, %v416, 0
      %v1249 = vsel %vm599, %v417, 0
      %v1252 = vsel %vm599, %v418, 0
      %v1255 = vsel %vm599, %v419, 0
      %v1258 = vsel %vm599, %v420, 0
      %v1261 = vsel %vm599, %v421, 0
      %v1264 = vsel %vm599, %v422, 0
      %v1267 = vsel %vm599, %v423, 0
      %v1270 = vsel %vm599, %v424, 0
      %v1273 = vsel %vm599, %v425, 0
      %v1276 = vsel %vm599, %v426, 0
      %v1279 = vsel %vm599, %v427, 0
      %v1282 = vsel %vm599, %v428, 0
      %v1285 = vsel %vm599, %v429, 0
      %v1288 = vsel %vm599, %v430, 0
      %v1291 = vsel %vm599, %v431, 0
      %v1294 = vsel %vm599, %v432, 0
      %v1297 = vsel %vm599, %v433, 0
      %v1300 = vsel %vm599, %v434, 0
      %v1303 = vsel %vm599, %v435, 0
      %v1306 = vsel %vm599, %v436, 0
      %v1309 = vsel %vm599, %v437, 0
      %v1312 = vsel %vm599, %v438, 0
      %v1315 = vsel %vm599, %v439, 0
      %v1318 = vsel %vm599, %v440, 0
      %v1321 = vsel %vm599, %v441, 0
      %v1324 = vsel %vm599, %v442, 0
      %v1327 = vsel %vm599, %v443, 0
      %v1330 = vsel %vm599, %v444, 0
      %v1333 = vsel %vm599, %v445, 0
      %v1336 = vsel %vm599, %v446, 0
      %v1339 = vsel %vm599, %v447, 0
      %v1342 = vsel %vm599, %v448, 0
      %v1345 = vsel %vm599, %v449, 0
      %v1348 = vsel %vm599, %v450, 0
      %v1351 = vsel %vm599, %v451, 0
      %v1354 = vsel %vm599, %v452, 0
      %v1357 = vsel %vm599, %v453, 0
      %v1360 = vsel %vm599, %v454, 0
      %v1363 = vsel %vm599, %v455, 0
      %v1366 = vsel %vm599, %v456, 0
      %v1369 = vsel %vm599, %v457, 0
      %v1372 = vsel %vm599, %v458, 0
      %v1375 = vsel %vm599, %v459, 0
      %v1378 = vsel %vm599, %v460, 0
      %v1381 = vsel %vm599, %v461, 0
      %v1384 = vsel %vm599, %v462, 0
      %v1387 = vsel %vm599, %v463, 0
      %v1390 = vsel %vm599, %v464, 0
      %v1393 = vsel %vm599, %v465, 0
      %v1396 = vsel %vm599, %v466, 0
      %v1399 = vsel %vm599, %v467, 0
      %v1402 = vsel %vm599, %v468, 0
      %v1405 = vsel %vm599, %v469, 0
      %v1408 = vsel %vm599, %v470, 0
      %v1411 = vsel %vm599, %v471, 0
      %v1414 = vsel %vm599, %v472, 0
      %v1417 = vsel %vm599, %v473, 0
      %v1420 = vsel %vm599, %v474, 0
      %v1423 = vsel %vm599, %v475, 0
      %v1426 = vsel %vm599, %v476, 0
      %v1429 = vsel %vm599, %v477, 0
      %v1432 = vsel %vm599, %v478, 0
      %v1435 = vsel %vm599, %v479, 0
      %v1438 = vsel %vm599, %v480, 0
      %v1441 = vsel %vm599, %v481, 0
      %v1444 = vsel %vm599, %v482, 0
      %v1447 = vsel %vm599, %v483, 0
      %v1450 = vsel %vm599, %v484, 0
      %v1453 = vsel %vm599, %v485, 0
      %v1456 = vsel %vm599, %v486, 0
      %v1459 = vsel %vm599, %v487, 0
      %v1462 = vsel %vm599, %v488, 0
      %v1465 = vsel %vm599, %v489, 0
      %v1468 = vsel %vm599, %v490, 0
      %v1471 = vsel %vm599, %v491, 0
      %v1474 = vsel %vm599, %v492, 0
      %v1477 = vsel %vm599, %v493, 0
      %v1480 = vsel %vm599, %v494, 0
      %v1483 = vsel %vm599, %v495, 0
      %v1486 = vsel %vm599, %v496, 0
      %v1489 = vsel %vm599, %v497, 0
      %v1492 = vsel %vm599, %v498, 0
      %v1495 = vsel %vm599, %v499, 0
      %v1498 = vsel %vm599, %v500, 0
      %v1501 = vsel %vm599, %v501, 0
      %v1504 = vsel %vm599, %v502, 0
      %v1507 = vsel %vm599, %v503, 0
      %v1510 = vsel %vm599, %v504, 0
      %v1513 = vsel %vm599, %v505, 0
      %v1516 = vsel %vm599, %v506, 0
      %v1519 = vsel %vm599, %v507, 0
      %v1522 = vsel %vm599, %v508, 0
      %v1525 = vsel %vm599, %v509, 0
      %v1528 = vsel %vm599, %v510, 0
      %v1531 = vsel %vm599, %v511, 0
      %v1534 = vsel %vm599, %v512, 0
      %v1537 = vsel %vm599, %v513, 0
      %v1540 = vsel %vm599, %v514, 0
      %v1543 = vsel %vm599, %v515, 0
      %v1546 = vsel %vm599, %v516, 0
      %v1549 = vsel %vm599, %v517, 0
      %v1552 = vsel %vm599, %v518, 0
      %v1555 = vsel %vm599, %v519, 0
      %v1558 = vsel %vm599, %v520, 0
      %v1561 = vsel %vm599, %v521, 0
      %v1564 = vsel %vm599, %v522, 0
      %v1567 = vsel %vm599, %v523, 0
      %v1570 = vsel %vm599, %v524, 0
      %v1573 = vsel %vm599, %v525, 0
      %v1576 = vsel %vm599, %v526, 0
      %v1579 = vsel %vm599, %v527, 0
      %v1582 = vsel %vm599, %v528, 0
      %v1585 = vsel %vm599, %v529, 0
      %v1588 = vsel %vm599, %v530, 0
      %v1591 = vsel %vm599, %v531, 0
      %v1594 = vsel %vm599, %v532, 0
      %v1597 = vsel %vm599, %v533, 0
      %v1600 = vsel %vm599, %v534, 0
      %v1603 = vsel %vm599, %v535, 0
      %v1606 = vsel %vm599, %v536, 0
      %v1609 = vsel %vm599, %v537, 0
      %v1612 = vsel %vm599, %v538, 0
      %v1615 = vsel %vm599, %v539, 0
      %v1618 = vsel %vm599, %v540, 0
      %v1621 = vsel %vm599, %v541, 0
      %v1624 = vsel %vm599, %v542, 0
      %v1627 = vsel %vm599, %v543, 0
      %v1630 = vsel %vm599, %v544, 0
      %v1633 = vsel %vm599, %v545, 0
      %v1636 = vsel %vm599, %v546, 0
      %v1639 = vsel %vm599, %v547, 0
      %v1642 = vsel %vm599, %v548, 0
      %v1645 = vsel %vm599, %v549, 0
      %v1648 = vsel %vm599, %v550, 0
      %v1651 = vsel %vm599, %v551, 0
      %v1654 = vsel %vm599, %v552, 0
      %v1657 = vsel %vm599, %v553, 0
      %v1660 = vsel %vm599, %v554, 0
      %v1663 = vsel %vm599, %v555, 0
      %v1666 = vsel %vm599, %v556, 0
      %v1669 = vsel %vm599, %v557, 0
      %v1672 = vsel %vm599, %v558, 0
      %v1675 = vsel %vm599, %v559, 0
      %v1678 = vsel %vm599, %v560, 0
      %v1681 = vsel %vm599, %v561, 0
      %v1684 = vsel %vm599, %v562, 0
      %v1687 = vsel %vm599, %v563, 0
      %v1690 = vsel %vm599, %v564, 0
      %v1693 = vsel %vm599, %v565, 0
      %v1696 = vsel %vm599, %v566, 0
      %v1699 = vsel %vm599, %v567, 0
      %v1702 = vsel %vm599, %v568, 0
      %v1705 = vsel %vm599, %v569, 0
      %v1708 = vsel %vm599, %v570, 0
      %v1711 = vsel %vm599, %v571, 0
      %v1714 = vsel %vm599, %v572, 0
      %v1717 = vsel %vm599, %v573, 0
      %v1720 = vsel %vm599, %v574, 0
      %v1723 = vsel %vm599, %v575, 0
      %v1726 = vsel %vm599, %v576, 0
      %v1729 = vsel %vm599, %v577, 0
      %v1732 = vsel %vm599, %v578, 0
      %v1735 = vsel %vm599, %v579, 0
      %v1738 = vsel %vm599, %v580, 0
      %v1741 = vsel %vm599, %v581, 0
      %v1744 = vsel %vm599, %v582, 0
      %v1747 = vsel %vm599, %v583, 0
      %v1750 = vsel %vm599, %v584, 0
      %v1753 = vsel %vm599, %v585, 0
      %v1756 = vsel %vm599, %v586, 0
      %v1759 = vsel %vm599, %v587, 0
      %v1762 = vsel %vm599, %v588, 0
      %v1765 = vsel %vm599, %v589, 0
      %v1768 = vsel %vm599, %v590, 0
      %v1771 = vsel %vm599, %v591, 0
      %v1774 = vsel %vm599, %v592, 0
      %1776 = vmatprep.subr.mxu0 0.0
      %1777 = vmatpush1.msra.mxu0 %v593
      %1778 = vmatprep.subr.mxu0 0.0
      %1779 = vmatpush1.msra.mxu0 %v594
      %1780 = vmatprep.subr.mxu0 0.0
      %1781 = vmatpush1.msra.mxu0 %v595
      %1782 = vmatprep.subr.mxu0 0.0
      %1783 = vmatpush1.msra.mxu0 %v596
      %1784 = vmatprep.subr.mxu0 0.0
      %1785 = vmatpush1.msra.mxu0 %v597
      %1786 = vmatprep.subr.mxu0 0.0
      %1787 = vmatpush1.msra.mxu0 %v598
      %1788 = vmatprep.subr.mxu0 0.0
      %1789 = vmatpush1.msra.mxu0 0.0
      %1790 = vmatprep.subr.mxu0 0.0
      %1791 = vmatpush1.msra.mxu0 0.0
      %1792 = vmatprep.subr.mxu0 0.0
      %1793 = vmatpush1.msra.mxu0 0.0
      %1794 = vmatprep.subr.mxu0 0.0
      %1795 = vmatpush1.msra.mxu0 0.0
      %1796 = vmatprep.subr.mxu0 0.0
      %1797 = vmatpush1.msra.mxu0 0.0
      %1798 = vmatprep.subr.mxu0 0.0
      %1799 = vmatpush1.msra.mxu0 0.0
      %1800 = vmatprep.subr.mxu0 0.0
      %1801 = vmatpush1.msra.mxu0 0.0
      %1802 = vmatprep.subr.mxu0 0.0
      %1803 = vmatpush1.msra.mxu0 0.0
      %1804 = vmatprep.subr.mxu0 0.0
      %1805 = vmatpush1.msra.mxu0 0.0
      %1806 = vmatprep.subr.mxu0 0.0
      %1807 = vmatpush1.msra.mxu0 0.0
      %1808 = vmatprep.subr.mxu0 0.0
      %1809 = vmatpush1.msra.mxu0 0.0
      %1810 = vmatprep.subr.mxu0 0.0
      %1811 = vmatpush1.msra.mxu0 0.0
      %1812 = vmatprep.subr.mxu0 0.0
      %1813 = vmatpush1.msra.mxu0 0.0
      %1814 = vmatprep.subr.mxu0 0.0
      %1815 = vmatpush1.msra.mxu0 0.0
      %1816 = vmatprep.subr.mxu0 0.0
      %1817 = vmatpush1.msra.mxu0 0.0
      %1818 = vmatprep.subr.mxu0 0.0
      %1819 = vmatpush1.msra.mxu0 0.0
      %1820 = vmatprep.subr.mxu0 0.0
      %1821 = vmatpush1.msra.mxu0 0.0
      %1822 = vmatprep.subr.mxu0 0.0
      %1823 = vmatpush1.msra.mxu0 0.0
      %1824 = vmatprep.subr.mxu0 0.0
      %1825 = vmatpush1.msra.mxu0 0.0
      %1826 = vmatprep.subr.mxu0 0.0
      %1827 = vmatpush1.msra.mxu0 0.0
      %1828 = vmatprep.subr.mxu0 0.0
      %1829 = vmatpush1.msra.mxu0 0.0
      %1830 = vmatprep.subr.mxu0 0.0
      %1831 = vmatpush1.msra.mxu0 0.0
      %1832 = vmatprep.subr.mxu0 0.0
      %1833 = vmatpush1.msra.mxu0 0.0
      %1834 = vmatprep.subr.mxu0 0.0
      %1835 = vmatpush1.msra.mxu0 0.0
      %1836 = vmatprep.subr.mxu0 0.0
      %1837 = vmatpush1.msra.mxu0 0.0
      %1838 = vmatprep.subr.mxu0 0.0
      %1839 = vmatpush1.msra.mxu0 0.0
      %1840 = vmatprep.mubr.f32.mxu0 0.0
      %1841 = vmatmul.mubr.f32.gmra.mrb[0].mxu0 %v601
      %v1842 = vpop.f32.mrb[0].mxu0
      %v1843 = vadd.f32 0.0, %v1842
      %v1844 = vpop.f32.mrb[0].mxu0
      %1845 = vmatprep.mubr.f32.mxu0 0.0
      %1846 = vmatmul.mubr.f32.gmra.mrb[0].mxu0 %v604
      %v1847 = vpop.f32.mrb[0].mxu0
      %v1848 = vadd.f32 0.0, %v1847
      %v1849 = vpop.f32.mrb[0].mxu0
      %1850 = vmatprep.mubr.f32.mxu0 0.0
      %1851 = vmatmul.mubr.f32.gmra.mrb[0].mxu0 %v607
      %v1852 = vpop.f32.mrb[0].mxu0
      %v1853 = vadd.f32 0.0, %v1852
      %v1854 = vpop.f32.mrb[0].mxu0
      %1855 = vmatprep.mubr.f32.mxu0 0.0
      %1856 = vmatmul.mubr.f32.gmra.mrb[0].mxu0 %v610
      %v1857 = vpop.f32.mrb[0].mxu0
      %v1858 = vadd.f32 0.0, %v1857
      %v1859 = vpop.f32.mrb[0].mxu0
      %1860 = vmatprep.mubr.f32.mxu0 0.0
      %1861 = vmatmul.mubr.f32.gmra.mrb[0].mxu0 %v613
      %v1862 = vpop.f32.mrb[0].mxu0
      %v1863 = vadd.f32 0.0, %v1862
      %v1864 = vpop.f32.mrb[0].mxu0
      %1865 = vmatprep.mubr.f32.mxu0 0.0
      %1866 = vmatmul.mubr.f32.gmra.mrb[0].mxu0 %v616
      %v1867 = vpop.f32.mrb[0].mxu0
      %v1868 = vadd.f32 0.0, %v1867
      %v1869 = vpop.f32.mrb[0].mxu0
      %1870 = vmatprep.mubr.f32.mxu0 0.0
      %1871 = vmatmul.mubr.f32.gmra.mrb[0].mxu0 %v619
      %v1872 = vpop.f32.mrb[0].mxu0
      %v1873 = vadd.f32 0.0, %v1872
      %v1874 = vpop.f32.mrb[0].mxu0
      %1875 = vmatprep.mubr.f32.mxu0 0.0
      %1876 = vmatmul.mubr.f32.gmra.mrb[0].mxu0 %v622
      %v1877 = vpop.f32.mrb[0].mxu0
      %v1878 = vadd.f32 0.0, %v1877
      %v1879 = vpop.f32.mrb[0].mxu0
      %1880 = vmatprep.mubr.f32.mxu0 0.0
      %1881 = vmatmul.mubr.f32.gmra.mrb[0].mxu0 %v625
      %v1882 = vpop.f32.mrb[0].mxu0
      %v1883 = vadd.f32 0.0, %v1882
      %v1884 = vpop.f32.mrb[0].mxu0
      %1885 = vmatprep.mubr.f32.mxu0 0.0
      %1886 = vmatmul.mubr.f32.gmra.mrb[0].mxu0 %v628
      %v1887 = vpop.f32.mrb[0].mxu0
      %v1888 = vadd.f32 0.0, %v1887
      %v1889 = vpop.f32.mrb[0].mxu0
      %1890 = vmatprep.mubr.f32.mxu0 0.0
      %1891 = vmatmul.mubr.f32.gmra.mrb[0].mxu0 %v631
      %v1892 = vpop.f32.mrb[0].mxu0
      %v1893 = vadd.f32 0.0, %v1892
      %v1894 = vpop.f32.mrb[0].mxu0
      %1895 = vmatprep.mubr.f32.mxu0 0.0
      %1896 = vmatmul.mubr.f32.gmra.mrb[0].mxu0 %v634
      %v1897 = vpop.f32.mrb[0].mxu0
      %v1898 = vadd.f32 0.0, %v1897
      %v1899 = vpop.f32.mrb[0].mxu0
      %1900 = vmatprep.mubr.f32.mxu0 0.0
      %1901 = vmatmul.mubr.f32.gmra.mrb[0].mxu0 %v637
      %v1902 = vpop.f32.mrb[0].mxu0
      %v1903 = vadd.f32 0.0, %v1902
      %v1904 = vpop.f32.mrb[0].mxu0
      %1905 = vmatprep.mubr.f32.mxu0 0.0
      %1906 = vmatmul.mubr.f32.gmra.mrb[0].mxu0 %v640
      %v1907 = vpop.f32.mrb[0].mxu0
      %v1908 = vadd.f32 0.0, %v1907
      %v1909 = vpop.f32.mrb[0].mxu0
      %1910 = vmatprep.mubr.f32.mxu0 0.0
      %1911 = vmatmul.mubr.f32.gmra.mrb[0].mxu0 %v643
      %v1912 = vpop.f32.mrb[0].mxu0
      %v1913 = vadd.f32 0.0, %v1912
      %v1914 = vpop.f32.mrb[0].mxu0
      %1915 = vmatprep.mubr.f32.mxu0 0.0
      %1916 = vmatmul.mubr.f32.gmra.mrb[0].mxu0 %v646
      %v1917 = vpop.f32.mrb[0].mxu0
      %v1918 = vadd.f32 0.0, %v1917
      %v1919 = vpop.f32.mrb[0].mxu0
      %1920 = vmatprep.mubr.f32.mxu0 0.0
      %1921 = vmatmul.mubr.f32.gmra.mrb[0].mxu0 %v649
      %v1922 = vpop.f32.mrb[0].mxu0
      %v1923 = vadd.f32 0.0, %v1922
      %v1924 = vpop.f32.mrb[0].mxu0
      %1925 = vmatprep.mubr.f32.mxu0 0.0
      %1926 = vmatmul.mubr.f32.gmra.mrb[0].mxu0 %v652
      %v1927 = vpop.f32.mrb[0].mxu0
      %v1928 = vadd.f32 0.0, %v1927
      %v1929 = vpop.f32.mrb[0].mxu0
      %1930 = vmatprep.mubr.f32.mxu0 0.0
      %1931 = vmatmul.mubr.f32.gmra.mrb[0].mxu0 %v655
      %v1932 = vpop.f32.mrb[0].mxu0
      %v1933 = vadd.f32 0.0, %v1932
      %v1934 = vpop.f32.mrb[0].mxu0
      %1935 = vmatprep.mubr.f32.mxu0 0.0
      %1936 = vmatmul.mubr.f32.gmra.mrb[0].mxu0 %v658
      %v1937 = vpop.f32.mrb[0].mxu0
      %v1938 = vadd.f32 0.0, %v1937
      %v1939 = vpop.f32.mrb[0].mxu0
      %1940 = vmatprep.mubr.f32.mxu0 0.0
      %1941 = vmatmul.mubr.f32.gmra.mrb[0].mxu0 %v661
      %v1942 = vpop.f32.mrb[0].mxu0
      %v1943 = vadd.f32 0.0, %v1942
      %v1944 = vpop.f32.mrb[0].mxu0
      %1945 = vmatprep.mubr.f32.mxu0 0.0
      %1946 = vmatmul.mubr.f32.gmra.mrb[0].mxu0 %v664
      %v1947 = vpop.f32.mrb[0].mxu0
      %v1948 = vadd.f32 0.0, %v1947
      %v1949 = vpop.f32.mrb[0].mxu0
      %1950 = vmatprep.mubr.f32.mxu0 0.0
      %1951 = vmatmul.mubr.f32.gmra.mrb[0].mxu0 %v667
      %v1952 = vpop.f32.mrb[0].mxu0
      %v1953 = vadd.f32 0.0, %v1952
      %v1954 = vpop.f32.mrb[0].mxu0
      %1955 = vmatprep.mubr.f32.mxu0 0.0
      %1956 = vmatmul.mubr.f32.gmra.mrb[0].mxu0 %v670
      %v1957 = vpop.f32.mrb[0].mxu0
      %v1958 = vadd.f32 0.0, %v1957
      %v1959 = vpop.f32.mrb[0].mxu0
      %1960 = vmatprep.mubr.f32.mxu0 0.0
      %1961 = vmatmul.mubr.f32.gmra.mrb[0].mxu0 %v673
      %v1962 = vpop.f32.mrb[0].mxu0
      %v1963 = vadd.f32 0.0, %v1962
      %v1964 = vpop.f32.mrb[0].mxu0
      %1965 = vmatprep.mubr.f32.mxu0 0.0
      %1966 = vmatmul.mubr.f32.gmra.mrb[0].mxu0 %v676
      %v1967 = vpop.f32.mrb[0].mxu0
      %v1968 = vadd.f32 0.0, %v1967
      %v1969 = vpop.f32.mrb[0].mxu0
      %1970 = vmatprep.mubr.f32.mxu0 0.0
      %1971 = vmatmul.mubr.f32.gmra.mrb[0].mxu0 %v679
      %v1972 = vpop.f32.mrb[0].mxu0
      %v1973 = vadd.f32 0.0, %v1972
      %v1974 = vpop.f32.mrb[0].mxu0
      %1975 = vmatprep.mubr.f32.mxu0 0.0
      %1976 = vmatmul.mubr.f32.gmra.mrb[0].mxu0 %v682
      %v1977 = vpop.f32.mrb[0].mxu0
      %v1978 = vadd.f32 0.0, %v1977
      %v1979 = vpop.f32.mrb[0].mxu0
      %1980 = vmatprep.mubr.f32.mxu0 0.0
      %1981 = vmatmul.mubr.f32.gmra.mrb[0].mxu0 %v685
      %v1982 = vpop.f32.mrb[0].mxu0
      %v1983 = vadd.f32 0.0, %v1982
      %v1984 = vpop.f32.mrb[0].mxu0
      %1985 = vmatprep.mubr.f32.mxu0 0.0
      %1986 = vmatmul.mubr.f32.gmra.mrb[0].mxu0 %v688
      %v1987 = vpop.f32.mrb[0].mxu0
      %v1988 = vadd.f32 0.0, %v1987
      %v1989 = vpop.f32.mrb[0].mxu0
      %1990 = vmatprep.mubr.f32.mxu0 0.0
      %1991 = vmatmul.mubr.f32.gmra.mrb[0].mxu0 %v691
      %v1992 = vpop.f32.mrb[0].mxu0
      %v1993 = vadd.f32 0.0, %v1992
      %v1994 = vpop.f32.mrb[0].mxu0
      %1995 = vmatprep.mubr.f32.mxu0 0.0
      %1996 = vmatmul.mubr.f32.gmra.mrb[0].mxu0 %v694
      %v1997 = vpop.f32.mrb[0].mxu0
      %v1998 = vadd.f32 0.0, %v1997
      %v1999 = vpop.f32.mrb[0].mxu0
      %2000 = vmatprep.mubr.f32.mxu0 0.0
      %2001 = vmatmul.mubr.f32.gmra.mrb[0].mxu0 %v697
      %v2002 = vpop.f32.mrb[0].mxu0
      %v2003 = vadd.f32 0.0, %v2002
      %v2004 = vpop.f32.mrb[0].mxu0
      %2005 = vmatprep.mubr.f32.mxu0 0.0
      %2006 = vmatmul.mubr.f32.gmra.mrb[0].mxu0 %v700
      %v2007 = vpop.f32.mrb[0].mxu0
      %v2008 = vadd.f32 0.0, %v2007
      %v2009 = vpop.f32.mrb[0].mxu0
      %2010 = vmatprep.mubr.f32.mxu0 0.0
      %2011 = vmatmul.mubr.f32.gmra.mrb[0].mxu0 %v703
      %v2012 = vpop.f32.mrb[0].mxu0
      %v2013 = vadd.f32 0.0, %v2012
      %v2014 = vpop.f32.mrb[0].mxu0
      %2015 = vmatprep.mubr.f32.mxu0 0.0
      %2016 = vmatmul.mubr.f32.gmra.mrb[0].mxu0 %v706
      %v2017 = vpop.f32.mrb[0].mxu0
      %v2018 = vadd.f32 0.0, %v2017
      %v2019 = vpop.f32.mrb[0].mxu0
      %2020 = vmatprep.mubr.f32.mxu0 0.0
      %2021 = vmatmul.mubr.f32.gmra.mrb[0].mxu0 %v709
      %v2022 = vpop.f32.mrb[0].mxu0
      %v2023 = vadd.f32 0.0, %v2022
      %v2024 = vpop.f32.mrb[0].mxu0
      %2025 = vmatprep.mubr.f32.mxu0 0.0
      %2026 = vmatmul.mubr.f32.gmra.mrb[0].mxu0 %v712
      %v2027 = vpop.f32.mrb[0].mxu0
      %v2028 = vadd.f32 0.0, %v2027
      %v2029 = vpop.f32.mrb[0].mxu0
      %2030 = vmatprep.mubr.f32.mxu0 0.0
      %2031 = vmatmul.mubr.f32.gmra.mrb[0].mxu0 %v715
      %v2032 = vpop.f32.mrb[0].mxu0
      %v2033 = vadd.f32 0.0, %v2032
      %v2034 = vpop.f32.mrb[0].mxu0
      %2035 = vmatprep.mubr.f32.mxu0 0.0
      %2036 = vmatmul.mubr.f32.gmra.mrb[0].mxu0 %v718
      %v2037 = vpop.f32.mrb[0].mxu0
      %v2038 = vadd.f32 0.0, %v2037
      %v2039 = vpop.f32.mrb[0].mxu0
      %2040 = vmatprep.mubr.f32.mxu0 0.0
      %2041 = vmatmul.mubr.f32.gmra.mrb[0].mxu0 %v721
      %v2042 = vpop.f32.mrb[0].mxu0
      %v2043 = vadd.f32 0.0, %v2042
      %v2044 = vpop.f32.mrb[0].mxu0
      %2045 = vmatprep.mubr.f32.mxu0 0.0
      %2046 = vmatmul.mubr.f32.gmra.mrb[0].mxu0 %v724
      %v2047 = vpop.f32.mrb[0].mxu0
      %v2048 = vadd.f32 0.0, %v2047
      %v2049 = vpop.f32.mrb[0].mxu0
      %2050 = vmatprep.mubr.f32.mxu0 0.0
      %2051 = vmatmul.mubr.f32.gmra.mrb[0].mxu0 %v727
      %v2052 = vpop.f32.mrb[0].mxu0
      %v2053 = vadd.f32 0.0, %v2052
      %v2054 = vpop.f32.mrb[0].mxu0
      %2055 = vmatprep.mubr.f32.mxu0 0.0
      %2056 = vmatmul.mubr.f32.gmra.mrb[0].mxu0 %v730
      %v2057 = vpop.f32.mrb[0].mxu0
      %v2058 = vadd.f32 0.0, %v2057
      %v2059 = vpop.f32.mrb[0].mxu0
      %2060 = vmatprep.mubr.f32.mxu0 0.0
      %2061 = vmatmul.mubr.f32.gmra.mrb[0].mxu0 %v733
      %v2062 = vpop.f32.mrb[0].mxu0
      %v2063 = vadd.f32 0.0, %v2062
      %v2064 = vpop.f32.mrb[0].mxu0
      %2065 = vmatprep.mubr.f32.mxu0 0.0
      %2066 = vmatmul.mubr.f32.gmra.mrb[0].mxu0 %v736
      %v2067 = vpop.f32.mrb[0].mxu0
      %v2068 = vadd.f32 0.0, %v2067
      %v2069 = vpop.f32.mrb[0].mxu0
      %2070 = vmatprep.mubr.f32.mxu0 0.0
      %2071 = vmatmul.mubr.f32.gmra.mrb[0].mxu0 %v739
      %v2072 = vpop.f32.mrb[0].mxu0
      %v2073 = vadd.f32 0.0, %v2072
      %v2074 = vpop.f32.mrb[0].mxu0
      %2075 = vmatprep.mubr.f32.mxu0 0.0
      %2076 = vmatmul.mubr.f32.gmra.mrb[0].mxu0 %v742
      %v2077 = vpop.f32.mrb[0].mxu0
      %v2078 = vadd.f32 0.0, %v2077
      %v2079 = vpop.f32.mrb[0].mxu0
      %2080 = vmatprep.mubr.f32.mxu0 0.0
      %2081 = vmatmul.mubr.f32.gmra.mrb[0].mxu0 %v745
      %v2082 = vpop.f32.mrb[0].mxu0
      %v2083 = vadd.f32 0.0, %v2082
      %v2084 = vpop.f32.mrb[0].mxu0
      %2085 = vmatprep.mubr.f32.mxu0 0.0
      %2086 = vmatmul.mubr.f32.gmra.mrb[0].mxu0 %v748
      %v2087 = vpop.f32.mrb[0].mxu0
      %v2088 = vadd.f32 0.0, %v2087
      %v2089 = vpop.f32.mrb[0].mxu0
      %2090 = vmatprep.mubr.f32.mxu0 0.0
      %2091 = vmatmul.mubr.f32.gmra.mrb[0].mxu0 %v751
      %v2092 = vpop.f32.mrb[0].mxu0
      %v2093 = vadd.f32 0.0, %v2092
      %v2094 = vpop.f32.mrb[0].mxu0
      %2095 = vmatprep.mubr.f32.mxu0 0.0
      %2096 = vmatmul.mubr.f32.gmra.mrb[0].mxu0 %v754
      %v2097 = vpop.f32.mrb[0].mxu0
      %v2098 = vadd.f32 0.0, %v2097
      %v2099 = vpop.f32.mrb[0].mxu0
      %2100 = vmatprep.mubr.f32.mxu0 0.0
      %2101 = vmatmul.mubr.f32.gmra.mrb[0].mxu0 %v757
      %v2102 = vpop.f32.mrb[0].mxu0
      %v2103 = vadd.f32 0.0, %v2102
      %v2104 = vpop.f32.mrb[0].mxu0
      %2105 = vmatprep.mubr.f32.mxu0 0.0
      %2106 = vmatmul.mubr.f32.gmra.mrb[0].mxu0 %v760
      %v2107 = vpop.f32.mrb[0].mxu0
      %v2108 = vadd.f32 0.0, %v2107
      %v2109 = vpop.f32.mrb[0].mxu0
      %2110 = vmatprep.mubr.f32.mxu0 0.0
      %2111 = vmatmul.mubr.f32.gmra.mrb[0].mxu0 %v763
      %v2112 = vpop.f32.mrb[0].mxu0
      %v2113 = vadd.f32 0.0, %v2112
      %v2114 = vpop.f32.mrb[0].mxu0
      %2115 = vmatprep.mubr.f32.mxu0 0.0
      %2116 = vmatmul.mubr.f32.gmra.mrb[0].mxu0 %v766
      %v2117 = vpop.f32.mrb[0].mxu0
      %v2118 = vadd.f32 0.0, %v2117
      %v2119 = vpop.f32.mrb[0].mxu0
      %2120 = vmatprep.mubr.f32.mxu0 0.0
      %2121 = vmatmul.mubr.f32.gmra.mrb[0].mxu0 %v769
      %v2122 = vpop.f32.mrb[0].mxu0
      %v2123 = vadd.f32 0.0, %v2122
      %v2124 = vpop.f32.mrb[0].mxu0
      %2125 = vmatprep.mubr.f32.mxu0 0.0
      %2126 = vmatmul.mubr.f32.gmra.mrb[0].mxu0 %v772
      %v2127 = vpop.f32.mrb[0].mxu0
      %v2128 = vadd.f32 0.0, %v2127
      %v2129 = vpop.f32.mrb[0].mxu0
      %2130 = vmatprep.mubr.f32.mxu0 0.0
      %2131 = vmatmul.mubr.f32.gmra.mrb[0].mxu0 %v775
      %v2132 = vpop.f32.mrb[0].mxu0
      %v2133 = vadd.f32 0.0, %v2132
      %v2134 = vpop.f32.mrb[0].mxu0
      %2135 = vmatprep.mubr.f32.mxu0 0.0
      %2136 = vmatmul.mubr.f32.gmra.mrb[0].mxu0 %v778
      %v2137 = vpop.f32.mrb[0].mxu0
      %v2138 = vadd.f32 0.0, %v2137
      %v2139 = vpop.f32.mrb[0].mxu0
      %2140 = vmatprep.mubr.f32.mxu0 0.0
      %2141 = vmatmul.mubr.f32.gmra.mrb[0].mxu0 %v781
      %v2142 = vpop.f32.mrb[0].mxu0
      %v2143 = vadd.f32 0.0, %v2142
      %v2144 = vpop.f32.mrb[0].mxu0
      %2145 = vmatprep.mubr.f32.mxu0 0.0
      %2146 = vmatmul.mubr.f32.gmra.mrb[0].mxu0 %v784
      %v2147 = vpop.f32.mrb[0].mxu0
      %v2148 = vadd.f32 0.0, %v2147
      %v2149 = vpop.f32.mrb[0].mxu0
      %2150 = vmatprep.mubr.f32.mxu0 0.0
      %2151 = vmatmul.mubr.f32.gmra.mrb[0].mxu0 %v787
      %v2152 = vpop.f32.mrb[0].mxu0
      %v2153 = vadd.f32 0.0, %v2152
      %v2154 = vpop.f32.mrb[0].mxu0
      %2155 = vmatprep.mubr.f32.mxu0 0.0
      %2156 = vmatmul.mubr.f32.gmra.mrb[0].mxu0 %v790
      %v2157 = vpop.f32.mrb[0].mxu0
      %v2158 = vadd.f32 0.0, %v2157
      %v2159 = vpop.f32.mrb[0].mxu0
      %2160 = vmatprep.mubr.f32.mxu0 0.0
      %2161 = vmatmul.mubr.f32.gmra.mrb[0].mxu0 %v793
      %v2162 = vpop.f32.mrb[0].mxu0
      %v2163 = vadd.f32 0.0, %v2162
      %v2164 = vpop.f32.mrb[0].mxu0
      %2165 = vmatprep.mubr.f32.mxu0 0.0
      %2166 = vmatmul.mubr.f32.gmra.mrb[0].mxu0 %v796
      %v2167 = vpop.f32.mrb[0].mxu0
      %v2168 = vadd.f32 0.0, %v2167
      %v2169 = vpop.f32.mrb[0].mxu0
      %2170 = vmatprep.mubr.f32.mxu0 0.0
      %2171 = vmatmul.mubr.f32.gmra.mrb[0].mxu0 %v799
      %v2172 = vpop.f32.mrb[0].mxu0
      %v2173 = vadd.f32 0.0, %v2172
      %v2174 = vpop.f32.mrb[0].mxu0
      %2175 = vmatprep.mubr.f32.mxu0 0.0
      %2176 = vmatmul.mubr.f32.gmra.mrb[0].mxu0 %v802
      %v2177 = vpop.f32.mrb[0].mxu0
      %v2178 = vadd.f32 0.0, %v2177
      %v2179 = vpop.f32.mrb[0].mxu0
      %2180 = vmatprep.mubr.f32.mxu0 0.0
      %2181 = vmatmul.mubr.f32.gmra.mrb[0].mxu0 %v805
      %v2182 = vpop.f32.mrb[0].mxu0
      %v2183 = vadd.f32 0.0, %v2182
      %v2184 = vpop.f32.mrb[0].mxu0
      %2185 = vmatprep.mubr.f32.mxu0 0.0
      %2186 = vmatmul.mubr.f32.gmra.mrb[0].mxu0 %v808
      %v2187 = vpop.f32.mrb[0].mxu0
      %v2188 = vadd.f32 0.0, %v2187
      %v2189 = vpop.f32.mrb[0].mxu0
      %2190 = vmatprep.mubr.f32.mxu0 0.0
      %2191 = vmatmul.mubr.f32.gmra.mrb[0].mxu0 %v811
      %v2192 = vpop.f32.mrb[0].mxu0
      %v2193 = vadd.f32 0.0, %v2192
      %v2194 = vpop.f32.mrb[0].mxu0
      %2195 = vmatprep.mubr.f32.mxu0 0.0
      %2196 = vmatmul.mubr.f32.gmra.mrb[0].mxu0 %v814
      %v2197 = vpop.f32.mrb[0].mxu0
      %v2198 = vadd.f32 0.0, %v2197
      %v2199 = vpop.f32.mrb[0].mxu0
      %2200 = vmatprep.mubr.f32.mxu0 0.0
      %2201 = vmatmul.mubr.f32.gmra.mrb[0].mxu0 %v817
      %v2202 = vpop.f32.mrb[0].mxu0
      %v2203 = vadd.f32 0.0, %v2202
      %v2204 = vpop.f32.mrb[0].mxu0
      %2205 = vmatprep.mubr.f32.mxu0 0.0
      %2206 = vmatmul.mubr.f32.gmra.mrb[0].mxu0 %v820
      %v2207 = vpop.f32.mrb[0].mxu0
      %v2208 = vadd.f32 0.0, %v2207
      %v2209 = vpop.f32.mrb[0].mxu0
      %2210 = vmatprep.mubr.f32.mxu0 0.0
      %2211 = vmatmul.mubr.f32.gmra.mrb[0].mxu0 %v823
      %v2212 = vpop.f32.mrb[0].mxu0
      %v2213 = vadd.f32 0.0, %v2212
      %v2214 = vpop.f32.mrb[0].mxu0
      %2215 = vmatprep.mubr.f32.mxu0 0.0
      %2216 = vmatmul.mubr.f32.gmra.mrb[0].mxu0 %v826
      %v2217 = vpop.f32.mrb[0].mxu0
      %v2218 = vadd.f32 0.0, %v2217
      %v2219 = vpop.f32.mrb[0].mxu0
      %2220 = vmatprep.mubr.f32.mxu0 0.0
      %2221 = vmatmul.mubr.f32.gmra.mrb[0].mxu0 %v829
      %v2222 = vpop.f32.mrb[0].mxu0
      %v2223 = vadd.f32 0.0, %v2222
      %v2224 = vpop.f32.mrb[0].mxu0
      %2225 = vmatprep.mubr.f32.mxu0 0.0
      %2226 = vmatmul.mubr.f32.gmra.mrb[0].mxu0 %v832
      %v2227 = vpop.f32.mrb[0].mxu0
      %v2228 = vadd.f32 0.0, %v2227
      %v2229 = vpop.f32.mrb[0].mxu0
      %2230 = vmatprep.mubr.f32.mxu0 0.0
      %2231 = vmatmul.mubr.f32.gmra.mrb[0].mxu0 %v835
      %v2232 = vpop.f32.mrb[0].mxu0
      %v2233 = vadd.f32 0.0, %v2232
      %v2234 = vpop.f32.mrb[0].mxu0
      %2235 = vmatprep.mubr.f32.mxu0 0.0
      %2236 = vmatmul.mubr.f32.gmra.mrb[0].mxu0 %v838
      %v2237 = vpop.f32.mrb[0].mxu0
      %v2238 = vadd.f32 0.0, %v2237
      %v2239 = vpop.f32.mrb[0].mxu0
      %2240 = vmatprep.mubr.f32.mxu0 0.0
      %2241 = vmatmul.mubr.f32.gmra.mrb[0].mxu0 %v841
      %v2242 = vpop.f32.mrb[0].mxu0
      %v2243 = vadd.f32 0.0, %v2242
      %v2244 = vpop.f32.mrb[0].mxu0
      %2245 = vmatprep.mubr.f32.mxu0 0.0
      %2246 = vmatmul.mubr.f32.gmra.mrb[0].mxu0 %v844
      %v2247 = vpop.f32.mrb[0].mxu0
      %v2248 = vadd.f32 0.0, %v2247
      %v2249 = vpop.f32.mrb[0].mxu0
      %2250 = vmatprep.mubr.f32.mxu0 0.0
      %2251 = vmatmul.mubr.f32.gmra.mrb[0].mxu0 %v847
      %v2252 = vpop.f32.mrb[0].mxu0
      %v2253 = vadd.f32 0.0, %v2252
      %v2254 = vpop.f32.mrb[0].mxu0
      %2255 = vmatprep.mubr.f32.mxu0 0.0
      %2256 = vmatmul.mubr.f32.gmra.mrb[0].mxu0 %v850
      %v2257 = vpop.f32.mrb[0].mxu0
      %v2258 = vadd.f32 0.0, %v2257
      %v2259 = vpop.f32.mrb[0].mxu0
      %2260 = vmatprep.mubr.f32.mxu0 0.0
      %2261 = vmatmul.mubr.f32.gmra.mrb[0].mxu0 %v853
      %v2262 = vpop.f32.mrb[0].mxu0
      %v2263 = vadd.f32 0.0, %v2262
      %v2264 = vpop.f32.mrb[0].mxu0
      %2265 = vmatprep.mubr.f32.mxu0 0.0
      %2266 = vmatmul.mubr.f32.gmra.mrb[0].mxu0 %v856
      %v2267 = vpop.f32.mrb[0].mxu0
      %v2268 = vadd.f32 0.0, %v2267
      %v2269 = vpop.f32.mrb[0].mxu0
      %2270 = vmatprep.mubr.f32.mxu0 0.0
      %2271 = vmatmul.mubr.f32.gmra.mrb[0].mxu0 %v859
      %v2272 = vpop.f32.mrb[0].mxu0
      %v2273 = vadd.f32 0.0, %v2272
      %v2274 = vpop.f32.mrb[0].mxu0
      %2275 = vmatprep.mubr.f32.mxu0 0.0
      %2276 = vmatmul.mubr.f32.gmra.mrb[0].mxu0 %v862
      %v2277 = vpop.f32.mrb[0].mxu0
      %v2278 = vadd.f32 0.0, %v2277
      %v2279 = vpop.f32.mrb[0].mxu0
      %2280 = vmatprep.mubr.f32.mxu0 0.0
      %2281 = vmatmul.mubr.f32.gmra.mrb[0].mxu0 %v865
      %v2282 = vpop.f32.mrb[0].mxu0
      %v2283 = vadd.f32 0.0, %v2282
      %v2284 = vpop.f32.mrb[0].mxu0
      %2285 = vmatprep.mubr.f32.mxu0 0.0
      %2286 = vmatmul.mubr.f32.gmra.mrb[0].mxu0 %v868
      %v2287 = vpop.f32.mrb[0].mxu0
      %v2288 = vadd.f32 0.0, %v2287
      %v2289 = vpop.f32.mrb[0].mxu0
      %2290 = vmatprep.mubr.f32.mxu0 0.0
      %2291 = vmatmul.mubr.f32.gmra.mrb[0].mxu0 %v871
      %v2292 = vpop.f32.mrb[0].mxu0
      %v2293 = vadd.f32 0.0, %v2292
      %v2294 = vpop.f32.mrb[0].mxu0
      %2295 = vmatprep.mubr.f32.mxu0 0.0
      %2296 = vmatmul.mubr.f32.gmra.mrb[0].mxu0 %v874
      %v2297 = vpop.f32.mrb[0].mxu0
      %v2298 = vadd.f32 0.0, %v2297
      %v2299 = vpop.f32.mrb[0].mxu0
      %2300 = vmatprep.mubr.f32.mxu0 0.0
      %2301 = vmatmul.mubr.f32.gmra.mrb[0].mxu0 %v877
      %v2302 = vpop.f32.mrb[0].mxu0
      %v2303 = vadd.f32 0.0, %v2302
      %v2304 = vpop.f32.mrb[0].mxu0
      %2305 = vmatprep.mubr.f32.mxu0 0.0
      %2306 = vmatmul.mubr.f32.gmra.mrb[0].mxu0 %v880
      %v2307 = vpop.f32.mrb[0].mxu0
      %v2308 = vadd.f32 0.0, %v2307
      %v2309 = vpop.f32.mrb[0].mxu0
      %2310 = vmatprep.mubr.f32.mxu0 0.0
      %2311 = vmatmul.mubr.f32.gmra.mrb[0].mxu0 %v883
      %v2312 = vpop.f32.mrb[0].mxu0
      %v2313 = vadd.f32 0.0, %v2312
      %v2314 = vpop.f32.mrb[0].mxu0
      %2315 = vmatprep.mubr.f32.mxu0 0.0
      %2316 = vmatmul.mubr.f32.gmra.mrb[0].mxu0 %v886
      %v2317 = vpop.f32.mrb[0].mxu0
      %v2318 = vadd.f32 0.0, %v2317
      %v2319 = vpop.f32.mrb[0].mxu0
      %2320 = vmatprep.mubr.f32.mxu0 0.0
      %2321 = vmatmul.mubr.f32.gmra.mrb[0].mxu0 %v889
      %v2322 = vpop.f32.mrb[0].mxu0
      %v2323 = vadd.f32 0.0, %v2322
      %v2324 = vpop.f32.mrb[0].mxu0
      %2325 = vmatprep.mubr.f32.mxu0 0.0
      %2326 = vmatmul.mubr.f32.gmra.mrb[0].mxu0 %v892
      %v2327 = vpop.f32.mrb[0].mxu0
      %v2328 = vadd.f32 0.0, %v2327
      %v2329 = vpop.f32.mrb[0].mxu0
      %2330 = vmatprep.mubr.f32.mxu0 0.0
      %2331 = vmatmul.mubr.f32.gmra.mrb[0].mxu0 %v895
      %v2332 = vpop.f32.mrb[0].mxu0
      %v2333 = vadd.f32 0.0, %v2332
      %v2334 = vpop.f32.mrb[0].mxu0
      %2335 = vmatprep.mubr.f32.mxu0 0.0
      %2336 = vmatmul.mubr.f32.gmra.mrb[0].mxu0 %v898
      %v2337 = vpop.f32.mrb[0].mxu0
      %v2338 = vadd.f32 0.0, %v2337
      %v2339 = vpop.f32.mrb[0].mxu0
      %2340 = vmatprep.mubr.f32.mxu0 0.0
      %2341 = vmatmul.mubr.f32.gmra.mrb[0].mxu0 %v901
      %v2342 = vpop.f32.mrb[0].mxu0
      %v2343 = vadd.f32 0.0, %v2342
      %v2344 = vpop.f32.mrb[0].mxu0
      %2345 = vmatprep.mubr.f32.mxu0 0.0
      %2346 = vmatmul.mubr.f32.gmra.mrb[0].mxu0 %v904
      %v2347 = vpop.f32.mrb[0].mxu0
      %v2348 = vadd.f32 0.0, %v2347
      %v2349 = vpop.f32.mrb[0].mxu0
      %2350 = vmatprep.mubr.f32.mxu0 0.0
      %2351 = vmatmul.mubr.f32.gmra.mrb[0].mxu0 %v907
      %v2352 = vpop.f32.mrb[0].mxu0
      %v2353 = vadd.f32 0.0, %v2352
      %v2354 = vpop.f32.mrb[0].mxu0
      %2355 = vmatprep.mubr.f32.mxu0 0.0
      %2356 = vmatmul.mubr.f32.gmra.mrb[0].mxu0 %v910
      %v2357 = vpop.f32.mrb[0].mxu0
      %v2358 = vadd.f32 0.0, %v2357
      %v2359 = vpop.f32.mrb[0].mxu0
      %2360 = vmatprep.mubr.f32.mxu0 0.0
      %2361 = vmatmul.mubr.f32.gmra.mrb[0].mxu0 %v913
      %v2362 = vpop.f32.mrb[0].mxu0
      %v2363 = vadd.f32 0.0, %v2362
      %v2364 = vpop.f32.mrb[0].mxu0
      %2365 = vmatprep.mubr.f32.mxu0 0.0
      %2366 = vmatmul.mubr.f32.gmra.mrb[0].mxu0 %v916
      %v2367 = vpop.f32.mrb[0].mxu0
      %v2368 = vadd.f32 0.0, %v2367
      %v2369 = vpop.f32.mrb[0].mxu0
      %2370 = vmatprep.mubr.f32.mxu0 0.0
      %2371 = vmatmul.mubr.f32.gmra.mrb[0].mxu0 %v919
      %v2372 = vpop.f32.mrb[0].mxu0
      %v2373 = vadd.f32 0.0, %v2372
      %v2374 = vpop.f32.mrb[0].mxu0
      %2375 = vmatprep.mubr.f32.mxu0 0.0
      %2376 = vmatmul.mubr.f32.gmra.mrb[0].mxu0 %v922
      %v2377 = vpop.f32.mrb[0].mxu0
      %v2378 = vadd.f32 0.0, %v2377
      %v2379 = vpop.f32.mrb[0].mxu0
      %2380 = vmatprep.mubr.f32.mxu0 0.0
      %2381 = vmatmul.mubr.f32.gmra.mrb[0].mxu0 %v925
      %v2382 = vpop.f32.mrb[0].mxu0
      %v2383 = vadd.f32 0.0, %v2382
      %v2384 = vpop.f32.mrb[0].mxu0
      %2385 = vmatprep.mubr.f32.mxu0 0.0
      %2386 = vmatmul.mubr.f32.gmra.mrb[0].mxu0 %v928
      %v2387 = vpop.f32.mrb[0].mxu0
      %v2388 = vadd.f32 0.0, %v2387
      %v2389 = vpop.f32.mrb[0].mxu0
      %2390 = vmatprep.mubr.f32.mxu0 0.0
      %2391 = vmatmul.mubr.f32.gmra.mrb[0].mxu0 %v931
      %v2392 = vpop.f32.mrb[0].mxu0
      %v2393 = vadd.f32 0.0, %v2392
      %v2394 = vpop.f32.mrb[0].mxu0
      %2395 = vmatprep.mubr.f32.mxu0 0.0
      %2396 = vmatmul.mubr.f32.gmra.mrb[0].mxu0 %v934
      %v2397 = vpop.f32.mrb[0].mxu0
      %v2398 = vadd.f32 0.0, %v2397
      %v2399 = vpop.f32.mrb[0].mxu0
      %2400 = vmatprep.mubr.f32.mxu0 0.0
      %2401 = vmatmul.mubr.f32.gmra.mrb[0].mxu0 %v937
      %v2402 = vpop.f32.mrb[0].mxu0
      %v2403 = vadd.f32 0.0, %v2402
      %v2404 = vpop.f32.mrb[0].mxu0
      %2405 = vmatprep.mubr.f32.mxu0 0.0
      %2406 = vmatmul.mubr.f32.gmra.mrb[0].mxu0 %v940
      %v2407 = vpop.f32.mrb[0].mxu0
      %v2408 = vadd.f32 0.0, %v2407
      %v2409 = vpop.f32.mrb[0].mxu0
      %2410 = vmatprep.mubr.f32.mxu0 0.0
      %2411 = vmatmul.mubr.f32.gmra.mrb[0].mxu0 %v943
      %v2412 = vpop.f32.mrb[0].mxu0
      %v2413 = vadd.f32 0.0, %v2412
      %v2414 = vpop.f32.mrb[0].mxu0
      %2415 = vmatprep.mubr.f32.mxu0 0.0
      %2416 = vmatmul.mubr.f32.gmra.mrb[0].mxu0 %v946
      %v2417 = vpop.f32.mrb[0].mxu0
      %v2418 = vadd.f32 0.0, %v2417
      %v2419 = vpop.f32.mrb[0].mxu0
      %2420 = vmatprep.mubr.f32.mxu0 0.0
      %2421 = vmatmul.mubr.f32.gmra.mrb[0].mxu0 %v949
      %v2422 = vpop.f32.mrb[0].mxu0
      %v2423 = vadd.f32 0.0, %v2422
      %v2424 = vpop.f32.mrb[0].mxu0
      %2425 = vmatprep.mubr.f32.mxu0 0.0
      %2426 = vmatmul.mubr.f32.gmra.mrb[0].mxu0 %v952
      %v2427 = vpop.f32.mrb[0].mxu0
      %v2428 = vadd.f32 0.0, %v2427
      %v2429 = vpop.f32.mrb[0].mxu0
      %2430 = vmatprep.mubr.f32.mxu0 0.0
      %2431 = vmatmul.mubr.f32.gmra.mrb[0].mxu0 %v955
      %v2432 = vpop.f32.mrb[0].mxu0
      %v2433 = vadd.f32 0.0, %v2432
      %v2434 = vpop.f32.mrb[0].mxu0
      %2435 = vmatprep.mubr.f32.mxu0 0.0
      %2436 = vmatmul.mubr.f32.gmra.mrb[0].mxu0 %v958
      %v2437 = vpop.f32.mrb[0].mxu0
      %v2438 = vadd.f32 0.0, %v2437
      %v2439 = vpop.f32.mrb[0].mxu0
      %2440 = vmatprep.mubr.f32.mxu0 0.0
      %2441 = vmatmul.mubr.f32.gmra.mrb[0].mxu0 %v961
      %v2442 = vpop.f32.mrb[0].mxu0
      %v2443 = vadd.f32 0.0, %v2442
      %v2444 = vpop.f32.mrb[0].mxu0
      %2445 = vmatprep.mubr.f32.mxu0 0.0
      %2446 = vmatmul.mubr.f32.gmra.mrb[0].mxu0 %v964
      %v2447 = vpop.f32.mrb[0].mxu0
      %v2448 = vadd.f32 0.0, %v2447
      %v2449 = vpop.f32.mrb[0].mxu0
      %2450 = vmatprep.mubr.f32.mxu0 0.0
      %2451 = vmatmul.mubr.f32.gmra.mrb[0].mxu0 %v967
      %v2452 = vpop.f32.mrb[0].mxu0
      %v2453 = vadd.f32 0.0, %v2452
      %v2454 = vpop.f32.mrb[0].mxu0
      %2455 = vmatprep.mubr.f32.mxu0 0.0
      %2456 = vmatmul.mubr.f32.gmra.mrb[0].mxu0 %v970
      %v2457 = vpop.f32.mrb[0].mxu0
      %v2458 = vadd.f32 0.0, %v2457
      %v2459 = vpop.f32.mrb[0].mxu0
      %2460 = vmatprep.mubr.f32.mxu0 0.0
      %2461 = vmatmul.mubr.f32.gmra.mrb[0].mxu0 %v973
      %v2462 = vpop.f32.mrb[0].mxu0
      %v2463 = vadd.f32 0.0, %v2462
      %v2464 = vpop.f32.mrb[0].mxu0
      %2465 = vmatprep.mubr.f32.mxu0 0.0
      %2466 = vmatmul.mubr.f32.gmra.mrb[0].mxu0 %v976
      %v2467 = vpop.f32.mrb[0].mxu0
      %v2468 = vadd.f32 0.0, %v2467
      %v2469 = vpop.f32.mrb[0].mxu0
      %2470 = vmatprep.mubr.f32.mxu0 0.0
      %2471 = vmatmul.mubr.f32.gmra.mrb[0].mxu0 %v979
      %v2472 = vpop.f32.mrb[0].mxu0
      %v2473 = vadd.f32 0.0, %v2472
      %v2474 = vpop.f32.mrb[0].mxu0
      %2475 = vmatprep.mubr.f32.mxu0 0.0
      %2476 = vmatmul.mubr.f32.gmra.mrb[0].mxu0 %v982
      %v2477 = vpop.f32.mrb[0].mxu0
      %v2478 = vadd.f32 0.0, %v2477
      %v2479 = vpop.f32.mrb[0].mxu0
      %2480 = vmatprep.mubr.f32.mxu0 0.0
      %2481 = vmatmul.mubr.f32.gmra.mrb[0].mxu0 %v985
      %v2482 = vpop.f32.mrb[0].mxu0
      %v2483 = vadd.f32 0.0, %v2482
      %v2484 = vpop.f32.mrb[0].mxu0
      %2485 = vmatprep.mubr.f32.mxu0 0.0
      %2486 = vmatmul.mubr.f32.gmra.mrb[0].mxu0 %v988
      %v2487 = vpop.f32.mrb[0].mxu0
      %v2488 = vadd.f32 0.0, %v2487
      %v2489 = vpop.f32.mrb[0].mxu0
      %2490 = vmatprep.mubr.f32.mxu0 0.0
      %2491 = vmatmul.mubr.f32.gmra.mrb[0].mxu0 %v991
      %v2492 = vpop.f32.mrb[0].mxu0
      %v2493 = vadd.f32 0.0, %v2492
      %v2494 = vpop.f32.mrb[0].mxu0
      %2495 = vmatprep.mubr.f32.mxu0 0.0
      %2496 = vmatmul.mubr.f32.gmra.mrb[0].mxu0 %v994
      %v2497 = vpop.f32.mrb[0].mxu0
      %v2498 = vadd.f32 0.0, %v2497
      %v2499 = vpop.f32.mrb[0].mxu0
      %2500 = vmatprep.mubr.f32.mxu0 0.0
      %2501 = vmatmul.mubr.f32.gmra.mrb[0].mxu0 %v997
      %v2502 = vpop.f32.mrb[0].mxu0
      %v2503 = vadd.f32 0.0, %v2502
      %v2504 = vpop.f32.mrb[0].mxu0
      %2505 = vmatprep.mubr.f32.mxu0 0.0
      %2506 = vmatmul.mubr.f32.gmra.mrb[0].mxu0 %v1000
      %v2507 = vpop.f32.mrb[0].mxu0
      %v2508 = vadd.f32 0.0, %v2507
      %v2509 = vpop.f32.mrb[0].mxu0
      %2510 = vmatprep.mubr.f32.mxu0 0.0
      %2511 = vmatmul.mubr.f32.gmra.mrb[0].mxu0 %v1003
      %v2512 = vpop.f32.mrb[0].mxu0
      %v2513 = vadd.f32 0.0, %v2512
      %v2514 = vpop.f32.mrb[0].mxu0
      %2515 = vmatprep.mubr.f32.mxu0 0.0
      %2516 = vmatmul.mubr.f32.gmra.mrb[0].mxu0 %v1006
      %v2517 = vpop.f32.mrb[0].mxu0
      %v2518 = vadd.f32 0.0, %v2517
      %v2519 = vpop.f32.mrb[0].mxu0
      %2520 = vmatprep.mubr.f32.mxu0 0.0
      %2521 = vmatmul.mubr.f32.gmra.mrb[0].mxu0 %v1009
      %v2522 = vpop.f32.mrb[0].mxu0
      %v2523 = vadd.f32 0.0, %v2522
      %v2524 = vpop.f32.mrb[0].mxu0
      %2525 = vmatprep.mubr.f32.mxu0 0.0
      %2526 = vmatmul.mubr.f32.gmra.mrb[0].mxu0 %v1012
      %v2527 = vpop.f32.mrb[0].mxu0
      %v2528 = vadd.f32 0.0, %v2527
      %v2529 = vpop.f32.mrb[0].mxu0
      %2530 = vmatprep.mubr.f32.mxu0 0.0
      %2531 = vmatmul.mubr.f32.gmra.mrb[0].mxu0 %v1015
      %v2532 = vpop.f32.mrb[0].mxu0
      %v2533 = vadd.f32 0.0, %v2532
      %v2534 = vpop.f32.mrb[0].mxu0
      %2535 = vmatprep.mubr.f32.mxu0 0.0
      %2536 = vmatmul.mubr.f32.gmra.mrb[0].mxu0 %v1018
      %v2537 = vpop.f32.mrb[0].mxu0
      %v2538 = vadd.f32 0.0, %v2537
      %v2539 = vpop.f32.mrb[0].mxu0
      %2540 = vmatprep.mubr.f32.mxu0 0.0
      %2541 = vmatmul.mubr.f32.gmra.mrb[0].mxu0 %v1021
      %v2542 = vpop.f32.mrb[0].mxu0
      %v2543 = vadd.f32 0.0, %v2542
      %v2544 = vpop.f32.mrb[0].mxu0
      %2545 = vmatprep.mubr.f32.mxu0 0.0
      %2546 = vmatmul.mubr.f32.gmra.mrb[0].mxu0 %v1024
      %v2547 = vpop.f32.mrb[0].mxu0
      %v2548 = vadd.f32 0.0, %v2547
      %v2549 = vpop.f32.mrb[0].mxu0
      %2550 = vmatprep.mubr.f32.mxu0 0.0
      %2551 = vmatmul.mubr.f32.gmra.mrb[0].mxu0 %v1027
      %v2552 = vpop.f32.mrb[0].mxu0
      %v2553 = vadd.f32 0.0, %v2552
      %v2554 = vpop.f32.mrb[0].mxu0
      %2555 = vmatprep.mubr.f32.mxu0 0.0
      %2556 = vmatmul.mubr.f32.gmra.mrb[0].mxu0 %v1030
      %v2557 = vpop.f32.mrb[0].mxu0
      %v2558 = vadd.f32 0.0, %v2557
      %v2559 = vpop.f32.mrb[0].mxu0
      %2560 = vmatprep.mubr.f32.mxu0 0.0
      %2561 = vmatmul.mubr.f32.gmra.mrb[0].mxu0 %v1033
      %v2562 = vpop.f32.mrb[0].mxu0
      %v2563 = vadd.f32 0.0, %v2562
      %v2564 = vpop.f32.mrb[0].mxu0
      %2565 = vmatprep.mubr.f32.mxu0 0.0
      %2566 = vmatmul.mubr.f32.gmra.mrb[0].mxu0 %v1036
      %v2567 = vpop.f32.mrb[0].mxu0
      %v2568 = vadd.f32 0.0, %v2567
      %v2569 = vpop.f32.mrb[0].mxu0
      %2570 = vmatprep.mubr.f32.mxu0 0.0
      %2571 = vmatmul.mubr.f32.gmra.mrb[0].mxu0 %v1039
      %v2572 = vpop.f32.mrb[0].mxu0
      %v2573 = vadd.f32 0.0, %v2572
      %v2574 = vpop.f32.mrb[0].mxu0
      %2575 = vmatprep.mubr.f32.mxu0 0.0
      %2576 = vmatmul.mubr.f32.gmra.mrb[0].mxu0 %v1042
      %v2577 = vpop.f32.mrb[0].mxu0
      %v2578 = vadd.f32 0.0, %v2577
      %v2579 = vpop.f32.mrb[0].mxu0
      %2580 = vmatprep.mubr.f32.mxu0 0.0
      %2581 = vmatmul.mubr.f32.gmra.mrb[0].mxu0 %v1045
      %v2582 = vpop.f32.mrb[0].mxu0
      %v2583 = vadd.f32 0.0, %v2582
      %v2584 = vpop.f32.mrb[0].mxu0
      %2585 = vmatprep.mubr.f32.mxu0 0.0
      %2586 = vmatmul.mubr.f32.gmra.mrb[0].mxu0 %v1048
      %v2587 = vpop.f32.mrb[0].mxu0
      %v2588 = vadd.f32 0.0, %v2587
      %v2589 = vpop.f32.mrb[0].mxu0
      %2590 = vmatprep.mubr.f32.mxu0 0.0
      %2591 = vmatmul.mubr.f32.gmra.mrb[0].mxu0 %v1051
      %v2592 = vpop.f32.mrb[0].mxu0
      %v2593 = vadd.f32 0.0, %v2592
      %v2594 = vpop.f32.mrb[0].mxu0
      %2595 = vmatprep.mubr.f32.mxu0 0.0
      %2596 = vmatmul.mubr.f32.gmra.mrb[0].mxu0 %v1054
      %v2597 = vpop.f32.mrb[0].mxu0
      %v2598 = vadd.f32 0.0, %v2597
      %v2599 = vpop.f32.mrb[0].mxu0
      %2600 = vmatprep.mubr.f32.mxu0 0.0
      %2601 = vmatmul.mubr.f32.gmra.mrb[0].mxu0 %v1057
      %v2602 = vpop.f32.mrb[0].mxu0
      %v2603 = vadd.f32 0.0, %v2602
      %v2604 = vpop.f32.mrb[0].mxu0
      %2605 = vmatprep.mubr.f32.mxu0 0.0
      %2606 = vmatmul.mubr.f32.gmra.mrb[0].mxu0 %v1060
      %v2607 = vpop.f32.mrb[0].mxu0
      %v2608 = vadd.f32 0.0, %v2607
      %v2609 = vpop.f32.mrb[0].mxu0
      %2610 = vmatprep.mubr.f32.mxu0 0.0
      %2611 = vmatmul.mubr.f32.gmra.mrb[0].mxu0 %v1063
      %v2612 = vpop.f32.mrb[0].mxu0
      %v2613 = vadd.f32 0.0, %v2612
      %v2614 = vpop.f32.mrb[0].mxu0
      %2615 = vmatprep.mubr.f32.mxu0 0.0
      %2616 = vmatmul.mubr.f32.gmra.mrb[0].mxu0 %v1066
      %v2617 = vpop.f32.mrb[0].mxu0
      %v2618 = vadd.f32 0.0, %v2617
      %v2619 = vpop.f32.mrb[0].mxu0
      %2620 = vmatprep.mubr.f32.mxu0 0.0
      %2621 = vmatmul.mubr.f32.gmra.mrb[0].mxu0 %v1069
      %v2622 = vpop.f32.mrb[0].mxu0
      %v2623 = vadd.f32 0.0, %v2622
      %v2624 = vpop.f32.mrb[0].mxu0
      %2625 = vmatprep.mubr.f32.mxu0 0.0
      %2626 = vmatmul.mubr.f32.gmra.mrb[0].mxu0 %v1072
      %v2627 = vpop.f32.mrb[0].mxu0
      %v2628 = vadd.f32 0.0, %v2627
      %v2629 = vpop.f32.mrb[0].mxu0
      %2630 = vmatprep.mubr.f32.mxu0 0.0
      %2631 = vmatmul.mubr.f32.gmra.mrb[0].mxu0 %v1075
      %v2632 = vpop.f32.mrb[0].mxu0
      %v2633 = vadd.f32 0.0, %v2632
      %v2634 = vpop.f32.mrb[0].mxu0
      %2635 = vmatprep.mubr.f32.mxu0 0.0
      %2636 = vmatmul.mubr.f32.gmra.mrb[0].mxu0 %v1078
      %v2637 = vpop.f32.mrb[0].mxu0
      %v2638 = vadd.f32 0.0, %v2637
      %v2639 = vpop.f32.mrb[0].mxu0
      %2640 = vmatprep.mubr.f32.mxu0 0.0
      %2641 = vmatmul.mubr.f32.gmra.mrb[0].mxu0 %v1081
      %v2642 = vpop.f32.mrb[0].mxu0
      %v2643 = vadd.f32 0.0, %v2642
      %v2644 = vpop.f32.mrb[0].mxu0
      %2645 = vmatprep.mubr.f32.mxu0 0.0
      %2646 = vmatmul.mubr.f32.gmra.mrb[0].mxu0 %v1084
      %v2647 = vpop.f32.mrb[0].mxu0
      %v2648 = vadd.f32 0.0, %v2647
      %v2649 = vpop.f32.mrb[0].mxu0
      %2650 = vmatprep.mubr.f32.mxu0 0.0
      %2651 = vmatmul.mubr.f32.gmra.mrb[0].mxu0 %v1087
      %v2652 = vpop.f32.mrb[0].mxu0
      %v2653 = vadd.f32 0.0, %v2652
      %v2654 = vpop.f32.mrb[0].mxu0
      %2655 = vmatprep.mubr.f32.mxu0 0.0
      %2656 = vmatmul.mubr.f32.gmra.mrb[0].mxu0 %v1090
      %v2657 = vpop.f32.mrb[0].mxu0
      %v2658 = vadd.f32 0.0, %v2657
      %v2659 = vpop.f32.mrb[0].mxu0
      %2660 = vmatprep.mubr.f32.mxu0 0.0
      %2661 = vmatmul.mubr.f32.gmra.mrb[0].mxu0 %v1093
      %v2662 = vpop.f32.mrb[0].mxu0
      %v2663 = vadd.f32 0.0, %v2662
      %v2664 = vpop.f32.mrb[0].mxu0
      %2665 = vmatprep.mubr.f32.mxu0 0.0
      %2666 = vmatmul.mubr.f32.gmra.mrb[0].mxu0 %v1096
      %v2667 = vpop.f32.mrb[0].mxu0
      %v2668 = vadd.f32 0.0, %v2667
      %v2669 = vpop.f32.mrb[0].mxu0
      %2670 = vmatprep.mubr.f32.mxu0 0.0
      %2671 = vmatmul.mubr.f32.gmra.mrb[0].mxu0 %v1099
      %v2672 = vpop.f32.mrb[0].mxu0
      %v2673 = vadd.f32 0.0, %v2672
      %v2674 = vpop.f32.mrb[0].mxu0
      %2675 = vmatprep.mubr.f32.mxu0 0.0
      %2676 = vmatmul.mubr.f32.gmra.mrb[0].mxu0 %v1102
      %v2677 = vpop.f32.mrb[0].mxu0
      %v2678 = vadd.f32 0.0, %v2677
      %v2679 = vpop.f32.mrb[0].mxu0
      %2680 = vmatprep.mubr.f32.mxu0 0.0
      %2681 = vmatmul.mubr.f32.gmra.mrb[0].mxu0 %v1105
      %v2682 = vpop.f32.mrb[0].mxu0
      %v2683 = vadd.f32 0.0, %v2682
      %v2684 = vpop.f32.mrb[0].mxu0
      %2685 = vmatprep.mubr.f32.mxu0 0.0
      %2686 = vmatmul.mubr.f32.gmra.mrb[0].mxu0 %v1108
      %v2687 = vpop.f32.mrb[0].mxu0
      %v2688 = vadd.f32 0.0, %v2687
      %v2689 = vpop.f32.mrb[0].mxu0
      %2690 = vmatprep.mubr.f32.mxu0 0.0
      %2691 = vmatmul.mubr.f32.gmra.mrb[0].mxu0 %v1111
      %v2692 = vpop.f32.mrb[0].mxu0
      %v2693 = vadd.f32 0.0, %v2692
      %v2694 = vpop.f32.mrb[0].mxu0
      %2695 = vmatprep.mubr.f32.mxu0 0.0
      %2696 = vmatmul.mubr.f32.gmra.mrb[0].mxu0 %v1114
      %v2697 = vpop.f32.mrb[0].mxu0
      %v2698 = vadd.f32 0.0, %v2697
      %v2699 = vpop.f32.mrb[0].mxu0
      %2700 = vmatprep.mubr.f32.mxu0 0.0
      %2701 = vmatmul.mubr.f32.gmra.mrb[0].mxu0 %v1117
      %v2702 = vpop.f32.mrb[0].mxu0
      %v2703 = vadd.f32 0.0, %v2702
      %v2704 = vpop.f32.mrb[0].mxu0
      %2705 = vmatprep.mubr.f32.mxu0 0.0
      %2706 = vmatmul.mubr.f32.gmra.mrb[0].mxu0 %v1120
      %v2707 = vpop.f32.mrb[0].mxu0
      %v2708 = vadd.f32 0.0, %v2707
      %v2709 = vpop.f32.mrb[0].mxu0
      %2710 = vmatprep.mubr.f32.mxu0 0.0
      %2711 = vmatmul.mubr.f32.gmra.mrb[0].mxu0 %v1123
      %v2712 = vpop.f32.mrb[0].mxu0
      %v2713 = vadd.f32 0.0, %v2712
      %v2714 = vpop.f32.mrb[0].mxu0
      %2715 = vmatprep.mubr.f32.mxu0 0.0
      %2716 = vmatmul.mubr.f32.gmra.mrb[0].mxu0 %v1126
      %v2717 = vpop.f32.mrb[0].mxu0
      %v2718 = vadd.f32 0.0, %v2717
      %v2719 = vpop.f32.mrb[0].mxu0
      %2720 = vmatprep.mubr.f32.mxu0 0.0
      %2721 = vmatmul.mubr.f32.gmra.mrb[0].mxu0 %v1129
      %v2722 = vpop.f32.mrb[0].mxu0
      %v2723 = vadd.f32 0.0, %v2722
      %v2724 = vpop.f32.mrb[0].mxu0
      %2725 = vmatprep.mubr.f32.mxu0 0.0
      %2726 = vmatmul.mubr.f32.gmra.mrb[0].mxu0 %v1132
      %v2727 = vpop.f32.mrb[0].mxu0
      %v2728 = vadd.f32 0.0, %v2727
      %v2729 = vpop.f32.mrb[0].mxu0
      %2730 = vmatprep.mubr.f32.mxu0 0.0
      %2731 = vmatmul.mubr.f32.gmra.mrb[0].mxu0 %v1135
      %v2732 = vpop.f32.mrb[0].mxu0
      %v2733 = vadd.f32 0.0, %v2732
      %v2734 = vpop.f32.mrb[0].mxu0
      %2735 = vmatprep.mubr.f32.mxu0 0.0
      %2736 = vmatmul.mubr.f32.gmra.mrb[0].mxu0 %v1138
      %v2737 = vpop.f32.mrb[0].mxu0
      %v2738 = vadd.f32 0.0, %v2737
      %v2739 = vpop.f32.mrb[0].mxu0
      %2740 = vmatprep.mubr.f32.mxu0 0.0
      %2741 = vmatmul.mubr.f32.gmra.mrb[0].mxu0 %v1141
      %v2742 = vpop.f32.mrb[0].mxu0
      %v2743 = vadd.f32 0.0, %v2742
      %v2744 = vpop.f32.mrb[0].mxu0
      %2745 = vmatprep.mubr.f32.mxu0 0.0
      %2746 = vmatmul.mubr.f32.gmra.mrb[0].mxu0 %v1144
      %v2747 = vpop.f32.mrb[0].mxu0
      %v2748 = vadd.f32 0.0, %v2747
      %v2749 = vpop.f32.mrb[0].mxu0
      %2750 = vmatprep.mubr.f32.mxu0 0.0
      %2751 = vmatmul.mubr.f32.gmra.mrb[0].mxu0 %v1147
      %v2752 = vpop.f32.mrb[0].mxu0
      %v2753 = vadd.f32 0.0, %v2752
      %v2754 = vpop.f32.mrb[0].mxu0
      %2755 = vmatprep.mubr.f32.mxu0 0.0
      %2756 = vmatmul.mubr.f32.gmra.mrb[0].mxu0 %v1150
      %v2757 = vpop.f32.mrb[0].mxu0
      %v2758 = vadd.f32 0.0, %v2757
      %v2759 = vpop.f32.mrb[0].mxu0
      %2760 = vmatprep.mubr.f32.mxu0 0.0
      %2761 = vmatmul.mubr.f32.gmra.mrb[0].mxu0 %v1153
      %v2762 = vpop.f32.mrb[0].mxu0
      %v2763 = vadd.f32 0.0, %v2762
      %v2764 = vpop.f32.mrb[0].mxu0
      %2765 = vmatprep.mubr.f32.mxu0 0.0
      %2766 = vmatmul.mubr.f32.gmra.mrb[0].mxu0 %v1156
      %v2767 = vpop.f32.mrb[0].mxu0
      %v2768 = vadd.f32 0.0, %v2767
      %v2769 = vpop.f32.mrb[0].mxu0
      %2770 = vmatprep.mubr.f32.mxu0 0.0
      %2771 = vmatmul.mubr.f32.gmra.mrb[0].mxu0 %v1159
      %v2772 = vpop.f32.mrb[0].mxu0
      %v2773 = vadd.f32 0.0, %v2772
      %v2774 = vpop.f32.mrb[0].mxu0
      %2775 = vmatprep.mubr.f32.mxu0 0.0
      %2776 = vmatmul.mubr.f32.gmra.mrb[0].mxu0 %v1162
      %v2777 = vpop.f32.mrb[0].mxu0
      %v2778 = vadd.f32 0.0, %v2777
      %v2779 = vpop.f32.mrb[0].mxu0
      %2780 = vmatprep.mubr.f32.mxu0 0.0
      %2781 = vmatmul.mubr.f32.gmra.mrb[0].mxu0 %v1165
      %v2782 = vpop.f32.mrb[0].mxu0
      %v2783 = vadd.f32 0.0, %v2782
      %v2784 = vpop.f32.mrb[0].mxu0
      %2785 = vmatprep.mubr.f32.mxu0 0.0
      %2786 = vmatmul.mubr.f32.gmra.mrb[0].mxu0 %v1168
      %v2787 = vpop.f32.mrb[0].mxu0
      %v2788 = vadd.f32 0.0, %v2787
      %v2789 = vpop.f32.mrb[0].mxu0
      %2790 = vmatprep.mubr.f32.mxu0 0.0
      %2791 = vmatmul.mubr.f32.gmra.mrb[0].mxu0 %v1171
      %v2792 = vpop.f32.mrb[0].mxu0
      %v2793 = vadd.f32 0.0, %v2792
      %v2794 = vpop.f32.mrb[0].mxu0
      %2795 = vmatprep.mubr.f32.mxu0 0.0
      %2796 = vmatmul.mubr.f32.gmra.mrb[0].mxu0 %v1174
      %v2797 = vpop.f32.mrb[0].mxu0
      %v2798 = vadd.f32 0.0, %v2797
      %v2799 = vpop.f32.mrb[0].mxu0
      %2800 = vmatprep.mubr.f32.mxu0 0.0
      %2801 = vmatmul.mubr.f32.gmra.mrb[0].mxu0 %v1177
      %v2802 = vpop.f32.mrb[0].mxu0
      %v2803 = vadd.f32 0.0, %v2802
      %v2804 = vpop.f32.mrb[0].mxu0
      %2805 = vmatprep.mubr.f32.mxu0 0.0
      %2806 = vmatmul.mubr.f32.gmra.mrb[0].mxu0 %v1180
      %v2807 = vpop.f32.mrb[0].mxu0
      %v2808 = vadd.f32 0.0, %v2807
      %v2809 = vpop.f32.mrb[0].mxu0
      %2810 = vmatprep.mubr.f32.mxu0 0.0
      %2811 = vmatmul.mubr.f32.gmra.mrb[0].mxu0 %v1183
      %v2812 = vpop.f32.mrb[0].mxu0
      %v2813 = vadd.f32 0.0, %v2812
      %v2814 = vpop.f32.mrb[0].mxu0
      %2815 = vmatprep.mubr.f32.mxu0 0.0
      %2816 = vmatmul.mubr.f32.gmra.mrb[0].mxu0 %v1186
      %v2817 = vpop.f32.mrb[0].mxu0
      %v2818 = vadd.f32 0.0, %v2817
      %v2819 = vpop.f32.mrb[0].mxu0
      %2820 = vmatprep.mubr.f32.mxu0 0.0
      %2821 = vmatmul.mubr.f32.gmra.mrb[0].mxu0 %v1189
      %v2822 = vpop.f32.mrb[0].mxu0
      %v2823 = vadd.f32 0.0, %v2822
      %v2824 = vpop.f32.mrb[0].mxu0
      %2825 = vmatprep.mubr.f32.mxu0 0.0
      %2826 = vmatmul.mubr.f32.gmra.mrb[0].mxu0 %v1192
      %v2827 = vpop.f32.mrb[0].mxu0
      %v2828 = vadd.f32 0.0, %v2827
      %v2829 = vpop.f32.mrb[0].mxu0
      %2830 = vmatprep.mubr.f32.mxu0 0.0
      %2831 = vmatmul.mubr.f32.gmra.mrb[0].mxu0 %v1195
      %v2832 = vpop.f32.mrb[0].mxu0
      %v2833 = vadd.f32 0.0, %v2832
      %v2834 = vpop.f32.mrb[0].mxu0
      %2835 = vmatprep.mubr.f32.mxu0 0.0
      %2836 = vmatmul.mubr.f32.gmra.mrb[0].mxu0 %v1198
      %v2837 = vpop.f32.mrb[0].mxu0
      %v2838 = vadd.f32 0.0, %v2837
      %v2839 = vpop.f32.mrb[0].mxu0
      %2840 = vmatprep.mubr.f32.mxu0 0.0
      %2841 = vmatmul.mubr.f32.gmra.mrb[0].mxu0 %v1201
      %v2842 = vpop.f32.mrb[0].mxu0
      %v2843 = vadd.f32 0.0, %v2842
      %v2844 = vpop.f32.mrb[0].mxu0
      %2845 = vmatprep.mubr.f32.mxu0 0.0
      %2846 = vmatmul.mubr.f32.gmra.mrb[0].mxu0 %v1204
      %v2847 = vpop.f32.mrb[0].mxu0
      %v2848 = vadd.f32 0.0, %v2847
      %v2849 = vpop.f32.mrb[0].mxu0
      %2850 = vmatprep.mubr.f32.mxu0 0.0
      %2851 = vmatmul.mubr.f32.gmra.mrb[0].mxu0 %v1207
      %v2852 = vpop.f32.mrb[0].mxu0
      %v2853 = vadd.f32 0.0, %v2852
      %v2854 = vpop.f32.mrb[0].mxu0
      %2855 = vmatprep.mubr.f32.mxu0 0.0
      %2856 = vmatmul.mubr.f32.gmra.mrb[0].mxu0 %v1210
      %v2857 = vpop.f32.mrb[0].mxu0
      %v2858 = vadd.f32 0.0, %v2857
      %v2859 = vpop.f32.mrb[0].mxu0
      %2860 = vmatprep.mubr.f32.mxu0 0.0
      %2861 = vmatmul.mubr.f32.gmra.mrb[0].mxu0 %v1213
      %v2862 = vpop.f32.mrb[0].mxu0
      %v2863 = vadd.f32 0.0, %v2862
      %v2864 = vpop.f32.mrb[0].mxu0
      %2865 = vmatprep.mubr.f32.mxu0 0.0
      %2866 = vmatmul.mubr.f32.gmra.mrb[0].mxu0 %v1216
      %v2867 = vpop.f32.mrb[0].mxu0
      %v2868 = vadd.f32 0.0, %v2867
      %v2869 = vpop.f32.mrb[0].mxu0
      %2870 = vmatprep.mubr.f32.mxu0 0.0
      %2871 = vmatmul.mubr.f32.gmra.mrb[0].mxu0 %v1219
      %v2872 = vpop.f32.mrb[0].mxu0
      %v2873 = vadd.f32 0.0, %v2872
      %v2874 = vpop.f32.mrb[0].mxu0
      %2875 = vmatprep.mubr.f32.mxu0 0.0
      %2876 = vmatmul.mubr.f32.gmra.mrb[0].mxu0 %v1222
      %v2877 = vpop.f32.mrb[0].mxu0
      %v2878 = vadd.f32 0.0, %v2877
      %v2879 = vpop.f32.mrb[0].mxu0
      %2880 = vmatprep.mubr.f32.mxu0 0.0
      %2881 = vmatmul.mubr.f32.gmra.mrb[0].mxu0 %v1225
      %v2882 = vpop.f32.mrb[0].mxu0
      %v2883 = vadd.f32 0.0, %v2882
      %v2884 = vpop.f32.mrb[0].mxu0
      %2885 = vmatprep.mubr.f32.mxu0 0.0
      %2886 = vmatmul.mubr.f32.gmra.mrb[0].mxu0 %v1228
      %v2887 = vpop.f32.mrb[0].mxu0
      %v2888 = vadd.f32 0.0, %v2887
      %v2889 = vpop.f32.mrb[0].mxu0
      %2890 = vmatprep.mubr.f32.mxu0 0.0
      %2891 = vmatmul.mubr.f32.gmra.mrb[0].mxu0 %v1231
      %v2892 = vpop.f32.mrb[0].mxu0
      %v2893 = vadd.f32 0.0, %v2892
      %v2894 = vpop.f32.mrb[0].mxu0
      %2895 = vmatprep.mubr.f32.mxu0 0.0
      %2896 = vmatmul.mubr.f32.gmra.mrb[0].mxu0 %v1234
      %v2897 = vpop.f32.mrb[0].mxu0
      %v2898 = vadd.f32 0.0, %v2897
      %v2899 = vpop.f32.mrb[0].mxu0
      %2900 = vmatprep.mubr.f32.mxu0 0.0
      %2901 = vmatmul.mubr.f32.gmra.mrb[0].mxu0 %v1237
      %v2902 = vpop.f32.mrb[0].mxu0
      %v2903 = vadd.f32 0.0, %v2902
      %v2904 = vpop.f32.mrb[0].mxu0
      %2905 = vmatprep.mubr.f32.mxu0 0.0
      %2906 = vmatmul.mubr.f32.gmra.mrb[0].mxu0 %v1240
      %v2907 = vpop.f32.mrb[0].mxu0
      %v2908 = vadd.f32 0.0, %v2907
      %v2909 = vpop.f32.mrb[0].mxu0
      %2910 = vmatprep.mubr.f32.mxu0 0.0
      %2911 = vmatmul.mubr.f32.gmra.mrb[0].mxu0 %v1243
      %v2912 = vpop.f32.mrb[0].mxu0
      %v2913 = vadd.f32 0.0, %v2912
      %v2914 = vpop.f32.mrb[0].mxu0
      %2915 = vmatprep.mubr.f32.mxu0 0.0
      %2916 = vmatmul.mubr.f32.gmra.mrb[0].mxu0 %v1246
      %v2917 = vpop.f32.mrb[0].mxu0
      %v2918 = vadd.f32 0.0, %v2917
      %v2919 = vpop.f32.mrb[0].mxu0
      %2920 = vmatprep.mubr.f32.mxu0 0.0
      %2921 = vmatmul.mubr.f32.gmra.mrb[0].mxu0 %v1249
      %v2922 = vpop.f32.mrb[0].mxu0
      %v2923 = vadd.f32 0.0, %v2922
      %v2924 = vpop.f32.mrb[0].mxu0
      %2925 = vmatprep.mubr.f32.mxu0 0.0
      %2926 = vmatmul.mubr.f32.gmra.mrb[0].mxu0 %v1252
      %v2927 = vpop.f32.mrb[0].mxu0
      %v2928 = vadd.f32 0.0, %v2927
      %v2929 = vpop.f32.mrb[0].mxu0
      %2930 = vmatprep.mubr.f32.mxu0 0.0
      %2931 = vmatmul.mubr.f32.gmra.mrb[0].mxu0 %v1255
      %v2932 = vpop.f32.mrb[0].mxu0
      %v2933 = vadd.f32 0.0, %v2932
      %v2934 = vpop.f32.mrb[0].mxu0
      %2935 = vmatprep.mubr.f32.mxu0 0.0
      %2936 = vmatmul.mubr.f32.gmra.mrb[0].mxu0 %v1258
      %v2937 = vpop.f32.mrb[0].mxu0
      %v2938 = vadd.f32 0.0, %v2937
      %v2939 = vpop.f32.mrb[0].mxu0
      %2940 = vmatprep.mubr.f32.mxu0 0.0
      %2941 = vmatmul.mubr.f32.gmra.mrb[0].mxu0 %v1261
      %v2942 = vpop.f32.mrb[0].mxu0
      %v2943 = vadd.f32 0.0, %v2942
      %v2944 = vpop.f32.mrb[0].mxu0
      %2945 = vmatprep.mubr.f32.mxu0 0.0
      %2946 = vmatmul.mubr.f32.gmra.mrb[0].mxu0 %v1264
      %v2947 = vpop.f32.mrb[0].mxu0
      %v2948 = vadd.f32 0.0, %v2947
      %v2949 = vpop.f32.mrb[0].mxu0
      %2950 = vmatprep.mubr.f32.mxu0 0.0
      %2951 = vmatmul.mubr.f32.gmra.mrb[0].mxu0 %v1267
      %v2952 = vpop.f32.mrb[0].mxu0
      %v2953 = vadd.f32 0.0, %v2952
      %v2954 = vpop.f32.mrb[0].mxu0
      %2955 = vmatprep.mubr.f32.mxu0 0.0
      %2956 = vmatmul.mubr.f32.gmra.mrb[0].mxu0 %v1270
      %v2957 = vpop.f32.mrb[0].mxu0
      %v2958 = vadd.f32 0.0, %v2957
      %v2959 = vpop.f32.mrb[0].mxu0
      %2960 = vmatprep.mubr.f32.mxu0 0.0
      %2961 = vmatmul.mubr.f32.gmra.mrb[0].mxu0 %v1273
      %v2962 = vpop.f32.mrb[0].mxu0
      %v2963 = vadd.f32 0.0, %v2962
      %v2964 = vpop.f32.mrb[0].mxu0
      %2965 = vmatprep.mubr.f32.mxu0 0.0
      %2966 = vmatmul.mubr.f32.gmra.mrb[0].mxu0 %v1276
      %v2967 = vpop.f32.mrb[0].mxu0
      %v2968 = vadd.f32 0.0, %v2967
      %v2969 = vpop.f32.mrb[0].mxu0
      %2970 = vmatprep.mubr.f32.mxu0 0.0
      %2971 = vmatmul.mubr.f32.gmra.mrb[0].mxu0 %v1279
      %v2972 = vpop.f32.mrb[0].mxu0
      %v2973 = vadd.f32 0.0, %v2972
      %v2974 = vpop.f32.mrb[0].mxu0
      %2975 = vmatprep.mubr.f32.mxu0 0.0
      %2976 = vmatmul.mubr.f32.gmra.mrb[0].mxu0 %v1282
      %v2977 = vpop.f32.mrb[0].mxu0
      %v2978 = vadd.f32 0.0, %v2977
      %v2979 = vpop.f32.mrb[0].mxu0
      %2980 = vmatprep.mubr.f32.mxu0 0.0
      %2981 = vmatmul.mubr.f32.gmra.mrb[0].mxu0 %v1285
      %v2982 = vpop.f32.mrb[0].mxu0
      %v2983 = vadd.f32 0.0, %v2982
      %v2984 = vpop.f32.mrb[0].mxu0
      %2985 = vmatprep.mubr.f32.mxu0 0.0
      %2986 = vmatmul.mubr.f32.gmra.mrb[0].mxu0 %v1288
      %v2987 = vpop.f32.mrb[0].mxu0
      %v2988 = vadd.f32 0.0, %v2987
      %v2989 = vpop.f32.mrb[0].mxu0
      %2990 = vmatprep.mubr.f32.mxu0 0.0
      %2991 = vmatmul.mubr.f32.gmra.mrb[0].mxu0 %v1291
      %v2992 = vpop.f32.mrb[0].mxu0
      %v2993 = vadd.f32 0.0, %v2992
      %v2994 = vpop.f32.mrb[0].mxu0
      %2995 = vmatprep.mubr.f32.mxu0 0.0
      %2996 = vmatmul.mubr.f32.gmra.mrb[0].mxu0 %v1294
      %v2997 = vpop.f32.mrb[0].mxu0
      %v2998 = vadd.f32 0.0, %v2997
      %v2999 = vpop.f32.mrb[0].mxu0
      %3000 = vmatprep.mubr.f32.mxu0 0.0
      %3001 = vmatmul.mubr.f32.gmra.mrb[0].mxu0 %v1297
      %v3002 = vpop.f32.mrb[0].mxu0
      %v3003 = vadd.f32 0.0, %v3002
      %v3004 = vpop.f32.mrb[0].mxu0
      %3005 = vmatprep.mubr.f32.mxu0 0.0
      %3006 = vmatmul.mubr.f32.gmra.mrb[0].mxu0 %v1300
      %v3007 = vpop.f32.mrb[0].mxu0
      %v3008 = vadd.f32 0.0, %v3007
      %v3009 = vpop.f32.mrb[0].mxu0
      %3010 = vmatprep.mubr.f32.mxu0 0.0
      %3011 = vmatmul.mubr.f32.gmra.mrb[0].mxu0 %v1303
      %v3012 = vpop.f32.mrb[0].mxu0
      %v3013 = vadd.f32 0.0, %v3012
      %v3014 = vpop.f32.mrb[0].mxu0
      %3015 = vmatprep.mubr.f32.mxu0 0.0
      %3016 = vmatmul.mubr.f32.gmra.mrb[0].mxu0 %v1306
      %v3017 = vpop.f32.mrb[0].mxu0
      %v3018 = vadd.f32 0.0, %v3017
      %v3019 = vpop.f32.mrb[0].mxu0
      %3020 = vmatprep.mubr.f32.mxu0 0.0
      %3021 = vmatmul.mubr.f32.gmra.mrb[0].mxu0 %v1309
      %v3022 = vpop.f32.mrb[0].mxu0
      %v3023 = vadd.f32 0.0, %v3022
      %v3024 = vpop.f32.mrb[0].mxu0
      %3025 = vmatprep.mubr.f32.mxu0 0.0
      %3026 = vmatmul.mubr.f32.gmra.mrb[0].mxu0 %v1312
      %v3027 = vpop.f32.mrb[0].mxu0
      %v3028 = vadd.f32 0.0, %v3027
      %v3029 = vpop.f32.mrb[0].mxu0
      %3030 = vmatprep.mubr.f32.mxu0 0.0
      %3031 = vmatmul.mubr.f32.gmra.mrb[0].mxu0 %v1315
      %v3032 = vpop.f32.mrb[0].mxu0
      %v3033 = vadd.f32 0.0, %v3032
      %v3034 = vpop.f32.mrb[0].mxu0
      %3035 = vmatprep.mubr.f32.mxu0 0.0
      %3036 = vmatmul.mubr.f32.gmra.mrb[0].mxu0 %v1318
      %v3037 = vpop.f32.mrb[0].mxu0
      %v3038 = vadd.f32 0.0, %v3037
      %v3039 = vpop.f32.mrb[0].mxu0
      %3040 = vmatprep.mubr.f32.mxu0 0.0
      %3041 = vmatmul.mubr.f32.gmra.mrb[0].mxu0 %v1321
      %v3042 = vpop.f32.mrb[0].mxu0
      %v3043 = vadd.f32 0.0, %v3042
      %v3044 = vpop.f32.mrb[0].mxu0
      %3045 = vmatprep.mubr.f32.mxu0 0.0
      %3046 = vmatmul.mubr.f32.gmra.mrb[0].mxu0 %v1324
      %v3047 = vpop.f32.mrb[0].mxu0
      %v3048 = vadd.f32 0.0, %v3047
      %v3049 = vpop.f32.mrb[0].mxu0
      %3050 = vmatprep.mubr.f32.mxu0 0.0
      %3051 = vmatmul.mubr.f32.gmra.mrb[0].mxu0 %v1327
      %v3052 = vpop.f32.mrb[0].mxu0
      %v3053 = vadd.f32 0.0, %v3052
      %v3054 = vpop.f32.mrb[0].mxu0
      %3055 = vmatprep.mubr.f32.mxu0 0.0
      %3056 = vmatmul.mubr.f32.gmra.mrb[0].mxu0 %v1330
      %v3057 = vpop.f32.mrb[0].mxu0
      %v3058 = vadd.f32 0.0, %v3057
      %v3059 = vpop.f32.mrb[0].mxu0
      %3060 = vmatprep.mubr.f32.mxu0 0.0
      %3061 = vmatmul.mubr.f32.gmra.mrb[0].mxu0 %v1333
      %v3062 = vpop.f32.mrb[0].mxu0
      %v3063 = vadd.f32 0.0, %v3062
      %v3064 = vpop.f32.mrb[0].mxu0
      %3065 = vmatprep.mubr.f32.mxu0 0.0
      %3066 = vmatmul.mubr.f32.gmra.mrb[0].mxu0 %v1336
      %v3067 = vpop.f32.mrb[0].mxu0
      %v3068 = vadd.f32 0.0, %v3067
      %v3069 = vpop.f32.mrb[0].mxu0
      %3070 = vmatprep.mubr.f32.mxu0 0.0
      %3071 = vmatmul.mubr.f32.gmra.mrb[0].mxu0 %v1339
      %v3072 = vpop.f32.mrb[0].mxu0
      %v3073 = vadd.f32 0.0, %v3072
      %v3074 = vpop.f32.mrb[0].mxu0
      %3075 = vmatprep.mubr.f32.mxu0 0.0
      %3076 = vmatmul.mubr.f32.gmra.mrb[0].mxu0 %v1342
      %v3077 = vpop.f32.mrb[0].mxu0
      %v3078 = vadd.f32 0.0, %v3077
      %v3079 = vpop.f32.mrb[0].mxu0
      %3080 = vmatprep.mubr.f32.mxu0 0.0
      %3081 = vmatmul.mubr.f32.gmra.mrb[0].mxu0 %v1345
      %v3082 = vpop.f32.mrb[0].mxu0
      %v3083 = vadd.f32 0.0, %v3082
      %v3084 = vpop.f32.mrb[0].mxu0
      %3085 = vmatprep.mubr.f32.mxu0 0.0
      %3086 = vmatmul.mubr.f32.gmra.mrb[0].mxu0 %v1348
      %v3087 = vpop.f32.mrb[0].mxu0
      %v3088 = vadd.f32 0.0, %v3087
      %v3089 = vpop.f32.mrb[0].mxu0
      %3090 = vmatprep.mubr.f32.mxu0 0.0
      %3091 = vmatmul.mubr.f32.gmra.mrb[0].mxu0 %v1351
      %v3092 = vpop.f32.mrb[0].mxu0
      %v3093 = vadd.f32 0.0, %v3092
      %v3094 = vpop.f32.mrb[0].mxu0
      %3095 = vmatprep.mubr.f32.mxu0 0.0
      %3096 = vmatmul.mubr.f32.gmra.mrb[0].mxu0 %v1354
      %v3097 = vpop.f32.mrb[0].mxu0
      %v3098 = vadd.f32 0.0, %v3097
      %v3099 = vpop.f32.mrb[0].mxu0
      %3100 = vmatprep.mubr.f32.mxu0 0.0
      %3101 = vmatmul.mubr.f32.gmra.mrb[0].mxu0 %v1357
      %v3102 = vpop.f32.mrb[0].mxu0
      %v3103 = vadd.f32 0.0, %v3102
      %v3104 = vpop.f32.mrb[0].mxu0
      %3105 = vmatprep.mubr.f32.mxu0 0.0
      %3106 = vmatmul.mubr.f32.gmra.mrb[0].mxu0 %v1360
      %v3107 = vpop.f32.mrb[0].mxu0
      %v3108 = vadd.f32 0.0, %v3107
      %v3109 = vpop.f32.mrb[0].mxu0
      %3110 = vmatprep.mubr.f32.mxu0 0.0
      %3111 = vmatmul.mubr.f32.gmra.mrb[0].mxu0 %v1363
      %v3112 = vpop.f32.mrb[0].mxu0
      %v3113 = vadd.f32 0.0, %v3112
      %v3114 = vpop.f32.mrb[0].mxu0
      %3115 = vmatprep.mubr.f32.mxu0 0.0
      %3116 = vmatmul.mubr.f32.gmra.mrb[0].mxu0 %v1366
      %v3117 = vpop.f32.mrb[0].mxu0
      %v3118 = vadd.f32 0.0, %v3117
      %v3119 = vpop.f32.mrb[0].mxu0
      %3120 = vmatprep.mubr.f32.mxu0 0.0
      %3121 = vmatmul.mubr.f32.gmra.mrb[0].mxu0 %v1369
      %v3122 = vpop.f32.mrb[0].mxu0
      %v3123 = vadd.f32 0.0, %v3122
      %v3124 = vpop.f32.mrb[0].mxu0
      %3125 = vmatprep.mubr.f32.mxu0 0.0
      %3126 = vmatmul.mubr.f32.gmra.mrb[0].mxu0 %v1372
      %v3127 = vpop.f32.mrb[0].mxu0
      %v3128 = vadd.f32 0.0, %v3127
      %v3129 = vpop.f32.mrb[0].mxu0
      %3130 = vmatprep.mubr.f32.mxu0 0.0
      %3131 = vmatmul.mubr.f32.gmra.mrb[0].mxu0 %v1375
      %v3132 = vpop.f32.mrb[0].mxu0
      %v3133 = vadd.f32 0.0, %v3132
      %v3134 = vpop.f32.mrb[0].mxu0
      %3135 = vmatprep.mubr.f32.mxu0 0.0
      %3136 = vmatmul.mubr.f32.gmra.mrb[0].mxu0 %v1378
      %v3137 = vpop.f32.mrb[0].mxu0
      %v3138 = vadd.f32 0.0, %v3137
      %v3139 = vpop.f32.mrb[0].mxu0
      %3140 = vmatprep.mubr.f32.mxu0 0.0
      %3141 = vmatmul.mubr.f32.gmra.mrb[0].mxu0 %v1381
      %v3142 = vpop.f32.mrb[0].mxu0
      %v3143 = vadd.f32 0.0, %v3142
      %v3144 = vpop.f32.mrb[0].mxu0
      %3145 = vmatprep.mubr.f32.mxu0 0.0
      %3146 = vmatmul.mubr.f32.gmra.mrb[0].mxu0 %v1384
      %v3147 = vpop.f32.mrb[0].mxu0
      %v3148 = vadd.f32 0.0, %v3147
      %v3149 = vpop.f32.mrb[0].mxu0
      %3150 = vmatprep.mubr.f32.mxu0 0.0
      %3151 = vmatmul.mubr.f32.gmra.mrb[0].mxu0 %v1387
      %v3152 = vpop.f32.mrb[0].mxu0
      %v3153 = vadd.f32 0.0, %v3152
      %v3154 = vpop.f32.mrb[0].mxu0
      %3155 = vmatprep.mubr.f32.mxu0 0.0
      %3156 = vmatmul.mubr.f32.gmra.mrb[0].mxu0 %v1390
      %v3157 = vpop.f32.mrb[0].mxu0
      %v3158 = vadd.f32 0.0, %v3157
      %v3159 = vpop.f32.mrb[0].mxu0
      %3160 = vmatprep.mubr.f32.mxu0 0.0
      %3161 = vmatmul.mubr.f32.gmra.mrb[0].mxu0 %v1393
      %v3162 = vpop.f32.mrb[0].mxu0
      %v3163 = vadd.f32 0.0, %v3162
      %v3164 = vpop.f32.mrb[0].mxu0
      %3165 = vmatprep.mubr.f32.mxu0 0.0
      %3166 = vmatmul.mubr.f32.gmra.mrb[0].mxu0 %v1396
      %v3167 = vpop.f32.mrb[0].mxu0
      %v3168 = vadd.f32 0.0, %v3167
      %v3169 = vpop.f32.mrb[0].mxu0
      %3170 = vmatprep.mubr.f32.mxu0 0.0
      %3171 = vmatmul.mubr.f32.gmra.mrb[0].mxu0 %v1399
      %v3172 = vpop.f32.mrb[0].mxu0
      %v3173 = vadd.f32 0.0, %v3172
      %v3174 = vpop.f32.mrb[0].mxu0
      %3175 = vmatprep.mubr.f32.mxu0 0.0
      %3176 = vmatmul.mubr.f32.gmra.mrb[0].mxu0 %v1402
      %v3177 = vpop.f32.mrb[0].mxu0
      %v3178 = vadd.f32 0.0, %v3177
      %v3179 = vpop.f32.mrb[0].mxu0
      %3180 = vmatprep.mubr.f32.mxu0 0.0
      %3181 = vmatmul.mubr.f32.gmra.mrb[0].mxu0 %v1405
      %v3182 = vpop.f32.mrb[0].mxu0
      %v3183 = vadd.f32 0.0, %v3182
      %v3184 = vpop.f32.mrb[0].mxu0
      %3185 = vmatprep.mubr.f32.mxu0 0.0
      %3186 = vmatmul.mubr.f32.gmra.mrb[0].mxu0 %v1408
      %v3187 = vpop.f32.mrb[0].mxu0
      %v3188 = vadd.f32 0.0, %v3187
      %v3189 = vpop.f32.mrb[0].mxu0
      %3190 = vmatprep.mubr.f32.mxu0 0.0
      %3191 = vmatmul.mubr.f32.gmra.mrb[0].mxu0 %v1411
      %v3192 = vpop.f32.mrb[0].mxu0
      %v3193 = vadd.f32 0.0, %v3192
      %v3194 = vpop.f32.mrb[0].mxu0
      %3195 = vmatprep.mubr.f32.mxu0 0.0
      %3196 = vmatmul.mubr.f32.gmra.mrb[0].mxu0 %v1414
      %v3197 = vpop.f32.mrb[0].mxu0
      %v3198 = vadd.f32 0.0, %v3197
      %v3199 = vpop.f32.mrb[0].mxu0
      %3200 = vmatprep.mubr.f32.mxu0 0.0
      %3201 = vmatmul.mubr.f32.gmra.mrb[0].mxu0 %v1417
      %v3202 = vpop.f32.mrb[0].mxu0
      %v3203 = vadd.f32 0.0, %v3202
      %v3204 = vpop.f32.mrb[0].mxu0
      %3205 = vmatprep.mubr.f32.mxu0 0.0
      %3206 = vmatmul.mubr.f32.gmra.mrb[0].mxu0 %v1420
      %v3207 = vpop.f32.mrb[0].mxu0
      %v3208 = vadd.f32 0.0, %v3207
      %v3209 = vpop.f32.mrb[0].mxu0
      %3210 = vmatprep.mubr.f32.mxu0 0.0
      %3211 = vmatmul.mubr.f32.gmra.mrb[0].mxu0 %v1423
      %v3212 = vpop.f32.mrb[0].mxu0
      %v3213 = vadd.f32 0.0, %v3212
      %v3214 = vpop.f32.mrb[0].mxu0
      %3215 = vmatprep.mubr.f32.mxu0 0.0
      %3216 = vmatmul.mubr.f32.gmra.mrb[0].mxu0 %v1426
      %v3217 = vpop.f32.mrb[0].mxu0
      %v3218 = vadd.f32 0.0, %v3217
      %v3219 = vpop.f32.mrb[0].mxu0
      %3220 = vmatprep.mubr.f32.mxu0 0.0
      %3221 = vmatmul.mubr.f32.gmra.mrb[0].mxu0 %v1429
      %v3222 = vpop.f32.mrb[0].mxu0
      %v3223 = vadd.f32 0.0, %v3222
      %v3224 = vpop.f32.mrb[0].mxu0
      %3225 = vmatprep.mubr.f32.mxu0 0.0
      %3226 = vmatmul.mubr.f32.gmra.mrb[0].mxu0 %v1432
      %v3227 = vpop.f32.mrb[0].mxu0
      %v3228 = vadd.f32 0.0, %v3227
      %v3229 = vpop.f32.mrb[0].mxu0
      %3230 = vmatprep.mubr.f32.mxu0 0.0
      %3231 = vmatmul.mubr.f32.gmra.mrb[0].mxu0 %v1435
      %v3232 = vpop.f32.mrb[0].mxu0
      %v3233 = vadd.f32 0.0, %v3232
      %v3234 = vpop.f32.mrb[0].mxu0
      %3235 = vmatprep.mubr.f32.mxu0 0.0
      %3236 = vmatmul.mubr.f32.gmra.mrb[0].mxu0 %v1438
      %v3237 = vpop.f32.mrb[0].mxu0
      %v3238 = vadd.f32 0.0, %v3237
      %v3239 = vpop.f32.mrb[0].mxu0
      %3240 = vmatprep.mubr.f32.mxu0 0.0
      %3241 = vmatmul.mubr.f32.gmra.mrb[0].mxu0 %v1441
      %v3242 = vpop.f32.mrb[0].mxu0
      %v3243 = vadd.f32 0.0, %v3242
      %v3244 = vpop.f32.mrb[0].mxu0
      %3245 = vmatprep.mubr.f32.mxu0 0.0
      %3246 = vmatmul.mubr.f32.gmra.mrb[0].mxu0 %v1444
      %v3247 = vpop.f32.mrb[0].mxu0
      %v3248 = vadd.f32 0.0, %v3247
      %v3249 = vpop.f32.mrb[0].mxu0
      %3250 = vmatprep.mubr.f32.mxu0 0.0
      %3251 = vmatmul.mubr.f32.gmra.mrb[0].mxu0 %v1447
      %v3252 = vpop.f32.mrb[0].mxu0
      %v3253 = vadd.f32 0.0, %v3252
      %v3254 = vpop.f32.mrb[0].mxu0
      %3255 = vmatprep.mubr.f32.mxu0 0.0
      %3256 = vmatmul.mubr.f32.gmra.mrb[0].mxu0 %v1450
      %v3257 = vpop.f32.mrb[0].mxu0
      %v3258 = vadd.f32 0.0, %v3257
      %v3259 = vpop.f32.mrb[0].mxu0
      %3260 = vmatprep.mubr.f32.mxu0 0.0
      %3261 = vmatmul.mubr.f32.gmra.mrb[0].mxu0 %v1453
      %v3262 = vpop.f32.mrb[0].mxu0
      %v3263 = vadd.f32 0.0, %v3262
      %v3264 = vpop.f32.mrb[0].mxu0
      %3265 = vmatprep.mubr.f32.mxu0 0.0
      %3266 = vmatmul.mubr.f32.gmra.mrb[0].mxu0 %v1456
      %v3267 = vpop.f32.mrb[0].mxu0
      %v3268 = vadd.f32 0.0, %v3267
      %v3269 = vpop.f32.mrb[0].mxu0
      %3270 = vmatprep.mubr.f32.mxu0 0.0
      %3271 = vmatmul.mubr.f32.gmra.mrb[0].mxu0 %v1459
      %v3272 = vpop.f32.mrb[0].mxu0
      %v3273 = vadd.f32 0.0, %v3272
      %v3274 = vpop.f32.mrb[0].mxu0
      %3275 = vmatprep.mubr.f32.mxu0 0.0
      %3276 = vmatmul.mubr.f32.gmra.mrb[0].mxu0 %v1462
      %v3277 = vpop.f32.mrb[0].mxu0
      %v3278 = vadd.f32 0.0, %v3277
      %v3279 = vpop.f32.mrb[0].mxu0
      %3280 = vmatprep.mubr.f32.mxu0 0.0
      %3281 = vmatmul.mubr.f32.gmra.mrb[0].mxu0 %v1465
      %v3282 = vpop.f32.mrb[0].mxu0
      %v3283 = vadd.f32 0.0, %v3282
      %v3284 = vpop.f32.mrb[0].mxu0
      %3285 = vmatprep.mubr.f32.mxu0 0.0
      %3286 = vmatmul.mubr.f32.gmra.mrb[0].mxu0 %v1468
      %v3287 = vpop.f32.mrb[0].mxu0
      %v3288 = vadd.f32 0.0, %v3287
      %v3289 = vpop.f32.mrb[0].mxu0
      %3290 = vmatprep.mubr.f32.mxu0 0.0
      %3291 = vmatmul.mubr.f32.gmra.mrb[0].mxu0 %v1471
      %v3292 = vpop.f32.mrb[0].mxu0
      %v3293 = vadd.f32 0.0, %v3292
      %v3294 = vpop.f32.mrb[0].mxu0
      %3295 = vmatprep.mubr.f32.mxu0 0.0
      %3296 = vmatmul.mubr.f32.gmra.mrb[0].mxu0 %v1474
      %v3297 = vpop.f32.mrb[0].mxu0
      %v3298 = vadd.f32 0.0, %v3297
      %v3299 = vpop.f32.mrb[0].mxu0
      %3300 = vmatprep.mubr.f32.mxu0 0.0
      %3301 = vmatmul.mubr.f32.gmra.mrb[0].mxu0 %v1477
      %v3302 = vpop.f32.mrb[0].mxu0
      %v3303 = vadd.f32 0.0, %v3302
      %v3304 = vpop.f32.mrb[0].mxu0
      %3305 = vmatprep.mubr.f32.mxu0 0.0
      %3306 = vmatmul.mubr.f32.gmra.mrb[0].mxu0 %v1480
      %v3307 = vpop.f32.mrb[0].mxu0
      %v3308 = vadd.f32 0.0, %v3307
      %v3309 = vpop.f32.mrb[0].mxu0
      %3310 = vmatprep.mubr.f32.mxu0 0.0
      %3311 = vmatmul.mubr.f32.gmra.mrb[0].mxu0 %v1483
      %v3312 = vpop.f32.mrb[0].mxu0
      %v3313 = vadd.f32 0.0, %v3312
      %v3314 = vpop.f32.mrb[0].mxu0
      %3315 = vmatprep.mubr.f32.mxu0 0.0
      %3316 = vmatmul.mubr.f32.gmra.mrb[0].mxu0 %v1486
      %v3317 = vpop.f32.mrb[0].mxu0
      %v3318 = vadd.f32 0.0, %v3317
      %v3319 = vpop.f32.mrb[0].mxu0
      %3320 = vmatprep.mubr.f32.mxu0 0.0
      %3321 = vmatmul.mubr.f32.gmra.mrb[0].mxu0 %v1489
      %v3322 = vpop.f32.mrb[0].mxu0
      %v3323 = vadd.f32 0.0, %v3322
      %v3324 = vpop.f32.mrb[0].mxu0
      %3325 = vmatprep.mubr.f32.mxu0 0.0
      %3326 = vmatmul.mubr.f32.gmra.mrb[0].mxu0 %v1492
      %v3327 = vpop.f32.mrb[0].mxu0
      %v3328 = vadd.f32 0.0, %v3327
      %v3329 = vpop.f32.mrb[0].mxu0
      %3330 = vmatprep.mubr.f32.mxu0 0.0
      %3331 = vmatmul.mubr.f32.gmra.mrb[0].mxu0 %v1495
      %v3332 = vpop.f32.mrb[0].mxu0
      %v3333 = vadd.f32 0.0, %v3332
      %v3334 = vpop.f32.mrb[0].mxu0
      %3335 = vmatprep.mubr.f32.mxu0 0.0
      %3336 = vmatmul.mubr.f32.gmra.mrb[0].mxu0 %v1498
      %v3337 = vpop.f32.mrb[0].mxu0
      %v3338 = vadd.f32 0.0, %v3337
      %v3339 = vpop.f32.mrb[0].mxu0
      %3340 = vmatprep.mubr.f32.mxu0 0.0
      %3341 = vmatmul.mubr.f32.gmra.mrb[0].mxu0 %v1501
      %v3342 = vpop.f32.mrb[0].mxu0
      %v3343 = vadd.f32 0.0, %v3342
      %v3344 = vpop.f32.mrb[0].mxu0
      %3345 = vmatprep.mubr.f32.mxu0 0.0
      %3346 = vmatmul.mubr.f32.gmra.mrb[0].mxu0 %v1504
      %v3347 = vpop.f32.mrb[0].mxu0
      %v3348 = vadd.f32 0.0, %v3347
      %v3349 = vpop.f32.mrb[0].mxu0
      %3350 = vmatprep.mubr.f32.mxu0 0.0
      %3351 = vmatmul.mubr.f32.gmra.mrb[0].mxu0 %v1507
      %v3352 = vpop.f32.mrb[0].mxu0
      %v3353 = vadd.f32 0.0, %v3352
      %v3354 = vpop.f32.mrb[0].mxu0
      %3355 = vmatprep.mubr.f32.mxu0 0.0
      %3356 = vmatmul.mubr.f32.gmra.mrb[0].mxu0 %v1510
      %v3357 = vpop.f32.mrb[0].mxu0
      %v3358 = vadd.f32 0.0, %v3357
      %v3359 = vpop.f32.mrb[0].mxu0
      %3360 = vmatprep.mubr.f32.mxu0 0.0
      %3361 = vmatmul.mubr.f32.gmra.mrb[0].mxu0 %v1513
      %v3362 = vpop.f32.mrb[0].mxu0
      %v3363 = vadd.f32 0.0, %v3362
      %v3364 = vpop.f32.mrb[0].mxu0
      %3365 = vmatprep.mubr.f32.mxu0 0.0
      %3366 = vmatmul.mubr.f32.gmra.mrb[0].mxu0 %v1516
      %v3367 = vpop.f32.mrb[0].mxu0
      %v3368 = vadd.f32 0.0, %v3367
      %v3369 = vpop.f32.mrb[0].mxu0
      %3370 = vmatprep.mubr.f32.mxu0 0.0
      %3371 = vmatmul.mubr.f32.gmra.mrb[0].mxu0 %v1519
      %v3372 = vpop.f32.mrb[0].mxu0
      %v3373 = vadd.f32 0.0, %v3372
      %v3374 = vpop.f32.mrb[0].mxu0
      %3375 = vmatprep.mubr.f32.mxu0 0.0
      %3376 = vmatmul.mubr.f32.gmra.mrb[0].mxu0 %v1522
      %v3377 = vpop.f32.mrb[0].mxu0
      %v3378 = vadd.f32 0.0, %v3377
      %v3379 = vpop.f32.mrb[0].mxu0
      %3380 = vmatprep.mubr.f32.mxu0 0.0
      %3381 = vmatmul.mubr.f32.gmra.mrb[0].mxu0 %v1525
      %v3382 = vpop.f32.mrb[0].mxu0
      %v3383 = vadd.f32 0.0, %v3382
      %v3384 = vpop.f32.mrb[0].mxu0
      %3385 = vmatprep.mubr.f32.mxu0 0.0
      %3386 = vmatmul.mubr.f32.gmra.mrb[0].mxu0 %v1528
      %v3387 = vpop.f32.mrb[0].mxu0
      %v3388 = vadd.f32 0.0, %v3387
      %v3389 = vpop.f32.mrb[0].mxu0
      %3390 = vmatprep.mubr.f32.mxu0 0.0
      %3391 = vmatmul.mubr.f32.gmra.mrb[0].mxu0 %v1531
      %v3392 = vpop.f32.mrb[0].mxu0
      %v3393 = vadd.f32 0.0, %v3392
      %v3394 = vpop.f32.mrb[0].mxu0
      %3395 = vmatprep.mubr.f32.mxu0 0.0
      %3396 = vmatmul.mubr.f32.gmra.mrb[0].mxu0 %v1534
      %v3397 = vpop.f32.mrb[0].mxu0
      %v3398 = vadd.f32 0.0, %v3397
      %v3399 = vpop.f32.mrb[0].mxu0
      %3400 = vmatprep.mubr.f32.mxu0 0.0
      %3401 = vmatmul.mubr.f32.gmra.mrb[0].mxu0 %v1537
      %v3402 = vpop.f32.mrb[0].mxu0
      %v3403 = vadd.f32 0.0, %v3402
      %v3404 = vpop.f32.mrb[0].mxu0
      %3405 = vmatprep.mubr.f32.mxu0 0.0
      %3406 = vmatmul.mubr.f32.gmra.mrb[0].mxu0 %v1540
      %v3407 = vpop.f32.mrb[0].mxu0
      %v3408 = vadd.f32 0.0, %v3407
      %v3409 = vpop.f32.mrb[0].mxu0
      %3410 = vmatprep.mubr.f32.mxu0 0.0
      %3411 = vmatmul.mubr.f32.gmra.mrb[0].mxu0 %v1543
      %v3412 = vpop.f32.mrb[0].mxu0
      %v3413 = vadd.f32 0.0, %v3412
      %v3414 = vpop.f32.mrb[0].mxu0
      %3415 = vmatprep.mubr.f32.mxu0 0.0
      %3416 = vmatmul.mubr.f32.gmra.mrb[0].mxu0 %v1546
      %v3417 = vpop.f32.mrb[0].mxu0
      %v3418 = vadd.f32 0.0, %v3417
      %v3419 = vpop.f32.mrb[0].mxu0
      %3420 = vmatprep.mubr.f32.mxu0 0.0
      %3421 = vmatmul.mubr.f32.gmra.mrb[0].mxu0 %v1549
      %v3422 = vpop.f32.mrb[0].mxu0
      %v3423 = vadd.f32 0.0, %v3422
      %v3424 = vpop.f32.mrb[0].mxu0
      %3425 = vmatprep.mubr.f32.mxu0 0.0
      %3426 = vmatmul.mubr.f32.gmra.mrb[0].mxu0 %v1552
      %v3427 = vpop.f32.mrb[0].mxu0
      %v3428 = vadd.f32 0.0, %v3427
      %v3429 = vpop.f32.mrb[0].mxu0
      %3430 = vmatprep.mubr.f32.mxu0 0.0
      %3431 = vmatmul.mubr.f32.gmra.mrb[0].mxu0 %v1555
      %v3432 = vpop.f32.mrb[0].mxu0
      %v3433 = vadd.f32 0.0, %v3432
      %v3434 = vpop.f32.mrb[0].mxu0
      %3435 = vmatprep.mubr.f32.mxu0 0.0
      %3436 = vmatmul.mubr.f32.gmra.mrb[0].mxu0 %v1558
      %v3437 = vpop.f32.mrb[0].mxu0
      %v3438 = vadd.f32 0.0, %v3437
      %v3439 = vpop.f32.mrb[0].mxu0
      %3440 = vmatprep.mubr.f32.mxu0 0.0
      %3441 = vmatmul.mubr.f32.gmra.mrb[0].mxu0 %v1561
      %v3442 = vpop.f32.mrb[0].mxu0
      %v3443 = vadd.f32 0.0, %v3442
      %v3444 = vpop.f32.mrb[0].mxu0
      %3445 = vmatprep.mubr.f32.mxu0 0.0
      %3446 = vmatmul.mubr.f32.gmra.mrb[0].mxu0 %v1564
      %v3447 = vpop.f32.mrb[0].mxu0
      %v3448 = vadd.f32 0.0, %v3447
      %v3449 = vpop.f32.mrb[0].mxu0
      %3450 = vmatprep.mubr.f32.mxu0 0.0
      %3451 = vmatmul.mubr.f32.gmra.mrb[0].mxu0 %v1567
      %v3452 = vpop.f32.mrb[0].mxu0
      %v3453 = vadd.f32 0.0, %v3452
      %v3454 = vpop.f32.mrb[0].mxu0
      %3455 = vmatprep.mubr.f32.mxu0 0.0
      %3456 = vmatmul.mubr.f32.gmra.mrb[0].mxu0 %v1570
      %v3457 = vpop.f32.mrb[0].mxu0
      %v3458 = vadd.f32 0.0, %v3457
      %v3459 = vpop.f32.mrb[0].mxu0
      %3460 = vmatprep.mubr.f32.mxu0 0.0
      %3461 = vmatmul.mubr.f32.gmra.mrb[0].mxu0 %v1573
      %v3462 = vpop.f32.mrb[0].mxu0
      %v3463 = vadd.f32 0.0, %v3462
      %v3464 = vpop.f32.mrb[0].mxu0
      %3465 = vmatprep.mubr.f32.mxu0 0.0
      %3466 = vmatmul.mubr.f32.gmra.mrb[0].mxu0 %v1576
      %v3467 = vpop.f32.mrb[0].mxu0
      %v3468 = vadd.f32 0.0, %v3467
      %v3469 = vpop.f32.mrb[0].mxu0
      %3470 = vmatprep.mubr.f32.mxu0 0.0
      %3471 = vmatmul.mubr.f32.gmra.mrb[0].mxu0 %v1579
      %v3472 = vpop.f32.mrb[0].mxu0
      %v3473 = vadd.f32 0.0, %v3472
      %v3474 = vpop.f32.mrb[0].mxu0
      %3475 = vmatprep.mubr.f32.mxu0 0.0
      %3476 = vmatmul.mubr.f32.gmra.mrb[0].mxu0 %v1582
      %v3477 = vpop.f32.mrb[0].mxu0
      %v3478 = vadd.f32 0.0, %v3477
      %v3479 = vpop.f32.mrb[0].mxu0
      %3480 = vmatprep.mubr.f32.mxu0 0.0
      %3481 = vmatmul.mubr.f32.gmra.mrb[0].mxu0 %v1585
      %v3482 = vpop.f32.mrb[0].mxu0
      %v3483 = vadd.f32 0.0, %v3482
      %v3484 = vpop.f32.mrb[0].mxu0
      %3485 = vmatprep.mubr.f32.mxu0 0.0
      %3486 = vmatmul.mubr.f32.gmra.mrb[0].mxu0 %v1588
      %v3487 = vpop.f32.mrb[0].mxu0
      %v3488 = vadd.f32 0.0, %v3487
      %v3489 = vpop.f32.mrb[0].mxu0
      %3490 = vmatprep.mubr.f32.mxu0 0.0
      %3491 = vmatmul.mubr.f32.gmra.mrb[0].mxu0 %v1591
      %v3492 = vpop.f32.mrb[0].mxu0
      %v3493 = vadd.f32 0.0, %v3492
      %v3494 = vpop.f32.mrb[0].mxu0
      %3495 = vmatprep.mubr.f32.mxu0 0.0
      %3496 = vmatmul.mubr.f32.gmra.mrb[0].mxu0 %v1594
      %v3497 = vpop.f32.mrb[0].mxu0
      %v3498 = vadd.f32 0.0, %v3497
      %v3499 = vpop.f32.mrb[0].mxu0
      %3500 = vmatprep.mubr.f32.mxu0 0.0
      %3501 = vmatmul.mubr.f32.gmra.mrb[0].mxu0 %v1597
      %v3502 = vpop.f32.mrb[0].mxu0
      %v3503 = vadd.f32 0.0, %v3502
      %v3504 = vpop.f32.mrb[0].mxu0
      %3505 = vmatprep.mubr.f32.mxu0 0.0
      %3506 = vmatmul.mubr.f32.gmra.mrb[0].mxu0 %v1600
      %v3507 = vpop.f32.mrb[0].mxu0
      %v3508 = vadd.f32 0.0, %v3507
      %v3509 = vpop.f32.mrb[0].mxu0
      %3510 = vmatprep.mubr.f32.mxu0 0.0
      %3511 = vmatmul.mubr.f32.gmra.mrb[0].mxu0 %v1603
      %v3512 = vpop.f32.mrb[0].mxu0
      %v3513 = vadd.f32 0.0, %v3512
      %v3514 = vpop.f32.mrb[0].mxu0
      %3515 = vmatprep.mubr.f32.mxu0 0.0
      %3516 = vmatmul.mubr.f32.gmra.mrb[0].mxu0 %v1606
      %v3517 = vpop.f32.mrb[0].mxu0
      %v3518 = vadd.f32 0.0, %v3517
      %v3519 = vpop.f32.mrb[0].mxu0
      %3520 = vmatprep.mubr.f32.mxu0 0.0
      %3521 = vmatmul.mubr.f32.gmra.mrb[0].mxu0 %v1609
      %v3522 = vpop.f32.mrb[0].mxu0
      %v3523 = vadd.f32 0.0, %v3522
      %v3524 = vpop.f32.mrb[0].mxu0
      %3525 = vmatprep.mubr.f32.mxu0 0.0
      %3526 = vmatmul.mubr.f32.gmra.mrb[0].mxu0 %v1612
      %v3527 = vpop.f32.mrb[0].mxu0
      %v3528 = vadd.f32 0.0, %v3527
      %v3529 = vpop.f32.mrb[0].mxu0
      %3530 = vmatprep.mubr.f32.mxu0 0.0
      %3531 = vmatmul.mubr.f32.gmra.mrb[0].mxu0 %v1615
      %v3532 = vpop.f32.mrb[0].mxu0
      %v3533 = vadd.f32 0.0, %v3532
      %v3534 = vpop.f32.mrb[0].mxu0
      %3535 = vmatprep.mubr.f32.mxu0 0.0
      %3536 = vmatmul.mubr.f32.gmra.mrb[0].mxu0 %v1618
      %v3537 = vpop.f32.mrb[0].mxu0
      %v3538 = vadd.f32 0.0, %v3537
      %v3539 = vpop.f32.mrb[0].mxu0
      %3540 = vmatprep.mubr.f32.mxu0 0.0
      %3541 = vmatmul.mubr.f32.gmra.mrb[0].mxu0 %v1621
      %v3542 = vpop.f32.mrb[0].mxu0
      %v3543 = vadd.f32 0.0, %v3542
      %v3544 = vpop.f32.mrb[0].mxu0
      %3545 = vmatprep.mubr.f32.mxu0 0.0
      %3546 = vmatmul.mubr.f32.gmra.mrb[0].mxu0 %v1624
      %v3547 = vpop.f32.mrb[0].mxu0
      %v3548 = vadd.f32 0.0, %v3547
      %v3549 = vpop.f32.mrb[0].mxu0
      %3550 = vmatprep.mubr.f32.mxu0 0.0
      %3551 = vmatmul.mubr.f32.gmra.mrb[0].mxu0 %v1627
      %v3552 = vpop.f32.mrb[0].mxu0
      %v3553 = vadd.f32 0.0, %v3552
      %v3554 = vpop.f32.mrb[0].mxu0
      %3555 = vmatprep.mubr.f32.mxu0 0.0
      %3556 = vmatmul.mubr.f32.gmra.mrb[0].mxu0 %v1630
      %v3557 = vpop.f32.mrb[0].mxu0
      %v3558 = vadd.f32 0.0, %v3557
      %v3559 = vpop.f32.mrb[0].mxu0
      %3560 = vmatprep.mubr.f32.mxu0 0.0
      %3561 = vmatmul.mubr.f32.gmra.mrb[0].mxu0 %v1633
      %v3562 = vpop.f32.mrb[0].mxu0
      %v3563 = vadd.f32 0.0, %v3562
      %v3564 = vpop.f32.mrb[0].mxu0
      %3565 = vmatprep.mubr.f32.mxu0 0.0
      %3566 = vmatmul.mubr.f32.gmra.mrb[0].mxu0 %v1636
      %v3567 = vpop.f32.mrb[0].mxu0
      %v3568 = vadd.f32 0.0, %v3567
      %v3569 = vpop.f32.mrb[0].mxu0
      %3570 = vmatprep.mubr.f32.mxu0 0.0
      %3571 = vmatmul.mubr.f32.gmra.mrb[0].mxu0 %v1639
      %v3572 = vpop.f32.mrb[0].mxu0
      %v3573 = vadd.f32 0.0, %v3572
      %v3574 = vpop.f32.mrb[0].mxu0
      %3575 = vmatprep.mubr.f32.mxu0 0.0
      %3576 = vmatmul.mubr.f32.gmra.mrb[0].mxu0 %v1642
      %v3577 = vpop.f32.mrb[0].mxu0
      %v3578 = vadd.f32 0.0, %v3577
      %v3579 = vpop.f32.mrb[0].mxu0
      %3580 = vmatprep.mubr.f32.mxu0 0.0
      %3581 = vmatmul.mubr.f32.gmra.mrb[0].mxu0 %v1645
      %v3582 = vpop.f32.mrb[0].mxu0
      %v3583 = vadd.f32 0.0, %v3582
      %v3584 = vpop.f32.mrb[0].mxu0
      %3585 = vmatprep.mubr.f32.mxu0 0.0
      %3586 = vmatmul.mubr.f32.gmra.mrb[0].mxu0 %v1648
      %v3587 = vpop.f32.mrb[0].mxu0
      %v3588 = vadd.f32 0.0, %v3587
      %v3589 = vpop.f32.mrb[0].mxu0
      %3590 = vmatprep.mubr.f32.mxu0 0.0
      %3591 = vmatmul.mubr.f32.gmra.mrb[0].mxu0 %v1651
      %v3592 = vpop.f32.mrb[0].mxu0
      %v3593 = vadd.f32 0.0, %v3592
      %v3594 = vpop.f32.mrb[0].mxu0
      %3595 = vmatprep.mubr.f32.mxu0 0.0
      %3596 = vmatmul.mubr.f32.gmra.mrb[0].mxu0 %v1654
      %v3597 = vpop.f32.mrb[0].mxu0
      %v3598 = vadd.f32 0.0, %v3597
      %v3599 = vpop.f32.mrb[0].mxu0
      %3600 = vmatprep.mubr.f32.mxu0 0.0
      %3601 = vmatmul.mubr.f32.gmra.mrb[0].mxu0 %v1657
      %v3602 = vpop.f32.mrb[0].mxu0
      %v3603 = vadd.f32 0.0, %v3602
      %v3604 = vpop.f32.mrb[0].mxu0
      %3605 = vmatprep.mubr.f32.mxu0 0.0
      %3606 = vmatmul.mubr.f32.gmra.mrb[0].mxu0 %v1660
      %v3607 = vpop.f32.mrb[0].mxu0
      %v3608 = vadd.f32 0.0, %v3607
      %v3609 = vpop.f32.mrb[0].mxu0
      %3610 = vmatprep.mubr.f32.mxu0 0.0
      %3611 = vmatmul.mubr.f32.gmra.mrb[0].mxu0 %v1663
      %v3612 = vpop.f32.mrb[0].mxu0
      %v3613 = vadd.f32 0.0, %v3612
      %v3614 = vpop.f32.mrb[0].mxu0
      %3615 = vmatprep.mubr.f32.mxu0 0.0
      %3616 = vmatmul.mubr.f32.gmra.mrb[0].mxu0 %v1666
      %v3617 = vpop.f32.mrb[0].mxu0
      %v3618 = vadd.f32 0.0, %v3617
      %v3619 = vpop.f32.mrb[0].mxu0
      %3620 = vmatprep.mubr.f32.mxu0 0.0
      %3621 = vmatmul.mubr.f32.gmra.mrb[0].mxu0 %v1669
      %v3622 = vpop.f32.mrb[0].mxu0
      %v3623 = vadd.f32 0.0, %v3622
      %v3624 = vpop.f32.mrb[0].mxu0
      %3625 = vmatprep.mubr.f32.mxu0 0.0
      %3626 = vmatmul.mubr.f32.gmra.mrb[0].mxu0 %v1672
      %v3627 = vpop.f32.mrb[0].mxu0
      %v3628 = vadd.f32 0.0, %v3627
      %v3629 = vpop.f32.mrb[0].mxu0
      %3630 = vmatprep.mubr.f32.mxu0 0.0
      %3631 = vmatmul.mubr.f32.gmra.mrb[0].mxu0 %v1675
      %v3632 = vpop.f32.mrb[0].mxu0
      %v3633 = vadd.f32 0.0, %v3632
      %v3634 = vpop.f32.mrb[0].mxu0
      %3635 = vmatprep.mubr.f32.mxu0 0.0
      %3636 = vmatmul.mubr.f32.gmra.mrb[0].mxu0 %v1678
      %v3637 = vpop.f32.mrb[0].mxu0
      %v3638 = vadd.f32 0.0, %v3637
      %v3639 = vpop.f32.mrb[0].mxu0
      %3640 = vmatprep.mubr.f32.mxu0 0.0
      %3641 = vmatmul.mubr.f32.gmra.mrb[0].mxu0 %v1681
      %v3642 = vpop.f32.mrb[0].mxu0
      %v3643 = vadd.f32 0.0, %v3642
      %v3644 = vpop.f32.mrb[0].mxu0
      %3645 = vmatprep.mubr.f32.mxu0 0.0
      %3646 = vmatmul.mubr.f32.gmra.mrb[0].mxu0 %v1684
      %v3647 = vpop.f32.mrb[0].mxu0
      %v3648 = vadd.f32 0.0, %v3647
      %v3649 = vpop.f32.mrb[0].mxu0
      %3650 = vmatprep.mubr.f32.mxu0 0.0
      %3651 = vmatmul.mubr.f32.gmra.mrb[0].mxu0 %v1687
      %v3652 = vpop.f32.mrb[0].mxu0
      %v3653 = vadd.f32 0.0, %v3652
      %v3654 = vpop.f32.mrb[0].mxu0
      %3655 = vmatprep.mubr.f32.mxu0 0.0
      %3656 = vmatmul.mubr.f32.gmra.mrb[0].mxu0 %v1690
      %v3657 = vpop.f32.mrb[0].mxu0
      %v3658 = vadd.f32 0.0, %v3657
      %v3659 = vpop.f32.mrb[0].mxu0
      %3660 = vmatprep.mubr.f32.mxu0 0.0
      %3661 = vmatmul.mubr.f32.gmra.mrb[0].mxu0 %v1693
      %v3662 = vpop.f32.mrb[0].mxu0
      %v3663 = vadd.f32 0.0, %v3662
      %v3664 = vpop.f32.mrb[0].mxu0
      %3665 = vmatprep.mubr.f32.mxu0 0.0
      %3666 = vmatmul.mubr.f32.gmra.mrb[0].mxu0 %v1696
      %v3667 = vpop.f32.mrb[0].mxu0
      %v3668 = vadd.f32 0.0, %v3667
      %v3669 = vpop.f32.mrb[0].mxu0
      %3670 = vmatprep.mubr.f32.mxu0 0.0
      %3671 = vmatmul.mubr.f32.gmra.mrb[0].mxu0 %v1699
      %v3672 = vpop.f32.mrb[0].mxu0
      %v3673 = vadd.f32 0.0, %v3672
      %v3674 = vpop.f32.mrb[0].mxu0
      %3675 = vmatprep.mubr.f32.mxu0 0.0
      %3676 = vmatmul.mubr.f32.gmra.mrb[0].mxu0 %v1702
      %v3677 = vpop.f32.mrb[0].mxu0
      %v3678 = vadd.f32 0.0, %v3677
      %v3679 = vpop.f32.mrb[0].mxu0
      %3680 = vmatprep.mubr.f32.mxu0 0.0
      %3681 = vmatmul.mubr.f32.gmra.mrb[0].mxu0 %v1705
      %v3682 = vpop.f32.mrb[0].mxu0
      %v3683 = vadd.f32 0.0, %v3682
      %v3684 = vpop.f32.mrb[0].mxu0
      %3685 = vmatprep.mubr.f32.mxu0 0.0
      %3686 = vmatmul.mubr.f32.gmra.mrb[0].mxu0 %v1708
      %v3687 = vpop.f32.mrb[0].mxu0
      %v3688 = vadd.f32 0.0, %v3687
      %v3689 = vpop.f32.mrb[0].mxu0
      %3690 = vmatprep.mubr.f32.mxu0 0.0
      %3691 = vmatmul.mubr.f32.gmra.mrb[0].mxu0 %v1711
      %v3692 = vpop.f32.mrb[0].mxu0
      %v3693 = vadd.f32 0.0, %v3692
      %v3694 = vpop.f32.mrb[0].mxu0
      %3695 = vmatprep.mubr.f32.mxu0 0.0
      %3696 = vmatmul.mubr.f32.gmra.mrb[0].mxu0 %v1714
      %v3697 = vpop.f32.mrb[0].mxu0
      %v3698 = vadd.f32 0.0, %v3697
      %v3699 = vpop.f32.mrb[0].mxu0
      %3700 = vmatprep.mubr.f32.mxu0 0.0
      %3701 = vmatmul.mubr.f32.gmra.mrb[0].mxu0 %v1717
      %v3702 = vpop.f32.mrb[0].mxu0
      %v3703 = vadd.f32 0.0, %v3702
      %v3704 = vpop.f32.mrb[0].mxu0
      %3705 = vmatprep.mubr.f32.mxu0 0.0
      %3706 = vmatmul.mubr.f32.gmra.mrb[0].mxu0 %v1720
      %v3707 = vpop.f32.mrb[0].mxu0
      %v3708 = vadd.f32 0.0, %v3707
      %v3709 = vpop.f32.mrb[0].mxu0
      %3710 = vmatprep.mubr.f32.mxu0 0.0
      %3711 = vmatmul.mubr.f32.gmra.mrb[0].mxu0 %v1723
      %v3712 = vpop.f32.mrb[0].mxu0
      %v3713 = vadd.f32 0.0, %v3712
      %v3714 = vpop.f32.mrb[0].mxu0
      %3715 = vmatprep.mubr.f32.mxu0 0.0
      %3716 = vmatmul.mubr.f32.gmra.mrb[0].mxu0 %v1726
      %v3717 = vpop.f32.mrb[0].mxu0
      %v3718 = vadd.f32 0.0, %v3717
      %v3719 = vpop.f32.mrb[0].mxu0
      %3720 = vmatprep.mubr.f32.mxu0 0.0
      %3721 = vmatmul.mubr.f32.gmra.mrb[0].mxu0 %v1729
      %v3722 = vpop.f32.mrb[0].mxu0
      %v3723 = vadd.f32 0.0, %v3722
      %v3724 = vpop.f32.mrb[0].mxu0
      %3725 = vmatprep.mubr.f32.mxu0 0.0
      %3726 = vmatmul.mubr.f32.gmra.mrb[0].mxu0 %v1732
      %v3727 = vpop.f32.mrb[0].mxu0
      %v3728 = vadd.f32 0.0, %v3727
      %v3729 = vpop.f32.mrb[0].mxu0
      %3730 = vmatprep.mubr.f32.mxu0 0.0
      %3731 = vmatmul.mubr.f32.gmra.mrb[0].mxu0 %v1735
      %v3732 = vpop.f32.mrb[0].mxu0
      %v3733 = vadd.f32 0.0, %v3732
      %v3734 = vpop.f32.mrb[0].mxu0
      %3735 = vmatprep.mubr.f32.mxu0 0.0
      %3736 = vmatmul.mubr.f32.gmra.mrb[0].mxu0 %v1738
      %v3737 = vpop.f32.mrb[0].mxu0
      %v3738 = vadd.f32 0.0, %v3737
      %v3739 = vpop.f32.mrb[0].mxu0
      %3740 = vmatprep.mubr.f32.mxu0 0.0
      %3741 = vmatmul.mubr.f32.gmra.mrb[0].mxu0 %v1741
      %v3742 = vpop.f32.mrb[0].mxu0
      %v3743 = vadd.f32 0.0, %v3742
      %v3744 = vpop.f32.mrb[0].mxu0
      %3745 = vmatprep.mubr.f32.mxu0 0.0
      %3746 = vmatmul.mubr.f32.gmra.mrb[0].mxu0 %v1744
      %v3747 = vpop.f32.mrb[0].mxu0
      %v3748 = vadd.f32 0.0, %v3747
      %v3749 = vpop.f32.mrb[0].mxu0
      %3750 = vmatprep.mubr.f32.mxu0 0.0
      %3751 = vmatmul.mubr.f32.gmra.mrb[0].mxu0 %v1747
      %v3752 = vpop.f32.mrb[0].mxu0
      %v3753 = vadd.f32 0.0, %v3752
      %v3754 = vpop.f32.mrb[0].mxu0
      %3755 = vmatprep.mubr.f32.mxu0 0.0
      %3756 = vmatmul.mubr.f32.gmra.mrb[0].mxu0 %v1750
      %v3757 = vpop.f32.mrb[0].mxu0
      %v3758 = vadd.f32 0.0, %v3757
      %v3759 = vpop.f32.mrb[0].mxu0
      %3760 = vmatprep.mubr.f32.mxu0 0.0
      %3761 = vmatmul.mubr.f32.gmra.mrb[0].mxu0 %v1753
      %v3762 = vpop.f32.mrb[0].mxu0
      %v3763 = vadd.f32 0.0, %v3762
      %v3764 = vpop.f32.mrb[0].mxu0
      %3765 = vmatprep.mubr.f32.mxu0 0.0
      %3766 = vmatmul.mubr.f32.gmra.mrb[0].mxu0 %v1756
      %v3767 = vpop.f32.mrb[0].mxu0
      %v3768 = vadd.f32 0.0, %v3767
      %v3769 = vpop.f32.mrb[0].mxu0
      %3770 = vmatprep.mubr.f32.mxu0 0.0
      %3771 = vmatmul.mubr.f32.gmra.mrb[0].mxu0 %v1759
      %v3772 = vpop.f32.mrb[0].mxu0
      %v3773 = vadd.f32 0.0, %v3772
      %v3774 = vpop.f32.mrb[0].mxu0
      %3775 = vmatprep.mubr.f32.mxu0 0.0
      %3776 = vmatmul.mubr.f32.gmra.mrb[0].mxu0 %v1762
      %v3777 = vpop.f32.mrb[0].mxu0
      %v3778 = vadd.f32 0.0, %v3777
      %v3779 = vpop.f32.mrb[0].mxu0
      %3780 = vmatprep.mubr.f32.mxu0 0.0
      %3781 = vmatmul.mubr.f32.gmra.mrb[0].mxu0 %v1765
      %v3782 = vpop.f32.mrb[0].mxu0
      %v3783 = vadd.f32 0.0, %v3782
      %v3784 = vpop.f32.mrb[0].mxu0
      %3785 = vmatprep.mubr.f32.mxu0 0.0
      %3786 = vmatmul.mubr.f32.gmra.mrb[0].mxu0 %v1768
      %v3787 = vpop.f32.mrb[0].mxu0
      %v3788 = vadd.f32 0.0, %v3787
      %v3789 = vpop.f32.mrb[0].mxu0
      %3790 = vmatprep.mubr.f32.mxu0 0.0
      %3791 = vmatmul.mubr.f32.gmra.mrb[0].mxu0 %v1771
      %v3792 = vpop.f32.mrb[0].mxu0
      %v3793 = vadd.f32 0.0, %v3792
      %v3794 = vpop.f32.mrb[0].mxu0
      %3795 = vmatprep.mubr.f32.mxu0 0.0
      %3796 = vmatmul.mubr.f32.gmra.mrb[0].mxu0 %v1774
      %v3797 = vpop.f32.mrb[0].mxu0
      %v3798 = vadd.f32 0.0, %v3797
      %v3799 = vpop.f32.mrb[0].mxu0
      %3800 = vdwg.mxu0
      %v3801 = vld [vmem:[%s2] sm:$0x1]
      %v3803 = vlaneseq
      %v3804 = vshrl.u32 %v3803, 7
      %v3805 = vsub.s32 0, %v3804
      %v3806 = vrot.slane %v3801, %v3805
      %v3808 = vmul.f32 %v1843, %v3806
      %v3809 = vmul.f32 %v1848, %v3806
      %v3810 = vmul.f32 %v1853, %v3806
      %v3811 = vmul.f32 %v1858, %v3806
      %v3812 = vmul.f32 %v1863, %v3806
      %v3813 = vmul.f32 %v1868, %v3806
      %v3814 = vmul.f32 %v1873, %v3806
      %v3815 = vmul.f32 %v1878, %v3806
      %v3816 = vmul.f32 %v1883, %v3806
      %v3817 = vmul.f32 %v1888, %v3806
      %v3818 = vmul.f32 %v1893, %v3806
      %v3819 = vmul.f32 %v1898, %v3806
      %v3820 = vmul.f32 %v1903, %v3806
      %v3821 = vmul.f32 %v1908, %v3806
      %v3822 = vmul.f32 %v1913, %v3806
      %v3823 = vmul.f32 %v1918, %v3806
      %v3824 = vmul.f32 %v1923, %v3806
      %v3825 = vmul.f32 %v1928, %v3806
      %v3826 = vmul.f32 %v1933, %v3806
      %v3827 = vmul.f32 %v1938, %v3806
      %v3828 = vmul.f32 %v1943, %v3806
      %v3829 = vmul.f32 %v1948, %v3806
      %v3830 = vmul.f32 %v1953, %v3806
      %v3831 = vmul.f32 %v1958, %v3806
      %v3832 = vmul.f32 %v1963, %v3806
      %v3833 = vmul.f32 %v1968, %v3806
      %v3834 = vmul.f32 %v1973, %v3806
      %v3835 = vmul.f32 %v1978, %v3806
      %v3836 = vmul.f32 %v1983, %v3806
      %v3837 = vmul.f32 %v1988, %v3806
      %v3838 = vmul.f32 %v1993, %v3806
      %v3839 = vmul.f32 %v1998, %v3806
      %v3840 = vmul.f32 %v2003, %v3806
      %v3841 = vmul.f32 %v2008, %v3806
      %v3842 = vmul.f32 %v2013, %v3806
      %v3843 = vmul.f32 %v2018, %v3806
      %v3844 = vmul.f32 %v2023, %v3806
      %v3845 = vmul.f32 %v2028, %v3806
      %v3846 = vmul.f32 %v2033, %v3806
      %v3847 = vmul.f32 %v2038, %v3806
      %v3848 = vmul.f32 %v2043, %v3806
      %v3849 = vmul.f32 %v2048, %v3806
      %v3850 = vmul.f32 %v2053, %v3806
      %v3851 = vmul.f32 %v2058, %v3806
      %v3852 = vmul.f32 %v2063, %v3806
      %v3853 = vmul.f32 %v2068, %v3806
      %v3854 = vmul.f32 %v2073, %v3806
      %v3855 = vmul.f32 %v2078, %v3806
      %v3856 = vmul.f32 %v2083, %v3806
      %v3857 = vmul.f32 %v2088, %v3806
      %v3858 = vmul.f32 %v2093, %v3806
      %v3859 = vmul.f32 %v2098, %v3806
      %v3860 = vmul.f32 %v2103, %v3806
      %v3861 = vmul.f32 %v2108, %v3806
      %v3862 = vmul.f32 %v2113, %v3806
      %v3863 = vmul.f32 %v2118, %v3806
      %v3864 = vmul.f32 %v2123, %v3806
      %v3865 = vmul.f32 %v2128, %v3806
      %v3866 = vmul.f32 %v2133, %v3806
      %v3867 = vmul.f32 %v2138, %v3806
      %v3868 = vmul.f32 %v2143, %v3806
      %v3869 = vmul.f32 %v2148, %v3806
      %v3870 = vmul.f32 %v2153, %v3806
      %v3871 = vmul.f32 %v2158, %v3806
      %v3872 = vmul.f32 %v2163, %v3806
      %v3873 = vmul.f32 %v2168, %v3806
      %v3874 = vmul.f32 %v2173, %v3806
      %v3875 = vmul.f32 %v2178, %v3806
      %v3876 = vmul.f32 %v2183, %v3806
      %v3877 = vmul.f32 %v2188, %v3806
      %v3878 = vmul.f32 %v2193, %v3806
      %v3879 = vmul.f32 %v2198, %v3806
      %v3880 = vmul.f32 %v2203, %v3806
      %v3881 = vmul.f32 %v2208, %v3806
      %v3882 = vmul.f32 %v2213, %v3806
      %v3883 = vmul.f32 %v2218, %v3806
      %v3884 = vmul.f32 %v2223, %v3806
      %v3885 = vmul.f32 %v2228, %v3806
      %v3886 = vmul.f32 %v2233, %v3806
      %v3887 = vmul.f32 %v2238, %v3806
      %v3888 = vmul.f32 %v2243, %v3806
      %v3889 = vmul.f32 %v2248, %v3806
      %v3890 = vmul.f32 %v2253, %v3806
      %v3891 = vmul.f32 %v2258, %v3806
      %v3892 = vmul.f32 %v2263, %v3806
      %v3893 = vmul.f32 %v2268, %v3806
      %v3894 = vmul.f32 %v2273, %v3806
      %v3895 = vmul.f32 %v2278, %v3806
      %v3896 = vmul.f32 %v2283, %v3806
      %v3897 = vmul.f32 %v2288, %v3806
      %v3898 = vmul.f32 %v2293, %v3806
      %v3899 = vmul.f32 %v2298, %v3806
      %v3900 = vmul.f32 %v2303, %v3806
      %v3901 = vmul.f32 %v2308, %v3806
      %v3902 = vmul.f32 %v2313, %v3806
      %v3903 = vmul.f32 %v2318, %v3806
      %v3904 = vmul.f32 %v2323, %v3806
      %v3905 = vmul.f32 %v2328, %v3806
      %v3906 = vmul.f32 %v2333, %v3806
      %v3907 = vmul.f32 %v2338, %v3806
      %v3908 = vmul.f32 %v2343, %v3806
      %v3909 = vmul.f32 %v2348, %v3806
      %v3910 = vmul.f32 %v2353, %v3806
      %v3911 = vmul.f32 %v2358, %v3806
      %v3912 = vmul.f32 %v2363, %v3806
      %v3913 = vmul.f32 %v2368, %v3806
      %v3914 = vmul.f32 %v2373, %v3806
      %v3915 = vmul.f32 %v2378, %v3806
      %v3916 = vmul.f32 %v2383, %v3806
      %v3917 = vmul.f32 %v2388, %v3806
      %v3918 = vmul.f32 %v2393, %v3806
      %v3919 = vmul.f32 %v2398, %v3806
      %v3920 = vmul.f32 %v2403, %v3806
      %v3921 = vmul.f32 %v2408, %v3806
      %v3922 = vmul.f32 %v2413, %v3806
      %v3923 = vmul.f32 %v2418, %v3806
      %v3924 = vmul.f32 %v2423, %v3806
      %v3925 = vmul.f32 %v2428, %v3806
      %v3926 = vmul.f32 %v2433, %v3806
      %v3927 = vmul.f32 %v2438, %v3806
      %v3928 = vmul.f32 %v2443, %v3806
      %v3929 = vmul.f32 %v2448, %v3806
      %v3930 = vmul.f32 %v2453, %v3806
      %v3931 = vmul.f32 %v2458, %v3806
      %v3932 = vmul.f32 %v2463, %v3806
      %v3933 = vmul.f32 %v2468, %v3806
      %v3934 = vmul.f32 %v2473, %v3806
      %v3935 = vmul.f32 %v2478, %v3806
      %v3936 = vmul.f32 %v2483, %v3806
      %v3937 = vmul.f32 %v2488, %v3806
      %v3938 = vmul.f32 %v2493, %v3806
      %v3939 = vmul.f32 %v2498, %v3806
      %v3940 = vmul.f32 %v2503, %v3806
      %v3941 = vmul.f32 %v2508, %v3806
      %v3942 = vmul.f32 %v2513, %v3806
      %v3943 = vmul.f32 %v2518, %v3806
      %v3944 = vmul.f32 %v2523, %v3806
      %v3945 = vmul.f32 %v2528, %v3806
      %v3946 = vmul.f32 %v2533, %v3806
      %v3947 = vmul.f32 %v2538, %v3806
      %v3948 = vmul.f32 %v2543, %v3806
      %v3949 = vmul.f32 %v2548, %v3806
      %v3950 = vmul.f32 %v2553, %v3806
      %v3951 = vmul.f32 %v2558, %v3806
      %v3952 = vmul.f32 %v2563, %v3806
      %v3953 = vmul.f32 %v2568, %v3806
      %v3954 = vmul.f32 %v2573, %v3806
      %v3955 = vmul.f32 %v2578, %v3806
      %v3956 = vmul.f32 %v2583, %v3806
      %v3957 = vmul.f32 %v2588, %v3806
      %v3958 = vmul.f32 %v2593, %v3806
      %v3959 = vmul.f32 %v2598, %v3806
      %v3960 = vmul.f32 %v2603, %v3806
      %v3961 = vmul.f32 %v2608, %v3806
      %v3962 = vmul.f32 %v2613, %v3806
      %v3963 = vmul.f32 %v2618, %v3806
      %v3964 = vmul.f32 %v2623, %v3806
      %v3965 = vmul.f32 %v2628, %v3806
      %v3966 = vmul.f32 %v2633, %v3806
      %v3967 = vmul.f32 %v2638, %v3806
      %v3968 = vmul.f32 %v2643, %v3806
      %v3969 = vmul.f32 %v2648, %v3806
      %v3970 = vmul.f32 %v2653, %v3806
      %v3971 = vmul.f32 %v2658, %v3806
      %v3972 = vmul.f32 %v2663, %v3806
      %v3973 = vmul.f32 %v2668, %v3806
      %v3974 = vmul.f32 %v2673, %v3806
      %v3975 = vmul.f32 %v2678, %v3806
      %v3976 = vmul.f32 %v2683, %v3806
      %v3977 = vmul.f32 %v2688, %v3806
      %v3978 = vmul.f32 %v2693, %v3806
      %v3979 = vmul.f32 %v2698, %v3806
      %v3980 = vmul.f32 %v2703, %v3806
      %v3981 = vmul.f32 %v2708, %v3806
      %v3982 = vmul.f32 %v2713, %v3806
      %v3983 = vmul.f32 %v2718, %v3806
      %v3984 = vmul.f32 %v2723, %v3806
      %v3985 = vmul.f32 %v2728, %v3806
      %v3986 = vmul.f32 %v2733, %v3806
      %v3987 = vmul.f32 %v2738, %v3806
      %v3988 = vmul.f32 %v2743, %v3806
      %v3989 = vmul.f32 %v2748, %v3806
      %v3990 = vmul.f32 %v2753, %v3806
      %v3991 = vmul.f32 %v2758, %v3806
      %v3992 = vmul.f32 %v2763, %v3806
      %v3993 = vmul.f32 %v2768, %v3806
      %v3994 = vmul.f32 %v2773, %v3806
      %v3995 = vmul.f32 %v2778, %v3806
      %v3996 = vmul.f32 %v2783, %v3806
      %v3997 = vmul.f32 %v2788, %v3806
      %v3998 = vmul.f32 %v2793, %v3806
      %v3999 = vmul.f32 %v2798, %v3806
      %v4000 = vmul.f32 %v2803, %v3806
      %v4001 = vmul.f32 %v2808, %v3806
      %v4002 = vmul.f32 %v2813, %v3806
      %v4003 = vmul.f32 %v2818, %v3806
      %v4004 = vmul.f32 %v2823, %v3806
      %v4005 = vmul.f32 %v2828, %v3806
      %v4006 = vmul.f32 %v2833, %v3806
      %v4007 = vmul.f32 %v2838, %v3806
      %v4008 = vmul.f32 %v2843, %v3806
      %v4009 = vmul.f32 %v2848, %v3806
      %v4010 = vmul.f32 %v2853, %v3806
      %v4011 = vmul.f32 %v2858, %v3806
      %v4012 = vmul.f32 %v2863, %v3806
      %v4013 = vmul.f32 %v2868, %v3806
      %v4014 = vmul.f32 %v2873, %v3806
      %v4015 = vmul.f32 %v2878, %v3806
      %v4016 = vmul.f32 %v2883, %v3806
      %v4017 = vmul.f32 %v2888, %v3806
      %v4018 = vmul.f32 %v2893, %v3806
      %v4019 = vmul.f32 %v2898, %v3806
      %v4020 = vmul.f32 %v2903, %v3806
      %v4021 = vmul.f32 %v2908, %v3806
      %v4022 = vmul.f32 %v2913, %v3806
      %v4023 = vmul.f32 %v2918, %v3806
      %v4024 = vmul.f32 %v2923, %v3806
      %v4025 = vmul.f32 %v2928, %v3806
      %v4026 = vmul.f32 %v2933, %v3806
      %v4027 = vmul.f32 %v2938, %v3806
      %v4028 = vmul.f32 %v2943, %v3806
      %v4029 = vmul.f32 %v2948, %v3806
      %v4030 = vmul.f32 %v2953, %v3806
      %v4031 = vmul.f32 %v2958, %v3806
      %v4032 = vmul.f32 %v2963, %v3806
      %v4033 = vmul.f32 %v2968, %v3806
      %v4034 = vmul.f32 %v2973, %v3806
      %v4035 = vmul.f32 %v2978, %v3806
      %v4036 = vmul.f32 %v2983, %v3806
      %v4037 = vmul.f32 %v2988, %v3806
      %v4038 = vmul.f32 %v2993, %v3806
      %v4039 = vmul.f32 %v2998, %v3806
      %v4040 = vmul.f32 %v3003, %v3806
      %v4041 = vmul.f32 %v3008, %v3806
      %v4042 = vmul.f32 %v3013, %v3806
      %v4043 = vmul.f32 %v3018, %v3806
      %v4044 = vmul.f32 %v3023, %v3806
      %v4045 = vmul.f32 %v3028, %v3806
      %v4046 = vmul.f32 %v3033, %v3806
      %v4047 = vmul.f32 %v3038, %v3806
      %v4048 = vmul.f32 %v3043, %v3806
      %v4049 = vmul.f32 %v3048, %v3806
      %v4050 = vmul.f32 %v3053, %v3806
      %v4051 = vmul.f32 %v3058, %v3806
      %v4052 = vmul.f32 %v3063, %v3806
      %v4053 = vmul.f32 %v3068, %v3806
      %v4054 = vmul.f32 %v3073, %v3806
      %v4055 = vmul.f32 %v3078, %v3806
      %v4056 = vmul.f32 %v3083, %v3806
      %v4057 = vmul.f32 %v3088, %v3806
      %v4058 = vmul.f32 %v3093, %v3806
      %v4059 = vmul.f32 %v3098, %v3806
      %v4060 = vmul.f32 %v3103, %v3806
      %v4061 = vmul.f32 %v3108, %v3806
      %v4062 = vmul.f32 %v3113, %v3806
      %v4063 = vmul.f32 %v3118, %v3806
      %v4064 = vmul.f32 %v3123, %v3806
      %v4065 = vmul.f32 %v3128, %v3806
      %v4066 = vmul.f32 %v3133, %v3806
      %v4067 = vmul.f32 %v3138, %v3806
      %v4068 = vmul.f32 %v3143, %v3806
      %v4069 = vmul.f32 %v3148, %v3806
      %v4070 = vmul.f32 %v3153, %v3806
      %v4071 = vmul.f32 %v3158, %v3806
      %v4072 = vmul.f32 %v3163, %v3806
      %v4073 = vmul.f32 %v3168, %v3806
      %v4074 = vmul.f32 %v3173, %v3806
      %v4075 = vmul.f32 %v3178, %v3806
      %v4076 = vmul.f32 %v3183, %v3806
      %v4077 = vmul.f32 %v3188, %v3806
      %v4078 = vmul.f32 %v3193, %v3806
      %v4079 = vmul.f32 %v3198, %v3806
      %v4080 = vmul.f32 %v3203, %v3806
      %v4081 = vmul.f32 %v3208, %v3806
      %v4082 = vmul.f32 %v3213, %v3806
      %v4083 = vmul.f32 %v3218, %v3806
      %v4084 = vmul.f32 %v3223, %v3806
      %v4085 = vmul.f32 %v3228, %v3806
      %v4086 = vmul.f32 %v3233, %v3806
      %v4087 = vmul.f32 %v3238, %v3806
      %v4088 = vmul.f32 %v3243, %v3806
      %v4089 = vmul.f32 %v3248, %v3806
      %v4090 = vmul.f32 %v3253, %v3806
      %v4091 = vmul.f32 %v3258, %v3806
      %v4092 = vmul.f32 %v3263, %v3806
      %v4093 = vmul.f32 %v3268, %v3806
      %v4094 = vmul.f32 %v3273, %v3806
      %v4095 = vmul.f32 %v3278, %v3806
      %v4096 = vmul.f32 %v3283, %v3806
      %v4097 = vmul.f32 %v3288, %v3806
      %v4098 = vmul.f32 %v3293, %v3806
      %v4099 = vmul.f32 %v3298, %v3806
      %v4100 = vmul.f32 %v3303, %v3806
      %v4101 = vmul.f32 %v3308, %v3806
      %v4102 = vmul.f32 %v3313, %v3806
      %v4103 = vmul.f32 %v3318, %v3806
      %v4104 = vmul.f32 %v3323, %v3806
      %v4105 = vmul.f32 %v3328, %v3806
      %v4106 = vmul.f32 %v3333, %v3806
      %v4107 = vmul.f32 %v3338, %v3806
      %v4108 = vmul.f32 %v3343, %v3806
      %v4109 = vmul.f32 %v3348, %v3806
      %v4110 = vmul.f32 %v3353, %v3806
      %v4111 = vmul.f32 %v3358, %v3806
      %v4112 = vmul.f32 %v3363, %v3806
      %v4113 = vmul.f32 %v3368, %v3806
      %v4114 = vmul.f32 %v3373, %v3806
      %v4115 = vmul.f32 %v3378, %v3806
      %v4116 = vmul.f32 %v3383, %v3806
      %v4117 = vmul.f32 %v3388, %v3806
      %v4118 = vmul.f32 %v3393, %v3806
      %v4119 = vmul.f32 %v3398, %v3806
      %v4120 = vmul.f32 %v3403, %v3806
      %v4121 = vmul.f32 %v3408, %v3806
      %v4122 = vmul.f32 %v3413, %v3806
      %v4123 = vmul.f32 %v3418, %v3806
      %v4124 = vmul.f32 %v3423, %v3806
      %v4125 = vmul.f32 %v3428, %v3806
      %v4126 = vmul.f32 %v3433, %v3806
      %v4127 = vmul.f32 %v3438, %v3806
      %v4128 = vmul.f32 %v3443, %v3806
      %v4129 = vmul.f32 %v3448, %v3806
      %v4130 = vmul.f32 %v3453, %v3806
      %v4131 = vmul.f32 %v3458, %v3806
      %v4132 = vmul.f32 %v3463, %v3806
      %v4133 = vmul.f32 %v3468, %v3806
      %v4134 = vmul.f32 %v3473, %v3806
      %v4135 = vmul.f32 %v3478, %v3806
      %v4136 = vmul.f32 %v3483, %v3806
      %v4137 = vmul.f32 %v3488, %v3806
      %v4138 = vmul.f32 %v3493, %v3806
      %v4139 = vmul.f32 %v3498, %v3806
      %v4140 = vmul.f32 %v3503, %v3806
      %v4141 = vmul.f32 %v3508, %v3806
      %v4142 = vmul.f32 %v3513, %v3806
      %v4143 = vmul.f32 %v3518, %v3806
      %v4144 = vmul.f32 %v3523, %v3806
      %v4145 = vmul.f32 %v3528, %v3806
      %v4146 = vmul.f32 %v3533, %v3806
      %v4147 = vmul.f32 %v3538, %v3806
      %v4148 = vmul.f32 %v3543, %v3806
      %v4149 = vmul.f32 %v3548, %v3806
      %v4150 = vmul.f32 %v3553, %v3806
      %v4151 = vmul.f32 %v3558, %v3806
      %v4152 = vmul.f32 %v3563, %v3806
      %v4153 = vmul.f32 %v3568, %v3806
      %v4154 = vmul.f32 %v3573, %v3806
      %v4155 = vmul.f32 %v3578, %v3806
      %v4156 = vmul.f32 %v3583, %v3806
      %v4157 = vmul.f32 %v3588, %v3806
      %v4158 = vmul.f32 %v3593, %v3806
      %v4159 = vmul.f32 %v3598, %v3806
      %v4160 = vmul.f32 %v3603, %v3806
      %v4161 = vmul.f32 %v3608, %v3806
      %v4162 = vmul.f32 %v3613, %v3806
      %v4163 = vmul.f32 %v3618, %v3806
      %v4164 = vmul.f32 %v3623, %v3806
      %v4165 = vmul.f32 %v3628, %v3806
      %v4166 = vmul.f32 %v3633, %v3806
      %v4167 = vmul.f32 %v3638, %v3806
      %v4168 = vmul.f32 %v3643, %v3806
      %v4169 = vmul.f32 %v3648, %v3806
      %v4170 = vmul.f32 %v3653, %v3806
      %v4171 = vmul.f32 %v3658, %v3806
      %v4172 = vmul.f32 %v3663, %v3806
      %v4173 = vmul.f32 %v3668, %v3806
      %v4174 = vmul.f32 %v3673, %v3806
      %v4175 = vmul.f32 %v3678, %v3806
      %v4176 = vmul.f32 %v3683, %v3806
      %v4177 = vmul.f32 %v3688, %v3806
      %v4178 = vmul.f32 %v3693, %v3806
      %v4179 = vmul.f32 %v3698, %v3806
      %v4180 = vmul.f32 %v3703, %v3806
      %v4181 = vmul.f32 %v3708, %v3806
      %v4182 = vmul.f32 %v3713, %v3806
      %v4183 = vmul.f32 %v3718, %v3806
      %v4184 = vmul.f32 %v3723, %v3806
      %v4185 = vmul.f32 %v3728, %v3806
      %v4186 = vmul.f32 %v3733, %v3806
      %v4187 = vmul.f32 %v3738, %v3806
      %v4188 = vmul.f32 %v3743, %v3806
      %v4189 = vmul.f32 %v3748, %v3806
      %v4190 = vmul.f32 %v3753, %v3806
      %v4191 = vmul.f32 %v3758, %v3806
      %v4192 = vmul.f32 %v3763, %v3806
      %v4193 = vmul.f32 %v3768, %v3806
      %v4194 = vmul.f32 %v3773, %v3806
      %v4195 = vmul.f32 %v3778, %v3806
      %v4196 = vmul.f32 %v3783, %v3806
      %v4197 = vmul.f32 %v3788, %v3806
      %v4198 = vmul.f32 %v3793, %v3806
      %v4199 = vmul.f32 %v3798, %v3806
      %v4200 = vld [vmem:[%s3] sm:$0x1]
      %v4202 = vlaneseq
      %v4203 = vshrl.u32 %v4202, 7
      %v4204 = vsub.s32 0, %v4203
      %v4205 = vrot.slane %v4200, %v4204
      %v4207 = vadd.f32 %v3808, %v4205
      %v4208 = vadd.f32 %v3809, %v4205
      %v4209 = vadd.f32 %v3810, %v4205
      %v4210 = vadd.f32 %v3811, %v4205
      %v4211 = vadd.f32 %v3812, %v4205
      %v4212 = vadd.f32 %v3813, %v4205
      %v4213 = vadd.f32 %v3814, %v4205
      %v4214 = vadd.f32 %v3815, %v4205
      %v4215 = vadd.f32 %v3816, %v4205
      %v4216 = vadd.f32 %v3817, %v4205
      %v4217 = vadd.f32 %v3818, %v4205
      %v4218 = vadd.f32 %v3819, %v4205
      %v4219 = vadd.f32 %v3820, %v4205
      %v4220 = vadd.f32 %v3821, %v4205
      %v4221 = vadd.f32 %v3822, %v4205
      %v4222 = vadd.f32 %v3823, %v4205
      %v4223 = vadd.f32 %v3824, %v4205
      %v4224 = vadd.f32 %v3825, %v4205
      %v4225 = vadd.f32 %v3826, %v4205
      %v4226 = vadd.f32 %v3827, %v4205
      %v4227 = vadd.f32 %v3828, %v4205
      %v4228 = vadd.f32 %v3829, %v4205
      %v4229 = vadd.f32 %v3830, %v4205
      %v4230 = vadd.f32 %v3831, %v4205
      %v4231 = vadd.f32 %v3832, %v4205
      %v4232 = vadd.f32 %v3833, %v4205
      %v4233 = vadd.f32 %v3834, %v4205
      %v4234 = vadd.f32 %v3835, %v4205
      %v4235 = vadd.f32 %v3836, %v4205
      %v4236 = vadd.f32 %v3837, %v4205
      %v4237 = vadd.f32 %v3838, %v4205
      %v4238 = vadd.f32 %v3839, %v4205
      %v4239 = vadd.f32 %v3840, %v4205
      %v4240 = vadd.f32 %v3841, %v4205
      %v4241 = vadd.f32 %v3842, %v4205
      %v4242 = vadd.f32 %v3843, %v4205
      %v4243 = vadd.f32 %v3844, %v4205
      %v4244 = vadd.f32 %v3845, %v4205
      %v4245 = vadd.f32 %v3846, %v4205
      %v4246 = vadd.f32 %v3847, %v4205
      %v4247 = vadd.f32 %v3848, %v4205
      %v4248 = vadd.f32 %v3849, %v4205
      %v4249 = vadd.f32 %v3850, %v4205
      %v4250 = vadd.f32 %v3851, %v4205
      %v4251 = vadd.f32 %v3852, %v4205
      %v4252 = vadd.f32 %v3853, %v4205
      %v4253 = vadd.f32 %v3854, %v4205
      %v4254 = vadd.f32 %v3855, %v4205
      %v4255 = vadd.f32 %v3856, %v4205
      %v4256 = vadd.f32 %v3857, %v4205
      %v4257 = vadd.f32 %v3858, %v4205
      %v4258 = vadd.f32 %v3859, %v4205
      %v4259 = vadd.f32 %v3860, %v4205
      %v4260 = vadd.f32 %v3861, %v4205
      %v4261 = vadd.f32 %v3862, %v4205
      %v4262 = vadd.f32 %v3863, %v4205
      %v4263 = vadd.f32 %v3864, %v4205
      %v4264 = vadd.f32 %v3865, %v4205
      %v4265 = vadd.f32 %v3866, %v4205
      %v4266 = vadd.f32 %v3867, %v4205
      %v4267 = vadd.f32 %v3868, %v4205
      %v4268 = vadd.f32 %v3869, %v4205
      %v4269 = vadd.f32 %v3870, %v4205
      %v4270 = vadd.f32 %v3871, %v4205
      %v4271 = vadd.f32 %v3872, %v4205
      %v4272 = vadd.f32 %v3873, %v4205
      %v4273 = vadd.f32 %v3874, %v4205
      %v4274 = vadd.f32 %v3875, %v4205
      %v4275 = vadd.f32 %v3876, %v4205
      %v4276 = vadd.f32 %v3877, %v4205
      %v4277 = vadd.f32 %v3878, %v4205
      %v4278 = vadd.f32 %v3879, %v4205
      %v4279 = vadd.f32 %v3880, %v4205
      %v4280 = vadd.f32 %v3881, %v4205
      %v4281 = vadd.f32 %v3882, %v4205
      %v4282 = vadd.f32 %v3883, %v4205
      %v4283 = vadd.f32 %v3884, %v4205
      %v4284 = vadd.f32 %v3885, %v4205
      %v4285 = vadd.f32 %v3886, %v4205
      %v4286 = vadd.f32 %v3887, %v4205
      %v4287 = vadd.f32 %v3888, %v4205
      %v4288 = vadd.f32 %v3889, %v4205
      %v4289 = vadd.f32 %v3890, %v4205
      %v4290 = vadd.f32 %v3891, %v4205
      %v4291 = vadd.f32 %v3892, %v4205
      %v4292 = vadd.f32 %v3893, %v4205
      %v4293 = vadd.f32 %v3894, %v4205
      %v4294 = vadd.f32 %v3895, %v4205
      %v4295 = vadd.f32 %v3896, %v4205
      %v4296 = vadd.f32 %v3897, %v4205
      %v4297 = vadd.f32 %v3898, %v4205
      %v4298 = vadd.f32 %v3899, %v4205
      %v4299 = vadd.f32 %v3900, %v4205
      %v4300 = vadd.f32 %v3901, %v4205
      %v4301 = vadd.f32 %v3902, %v4205
      %v4302 = vadd.f32 %v3903, %v4205
      %v4303 = vadd.f32 %v3904, %v4205
      %v4304 = vadd.f32 %v3905, %v4205
      %v4305 = vadd.f32 %v3906, %v4205
      %v4306 = vadd.f32 %v3907, %v4205
      %v4307 = vadd.f32 %v3908, %v4205
      %v4308 = vadd.f32 %v3909, %v4205
      %v4309 = vadd.f32 %v3910, %v4205
      %v4310 = vadd.f32 %v3911, %v4205
      %v4311 = vadd.f32 %v3912, %v4205
      %v4312 = vadd.f32 %v3913, %v4205
      %v4313 = vadd.f32 %v3914, %v4205
      %v4314 = vadd.f32 %v3915, %v4205
      %v4315 = vadd.f32 %v3916, %v4205
      %v4316 = vadd.f32 %v3917, %v4205
      %v4317 = vadd.f32 %v3918, %v4205
      %v4318 = vadd.f32 %v3919, %v4205
      %v4319 = vadd.f32 %v3920, %v4205
      %v4320 = vadd.f32 %v3921, %v4205
      %v4321 = vadd.f32 %v3922, %v4205
      %v4322 = vadd.f32 %v3923, %v4205
      %v4323 = vadd.f32 %v3924, %v4205
      %v4324 = vadd.f32 %v3925, %v4205
      %v4325 = vadd.f32 %v3926, %v4205
      %v4326 = vadd.f32 %v3927, %v4205
      %v4327 = vadd.f32 %v3928, %v4205
      %v4328 = vadd.f32 %v3929, %v4205
      %v4329 = vadd.f32 %v3930, %v4205
      %v4330 = vadd.f32 %v3931, %v4205
      %v4331 = vadd.f32 %v3932, %v4205
      %v4332 = vadd.f32 %v3933, %v4205
      %v4333 = vadd.f32 %v3934, %v4205
      %v4334 = vadd.f32 %v3935, %v4205
      %v4335 = vadd.f32 %v3936, %v4205
      %v4336 = vadd.f32 %v3937, %v4205
      %v4337 = vadd.f32 %v3938, %v4205
      %v4338 = vadd.f32 %v3939, %v4205
      %v4339 = vadd.f32 %v3940, %v4205
      %v4340 = vadd.f32 %v3941, %v4205
      %v4341 = vadd.f32 %v3942, %v4205
      %v4342 = vadd.f32 %v3943, %v4205
      %v4343 = vadd.f32 %v3944, %v4205
      %v4344 = vadd.f32 %v3945, %v4205
      %v4345 = vadd.f32 %v3946, %v4205
      %v4346 = vadd.f32 %v3947, %v4205
      %v4347 = vadd.f32 %v3948, %v4205
      %v4348 = vadd.f32 %v3949, %v4205
      %v4349 = vadd.f32 %v3950, %v4205
      %v4350 = vadd.f32 %v3951, %v4205
      %v4351 = vadd.f32 %v3952, %v4205
      %v4352 = vadd.f32 %v3953, %v4205
      %v4353 = vadd.f32 %v3954, %v4205
      %v4354 = vadd.f32 %v3955, %v4205
      %v4355 = vadd.f32 %v3956, %v4205
      %v4356 = vadd.f32 %v3957, %v4205
      %v4357 = vadd.f32 %v3958, %v4205
      %v4358 = vadd.f32 %v3959, %v4205
      %v4359 = vadd.f32 %v3960, %v4205
      %v4360 = vadd.f32 %v3961, %v4205
      %v4361 = vadd.f32 %v3962, %v4205
      %v4362 = vadd.f32 %v3963, %v4205
      %v4363 = vadd.f32 %v3964, %v4205
      %v4364 = vadd.f32 %v3965, %v4205
      %v4365 = vadd.f32 %v3966, %v4205
      %v4366 = vadd.f32 %v3967, %v4205
      %v4367 = vadd.f32 %v3968, %v4205
      %v4368 = vadd.f32 %v3969, %v4205
      %v4369 = vadd.f32 %v3970, %v4205
      %v4370 = vadd.f32 %v3971, %v4205
      %v4371 = vadd.f32 %v3972, %v4205
      %v4372 = vadd.f32 %v3973, %v4205
      %v4373 = vadd.f32 %v3974, %v4205
      %v4374 = vadd.f32 %v3975, %v4205
      %v4375 = vadd.f32 %v3976, %v4205
      %v4376 = vadd.f32 %v3977, %v4205
      %v4377 = vadd.f32 %v3978, %v4205
      %v4378 = vadd.f32 %v3979, %v4205
      %v4379 = vadd.f32 %v3980, %v4205
      %v4380 = vadd.f32 %v3981, %v4205
      %v4381 = vadd.f32 %v3982, %v4205
      %v4382 = vadd.f32 %v3983, %v4205
      %v4383 = vadd.f32 %v3984, %v4205
      %v4384 = vadd.f32 %v3985, %v4205
      %v4385 = vadd.f32 %v3986, %v4205
      %v4386 = vadd.f32 %v3987, %v4205
      %v4387 = vadd.f32 %v3988, %v4205
      %v4388 = vadd.f32 %v3989, %v4205
      %v4389 = vadd.f32 %v3990, %v4205
      %v4390 = vadd.f32 %v3991, %v4205
      %v4391 = vadd.f32 %v3992, %v4205
      %v4392 = vadd.f32 %v3993, %v4205
      %v4393 = vadd.f32 %v3994, %v4205
      %v4394 = vadd.f32 %v3995, %v4205
      %v4395 = vadd.f32 %v3996, %v4205
      %v4396 = vadd.f32 %v3997, %v4205
      %v4397 = vadd.f32 %v3998, %v4205
      %v4398 = vadd.f32 %v3999, %v4205
      %v4399 = vadd.f32 %v4000, %v4205
      %v4400 = vadd.f32 %v4001, %v4205
      %v4401 = vadd.f32 %v4002, %v4205
      %v4402 = vadd.f32 %v4003, %v4205
      %v4403 = vadd.f32 %v4004, %v4205
      %v4404 = vadd.f32 %v4005, %v4205
      %v4405 = vadd.f32 %v4006, %v4205
      %v4406 = vadd.f32 %v4007, %v4205
      %v4407 = vadd.f32 %v4008, %v4205
      %v4408 = vadd.f32 %v4009, %v4205
      %v4409 = vadd.f32 %v4010, %v4205
      %v4410 = vadd.f32 %v4011, %v4205
      %v4411 = vadd.f32 %v4012, %v4205
      %v4412 = vadd.f32 %v4013, %v4205
      %v4413 = vadd.f32 %v4014, %v4205
      %v4414 = vadd.f32 %v4015, %v4205
      %v4415 = vadd.f32 %v4016, %v4205
      %v4416 = vadd.f32 %v4017, %v4205
      %v4417 = vadd.f32 %v4018, %v4205
      %v4418 = vadd.f32 %v4019, %v4205
      %v4419 = vadd.f32 %v4020, %v4205
      %v4420 = vadd.f32 %v4021, %v4205
      %v4421 = vadd.f32 %v4022, %v4205
      %v4422 = vadd.f32 %v4023, %v4205
      %v4423 = vadd.f32 %v4024, %v4205
      %v4424 = vadd.f32 %v4025, %v4205
      %v4425 = vadd.f32 %v4026, %v4205
      %v4426 = vadd.f32 %v4027, %v4205
      %v4427 = vadd.f32 %v4028, %v4205
      %v4428 = vadd.f32 %v4029, %v4205
      %v4429 = vadd.f32 %v4030, %v4205
      %v4430 = vadd.f32 %v4031, %v4205
      %v4431 = vadd.f32 %v4032, %v4205
      %v4432 = vadd.f32 %v4033, %v4205
      %v4433 = vadd.f32 %v4034, %v4205
      %v4434 = vadd.f32 %v4035, %v4205
      %v4435 = vadd.f32 %v4036, %v4205
      %v4436 = vadd.f32 %v4037, %v4205
      %v4437 = vadd.f32 %v4038, %v4205
      %v4438 = vadd.f32 %v4039, %v4205
      %v4439 = vadd.f32 %v4040, %v4205
      %v4440 = vadd.f32 %v4041, %v4205
      %v4441 = vadd.f32 %v4042, %v4205
      %v4442 = vadd.f32 %v4043, %v4205
      %v4443 = vadd.f32 %v4044, %v4205
      %v4444 = vadd.f32 %v4045, %v4205
      %v4445 = vadd.f32 %v4046, %v4205
      %v4446 = vadd.f32 %v4047, %v4205
      %v4447 = vadd.f32 %v4048, %v4205
      %v4448 = vadd.f32 %v4049, %v4205
      %v4449 = vadd.f32 %v4050, %v4205
      %v4450 = vadd.f32 %v4051, %v4205
      %v4451 = vadd.f32 %v4052, %v4205
      %v4452 = vadd.f32 %v4053, %v4205
      %v4453 = vadd.f32 %v4054, %v4205
      %v4454 = vadd.f32 %v4055, %v4205
      %v4455 = vadd.f32 %v4056, %v4205
      %v4456 = vadd.f32 %v4057, %v4205
      %v4457 = vadd.f32 %v4058, %v4205
      %v4458 = vadd.f32 %v4059, %v4205
      %v4459 = vadd.f32 %v4060, %v4205
      %v4460 = vadd.f32 %v4061, %v4205
      %v4461 = vadd.f32 %v4062, %v4205
      %v4462 = vadd.f32 %v4063, %v4205
      %v4463 = vadd.f32 %v4064, %v4205
      %v4464 = vadd.f32 %v4065, %v4205
      %v4465 = vadd.f32 %v4066, %v4205
      %v4466 = vadd.f32 %v4067, %v4205
      %v4467 = vadd.f32 %v4068, %v4205
      %v4468 = vadd.f32 %v4069, %v4205
      %v4469 = vadd.f32 %v4070, %v4205
      %v4470 = vadd.f32 %v4071, %v4205
      %v4471 = vadd.f32 %v4072, %v4205
      %v4472 = vadd.f32 %v4073, %v4205
      %v4473 = vadd.f32 %v4074, %v4205
      %v4474 = vadd.f32 %v4075, %v4205
      %v4475 = vadd.f32 %v4076, %v4205
      %v4476 = vadd.f32 %v4077, %v4205
      %v4477 = vadd.f32 %v4078, %v4205
      %v4478 = vadd.f32 %v4079, %v4205
      %v4479 = vadd.f32 %v4080, %v4205
      %v4480 = vadd.f32 %v4081, %v4205
      %v4481 = vadd.f32 %v4082, %v4205
      %v4482 = vadd.f32 %v4083, %v4205
      %v4483 = vadd.f32 %v4084, %v4205
      %v4484 = vadd.f32 %v4085, %v4205
      %v4485 = vadd.f32 %v4086, %v4205
      %v4486 = vadd.f32 %v4087, %v4205
      %v4487 = vadd.f32 %v4088, %v4205
      %v4488 = vadd.f32 %v4089, %v4205
      %v4489 = vadd.f32 %v4090, %v4205
      %v4490 = vadd.f32 %v4091, %v4205
      %v4491 = vadd.f32 %v4092, %v4205
      %v4492 = vadd.f32 %v4093, %v4205
      %v4493 = vadd.f32 %v4094, %v4205
      %v4494 = vadd.f32 %v4095, %v4205
      %v4495 = vadd.f32 %v4096, %v4205
      %v4496 = vadd.f32 %v4097, %v4205
      %v4497 = vadd.f32 %v4098, %v4205
      %v4498 = vadd.f32 %v4099, %v4205
      %v4499 = vadd.f32 %v4100, %v4205
      %v4500 = vadd.f32 %v4101, %v4205
      %v4501 = vadd.f32 %v4102, %v4205
      %v4502 = vadd.f32 %v4103, %v4205
      %v4503 = vadd.f32 %v4104, %v4205
      %v4504 = vadd.f32 %v4105, %v4205
      %v4505 = vadd.f32 %v4106, %v4205
      %v4506 = vadd.f32 %v4107, %v4205
      %v4507 = vadd.f32 %v4108, %v4205
      %v4508 = vadd.f32 %v4109, %v4205
      %v4509 = vadd.f32 %v4110, %v4205
      %v4510 = vadd.f32 %v4111, %v4205
      %v4511 = vadd.f32 %v4112, %v4205
      %v4512 = vadd.f32 %v4113, %v4205
      %v4513 = vadd.f32 %v4114, %v4205
      %v4514 = vadd.f32 %v4115, %v4205
      %v4515 = vadd.f32 %v4116, %v4205
      %v4516 = vadd.f32 %v4117, %v4205
      %v4517 = vadd.f32 %v4118, %v4205
      %v4518 = vadd.f32 %v4119, %v4205
      %v4519 = vadd.f32 %v4120, %v4205
      %v4520 = vadd.f32 %v4121, %v4205
      %v4521 = vadd.f32 %v4122, %v4205
      %v4522 = vadd.f32 %v4123, %v4205
      %v4523 = vadd.f32 %v4124, %v4205
      %v4524 = vadd.f32 %v4125, %v4205
      %v4525 = vadd.f32 %v4126, %v4205
      %v4526 = vadd.f32 %v4127, %v4205
      %v4527 = vadd.f32 %v4128, %v4205
      %v4528 = vadd.f32 %v4129, %v4205
      %v4529 = vadd.f32 %v4130, %v4205
      %v4530 = vadd.f32 %v4131, %v4205
      %v4531 = vadd.f32 %v4132, %v4205
      %v4532 = vadd.f32 %v4133, %v4205
      %v4533 = vadd.f32 %v4134, %v4205
      %v4534 = vadd.f32 %v4135, %v4205
      %v4535 = vadd.f32 %v4136, %v4205
      %v4536 = vadd.f32 %v4137, %v4205
      %v4537 = vadd.f32 %v4138, %v4205
      %v4538 = vadd.f32 %v4139, %v4205
      %v4539 = vadd.f32 %v4140, %v4205
      %v4540 = vadd.f32 %v4141, %v4205
      %v4541 = vadd.f32 %v4142, %v4205
      %v4542 = vadd.f32 %v4143, %v4205
      %v4543 = vadd.f32 %v4144, %v4205
      %v4544 = vadd.f32 %v4145, %v4205
      %v4545 = vadd.f32 %v4146, %v4205
      %v4546 = vadd.f32 %v4147, %v4205
      %v4547 = vadd.f32 %v4148, %v4205
      %v4548 = vadd.f32 %v4149, %v4205
      %v4549 = vadd.f32 %v4150, %v4205
      %v4550 = vadd.f32 %v4151, %v4205
      %v4551 = vadd.f32 %v4152, %v4205
      %v4552 = vadd.f32 %v4153, %v4205
      %v4553 = vadd.f32 %v4154, %v4205
      %v4554 = vadd.f32 %v4155, %v4205
      %v4555 = vadd.f32 %v4156, %v4205
      %v4556 = vadd.f32 %v4157, %v4205
      %v4557 = vadd.f32 %v4158, %v4205
      %v4558 = vadd.f32 %v4159, %v4205
      %v4559 = vadd.f32 %v4160, %v4205
      %v4560 = vadd.f32 %v4161, %v4205
      %v4561 = vadd.f32 %v4162, %v4205
      %v4562 = vadd.f32 %v4163, %v4205
      %v4563 = vadd.f32 %v4164, %v4205
      %v4564 = vadd.f32 %v4165, %v4205
      %v4565 = vadd.f32 %v4166, %v4205
      %v4566 = vadd.f32 %v4167, %v4205
      %v4567 = vadd.f32 %v4168, %v4205
      %v4568 = vadd.f32 %v4169, %v4205
      %v4569 = vadd.f32 %v4170, %v4205
      %v4570 = vadd.f32 %v4171, %v4205
      %v4571 = vadd.f32 %v4172, %v4205
      %v4572 = vadd.f32 %v4173, %v4205
      %v4573 = vadd.f32 %v4174, %v4205
      %v4574 = vadd.f32 %v4175, %v4205
      %v4575 = vadd.f32 %v4176, %v4205
      %v4576 = vadd.f32 %v4177, %v4205
      %v4577 = vadd.f32 %v4178, %v4205
      %v4578 = vadd.f32 %v4179, %v4205
      %v4579 = vadd.f32 %v4180, %v4205
      %v4580 = vadd.f32 %v4181, %v4205
      %v4581 = vadd.f32 %v4182, %v4205
      %v4582 = vadd.f32 %v4183, %v4205
      %v4583 = vadd.f32 %v4184, %v4205
      %v4584 = vadd.f32 %v4185, %v4205
      %v4585 = vadd.f32 %v4186, %v4205
      %v4586 = vadd.f32 %v4187, %v4205
      %v4587 = vadd.f32 %v4188, %v4205
      %v4588 = vadd.f32 %v4189, %v4205
      %v4589 = vadd.f32 %v4190, %v4205
      %v4590 = vadd.f32 %v4191, %v4205
      %v4591 = vadd.f32 %v4192, %v4205
      %v4592 = vadd.f32 %v4193, %v4205
      %v4593 = vadd.f32 %v4194, %v4205
      %v4594 = vadd.f32 %v4195, %v4205
      %v4595 = vadd.f32 %v4196, %v4205
      %v4596 = vadd.f32 %v4197, %v4205
      %v4597 = vadd.f32 %v4198, %v4205
      %v4598 = vadd.f32 %v4199, %v4205
      %v4599 = vmax.f32 %v4207, 0.0
      %v4600 = vmax.f32 %v4208, 0.0
      %v4601 = vmax.f32 %v4209, 0.0
      %v4602 = vmax.f32 %v4210, 0.0
      %v4603 = vmax.f32 %v4211, 0.0
      %v4604 = vmax.f32 %v4212, 0.0
      %v4605 = vmax.f32 %v4213, 0.0
      %v4606 = vmax.f32 %v4214, 0.0
      %v4607 = vmax.f32 %v4215, 0.0
      %v4608 = vmax.f32 %v4216, 0.0
      %v4609 = vmax.f32 %v4217, 0.0
      %v4610 = vmax.f32 %v4218, 0.0
      %v4611 = vmax.f32 %v4219, 0.0
      %v4612 = vmax.f32 %v4220, 0.0
      %v4613 = vmax.f32 %v4221, 0.0
      %v4614 = vmax.f32 %v4222, 0.0
      %v4615 = vmax.f32 %v4223, 0.0
      %v4616 = vmax.f32 %v4224, 0.0
      %v4617 = vmax.f32 %v4225, 0.0
      %v4618 = vmax.f32 %v4226, 0.0
      %v4619 = vmax.f32 %v4227, 0.0
      %v4620 = vmax.f32 %v4228, 0.0
      %v4621 = vmax.f32 %v4229, 0.0
      %v4622 = vmax.f32 %v4230, 0.0
      %v4623 = vmax.f32 %v4231, 0.0
      %v4624 = vmax.f32 %v4232, 0.0
      %v4625 = vmax.f32 %v4233, 0.0
      %v4626 = vmax.f32 %v4234, 0.0
      %v4627 = vmax.f32 %v4235, 0.0
      %v4628 = vmax.f32 %v4236, 0.0
      %v4629 = vmax.f32 %v4237, 0.0
      %v4630 = vmax.f32 %v4238, 0.0
      %v4631 = vmax.f32 %v4239, 0.0
      %v4632 = vmax.f32 %v4240, 0.0
      %v4633 = vmax.f32 %v4241, 0.0
      %v4634 = vmax.f32 %v4242, 0.0
      %v4635 = vmax.f32 %v4243, 0.0
      %v4636 = vmax.f32 %v4244, 0.0
      %v4637 = vmax.f32 %v4245, 0.0
      %v4638 = vmax.f32 %v4246, 0.0
      %v4639 = vmax.f32 %v4247, 0.0
      %v4640 = vmax.f32 %v4248, 0.0
      %v4641 = vmax.f32 %v4249, 0.0
      %v4642 = vmax.f32 %v4250, 0.0
      %v4643 = vmax.f32 %v4251, 0.0
      %v4644 = vmax.f32 %v4252, 0.0
      %v4645 = vmax.f32 %v4253, 0.0
      %v4646 = vmax.f32 %v4254, 0.0
      %v4647 = vmax.f32 %v4255, 0.0
      %v4648 = vmax.f32 %v4256, 0.0
      %v4649 = vmax.f32 %v4257, 0.0
      %v4650 = vmax.f32 %v4258, 0.0
      %v4651 = vmax.f32 %v4259, 0.0
      %v4652 = vmax.f32 %v4260, 0.0
      %v4653 = vmax.f32 %v4261, 0.0
      %v4654 = vmax.f32 %v4262, 0.0
      %v4655 = vmax.f32 %v4263, 0.0
      %v4656 = vmax.f32 %v4264, 0.0
      %v4657 = vmax.f32 %v4265, 0.0
      %v4658 = vmax.f32 %v4266, 0.0
      %v4659 = vmax.f32 %v4267, 0.0
      %v4660 = vmax.f32 %v4268, 0.0
      %v4661 = vmax.f32 %v4269, 0.0
      %v4662 = vmax.f32 %v4270, 0.0
      %v4663 = vmax.f32 %v4271, 0.0
      %v4664 = vmax.f32 %v4272, 0.0
      %v4665 = vmax.f32 %v4273, 0.0
      %v4666 = vmax.f32 %v4274, 0.0
      %v4667 = vmax.f32 %v4275, 0.0
      %v4668 = vmax.f32 %v4276, 0.0
      %v4669 = vmax.f32 %v4277, 0.0
      %v4670 = vmax.f32 %v4278, 0.0
      %v4671 = vmax.f32 %v4279, 0.0
      %v4672 = vmax.f32 %v4280, 0.0
      %v4673 = vmax.f32 %v4281, 0.0
      %v4674 = vmax.f32 %v4282, 0.0
      %v4675 = vmax.f32 %v4283, 0.0
      %v4676 = vmax.f32 %v4284, 0.0
      %v4677 = vmax.f32 %v4285, 0.0
      %v4678 = vmax.f32 %v4286, 0.0
      %v4679 = vmax.f32 %v4287, 0.0
      %v4680 = vmax.f32 %v4288, 0.0
      %v4681 = vmax.f32 %v4289, 0.0
      %v4682 = vmax.f32 %v4290, 0.0
      %v4683 = vmax.f32 %v4291, 0.0
      %v4684 = vmax.f32 %v4292, 0.0
      %v4685 = vmax.f32 %v4293, 0.0
      %v4686 = vmax.f32 %v4294, 0.0
      %v4687 = vmax.f32 %v4295, 0.0
      %v4688 = vmax.f32 %v4296, 0.0
      %v4689 = vmax.f32 %v4297, 0.0
      %v4690 = vmax.f32 %v4298, 0.0
      %v4691 = vmax.f32 %v4299, 0.0
      %v4692 = vmax.f32 %v4300, 0.0
      %v4693 = vmax.f32 %v4301, 0.0
      %v4694 = vmax.f32 %v4302, 0.0
      %v4695 = vmax.f32 %v4303, 0.0
      %v4696 = vmax.f32 %v4304, 0.0
      %v4697 = vmax.f32 %v4305, 0.0
      %v4698 = vmax.f32 %v4306, 0.0
      %v4699 = vmax.f32 %v4307, 0.0
      %v4700 = vmax.f32 %v4308, 0.0
      %v4701 = vmax.f32 %v4309, 0.0
      %v4702 = vmax.f32 %v4310, 0.0
      %v4703 = vmax.f32 %v4311, 0.0
      %v4704 = vmax.f32 %v4312, 0.0
      %v4705 = vmax.f32 %v4313, 0.0
      %v4706 = vmax.f32 %v4314, 0.0
      %v4707 = vmax.f32 %v4315, 0.0
      %v4708 = vmax.f32 %v4316, 0.0
      %v4709 = vmax.f32 %v4317, 0.0
      %v4710 = vmax.f32 %v4318, 0.0
      %v4711 = vmax.f32 %v4319, 0.0
      %v4712 = vmax.f32 %v4320, 0.0
      %v4713 = vmax.f32 %v4321, 0.0
      %v4714 = vmax.f32 %v4322, 0.0
      %v4715 = vmax.f32 %v4323, 0.0
      %v4716 = vmax.f32 %v4324, 0.0
      %v4717 = vmax.f32 %v4325, 0.0
      %v4718 = vmax.f32 %v4326, 0.0
      %v4719 = vmax.f32 %v4327, 0.0
      %v4720 = vmax.f32 %v4328, 0.0
      %v4721 = vmax.f32 %v4329, 0.0
      %v4722 = vmax.f32 %v4330, 0.0
      %v4723 = vmax.f32 %v4331, 0.0
      %v4724 = vmax.f32 %v4332, 0.0
      %v4725 = vmax.f32 %v4333, 0.0
      %v4726 = vmax.f32 %v4334, 0.0
      %v4727 = vmax.f32 %v4335, 0.0
      %v4728 = vmax.f32 %v4336, 0.0
      %v4729 = vmax.f32 %v4337, 0.0
      %v4730 = vmax.f32 %v4338, 0.0
      %v4731 = vmax.f32 %v4339, 0.0
      %v4732 = vmax.f32 %v4340, 0.0
      %v4733 = vmax.f32 %v4341, 0.0
      %v4734 = vmax.f32 %v4342, 0.0
      %v4735 = vmax.f32 %v4343, 0.0
      %v4736 = vmax.f32 %v4344, 0.0
      %v4737 = vmax.f32 %v4345, 0.0
      %v4738 = vmax.f32 %v4346, 0.0
      %v4739 = vmax.f32 %v4347, 0.0
      %v4740 = vmax.f32 %v4348, 0.0
      %v4741 = vmax.f32 %v4349, 0.0
      %v4742 = vmax.f32 %v4350, 0.0
      %v4743 = vmax.f32 %v4351, 0.0
      %v4744 = vmax.f32 %v4352, 0.0
      %v4745 = vmax.f32 %v4353, 0.0
      %v4746 = vmax.f32 %v4354, 0.0
      %v4747 = vmax.f32 %v4355, 0.0
      %v4748 = vmax.f32 %v4356, 0.0
      %v4749 = vmax.f32 %v4357, 0.0
      %v4750 = vmax.f32 %v4358, 0.0
      %v4751 = vmax.f32 %v4359, 0.0
      %v4752 = vmax.f32 %v4360, 0.0
      %v4753 = vmax.f32 %v4361, 0.0
      %v4754 = vmax.f32 %v4362, 0.0
      %v4755 = vmax.f32 %v4363, 0.0
      %v4756 = vmax.f32 %v4364, 0.0
      %v4757 = vmax.f32 %v4365, 0.0
      %v4758 = vmax.f32 %v4366, 0.0
      %v4759 = vmax.f32 %v4367, 0.0
      %v4760 = vmax.f32 %v4368, 0.0
      %v4761 = vmax.f32 %v4369, 0.0
      %v4762 = vmax.f32 %v4370, 0.0
      %v4763 = vmax.f32 %v4371, 0.0
      %v4764 = vmax.f32 %v4372, 0.0
      %v4765 = vmax.f32 %v4373, 0.0
      %v4766 = vmax.f32 %v4374, 0.0
      %v4767 = vmax.f32 %v4375, 0.0
      %v4768 = vmax.f32 %v4376, 0.0
      %v4769 = vmax.f32 %v4377, 0.0
      %v4770 = vmax.f32 %v4378, 0.0
      %v4771 = vmax.f32 %v4379, 0.0
      %v4772 = vmax.f32 %v4380, 0.0
      %v4773 = vmax.f32 %v4381, 0.0
      %v4774 = vmax.f32 %v4382, 0.0
      %v4775 = vmax.f32 %v4383, 0.0
      %v4776 = vmax.f32 %v4384, 0.0
      %v4777 = vmax.f32 %v4385, 0.0
      %v4778 = vmax.f32 %v4386, 0.0
      %v4779 = vmax.f32 %v4387, 0.0
      %v4780 = vmax.f32 %v4388, 0.0
      %v4781 = vmax.f32 %v4389, 0.0
      %v4782 = vmax.f32 %v4390, 0.0
      %v4783 = vmax.f32 %v4391, 0.0
      %v4784 = vmax.f32 %v4392, 0.0
      %v4785 = vmax.f32 %v4393, 0.0
      %v4786 = vmax.f32 %v4394, 0.0
      %v4787 = vmax.f32 %v4395, 0.0
      %v4788 = vmax.f32 %v4396, 0.0
      %v4789 = vmax.f32 %v4397, 0.0
      %v4790 = vmax.f32 %v4398, 0.0
      %v4791 = vmax.f32 %v4399, 0.0
      %v4792 = vmax.f32 %v4400, 0.0
      %v4793 = vmax.f32 %v4401, 0.0
      %v4794 = vmax.f32 %v4402, 0.0
      %v4795 = vmax.f32 %v4403, 0.0
      %v4796 = vmax.f32 %v4404, 0.0
      %v4797 = vmax.f32 %v4405, 0.0
      %v4798 = vmax.f32 %v4406, 0.0
      %v4799 = vmax.f32 %v4407, 0.0
      %v4800 = vmax.f32 %v4408, 0.0
      %v4801 = vmax.f32 %v4409, 0.0
      %v4802 = vmax.f32 %v4410, 0.0
      %v4803 = vmax.f32 %v4411, 0.0
      %v4804 = vmax.f32 %v4412, 0.0
      %v4805 = vmax.f32 %v4413, 0.0
      %v4806 = vmax.f32 %v4414, 0.0
      %v4807 = vmax.f32 %v4415, 0.0
      %v4808 = vmax.f32 %v4416, 0.0
      %v4809 = vmax.f32 %v4417, 0.0
      %v4810 = vmax.f32 %v4418, 0.0
      %v4811 = vmax.f32 %v4419, 0.0
      %v4812 = vmax.f32 %v4420, 0.0
      %v4813 = vmax.f32 %v4421, 0.0
      %v4814 = vmax.f32 %v4422, 0.0
      %v4815 = vmax.f32 %v4423, 0.0
      %v4816 = vmax.f32 %v4424, 0.0
      %v4817 = vmax.f32 %v4425, 0.0
      %v4818 = vmax.f32 %v4426, 0.0
      %v4819 = vmax.f32 %v4427, 0.0
      %v4820 = vmax.f32 %v4428, 0.0
      %v4821 = vmax.f32 %v4429, 0.0
      %v4822 = vmax.f32 %v4430, 0.0
      %v4823 = vmax.f32 %v4431, 0.0
      %v4824 = vmax.f32 %v4432, 0.0
      %v4825 = vmax.f32 %v4433, 0.0
      %v4826 = vmax.f32 %v4434, 0.0
      %v4827 = vmax.f32 %v4435, 0.0
      %v4828 = vmax.f32 %v4436, 0.0
      %v4829 = vmax.f32 %v4437, 0.0
      %v4830 = vmax.f32 %v4438, 0.0
      %v4831 = vmax.f32 %v4439, 0.0
      %v4832 = vmax.f32 %v4440, 0.0
      %v4833 = vmax.f32 %v4441, 0.0
      %v4834 = vmax.f32 %v4442, 0.0
      %v4835 = vmax.f32 %v4443, 0.0
      %v4836 = vmax.f32 %v4444, 0.0
      %v4837 = vmax.f32 %v4445, 0.0
      %v4838 = vmax.f32 %v4446, 0.0
      %v4839 = vmax.f32 %v4447, 0.0
      %v4840 = vmax.f32 %v4448, 0.0
      %v4841 = vmax.f32 %v4449, 0.0
      %v4842 = vmax.f32 %v4450, 0.0
      %v4843 = vmax.f32 %v4451, 0.0
      %v4844 = vmax.f32 %v4452, 0.0
      %v4845 = vmax.f32 %v4453, 0.0
      %v4846 = vmax.f32 %v4454, 0.0
      %v4847 = vmax.f32 %v4455, 0.0
      %v4848 = vmax.f32 %v4456, 0.0
      %v4849 = vmax.f32 %v4457, 0.0
      %v4850 = vmax.f32 %v4458, 0.0
      %v4851 = vmax.f32 %v4459, 0.0
      %v4852 = vmax.f32 %v4460, 0.0
      %v4853 = vmax.f32 %v4461, 0.0
      %v4854 = vmax.f32 %v4462, 0.0
      %v4855 = vmax.f32 %v4463, 0.0
      %v4856 = vmax.f32 %v4464, 0.0
      %v4857 = vmax.f32 %v4465, 0.0
      %v4858 = vmax.f32 %v4466, 0.0
      %v4859 = vmax.f32 %v4467, 0.0
      %v4860 = vmax.f32 %v4468, 0.0
      %v4861 = vmax.f32 %v4469, 0.0
      %v4862 = vmax.f32 %v4470, 0.0
      %v4863 = vmax.f32 %v4471, 0.0
      %v4864 = vmax.f32 %v4472, 0.0
      %v4865 = vmax.f32 %v4473, 0.0
      %v4866 = vmax.f32 %v4474, 0.0
      %v4867 = vmax.f32 %v4475, 0.0
      %v4868 = vmax.f32 %v4476, 0.0
      %v4869 = vmax.f32 %v4477, 0.0
      %v4870 = vmax.f32 %v4478, 0.0
      %v4871 = vmax.f32 %v4479, 0.0
      %v4872 = vmax.f32 %v4480, 0.0
      %v4873 = vmax.f32 %v4481, 0.0
      %v4874 = vmax.f32 %v4482, 0.0
      %v4875 = vmax.f32 %v4483, 0.0
      %v4876 = vmax.f32 %v4484, 0.0
      %v4877 = vmax.f32 %v4485, 0.0
      %v4878 = vmax.f32 %v4486, 0.0
      %v4879 = vmax.f32 %v4487, 0.0
      %v4880 = vmax.f32 %v4488, 0.0
      %v4881 = vmax.f32 %v4489, 0.0
      %v4882 = vmax.f32 %v4490, 0.0
      %v4883 = vmax.f32 %v4491, 0.0
      %v4884 = vmax.f32 %v4492, 0.0
      %v4885 = vmax.f32 %v4493, 0.0
      %v4886 = vmax.f32 %v4494, 0.0
      %v4887 = vmax.f32 %v4495, 0.0
      %v4888 = vmax.f32 %v4496, 0.0
      %v4889 = vmax.f32 %v4497, 0.0
      %v4890 = vmax.f32 %v4498, 0.0
      %v4891 = vmax.f32 %v4499, 0.0
      %v4892 = vmax.f32 %v4500, 0.0
      %v4893 = vmax.f32 %v4501, 0.0
      %v4894 = vmax.f32 %v4502, 0.0
      %v4895 = vmax.f32 %v4503, 0.0
      %v4896 = vmax.f32 %v4504, 0.0
      %v4897 = vmax.f32 %v4505, 0.0
      %v4898 = vmax.f32 %v4506, 0.0
      %v4899 = vmax.f32 %v4507, 0.0
      %v4900 = vmax.f32 %v4508, 0.0
      %v4901 = vmax.f32 %v4509, 0.0
      %v4902 = vmax.f32 %v4510, 0.0
      %v4903 = vmax.f32 %v4511, 0.0
      %v4904 = vmax.f32 %v4512, 0.0
      %v4905 = vmax.f32 %v4513, 0.0
      %v4906 = vmax.f32 %v4514, 0.0
      %v4907 = vmax.f32 %v4515, 0.0
      %v4908 = vmax.f32 %v4516, 0.0
      %v4909 = vmax.f32 %v4517, 0.0
      %v4910 = vmax.f32 %v4518, 0.0
      %v4911 = vmax.f32 %v4519, 0.0
      %v4912 = vmax.f32 %v4520, 0.0
      %v4913 = vmax.f32 %v4521, 0.0
      %v4914 = vmax.f32 %v4522, 0.0
      %v4915 = vmax.f32 %v4523, 0.0
      %v4916 = vmax.f32 %v4524, 0.0
      %v4917 = vmax.f32 %v4525, 0.0
      %v4918 = vmax.f32 %v4526, 0.0
      %v4919 = vmax.f32 %v4527, 0.0
      %v4920 = vmax.f32 %v4528, 0.0
      %v4921 = vmax.f32 %v4529, 0.0
      %v4922 = vmax.f32 %v4530, 0.0
      %v4923 = vmax.f32 %v4531, 0.0
      %v4924 = vmax.f32 %v4532, 0.0
      %v4925 = vmax.f32 %v4533, 0.0
      %v4926 = vmax.f32 %v4534, 0.0
      %v4927 = vmax.f32 %v4535, 0.0
      %v4928 = vmax.f32 %v4536, 0.0
      %v4929 = vmax.f32 %v4537, 0.0
      %v4930 = vmax.f32 %v4538, 0.0
      %v4931 = vmax.f32 %v4539, 0.0
      %v4932 = vmax.f32 %v4540, 0.0
      %v4933 = vmax.f32 %v4541, 0.0
      %v4934 = vmax.f32 %v4542, 0.0
      %v4935 = vmax.f32 %v4543, 0.0
      %v4936 = vmax.f32 %v4544, 0.0
      %v4937 = vmax.f32 %v4545, 0.0
      %v4938 = vmax.f32 %v4546, 0.0
      %v4939 = vmax.f32 %v4547, 0.0
      %v4940 = vmax.f32 %v4548, 0.0
      %v4941 = vmax.f32 %v4549, 0.0
      %v4942 = vmax.f32 %v4550, 0.0
      %v4943 = vmax.f32 %v4551, 0.0
      %v4944 = vmax.f32 %v4552, 0.0
      %v4945 = vmax.f32 %v4553, 0.0
      %v4946 = vmax.f32 %v4554, 0.0
      %v4947 = vmax.f32 %v4555, 0.0
      %v4948 = vmax.f32 %v4556, 0.0
      %v4949 = vmax.f32 %v4557, 0.0
      %v4950 = vmax.f32 %v4558, 0.0
      %v4951 = vmax.f32 %v4559, 0.0
      %v4952 = vmax.f32 %v4560, 0.0
      %v4953 = vmax.f32 %v4561, 0.0
      %v4954 = vmax.f32 %v4562, 0.0
      %v4955 = vmax.f32 %v4563, 0.0
      %v4956 = vmax.f32 %v4564, 0.0
      %v4957 = vmax.f32 %v4565, 0.0
      %v4958 = vmax.f32 %v4566, 0.0
      %v4959 = vmax.f32 %v4567, 0.0
      %v4960 = vmax.f32 %v4568, 0.0
      %v4961 = vmax.f32 %v4569, 0.0
      %v4962 = vmax.f32 %v4570, 0.0
      %v4963 = vmax.f32 %v4571, 0.0
      %v4964 = vmax.f32 %v4572, 0.0
      %v4965 = vmax.f32 %v4573, 0.0
      %v4966 = vmax.f32 %v4574, 0.0
      %v4967 = vmax.f32 %v4575, 0.0
      %v4968 = vmax.f32 %v4576, 0.0
      %v4969 = vmax.f32 %v4577, 0.0
      %v4970 = vmax.f32 %v4578, 0.0
      %v4971 = vmax.f32 %v4579, 0.0
      %v4972 = vmax.f32 %v4580, 0.0
      %v4973 = vmax.f32 %v4581, 0.0
      %v4974 = vmax.f32 %v4582, 0.0
      %v4975 = vmax.f32 %v4583, 0.0
      %v4976 = vmax.f32 %v4584, 0.0
      %v4977 = vmax.f32 %v4585, 0.0
      %v4978 = vmax.f32 %v4586, 0.0
      %v4979 = vmax.f32 %v4587, 0.0
      %v4980 = vmax.f32 %v4588, 0.0
      %v4981 = vmax.f32 %v4589, 0.0
      %v4982 = vmax.f32 %v4590, 0.0
      %v4983 = vmax.f32 %v4591, 0.0
      %v4984 = vmax.f32 %v4592, 0.0
      %v4985 = vmax.f32 %v4593, 0.0
      %v4986 = vmax.f32 %v4594, 0.0
      %v4987 = vmax.f32 %v4595, 0.0
      %v4988 = vmax.f32 %v4596, 0.0
      %v4989 = vmax.f32 %v4597, 0.0
      %v4990 = vmax.f32 %v4598, 0.0
      %vm4991 = vcmask 64512
      %4992 = vst.msk [vmem:[%s199] sm:$0xff] %vm4991, %v4599
      %4993 = vst.msk [vmem:[%s199 + $0x8] sm:$0xff] %vm4991, %v4600
      %4994 = vst.msk [vmem:[%s199 + $0x10] sm:$0xff] %vm4991, %v4601
      %4995 = vst.msk [vmem:[%s199 + $0x18] sm:$0xff] %vm4991, %v4602
      %4996 = vst.msk [vmem:[%s199 + $0x20] sm:$0xff] %vm4991, %v4603
      %4997 = vst.msk [vmem:[%s199 + $0x28] sm:$0xff] %vm4991, %v4604
      %4998 = vst.msk [vmem:[%s199 + $0x30] sm:$0xff] %vm4991, %v4605
      %4999 = vst.msk [vmem:[%s199 + $0x38] sm:$0xff] %vm4991, %v4606
      %5000 = vst.msk [vmem:[%s199 + $0x40] sm:$0xff] %vm4991, %v4607
      %5001 = vst.msk [vmem:[%s199 + $0x48] sm:$0xff] %vm4991, %v4608
      %5002 = vst.msk [vmem:[%s199 + $0x50] sm:$0xff] %vm4991, %v4609
      %5003 = vst.msk [vmem:[%s199 + $0x58] sm:$0xff] %vm4991, %v4610
      %5004 = vst.msk [vmem:[%s199 + $0x60] sm:$0xff] %vm4991, %v4611
      %5005 = vst.msk [vmem:[%s199 + $0x68] sm:$0xff] %vm4991, %v4612
      %5006 = vst.msk [vmem:[%s199 + $0x70] sm:$0xff] %vm4991, %v4613
      %5007 = vst.msk [vmem:[%s199 + $0x78] sm:$0xff] %vm4991, %v4614
      %5008 = vst.msk [vmem:[%s199 + $0x80] sm:$0xff] %vm4991, %v4615
      %5009 = vst.msk [vmem:[%s199 + $0x88] sm:$0xff] %vm4991, %v4616
      %5010 = vst.msk [vmem:[%s199 + $0x90] sm:$0xff] %vm4991, %v4617
      %5011 = vst.msk [vmem:[%s199 + $0x98] sm:$0xff] %vm4991, %v4618
      %5012 = vst.msk [vmem:[%s199 + $0xa0] sm:$0xff] %vm4991, %v4619
      %5013 = vst.msk [vmem:[%s199 + $0xa8] sm:$0xff] %vm4991, %v4620
      %5014 = vst.msk [vmem:[%s199 + $0xb0] sm:$0xff] %vm4991, %v4621
      %5015 = vst.msk [vmem:[%s199 + $0xb8] sm:$0xff] %vm4991, %v4622
      %5016 = vst.msk [vmem:[%s199 + $0xc0] sm:$0xff] %vm4991, %v4623
      %5017 = vst.msk [vmem:[%s199 + $0xc8] sm:$0xff] %vm4991, %v4624
      %5018 = vst.msk [vmem:[%s199 + $0xd0] sm:$0xff] %vm4991, %v4625
      %5019 = vst.msk [vmem:[%s199 + $0xd8] sm:$0xff] %vm4991, %v4626
      %5020 = vst.msk [vmem:[%s199 + $0xe0] sm:$0xff] %vm4991, %v4627
      %5021 = vst.msk [vmem:[%s199 + $0xe8] sm:$0xff] %vm4991, %v4628
      %5022 = vst.msk [vmem:[%s199 + $0xf0] sm:$0xff] %vm4991, %v4629
      %5023 = vst.msk [vmem:[%s199 + $0xf8] sm:$0xff] %vm4991, %v4630
      %5024 = vst.msk [vmem:[%s199 + $0x100] sm:$0xff] %vm4991, %v4631
      %5025 = vst.msk [vmem:[%s199 + $0x108] sm:$0xff] %vm4991, %v4632
      %5026 = vst.msk [vmem:[%s199 + $0x110] sm:$0xff] %vm4991, %v4633
      %5027 = vst.msk [vmem:[%s199 + $0x118] sm:$0xff] %vm4991, %v4634
      %5028 = vst.msk [vmem:[%s199 + $0x120] sm:$0xff] %vm4991, %v4635
      %5029 = vst.msk [vmem:[%s199 + $0x128] sm:$0xff] %vm4991, %v4636
      %5030 = vst.msk [vmem:[%s199 + $0x130] sm:$0xff] %vm4991, %v4637
      %5031 = vst.msk [vmem:[%s199 + $0x138] sm:$0xff] %vm4991, %v4638
      %5032 = vst.msk [vmem:[%s199 + $0x140] sm:$0xff] %vm4991, %v4639
      %5033 = vst.msk [vmem:[%s199 + $0x148] sm:$0xff] %vm4991, %v4640
      %5034 = vst.msk [vmem:[%s199 + $0x150] sm:$0xff] %vm4991, %v4641
      %5035 = vst.msk [vmem:[%s199 + $0x158] sm:$0xff] %vm4991, %v4642
      %5036 = vst.msk [vmem:[%s199 + $0x160] sm:$0xff] %vm4991, %v4643
      %5037 = vst.msk [vmem:[%s199 + $0x168] sm:$0xff] %vm4991, %v4644
      %5038 = vst.msk [vmem:[%s199 + $0x170] sm:$0xff] %vm4991, %v4645
      %5039 = vst.msk [vmem:[%s199 + $0x178] sm:$0xff] %vm4991, %v4646
      %5040 = vst.msk [vmem:[%s199 + $0x180] sm:$0xff] %vm4991, %v4647
      %5041 = vst.msk [vmem:[%s199 + $0x188] sm:$0xff] %vm4991, %v4648
      %5042 = vst.msk [vmem:[%s199 + $0x190] sm:$0xff] %vm4991, %v4649
      %5043 = vst.msk [vmem:[%s199 + $0x198] sm:$0xff] %vm4991, %v4650
      %5044 = vst.msk [vmem:[%s199 + $0x1a0] sm:$0xff] %vm4991, %v4651
      %5045 = vst.msk [vmem:[%s199 + $0x1a8] sm:$0xff] %vm4991, %v4652
      %5046 = vst.msk [vmem:[%s199 + $0x1b0] sm:$0xff] %vm4991, %v4653
      %5047 = vst.msk [vmem:[%s199 + $0x1b8] sm:$0xff] %vm4991, %v4654
      %5048 = vst.msk [vmem:[%s199 + $0x1c0] sm:$0xff] %vm4991, %v4655
      %5049 = vst.msk [vmem:[%s199 + $0x1c8] sm:$0xff] %vm4991, %v4656
      %5050 = vst.msk [vmem:[%s199 + $0x1d0] sm:$0xff] %vm4991, %v4657
      %5051 = vst.msk [vmem:[%s199 + $0x1d8] sm:$0xff] %vm4991, %v4658
      %5052 = vst.msk [vmem:[%s199 + $0x1e0] sm:$0xff] %vm4991, %v4659
      %5053 = vst.msk [vmem:[%s199 + $0x1e8] sm:$0xff] %vm4991, %v4660
      %5054 = vst.msk [vmem:[%s199 + $0x1f0] sm:$0xff] %vm4991, %v4661
      %5055 = vst.msk [vmem:[%s199 + $0x1f8] sm:$0xff] %vm4991, %v4662
      %5056 = vst.msk [vmem:[%s199 + $0x200] sm:$0xff] %vm4991, %v4663
      %5057 = vst.msk [vmem:[%s199 + $0x208] sm:$0xff] %vm4991, %v4664
      %5058 = vst.msk [vmem:[%s199 + $0x210] sm:$0xff] %vm4991, %v4665
      %5059 = vst.msk [vmem:[%s199 + $0x218] sm:$0xff] %vm4991, %v4666
      %5060 = vst.msk [vmem:[%s199 + $0x220] sm:$0xff] %vm4991, %v4667
      %5061 = vst.msk [vmem:[%s199 + $0x228] sm:$0xff] %vm4991, %v4668
      %5062 = vst.msk [vmem:[%s199 + $0x230] sm:$0xff] %vm4991, %v4669
      %5063 = vst.msk [vmem:[%s199 + $0x238] sm:$0xff] %vm4991, %v4670
      %5064 = vst.msk [vmem:[%s199 + $0x240] sm:$0xff] %vm4991, %v4671
      %5065 = vst.msk [vmem:[%s199 + $0x248] sm:$0xff] %vm4991, %v4672
      %5066 = vst.msk [vmem:[%s199 + $0x250] sm:$0xff] %vm4991, %v4673
      %5067 = vst.msk [vmem:[%s199 + $0x258] sm:$0xff] %vm4991, %v4674
      %5068 = vst.msk [vmem:[%s199 + $0x260] sm:$0xff] %vm4991, %v4675
      %5069 = vst.msk [vmem:[%s199 + $0x268] sm:$0xff] %vm4991, %v4676
      %5070 = vst.msk [vmem:[%s199 + $0x270] sm:$0xff] %vm4991, %v4677
      %5071 = vst.msk [vmem:[%s199 + $0x278] sm:$0xff] %vm4991, %v4678
      %5072 = vst.msk [vmem:[%s199 + $0x280] sm:$0xff] %vm4991, %v4679
      %5073 = vst.msk [vmem:[%s199 + $0x288] sm:$0xff] %vm4991, %v4680
      %5074 = vst.msk [vmem:[%s199 + $0x290] sm:$0xff] %vm4991, %v4681
      %5075 = vst.msk [vmem:[%s199 + $0x298] sm:$0xff] %vm4991, %v4682
      %5076 = vst.msk [vmem:[%s199 + $0x2a0] sm:$0xff] %vm4991, %v4683
      %5077 = vst.msk [vmem:[%s199 + $0x2a8] sm:$0xff] %vm4991, %v4684
      %5078 = vst.msk [vmem:[%s199 + $0x2b0] sm:$0xff] %vm4991, %v4685
      %5079 = vst.msk [vmem:[%s199 + $0x2b8] sm:$0xff] %vm4991, %v4686
      %5080 = vst.msk [vmem:[%s199 + $0x2c0] sm:$0xff] %vm4991, %v4687
      %5081 = vst.msk [vmem:[%s199 + $0x2c8] sm:$0xff] %vm4991, %v4688
      %5082 = vst.msk [vmem:[%s199 + $0x2d0] sm:$0xff] %vm4991, %v4689
      %5083 = vst.msk [vmem:[%s199 + $0x2d8] sm:$0xff] %vm4991, %v4690
      %5084 = vst.msk [vmem:[%s199 + $0x2e0] sm:$0xff] %vm4991, %v4691
      %5085 = vst.msk [vmem:[%s199 + $0x2e8] sm:$0xff] %vm4991, %v4692
      %5086 = vst.msk [vmem:[%s199 + $0x2f0] sm:$0xff] %vm4991, %v4693
      %5087 = vst.msk [vmem:[%s199 + $0x2f8] sm:$0xff] %vm4991, %v4694
      %5088 = vst.msk [vmem:[%s199 + $0x300] sm:$0xff] %vm4991, %v4695
      %5089 = vst.msk [vmem:[%s199 + $0x308] sm:$0xff] %vm4991, %v4696
      %5090 = vst.msk [vmem:[%s199 + $0x310] sm:$0xff] %vm4991, %v4697
      %5091 = vst.msk [vmem:[%s199 + $0x318] sm:$0xff] %vm4991, %v4698
      %5092 = vst.msk [vmem:[%s199 + $0x320] sm:$0xff] %vm4991, %v4699
      %5093 = vst.msk [vmem:[%s199 + $0x328] sm:$0xff] %vm4991, %v4700
      %5094 = vst.msk [vmem:[%s199 + $0x330] sm:$0xff] %vm4991, %v4701
      %5095 = vst.msk [vmem:[%s199 + $0x338] sm:$0xff] %vm4991, %v4702
      %5096 = vst.msk [vmem:[%s199 + $0x340] sm:$0xff] %vm4991, %v4703
      %5097 = vst.msk [vmem:[%s199 + $0x348] sm:$0xff] %vm4991, %v4704
      %5098 = vst.msk [vmem:[%s199 + $0x350] sm:$0xff] %vm4991, %v4705
      %5099 = vst.msk [vmem:[%s199 + $0x358] sm:$0xff] %vm4991, %v4706
      %5100 = vst.msk [vmem:[%s199 + $0x360] sm:$0xff] %vm4991, %v4707
      %5101 = vst.msk [vmem:[%s199 + $0x368] sm:$0xff] %vm4991, %v4708
      %5102 = vst.msk [vmem:[%s199 + $0x370] sm:$0xff] %vm4991, %v4709
      %5103 = vst.msk [vmem:[%s199 + $0x378] sm:$0xff] %vm4991, %v4710
      %5104 = vst.msk [vmem:[%s199 + $0x380] sm:$0xff] %vm4991, %v4711
      %5105 = vst.msk [vmem:[%s199 + $0x388] sm:$0xff] %vm4991, %v4712
      %5106 = vst.msk [vmem:[%s199 + $0x390] sm:$0xff] %vm4991, %v4713
      %5107 = vst.msk [vmem:[%s199 + $0x398] sm:$0xff] %vm4991, %v4714
      %5108 = vst.msk [vmem:[%s199 + $0x3a0] sm:$0xff] %vm4991, %v4715
      %5109 = vst.msk [vmem:[%s199 + $0x3a8] sm:$0xff] %vm4991, %v4716
      %5110 = vst.msk [vmem:[%s199 + $0x3b0] sm:$0xff] %vm4991, %v4717
      %5111 = vst.msk [vmem:[%s199 + $0x3b8] sm:$0xff] %vm4991, %v4718
      %5112 = vst.msk [vmem:[%s199 + $0x3c0] sm:$0xff] %vm4991, %v4719
      %5113 = vst.msk [vmem:[%s199 + $0x3c8] sm:$0xff] %vm4991, %v4720
      %5114 = vst.msk [vmem:[%s199 + $0x3d0] sm:$0xff] %vm4991, %v4721
      %5115 = vst.msk [vmem:[%s199 + $0x3d8] sm:$0xff] %vm4991, %v4722
      %5116 = vst.msk [vmem:[%s199 + $0x3e0] sm:$0xff] %vm4991, %v4723
      %5117 = vst.msk [vmem:[%s199 + $0x3e8] sm:$0xff] %vm4991, %v4724
      %5118 = vst.msk [vmem:[%s199 + $0x3f0] sm:$0xff] %vm4991, %v4725
      %5119 = vst.msk [vmem:[%s199 + $0x3f8] sm:$0xff] %vm4991, %v4726
      %5120 = vst.msk [vmem:[%s199 + $0x400] sm:$0xff] %vm4991, %v4727
      %5121 = vst.msk [vmem:[%s199 + $0x408] sm:$0xff] %vm4991, %v4728
      %5122 = vst.msk [vmem:[%s199 + $0x410] sm:$0xff] %vm4991, %v4729
      %5123 = vst.msk [vmem:[%s199 + $0x418] sm:$0xff] %vm4991, %v4730
      %5124 = vst.msk [vmem:[%s199 + $0x420] sm:$0xff] %vm4991, %v4731
      %5125 = vst.msk [vmem:[%s199 + $0x428] sm:$0xff] %vm4991, %v4732
      %5126 = vst.msk [vmem:[%s199 + $0x430] sm:$0xff] %vm4991, %v4733
      %5127 = vst.msk [vmem:[%s199 + $0x438] sm:$0xff] %vm4991, %v4734
      %5128 = vst.msk [vmem:[%s199 + $0x440] sm:$0xff] %vm4991, %v4735
      %5129 = vst.msk [vmem:[%s199 + $0x448] sm:$0xff] %vm4991, %v4736
      %5130 = vst.msk [vmem:[%s199 + $0x450] sm:$0xff] %vm4991, %v4737
      %5131 = vst.msk [vmem:[%s199 + $0x458] sm:$0xff] %vm4991, %v4738
      %5132 = vst.msk [vmem:[%s199 + $0x460] sm:$0xff] %vm4991, %v4739
      %5133 = vst.msk [vmem:[%s199 + $0x468] sm:$0xff] %vm4991, %v4740
      %5134 = vst.msk [vmem:[%s199 + $0x470] sm:$0xff] %vm4991, %v4741
      %5135 = vst.msk [vmem:[%s199 + $0x478] sm:$0xff] %vm4991, %v4742
      %5136 = vst.msk [vmem:[%s199 + $0x480] sm:$0xff] %vm4991, %v4743
      %5137 = vst.msk [vmem:[%s199 + $0x488] sm:$0xff] %vm4991, %v4744
      %5138 = vst.msk [vmem:[%s199 + $0x490] sm:$0xff] %vm4991, %v4745
      %5139 = vst.msk [vmem:[%s199 + $0x498] sm:$0xff] %vm4991, %v4746
      %5140 = vst.msk [vmem:[%s199 + $0x4a0] sm:$0xff] %vm4991, %v4747
      %5141 = vst.msk [vmem:[%s199 + $0x4a8] sm:$0xff] %vm4991, %v4748
      %5142 = vst.msk [vmem:[%s199 + $0x4b0] sm:$0xff] %vm4991, %v4749
      %5143 = vst.msk [vmem:[%s199 + $0x4b8] sm:$0xff] %vm4991, %v4750
      %5144 = vst.msk [vmem:[%s199 + $0x4c0] sm:$0xff] %vm4991, %v4751
      %5145 = vst.msk [vmem:[%s199 + $0x4c8] sm:$0xff] %vm4991, %v4752
      %5146 = vst.msk [vmem:[%s199 + $0x4d0] sm:$0xff] %vm4991, %v4753
      %5147 = vst.msk [vmem:[%s199 + $0x4d8] sm:$0xff] %vm4991, %v4754
      %5148 = vst.msk [vmem:[%s199 + $0x4e0] sm:$0xff] %vm4991, %v4755
      %5149 = vst.msk [vmem:[%s199 + $0x4e8] sm:$0xff] %vm4991, %v4756
      %5150 = vst.msk [vmem:[%s199 + $0x4f0] sm:$0xff] %vm4991, %v4757
      %5151 = vst.msk [vmem:[%s199 + $0x4f8] sm:$0xff] %vm4991, %v4758
      %5152 = vst.msk [vmem:[%s199 + $0x500] sm:$0xff] %vm4991, %v4759
      %5153 = vst.msk [vmem:[%s199 + $0x508] sm:$0xff] %vm4991, %v4760
      %5154 = vst.msk [vmem:[%s199 + $0x510] sm:$0xff] %vm4991, %v4761
      %5155 = vst.msk [vmem:[%s199 + $0x518] sm:$0xff] %vm4991, %v4762
      %5156 = vst.msk [vmem:[%s199 + $0x520] sm:$0xff] %vm4991, %v4763
      %5157 = vst.msk [vmem:[%s199 + $0x528] sm:$0xff] %vm4991, %v4764
      %5158 = vst.msk [vmem:[%s199 + $0x530] sm:$0xff] %vm4991, %v4765
      %5159 = vst.msk [vmem:[%s199 + $0x538] sm:$0xff] %vm4991, %v4766
      %5160 = vst.msk [vmem:[%s199 + $0x540] sm:$0xff] %vm4991, %v4767
      %5161 = vst.msk [vmem:[%s199 + $0x548] sm:$0xff] %vm4991, %v4768
      %5162 = vst.msk [vmem:[%s199 + $0x550] sm:$0xff] %vm4991, %v4769
      %5163 = vst.msk [vmem:[%s199 + $0x558] sm:$0xff] %vm4991, %v4770
      %5164 = vst.msk [vmem:[%s199 + $0x560] sm:$0xff] %vm4991, %v4771
      %5165 = vst.msk [vmem:[%s199 + $0x568] sm:$0xff] %vm4991, %v4772
      %5166 = vst.msk [vmem:[%s199 + $0x570] sm:$0xff] %vm4991, %v4773
      %5167 = vst.msk [vmem:[%s199 + $0x578] sm:$0xff] %vm4991, %v4774
      %5168 = vst.msk [vmem:[%s199 + $0x580] sm:$0xff] %vm4991, %v4775
      %5169 = vst.msk [vmem:[%s199 + $0x588] sm:$0xff] %vm4991, %v4776
      %5170 = vst.msk [vmem:[%s199 + $0x590] sm:$0xff] %vm4991, %v4777
      %5171 = vst.msk [vmem:[%s199 + $0x598] sm:$0xff] %vm4991, %v4778
      %5172 = vst.msk [vmem:[%s199 + $0x5a0] sm:$0xff] %vm4991, %v4779
      %5173 = vst.msk [vmem:[%s199 + $0x5a8] sm:$0xff] %vm4991, %v4780
      %5174 = vst.msk [vmem:[%s199 + $0x5b0] sm:$0xff] %vm4991, %v4781
      %5175 = vst.msk [vmem:[%s199 + $0x5b8] sm:$0xff] %vm4991, %v4782
      %5176 = vst.msk [vmem:[%s199 + $0x5c0] sm:$0xff] %vm4991, %v4783
      %5177 = vst.msk [vmem:[%s199 + $0x5c8] sm:$0xff] %vm4991, %v4784
      %5178 = vst.msk [vmem:[%s199 + $0x5d0] sm:$0xff] %vm4991, %v4785
      %5179 = vst.msk [vmem:[%s199 + $0x5d8] sm:$0xff] %vm4991, %v4786
      %5180 = vst.msk [vmem:[%s199 + $0x5e0] sm:$0xff] %vm4991, %v4787
      %5181 = vst.msk [vmem:[%s199 + $0x5e8] sm:$0xff] %vm4991, %v4788
      %5182 = vst.msk [vmem:[%s199 + $0x5f0] sm:$0xff] %vm4991, %v4789
      %5183 = vst.msk [vmem:[%s199 + $0x5f8] sm:$0xff] %vm4991, %v4790
      %5184 = vst.msk [vmem:[%s199 + $0x600] sm:$0xff] %vm4991, %v4791
      %5185 = vst.msk [vmem:[%s199 + $0x608] sm:$0xff] %vm4991, %v4792
      %5186 = vst.msk [vmem:[%s199 + $0x610] sm:$0xff] %vm4991, %v4793
      %5187 = vst.msk [vmem:[%s199 + $0x618] sm:$0xff] %vm4991, %v4794
      %5188 = vst.msk [vmem:[%s199 + $0x620] sm:$0xff] %vm4991, %v4795
      %5189 = vst.msk [vmem:[%s199 + $0x628] sm:$0xff] %vm4991, %v4796
      %5190 = vst.msk [vmem:[%s199 + $0x630] sm:$0xff] %vm4991, %v4797
      %5191 = vst.msk [vmem:[%s199 + $0x638] sm:$0xff] %vm4991, %v4798
      %5192 = vst.msk [vmem:[%s199 + $0x640] sm:$0xff] %vm4991, %v4799
      %5193 = vst.msk [vmem:[%s199 + $0x648] sm:$0xff] %vm4991, %v4800
      %5194 = vst.msk [vmem:[%s199 + $0x650] sm:$0xff] %vm4991, %v4801
      %5195 = vst.msk [vmem:[%s199 + $0x658] sm:$0xff] %vm4991, %v4802
      %5196 = vst.msk [vmem:[%s199 + $0x660] sm:$0xff] %vm4991, %v4803
      %5197 = vst.msk [vmem:[%s199 + $0x668] sm:$0xff] %vm4991, %v4804
      %5198 = vst.msk [vmem:[%s199 + $0x670] sm:$0xff] %vm4991, %v4805
      %5199 = vst.msk [vmem:[%s199 + $0x678] sm:$0xff] %vm4991, %v4806
      %5200 = vst.msk [vmem:[%s199 + $0x680] sm:$0xff] %vm4991, %v4807
      %5201 = vst.msk [vmem:[%s199 + $0x688] sm:$0xff] %vm4991, %v4808
      %5202 = vst.msk [vmem:[%s199 + $0x690] sm:$0xff] %vm4991, %v4809
      %5203 = vst.msk [vmem:[%s199 + $0x698] sm:$0xff] %vm4991, %v4810
      %5204 = vst.msk [vmem:[%s199 + $0x6a0] sm:$0xff] %vm4991, %v4811
      %5205 = vst.msk [vmem:[%s199 + $0x6a8] sm:$0xff] %vm4991, %v4812
      %5206 = vst.msk [vmem:[%s199 + $0x6b0] sm:$0xff] %vm4991, %v4813
      %5207 = vst.msk [vmem:[%s199 + $0x6b8] sm:$0xff] %vm4991, %v4814
      %5208 = vst.msk [vmem:[%s199 + $0x6c0] sm:$0xff] %vm4991, %v4815
      %5209 = vst.msk [vmem:[%s199 + $0x6c8] sm:$0xff] %vm4991, %v4816
      %5210 = vst.msk [vmem:[%s199 + $0x6d0] sm:$0xff] %vm4991, %v4817
      %5211 = vst.msk [vmem:[%s199 + $0x6d8] sm:$0xff] %vm4991, %v4818
      %5212 = vst.msk [vmem:[%s199 + $0x6e0] sm:$0xff] %vm4991, %v4819
      %5213 = vst.msk [vmem:[%s199 + $0x6e8] sm:$0xff] %vm4991, %v4820
      %5214 = vst.msk [vmem:[%s199 + $0x6f0] sm:$0xff] %vm4991, %v4821
      %5215 = vst.msk [vmem:[%s199 + $0x6f8] sm:$0xff] %vm4991, %v4822
      %5216 = vst.msk [vmem:[%s199 + $0x700] sm:$0xff] %vm4991, %v4823
      %5217 = vst.msk [vmem:[%s199 + $0x708] sm:$0xff] %vm4991, %v4824
      %5218 = vst.msk [vmem:[%s199 + $0x710] sm:$0xff] %vm4991, %v4825
      %5219 = vst.msk [vmem:[%s199 + $0x718] sm:$0xff] %vm4991, %v4826
      %5220 = vst.msk [vmem:[%s199 + $0x720] sm:$0xff] %vm4991, %v4827
      %5221 = vst.msk [vmem:[%s199 + $0x728] sm:$0xff] %vm4991, %v4828
      %5222 = vst.msk [vmem:[%s199 + $0x730] sm:$0xff] %vm4991, %v4829
      %5223 = vst.msk [vmem:[%s199 + $0x738] sm:$0xff] %vm4991, %v4830
      %5224 = vst.msk [vmem:[%s199 + $0x740] sm:$0xff] %vm4991, %v4831
      %5225 = vst.msk [vmem:[%s199 + $0x748] sm:$0xff] %vm4991, %v4832
      %5226 = vst.msk [vmem:[%s199 + $0x750] sm:$0xff] %vm4991, %v4833
      %5227 = vst.msk [vmem:[%s199 + $0x758] sm:$0xff] %vm4991, %v4834
      %5228 = vst.msk [vmem:[%s199 + $0x760] sm:$0xff] %vm4991, %v4835
      %5229 = vst.msk [vmem:[%s199 + $0x768] sm:$0xff] %vm4991, %v4836
      %5230 = vst.msk [vmem:[%s199 + $0x770] sm:$0xff] %vm4991, %v4837
      %5231 = vst.msk [vmem:[%s199 + $0x778] sm:$0xff] %vm4991, %v4838
      %5232 = vst.msk [vmem:[%s199 + $0x780] sm:$0xff] %vm4991, %v4839
      %5233 = vst.msk [vmem:[%s199 + $0x788] sm:$0xff] %vm4991, %v4840
      %5234 = vst.msk [vmem:[%s199 + $0x790] sm:$0xff] %vm4991, %v4841
      %5235 = vst.msk [vmem:[%s199 + $0x798] sm:$0xff] %vm4991, %v4842
      %5236 = vst.msk [vmem:[%s199 + $0x7a0] sm:$0xff] %vm4991, %v4843
      %5237 = vst.msk [vmem:[%s199 + $0x7a8] sm:$0xff] %vm4991, %v4844
      %5238 = vst.msk [vmem:[%s199 + $0x7b0] sm:$0xff] %vm4991, %v4845
      %5239 = vst.msk [vmem:[%s199 + $0x7b8] sm:$0xff] %vm4991, %v4846
      %5240 = vst.msk [vmem:[%s199 + $0x7c0] sm:$0xff] %vm4991, %v4847
      %5241 = vst.msk [vmem:[%s199 + $0x7c8] sm:$0xff] %vm4991, %v4848
      %5242 = vst.msk [vmem:[%s199 + $0x7d0] sm:$0xff] %vm4991, %v4849
      %5243 = vst.msk [vmem:[%s199 + $0x7d8] sm:$0xff] %vm4991, %v4850
      %5244 = vst.msk [vmem:[%s199 + $0x7e0] sm:$0xff] %vm4991, %v4851
      %5245 = vst.msk [vmem:[%s199 + $0x7e8] sm:$0xff] %vm4991, %v4852
      %5246 = vst.msk [vmem:[%s199 + $0x7f0] sm:$0xff] %vm4991, %v4853
      %5247 = vst.msk [vmem:[%s199 + $0x7f8] sm:$0xff] %vm4991, %v4854
      %5248 = vst.msk [vmem:[%s199 + $0x800] sm:$0xff] %vm4991, %v4855
      %5249 = vst.msk [vmem:[%s199 + $0x808] sm:$0xff] %vm4991, %v4856
      %5250 = vst.msk [vmem:[%s199 + $0x810] sm:$0xff] %vm4991, %v4857
      %5251 = vst.msk [vmem:[%s199 + $0x818] sm:$0xff] %vm4991, %v4858
      %5252 = vst.msk [vmem:[%s199 + $0x820] sm:$0xff] %vm4991, %v4859
      %5253 = vst.msk [vmem:[%s199 + $0x828] sm:$0xff] %vm4991, %v4860
      %5254 = vst.msk [vmem:[%s199 + $0x830] sm:$0xff] %vm4991, %v4861
      %5255 = vst.msk [vmem:[%s199 + $0x838] sm:$0xff] %vm4991, %v4862
      %5256 = vst.msk [vmem:[%s199 + $0x840] sm:$0xff] %vm4991, %v4863
      %5257 = vst.msk [vmem:[%s199 + $0x848] sm:$0xff] %vm4991, %v4864
      %5258 = vst.msk [vmem:[%s199 + $0x850] sm:$0xff] %vm4991, %v4865
      %5259 = vst.msk [vmem:[%s199 + $0x858] sm:$0xff] %vm4991, %v4866
      %5260 = vst.msk [vmem:[%s199 + $0x860] sm:$0xff] %vm4991, %v4867
      %5261 = vst.msk [vmem:[%s199 + $0x868] sm:$0xff] %vm4991, %v4868
      %5262 = vst.msk [vmem:[%s199 + $0x870] sm:$0xff] %vm4991, %v4869
      %5263 = vst.msk [vmem:[%s199 + $0x878] sm:$0xff] %vm4991, %v4870
      %5264 = vst.msk [vmem:[%s199 + $0x880] sm:$0xff] %vm4991, %v4871
      %5265 = vst.msk [vmem:[%s199 + $0x888] sm:$0xff] %vm4991, %v4872
      %5266 = vst.msk [vmem:[%s199 + $0x890] sm:$0xff] %vm4991, %v4873
      %5267 = vst.msk [vmem:[%s199 + $0x898] sm:$0xff] %vm4991, %v4874
      %5268 = vst.msk [vmem:[%s199 + $0x8a0] sm:$0xff] %vm4991, %v4875
      %5269 = vst.msk [vmem:[%s199 + $0x8a8] sm:$0xff] %vm4991, %v4876
      %5270 = vst.msk [vmem:[%s199 + $0x8b0] sm:$0xff] %vm4991, %v4877
      %5271 = vst.msk [vmem:[%s199 + $0x8b8] sm:$0xff] %vm4991, %v4878
      %5272 = vst.msk [vmem:[%s199 + $0x8c0] sm:$0xff] %vm4991, %v4879
      %5273 = vst.msk [vmem:[%s199 + $0x8c8] sm:$0xff] %vm4991, %v4880
      %5274 = vst.msk [vmem:[%s199 + $0x8d0] sm:$0xff] %vm4991, %v4881
      %5275 = vst.msk [vmem:[%s199 + $0x8d8] sm:$0xff] %vm4991, %v4882
      %5276 = vst.msk [vmem:[%s199 + $0x8e0] sm:$0xff] %vm4991, %v4883
      %5277 = vst.msk [vmem:[%s199 + $0x8e8] sm:$0xff] %vm4991, %v4884
      %5278 = vst.msk [vmem:[%s199 + $0x8f0] sm:$0xff] %vm4991, %v4885
      %5279 = vst.msk [vmem:[%s199 + $0x8f8] sm:$0xff] %vm4991, %v4886
      %5280 = vst.msk [vmem:[%s199 + $0x900] sm:$0xff] %vm4991, %v4887
      %5281 = vst.msk [vmem:[%s199 + $0x908] sm:$0xff] %vm4991, %v4888
      %5282 = vst.msk [vmem:[%s199 + $0x910] sm:$0xff] %vm4991, %v4889
      %5283 = vst.msk [vmem:[%s199 + $0x918] sm:$0xff] %vm4991, %v4890
      %5284 = vst.msk [vmem:[%s199 + $0x920] sm:$0xff] %vm4991, %v4891
      %5285 = vst.msk [vmem:[%s199 + $0x928] sm:$0xff] %vm4991, %v4892
      %5286 = vst.msk [vmem:[%s199 + $0x930] sm:$0xff] %vm4991, %v4893
      %5287 = vst.msk [vmem:[%s199 + $0x938] sm:$0xff] %vm4991, %v4894
      %5288 = vst.msk [vmem:[%s199 + $0x940] sm:$0xff] %vm4991, %v4895
      %5289 = vst.msk [vmem:[%s199 + $0x948] sm:$0xff] %vm4991, %v4896
      %5290 = vst.msk [vmem:[%s199 + $0x950] sm:$0xff] %vm4991, %v4897
      %5291 = vst.msk [vmem:[%s199 + $0x958] sm:$0xff] %vm4991, %v4898
      %5292 = vst.msk [vmem:[%s199 + $0x960] sm:$0xff] %vm4991, %v4899
      %5293 = vst.msk [vmem:[%s199 + $0x968] sm:$0xff] %vm4991, %v4900
      %5294 = vst.msk [vmem:[%s199 + $0x970] sm:$0xff] %vm4991, %v4901
      %5295 = vst.msk [vmem:[%s199 + $0x978] sm:$0xff] %vm4991, %v4902
      %5296 = vst.msk [vmem:[%s199 + $0x980] sm:$0xff] %vm4991, %v4903
      %5297 = vst.msk [vmem:[%s199 + $0x988] sm:$0xff] %vm4991, %v4904
      %5298 = vst.msk [vmem:[%s199 + $0x990] sm:$0xff] %vm4991, %v4905
      %5299 = vst.msk [vmem:[%s199 + $0x998] sm:$0xff] %vm4991, %v4906
      %5300 = vst.msk [vmem:[%s199 + $0x9a0] sm:$0xff] %vm4991, %v4907
      %5301 = vst.msk [vmem:[%s199 + $0x9a8] sm:$0xff] %vm4991, %v4908
      %5302 = vst.msk [vmem:[%s199 + $0x9b0] sm:$0xff] %vm4991, %v4909
      %5303 = vst.msk [vmem:[%s199 + $0x9b8] sm:$0xff] %vm4991, %v4910
      %5304 = vst.msk [vmem:[%s199 + $0x9c0] sm:$0xff] %vm4991, %v4911
      %5305 = vst.msk [vmem:[%s199 + $0x9c8] sm:$0xff] %vm4991, %v4912
      %5306 = vst.msk [vmem:[%s199 + $0x9d0] sm:$0xff] %vm4991, %v4913
      %5307 = vst.msk [vmem:[%s199 + $0x9d8] sm:$0xff] %vm4991, %v4914
      %5308 = vst.msk [vmem:[%s199 + $0x9e0] sm:$0xff] %vm4991, %v4915
      %5309 = vst.msk [vmem:[%s199 + $0x9e8] sm:$0xff] %vm4991, %v4916
      %5310 = vst.msk [vmem:[%s199 + $0x9f0] sm:$0xff] %vm4991, %v4917
      %5311 = vst.msk [vmem:[%s199 + $0x9f8] sm:$0xff] %vm4991, %v4918
      %5312 = vst.msk [vmem:[%s199 + $0xa00] sm:$0xff] %vm4991, %v4919
      %5313 = vst.msk [vmem:[%s199 + $0xa08] sm:$0xff] %vm4991, %v4920
      %5314 = vst.msk [vmem:[%s199 + $0xa10] sm:$0xff] %vm4991, %v4921
      %5315 = vst.msk [vmem:[%s199 + $0xa18] sm:$0xff] %vm4991, %v4922
      %5316 = vst.msk [vmem:[%s199 + $0xa20] sm:$0xff] %vm4991, %v4923
      %5317 = vst.msk [vmem:[%s199 + $0xa28] sm:$0xff] %vm4991, %v4924
      %5318 = vst.msk [vmem:[%s199 + $0xa30] sm:$0xff] %vm4991, %v4925
      %5319 = vst.msk [vmem:[%s199 + $0xa38] sm:$0xff] %vm4991, %v4926
      %5320 = vst.msk [vmem:[%s199 + $0xa40] sm:$0xff] %vm4991, %v4927
      %5321 = vst.msk [vmem:[%s199 + $0xa48] sm:$0xff] %vm4991, %v4928
      %5322 = vst.msk [vmem:[%s199 + $0xa50] sm:$0xff] %vm4991, %v4929
      %5323 = vst.msk [vmem:[%s199 + $0xa58] sm:$0xff] %vm4991, %v4930
      %5324 = vst.msk [vmem:[%s199 + $0xa60] sm:$0xff] %vm4991, %v4931
      %5325 = vst.msk [vmem:[%s199 + $0xa68] sm:$0xff] %vm4991, %v4932
      %5326 = vst.msk [vmem:[%s199 + $0xa70] sm:$0xff] %vm4991, %v4933
      %5327 = vst.msk [vmem:[%s199 + $0xa78] sm:$0xff] %vm4991, %v4934
      %5328 = vst.msk [vmem:[%s199 + $0xa80] sm:$0xff] %vm4991, %v4935
      %5329 = vst.msk [vmem:[%s199 + $0xa88] sm:$0xff] %vm4991, %v4936
      %5330 = vst.msk [vmem:[%s199 + $0xa90] sm:$0xff] %vm4991, %v4937
      %5331 = vst.msk [vmem:[%s199 + $0xa98] sm:$0xff] %vm4991, %v4938
      %5332 = vst.msk [vmem:[%s199 + $0xaa0] sm:$0xff] %vm4991, %v4939
      %5333 = vst.msk [vmem:[%s199 + $0xaa8] sm:$0xff] %vm4991, %v4940
      %5334 = vst.msk [vmem:[%s199 + $0xab0] sm:$0xff] %vm4991, %v4941
      %5335 = vst.msk [vmem:[%s199 + $0xab8] sm:$0xff] %vm4991, %v4942
      %5336 = vst.msk [vmem:[%s199 + $0xac0] sm:$0xff] %vm4991, %v4943
      %5337 = vst.msk [vmem:[%s199 + $0xac8] sm:$0xff] %vm4991, %v4944
      %5338 = vst.msk [vmem:[%s199 + $0xad0] sm:$0xff] %vm4991, %v4945
      %5339 = vst.msk [vmem:[%s199 + $0xad8] sm:$0xff] %vm4991, %v4946
      %5340 = vst.msk [vmem:[%s199 + $0xae0] sm:$0xff] %vm4991, %v4947
      %5341 = vst.msk [vmem:[%s199 + $0xae8] sm:$0xff] %vm4991, %v4948
      %5342 = vst.msk [vmem:[%s199 + $0xaf0] sm:$0xff] %vm4991, %v4949
      %5343 = vst.msk [vmem:[%s199 + $0xaf8] sm:$0xff] %vm4991, %v4950
      %5344 = vst.msk [vmem:[%s199 + $0xb00] sm:$0xff] %vm4991, %v4951
      %5345 = vst.msk [vmem:[%s199 + $0xb08] sm:$0xff] %vm4991, %v4952
      %5346 = vst.msk [vmem:[%s199 + $0xb10] sm:$0xff] %vm4991, %v4953
      %5347 = vst.msk [vmem:[%s199 + $0xb18] sm:$0xff] %vm4991, %v4954
      %5348 = vst.msk [vmem:[%s199 + $0xb20] sm:$0xff] %vm4991, %v4955
      %5349 = vst.msk [vmem:[%s199 + $0xb28] sm:$0xff] %vm4991, %v4956
      %5350 = vst.msk [vmem:[%s199 + $0xb30] sm:$0xff] %vm4991, %v4957
      %5351 = vst.msk [vmem:[%s199 + $0xb38] sm:$0xff] %vm4991, %v4958
      %5352 = vst.msk [vmem:[%s199 + $0xb40] sm:$0xff] %vm4991, %v4959
      %5353 = vst.msk [vmem:[%s199 + $0xb48] sm:$0xff] %vm4991, %v4960
      %5354 = vst.msk [vmem:[%s199 + $0xb50] sm:$0xff] %vm4991, %v4961
      %5355 = vst.msk [vmem:[%s199 + $0xb58] sm:$0xff] %vm4991, %v4962
      %5356 = vst.msk [vmem:[%s199 + $0xb60] sm:$0xff] %vm4991, %v4963
      %5357 = vst.msk [vmem:[%s199 + $0xb68] sm:$0xff] %vm4991, %v4964
      %5358 = vst.msk [vmem:[%s199 + $0xb70] sm:$0xff] %vm4991, %v4965
      %5359 = vst.msk [vmem:[%s199 + $0xb78] sm:$0xff] %vm4991, %v4966
      %5360 = vst.msk [vmem:[%s199 + $0xb80] sm:$0xff] %vm4991, %v4967
      %5361 = vst.msk [vmem:[%s199 + $0xb88] sm:$0xff] %vm4991, %v4968
      %5362 = vst.msk [vmem:[%s199 + $0xb90] sm:$0xff] %vm4991, %v4969
      %5363 = vst.msk [vmem:[%s199 + $0xb98] sm:$0xff] %vm4991, %v4970
      %5364 = vst.msk [vmem:[%s199 + $0xba0] sm:$0xff] %vm4991, %v4971
      %5365 = vst.msk [vmem:[%s199 + $0xba8] sm:$0xff] %vm4991, %v4972
      %5366 = vst.msk [vmem:[%s199 + $0xbb0] sm:$0xff] %vm4991, %v4973
      %5367 = vst.msk [vmem:[%s199 + $0xbb8] sm:$0xff] %vm4991, %v4974
      %5368 = vst.msk [vmem:[%s199 + $0xbc0] sm:$0xff] %vm4991, %v4975
      %5369 = vst.msk [vmem:[%s199 + $0xbc8] sm:$0xff] %vm4991, %v4976
      %5370 = vst.msk [vmem:[%s199 + $0xbd0] sm:$0xff] %vm4991, %v4977
      %5371 = vst.msk [vmem:[%s199 + $0xbd8] sm:$0xff] %vm4991, %v4978
      %5372 = vst.msk [vmem:[%s199 + $0xbe0] sm:$0xff] %vm4991, %v4979
      %5373 = vst.msk [vmem:[%s199 + $0xbe8] sm:$0xff] %vm4991, %v4980
      %5374 = vst.msk [vmem:[%s199 + $0xbf0] sm:$0xff] %vm4991, %v4981
      %5375 = vst.msk [vmem:[%s199 + $0xbf8] sm:$0xff] %vm4991, %v4982
      %5376 = vst.msk [vmem:[%s199 + $0xc00] sm:$0xff] %vm4991, %v4983
      %5377 = vst.msk [vmem:[%s199 + $0xc08] sm:$0xff] %vm4991, %v4984
      %5378 = vst.msk [vmem:[%s199 + $0xc10] sm:$0xff] %vm4991, %v4985
      %5379 = vst.msk [vmem:[%s199 + $0xc18] sm:$0xff] %vm4991, %v4986
      %5380 = vst.msk [vmem:[%s199 + $0xc20] sm:$0xff] %vm4991, %v4987
      %5381 = vst.msk [vmem:[%s199 + $0xc28] sm:$0xff] %vm4991, %v4988
      %5382 = vst.msk [vmem:[%s199 + $0xc30] sm:$0xff] %vm4991, %v4989
      %5383 = vst.msk [vmem:[%s199 + $0xc38] sm:$0xff] %vm4991, %v4990
      %s5384 = smul.u32 392, %s15
      %p5385 = scmp.lt.s32.totalorder %s5384, 783
      %s5386 = scalar_select %p5385, %s5384, 783
      %s5387 = smul.addr %s5386, 8
      %s5388 = scalar_lea.vmem %s4, %s5387
      // Predicated region
      $region37: #{encoder_forward.6} parent=35 // pred_check
        %p5389 = pneg %p122
      $region38: #{encoder_forward.6} parent=35 // pred_check_branch
        %5391 = sbr.rel (%p5389) target = $region40
      $region39: #{encoder_forward.6} parent=35 // pred_region
        %s5392 = smul.u32 392, %s15
      $region40: #{encoder_forward.6} parent=35 // pred_fallthru
        _
    $region36: #{encoder_forward.6} parent=5 // pred_fallthru
      _
    %p5393 = scmp.le.s32.totalorder 2, %s10
    // Predicated region
    $region41: #{encoder_forward.6} parent=5 // pred_check
      %p5394 = pneg %p5393
    $region42: #{encoder_forward.6} parent=5 // pred_check_branch
      %5396 = sbr.rel (%p5394) target = $region44
    $region43: #{encoder_forward.6} parent=5 // pred_region
      %s5397 = ssub.s32 %s10, 2
      // Predicated region
      $region45: #{encoder_forward.6} parent=43 // pred_check
        %p5398 = pneg %p128
      $region46: #{encoder_forward.6} parent=43 // pred_check_branch
        %5400 = sbr.rel (%p5398) target = $region48
      $region47: #{encoder_forward.6} parent=43 // pred_region
        %s5401 = smul.u32 392, %s16
        %p5402 = scmp.lt.s32.totalorder %s5401, 783
        %s5403 = scalar_select %p5402, %s5401, 783
        %s5404 = smul.addr %s5403, 8
        %s5405 = scalar_lea.vmem %s4, %s5404
      $region48: #{encoder_forward.6} parent=43 // pred_fallthru
        _
    $region44: #{encoder_forward.6} parent=5 // pred_fallthru
      _
  $region6: #{encoder_forward.6} parent=0 // loop_footer
    %s14 = sadd.s32 1, %s10
  $region7: #{encoder_forward.6} parent=0 // loop_footer_branch
    %9 = sbr.rel target = $region3
  $region8: #{encoder_forward.6} parent=0 // loop_exit
    _

// kernel: encoder_forward.7
$region0: #{encoder_forward.7}
  #allocation0 [shape = 'u32[]', space=smem, size = 0x4, offset = 0x4, fixed_abs, tag = 'smem constant byte address 0x4 - core index']
  #allocation1 [shape = 'u32[144,128]{1,0:T(1,128)}', space=vmem, size = 0x12000, scoped, tag = 'internal scratch']
  %s0 = inlined_call_operand.vmem [shape: f32[1568,128], index: 0, kind: input, shape index: {}]
  %s1 = inlined_call_operand.vmem [shape: f32[128,16], index: 1, kind: input, shape index: {}]
  %s2 = inlined_call_operand.vmem [shape: f32[1,16], index: 2, kind: input, shape index: {}]
  %s3 = inlined_call_operand.vmem [shape: f32[1,16], index: 3, kind: input, shape index: {}]
  %s4 = inlined_call_operand.vmem [shape: f32[1568,16], index: 4, kind: output, shape index: {}]
  %s5 = sld [smem:[#allocation0]]
  $region26: #{encoder_forward.7} parent=0
    _
  %s7 = ssub.s32 1, %s5
  %s8 = scalar_select 0, %s7, %s5
  // Predicated region
  $region2: #{encoder_forward.7} parent=0 // pred_check
    _
  $region3: #{encoder_forward.7} parent=0 // pred_check_branch
    %10 = sbr.rel (0) target = $region5
  $region4: #{encoder_forward.7} parent=0 // pred_region
    _
  $region5: #{encoder_forward.7} parent=0 // pred_fallthru
    _
  // Predicated region
  $region6: #{encoder_forward.7} parent=0 // pred_check
    _
  $region7: #{encoder_forward.7} parent=0 // pred_check_branch
    %12 = sbr.rel (0) target = $region9
  $region8: #{encoder_forward.7} parent=0 // pred_region
    _
  $region9: #{encoder_forward.7} parent=0 // pred_fallthru
    _
  // Predicated region
  $region10: #{encoder_forward.7} parent=0 // pred_check
    _
  $region11: #{encoder_forward.7} parent=0 // pred_check_branch
    %14 = sbr.rel (0) target = $region13
  $region12: #{encoder_forward.7} parent=0 // pred_region
    _
  $region13: #{encoder_forward.7} parent=0 // pred_fallthru
    _
  // Predicated region
  $region14: #{encoder_forward.7} parent=0 // pred_check
    _
  $region15: #{encoder_forward.7} parent=0 // pred_check_branch
    %16 = sbr.rel (0) target = $region17
  $region16: #{encoder_forward.7} parent=0 // pred_region
    _
  $region17: #{encoder_forward.7} parent=0 // pred_fallthru
    _
  %v17 = vld [vmem:[%s0] sm:$0xff]
  %v18 = vld [vmem:[%s0 + $0x8] sm:$0xff]
  %v19 = vld [vmem:[%s0 + $0x10] sm:$0xff]
  %v20 = vld [vmem:[%s0 + $0x18] sm:$0xff]
  %v21 = vld [vmem:[%s0 + $0x20] sm:$0xff]
  %v22 = vld [vmem:[%s0 + $0x28] sm:$0xff]
  %v23 = vld [vmem:[%s0 + $0x30] sm:$0xff]
  %v24 = vld [vmem:[%s0 + $0x38] sm:$0xff]
  %v25 = vld [vmem:[%s0 + $0x40] sm:$0xff]
  %v26 = vld [vmem:[%s0 + $0x48] sm:$0xff]
  %v27 = vld [vmem:[%s0 + $0x50] sm:$0xff]
  %v28 = vld [vmem:[%s0 + $0x58] sm:$0xff]
  %v29 = vld [vmem:[%s0 + $0x60] sm:$0xff]
  %v30 = vld [vmem:[%s0 + $0x68] sm:$0xff]
  %v31 = vld [vmem:[%s0 + $0x70] sm:$0xff]
  %v32 = vld [vmem:[%s0 + $0x78] sm:$0xff]
  %v33 = vld [vmem:[%s0 + $0x80] sm:$0xff]
  %v34 = vld [vmem:[%s0 + $0x88] sm:$0xff]
  %v35 = vld [vmem:[%s0 + $0x90] sm:$0xff]
  %v36 = vld [vmem:[%s0 + $0x98] sm:$0xff]
  %v37 = vld [vmem:[%s0 + $0xa0] sm:$0xff]
  %v38 = vld [vmem:[%s0 + $0xa8] sm:$0xff]
  %v39 = vld [vmem:[%s0 + $0xb0] sm:$0xff]
  %v40 = vld [vmem:[%s0 + $0xb8] sm:$0xff]
  %v41 = vld [vmem:[%s0 + $0xc0] sm:$0xff]
  %v42 = vld [vmem:[%s0 + $0xc8] sm:$0xff]
  %v43 = vld [vmem:[%s0 + $0xd0] sm:$0xff]
  %v44 = vld [vmem:[%s0 + $0xd8] sm:$0xff]
  %v45 = vld [vmem:[%s0 + $0xe0] sm:$0xff]
  %v46 = vld [vmem:[%s0 + $0xe8] sm:$0xff]
  %v47 = vld [vmem:[%s0 + $0xf0] sm:$0xff]
  %v48 = vld [vmem:[%s0 + $0xf8] sm:$0xff]
  %v49 = vld [vmem:[%s0 + $0x100] sm:$0xff]
  %v50 = vld [vmem:[%s0 + $0x108] sm:$0xff]
  %v51 = vld [vmem:[%s0 + $0x110] sm:$0xff]
  %v52 = vld [vmem:[%s0 + $0x118] sm:$0xff]
  %v53 = vld [vmem:[%s0 + $0x120] sm:$0xff]
  %v54 = vld [vmem:[%s0 + $0x128] sm:$0xff]
  %v55 = vld [vmem:[%s0 + $0x130] sm:$0xff]
  %v56 = vld [vmem:[%s0 + $0x138] sm:$0xff]
  %v57 = vld [vmem:[%s0 + $0x140] sm:$0xff]
  %v58 = vld [vmem:[%s0 + $0x148] sm:$0xff]
  %v59 = vld [vmem:[%s0 + $0x150] sm:$0xff]
  %v60 = vld [vmem:[%s0 + $0x158] sm:$0xff]
  %v61 = vld [vmem:[%s0 + $0x160] sm:$0xff]
  %v62 = vld [vmem:[%s0 + $0x168] sm:$0xff]
  %v63 = vld [vmem:[%s0 + $0x170] sm:$0xff]
  %v64 = vld [vmem:[%s0 + $0x178] sm:$0xff]
  %v65 = vld [vmem:[%s0 + $0x180] sm:$0xff]
  %v66 = vld [vmem:[%s0 + $0x188] sm:$0xff]
  %v67 = vld [vmem:[%s0 + $0x190] sm:$0xff]
  %v68 = vld [vmem:[%s0 + $0x198] sm:$0xff]
  %v69 = vld [vmem:[%s0 + $0x1a0] sm:$0xff]
  %v70 = vld [vmem:[%s0 + $0x1a8] sm:$0xff]
  %v71 = vld [vmem:[%s0 + $0x1b0] sm:$0xff]
  %v72 = vld [vmem:[%s0 + $0x1b8] sm:$0xff]
  %v73 = vld [vmem:[%s0 + $0x1c0] sm:$0xff]
  %v74 = vld [vmem:[%s0 + $0x1c8] sm:$0xff]
  %v75 = vld [vmem:[%s0 + $0x1d0] sm:$0xff]
  %v76 = vld [vmem:[%s0 + $0x1d8] sm:$0xff]
  %v77 = vld [vmem:[%s0 + $0x1e0] sm:$0xff]
  %v78 = vld [vmem:[%s0 + $0x1e8] sm:$0xff]
  %v79 = vld [vmem:[%s0 + $0x1f0] sm:$0xff]
  %v80 = vld [vmem:[%s0 + $0x1f8] sm:$0xff]
  %v81 = vld [vmem:[%s0 + $0x200] sm:$0xff]
  %v82 = vld [vmem:[%s0 + $0x208] sm:$0xff]
  %v83 = vld [vmem:[%s0 + $0x210] sm:$0xff]
  %v84 = vld [vmem:[%s0 + $0x218] sm:$0xff]
  %v85 = vld [vmem:[%s0 + $0x220] sm:$0xff]
  %v86 = vld [vmem:[%s0 + $0x228] sm:$0xff]
  %v87 = vld [vmem:[%s0 + $0x230] sm:$0xff]
  %v88 = vld [vmem:[%s0 + $0x238] sm:$0xff]
  %v89 = vld [vmem:[%s0 + $0x240] sm:$0xff]
  %v90 = vld [vmem:[%s0 + $0x248] sm:$0xff]
  %v91 = vld [vmem:[%s0 + $0x250] sm:$0xff]
  %v92 = vld [vmem:[%s0 + $0x258] sm:$0xff]
  %v93 = vld [vmem:[%s0 + $0x260] sm:$0xff]
  %v94 = vld [vmem:[%s0 + $0x268] sm:$0xff]
  %v95 = vld [vmem:[%s0 + $0x270] sm:$0xff]
  %v96 = vld [vmem:[%s0 + $0x278] sm:$0xff]
  %v97 = vld [vmem:[%s0 + $0x280] sm:$0xff]
  %v98 = vld [vmem:[%s0 + $0x288] sm:$0xff]
  %v99 = vld [vmem:[%s0 + $0x290] sm:$0xff]
  %v100 = vld [vmem:[%s0 + $0x298] sm:$0xff]
  %v101 = vld [vmem:[%s0 + $0x2a0] sm:$0xff]
  %v102 = vld [vmem:[%s0 + $0x2a8] sm:$0xff]
  %v103 = vld [vmem:[%s0 + $0x2b0] sm:$0xff]
  %v104 = vld [vmem:[%s0 + $0x2b8] sm:$0xff]
  %v105 = vld [vmem:[%s0 + $0x2c0] sm:$0xff]
  %v106 = vld [vmem:[%s0 + $0x2c8] sm:$0xff]
  %v107 = vld [vmem:[%s0 + $0x2d0] sm:$0xff]
  %v108 = vld [vmem:[%s0 + $0x2d8] sm:$0xff]
  %v109 = vld [vmem:[%s0 + $0x2e0] sm:$0xff]
  %v110 = vld [vmem:[%s0 + $0x2e8] sm:$0xff]
  %v111 = vld [vmem:[%s0 + $0x2f0] sm:$0xff]
  %v112 = vld [vmem:[%s0 + $0x2f8] sm:$0xff]
  %v113 = vld [vmem:[%s0 + $0x300] sm:$0xff]
  %v114 = vld [vmem:[%s0 + $0x308] sm:$0xff]
  %v115 = vld [vmem:[%s0 + $0x310] sm:$0xff]
  %v116 = vld [vmem:[%s0 + $0x318] sm:$0xff]
  %v117 = vld [vmem:[%s0 + $0x320] sm:$0xff]
  %v118 = vld [vmem:[%s0 + $0x328] sm:$0xff]
  %v119 = vld [vmem:[%s0 + $0x330] sm:$0xff]
  %v120 = vld [vmem:[%s0 + $0x338] sm:$0xff]
  %v121 = vld [vmem:[%s0 + $0x340] sm:$0xff]
  %v122 = vld [vmem:[%s0 + $0x348] sm:$0xff]
  %v123 = vld [vmem:[%s0 + $0x350] sm:$0xff]
  %v124 = vld [vmem:[%s0 + $0x358] sm:$0xff]
  %v125 = vld [vmem:[%s0 + $0x360] sm:$0xff]
  %v126 = vld [vmem:[%s0 + $0x368] sm:$0xff]
  %v127 = vld [vmem:[%s0 + $0x370] sm:$0xff]
  %v128 = vld [vmem:[%s0 + $0x378] sm:$0xff]
  %v129 = vld [vmem:[%s0 + $0x380] sm:$0xff]
  %v130 = vld [vmem:[%s0 + $0x388] sm:$0xff]
  %v131 = vld [vmem:[%s0 + $0x390] sm:$0xff]
  %v132 = vld [vmem:[%s0 + $0x398] sm:$0xff]
  %v133 = vld [vmem:[%s0 + $0x3a0] sm:$0xff]
  %v134 = vld [vmem:[%s0 + $0x3a8] sm:$0xff]
  %v135 = vld [vmem:[%s0 + $0x3b0] sm:$0xff]
  %v136 = vld [vmem:[%s0 + $0x3b8] sm:$0xff]
  %v137 = vld [vmem:[%s0 + $0x3c0] sm:$0xff]
  %v138 = vld [vmem:[%s0 + $0x3c8] sm:$0xff]
  %v139 = vld [vmem:[%s0 + $0x3d0] sm:$0xff]
  %v140 = vld [vmem:[%s0 + $0x3d8] sm:$0xff]
  %v141 = vld [vmem:[%s0 + $0x3e0] sm:$0xff]
  %v142 = vld [vmem:[%s0 + $0x3e8] sm:$0xff]
  %v143 = vld [vmem:[%s0 + $0x3f0] sm:$0xff]
  %v144 = vld [vmem:[%s0 + $0x3f8] sm:$0xff]
  %v145 = vld [vmem:[%s0 + $0x400] sm:$0xff]
  %v146 = vld [vmem:[%s0 + $0x408] sm:$0xff]
  %v147 = vld [vmem:[%s0 + $0x410] sm:$0xff]
  %v148 = vld [vmem:[%s0 + $0x418] sm:$0xff]
  %v149 = vld [vmem:[%s0 + $0x420] sm:$0xff]
  %v150 = vld [vmem:[%s0 + $0x428] sm:$0xff]
  %v151 = vld [vmem:[%s0 + $0x430] sm:$0xff]
  %v152 = vld [vmem:[%s0 + $0x438] sm:$0xff]
  %v153 = vld [vmem:[%s0 + $0x440] sm:$0xff]
  %v154 = vld [vmem:[%s0 + $0x448] sm:$0xff]
  %v155 = vld [vmem:[%s0 + $0x450] sm:$0xff]
  %v156 = vld [vmem:[%s0 + $0x458] sm:$0xff]
  %v157 = vld [vmem:[%s0 + $0x460] sm:$0xff]
  %v158 = vld [vmem:[%s0 + $0x468] sm:$0xff]
  %v159 = vld [vmem:[%s0 + $0x470] sm:$0xff]
  %v160 = vld [vmem:[%s0 + $0x478] sm:$0xff]
  %v161 = vld [vmem:[%s0 + $0x480] sm:$0xff]
  %v162 = vld [vmem:[%s0 + $0x488] sm:$0xff]
  %v163 = vld [vmem:[%s0 + $0x490] sm:$0xff]
  %v164 = vld [vmem:[%s0 + $0x498] sm:$0xff]
  %v165 = vld [vmem:[%s0 + $0x4a0] sm:$0xff]
  %v166 = vld [vmem:[%s0 + $0x4a8] sm:$0xff]
  %v167 = vld [vmem:[%s0 + $0x4b0] sm:$0xff]
  %v168 = vld [vmem:[%s0 + $0x4b8] sm:$0xff]
  %v169 = vld [vmem:[%s0 + $0x4c0] sm:$0xff]
  %v170 = vld [vmem:[%s0 + $0x4c8] sm:$0xff]
  %v171 = vld [vmem:[%s0 + $0x4d0] sm:$0xff]
  %v172 = vld [vmem:[%s0 + $0x4d8] sm:$0xff]
  %v173 = vld [vmem:[%s0 + $0x4e0] sm:$0xff]
  %v174 = vld [vmem:[%s0 + $0x4e8] sm:$0xff]
  %v175 = vld [vmem:[%s0 + $0x4f0] sm:$0xff]
  %v176 = vld [vmem:[%s0 + $0x4f8] sm:$0xff]
  %v177 = vld [vmem:[%s0 + $0x500] sm:$0xff]
  %v178 = vld [vmem:[%s0 + $0x508] sm:$0xff]
  %v179 = vld [vmem:[%s0 + $0x510] sm:$0xff]
  %v180 = vld [vmem:[%s0 + $0x518] sm:$0xff]
  %v181 = vld [vmem:[%s0 + $0x520] sm:$0xff]
  %v182 = vld [vmem:[%s0 + $0x528] sm:$0xff]
  %v183 = vld [vmem:[%s0 + $0x530] sm:$0xff]
  %v184 = vld [vmem:[%s0 + $0x538] sm:$0xff]
  %v185 = vld [vmem:[%s0 + $0x540] sm:$0xff]
  %v186 = vld [vmem:[%s0 + $0x548] sm:$0xff]
  %v187 = vld [vmem:[%s0 + $0x550] sm:$0xff]
  %v188 = vld [vmem:[%s0 + $0x558] sm:$0xff]
  %v189 = vld [vmem:[%s0 + $0x560] sm:$0xff]
  %v190 = vld [vmem:[%s0 + $0x568] sm:$0xff]
  %v191 = vld [vmem:[%s0 + $0x570] sm:$0xff]
  %v192 = vld [vmem:[%s0 + $0x578] sm:$0xff]
  %v193 = vld [vmem:[%s0 + $0x580] sm:$0xff]
  %v194 = vld [vmem:[%s0 + $0x588] sm:$0xff]
  %v195 = vld [vmem:[%s0 + $0x590] sm:$0xff]
  %v196 = vld [vmem:[%s0 + $0x598] sm:$0xff]
  %v197 = vld [vmem:[%s0 + $0x5a0] sm:$0xff]
  %v198 = vld [vmem:[%s0 + $0x5a8] sm:$0xff]
  %v199 = vld [vmem:[%s0 + $0x5b0] sm:$0xff]
  %v200 = vld [vmem:[%s0 + $0x5b8] sm:$0xff]
  %v201 = vld [vmem:[%s0 + $0x5c0] sm:$0xff]
  %v202 = vld [vmem:[%s0 + $0x5c8] sm:$0xff]
  %v203 = vld [vmem:[%s0 + $0x5d0] sm:$0xff]
  %v204 = vld [vmem:[%s0 + $0x5d8] sm:$0xff]
  %v205 = vld [vmem:[%s0 + $0x5e0] sm:$0xff]
  %v206 = vld [vmem:[%s0 + $0x5e8] sm:$0xff]
  %v207 = vld [vmem:[%s0 + $0x5f0] sm:$0xff]
  %v208 = vld [vmem:[%s0 + $0x5f8] sm:$0xff]
  %v209 = vld [vmem:[%s0 + $0x600] sm:$0xff]
  %v210 = vld [vmem:[%s0 + $0x608] sm:$0xff]
  %v211 = vld [vmem:[%s0 + $0x610] sm:$0xff]
  %v212 = vld [vmem:[%s0 + $0x618] sm:$0xff]
  %v213 = vld [vmem:[%s1] sm:$0xff]
  %v214 = vld [vmem:[%s1 + $0x8] sm:$0xff]
  %v215 = vld [vmem:[%s1 + $0x10] sm:$0xff]
  %v216 = vld [vmem:[%s1 + $0x18] sm:$0xff]
  %v217 = vld [vmem:[%s1 + $0x20] sm:$0xff]
  %v218 = vld [vmem:[%s1 + $0x28] sm:$0xff]
  %v219 = vld [vmem:[%s1 + $0x30] sm:$0xff]
  %v220 = vld [vmem:[%s1 + $0x38] sm:$0xff]
  %v221 = vld [vmem:[%s1 + $0x40] sm:$0xff]
  %v222 = vld [vmem:[%s1 + $0x48] sm:$0xff]
  %v223 = vld [vmem:[%s1 + $0x50] sm:$0xff]
  %v224 = vld [vmem:[%s1 + $0x58] sm:$0xff]
  %v225 = vld [vmem:[%s1 + $0x60] sm:$0xff]
  %v226 = vld [vmem:[%s1 + $0x68] sm:$0xff]
  %v227 = vld [vmem:[%s1 + $0x70] sm:$0xff]
  %v228 = vld [vmem:[%s1 + $0x78] sm:$0xff]
  %229 = vmatprep.subr.mxu0 0.0
  %230 = vmatpush1.msra.mxu0 %v213
  %231 = vmatprep.subr.mxu0 0.0
  %232 = vmatpush1.msra.mxu0 %v214
  %233 = vmatprep.subr.mxu0 0.0
  %234 = vmatpush1.msra.mxu0 %v215
  %235 = vmatprep.subr.mxu0 0.0
  %236 = vmatpush1.msra.mxu0 %v216
  %237 = vmatprep.subr.mxu0 0.0
  %238 = vmatpush1.msra.mxu0 %v217
  %239 = vmatprep.subr.mxu0 0.0
  %240 = vmatpush1.msra.mxu0 %v218
  %241 = vmatprep.subr.mxu0 0.0
  %242 = vmatpush1.msra.mxu0 %v219
  %243 = vmatprep.subr.mxu0 0.0
  %244 = vmatpush1.msra.mxu0 %v220
  %245 = vmatprep.subr.mxu0 0.0
  %246 = vmatpush1.msra.mxu0 %v221
  %247 = vmatprep.subr.mxu0 0.0
  %248 = vmatpush1.msra.mxu0 %v222
  %249 = vmatprep.subr.mxu0 0.0
  %250 = vmatpush1.msra.mxu0 %v223
  %251 = vmatprep.subr.mxu0 0.0
  %252 = vmatpush1.msra.mxu0 %v224
  %253 = vmatprep.subr.mxu0 0.0
  %254 = vmatpush1.msra.mxu0 %v225
  %255 = vmatprep.subr.mxu0 0.0
  %256 = vmatpush1.msra.mxu0 %v226
  %257 = vmatprep.subr.mxu0 0.0
  %258 = vmatpush1.msra.mxu0 %v227
  %259 = vmatprep.subr.mxu0 0.0
  %260 = vmatpush1.msra.mxu0 %v228
  %261 = vmatprep.subr.mxu0 0.0
  %262 = vmatpush1.msra.mxu0 0.0
  %263 = vmatprep.subr.mxu0 0.0
  %264 = vmatpush1.msra.mxu0 0.0
  %265 = vmatprep.subr.mxu0 0.0
  %266 = vmatpush1.msra.mxu0 0.0
  %267 = vmatprep.subr.mxu0 0.0
  %268 = vmatpush1.msra.mxu0 0.0
  %269 = vmatprep.subr.mxu0 0.0
  %270 = vmatpush1.msra.mxu0 0.0
  %271 = vmatprep.subr.mxu0 0.0
  %272 = vmatpush1.msra.mxu0 0.0
  %273 = vmatprep.subr.mxu0 0.0
  %274 = vmatpush1.msra.mxu0 0.0
  %275 = vmatprep.subr.mxu0 0.0
  %276 = vmatpush1.msra.mxu0 0.0
  %277 = vmatprep.subr.mxu0 0.0
  %278 = vmatpush1.msra.mxu0 0.0
  %279 = vmatprep.subr.mxu0 0.0
  %280 = vmatpush1.msra.mxu0 0.0
  %281 = vmatprep.subr.mxu0 0.0
  %282 = vmatpush1.msra.mxu0 0.0
  %283 = vmatprep.subr.mxu0 0.0
  %284 = vmatpush1.msra.mxu0 0.0
  %285 = vmatprep.subr.mxu0 0.0
  %286 = vmatpush1.msra.mxu0 0.0
  %287 = vmatprep.subr.mxu0 0.0
  %288 = vmatpush1.msra.mxu0 0.0
  %289 = vmatprep.subr.mxu0 0.0
  %290 = vmatpush1.msra.mxu0 0.0
  %291 = vmatprep.subr.mxu0 0.0
  %292 = vmatpush1.msra.mxu0 0.0
  %293 = vmatprep.mubr.f32.mxu0 0.0
  %294 = vmatmul.mubr.f32.gmra.mrb[0].mxu0 %v17
  %v295 = vpop.f32.mrb[0].mxu0
  %v296 = vadd.f32 0.0, %v295
  %v297 = vpop.f32.mrb[0].mxu0
  %298 = vmatprep.mubr.f32.mxu0 0.0
  %299 = vmatmul.mubr.f32.gmra.mrb[0].mxu0 %v18
  %v300 = vpop.f32.mrb[0].mxu0
  %v301 = vadd.f32 0.0, %v300
  %v302 = vpop.f32.mrb[0].mxu0
  %303 = vmatprep.mubr.f32.mxu0 0.0
  %304 = vmatmul.mubr.f32.gmra.mrb[0].mxu0 %v19
  %v305 = vpop.f32.mrb[0].mxu0
  %v306 = vadd.f32 0.0, %v305
  %v307 = vpop.f32.mrb[0].mxu0
  %308 = vmatprep.mubr.f32.mxu0 0.0
  %309 = vmatmul.mubr.f32.gmra.mrb[0].mxu0 %v20
  %v310 = vpop.f32.mrb[0].mxu0
  %v311 = vadd.f32 0.0, %v310
  %v312 = vpop.f32.mrb[0].mxu0
  %313 = vmatprep.mubr.f32.mxu0 0.0
  %314 = vmatmul.mubr.f32.gmra.mrb[0].mxu0 %v21
  %v315 = vpop.f32.mrb[0].mxu0
  %v316 = vadd.f32 0.0, %v315
  %v317 = vpop.f32.mrb[0].mxu0
  %318 = vmatprep.mubr.f32.mxu0 0.0
  %319 = vmatmul.mubr.f32.gmra.mrb[0].mxu0 %v22
  %v320 = vpop.f32.mrb[0].mxu0
  %v321 = vadd.f32 0.0, %v320
  %v322 = vpop.f32.mrb[0].mxu0
  %323 = vmatprep.mubr.f32.mxu0 0.0
  %324 = vmatmul.mubr.f32.gmra.mrb[0].mxu0 %v23
  %v325 = vpop.f32.mrb[0].mxu0
  %v326 = vadd.f32 0.0, %v325
  %v327 = vpop.f32.mrb[0].mxu0
  %328 = vmatprep.mubr.f32.mxu0 0.0
  %329 = vmatmul.mubr.f32.gmra.mrb[0].mxu0 %v24
  %v330 = vpop.f32.mrb[0].mxu0
  %v331 = vadd.f32 0.0, %v330
  %v332 = vpop.f32.mrb[0].mxu0
  %333 = vmatprep.mubr.f32.mxu0 0.0
  %334 = vmatmul.mubr.f32.gmra.mrb[0].mxu0 %v25
  %v335 = vpop.f32.mrb[0].mxu0
  %v336 = vadd.f32 0.0, %v335
  %v337 = vpop.f32.mrb[0].mxu0
  %338 = vmatprep.mubr.f32.mxu0 0.0
  %339 = vmatmul.mubr.f32.gmra.mrb[0].mxu0 %v26
  %v340 = vpop.f32.mrb[0].mxu0
  %v341 = vadd.f32 0.0, %v340
  %v342 = vpop.f32.mrb[0].mxu0
  %343 = vmatprep.mubr.f32.mxu0 0.0
  %344 = vmatmul.mubr.f32.gmra.mrb[0].mxu0 %v27
  %v345 = vpop.f32.mrb[0].mxu0
  %v346 = vadd.f32 0.0, %v345
  %v347 = vpop.f32.mrb[0].mxu0
  %348 = vmatprep.mubr.f32.mxu0 0.0
  %349 = vmatmul.mubr.f32.gmra.mrb[0].mxu0 %v28
  %v350 = vpop.f32.mrb[0].mxu0
  %v351 = vadd.f32 0.0, %v350
  %v352 = vpop.f32.mrb[0].mxu0
  %353 = vmatprep.mubr.f32.mxu0 0.0
  %354 = vmatmul.mubr.f32.gmra.mrb[0].mxu0 %v29
  %v355 = vpop.f32.mrb[0].mxu0
  %v356 = vadd.f32 0.0, %v355
  %v357 = vpop.f32.mrb[0].mxu0
  %358 = vmatprep.mubr.f32.mxu0 0.0
  %359 = vmatmul.mubr.f32.gmra.mrb[0].mxu0 %v30
  %v360 = vpop.f32.mrb[0].mxu0
  %v361 = vadd.f32 0.0, %v360
  %v362 = vpop.f32.mrb[0].mxu0
  %363 = vmatprep.mubr.f32.mxu0 0.0
  %364 = vmatmul.mubr.f32.gmra.mrb[0].mxu0 %v31
  %v365 = vpop.f32.mrb[0].mxu0
  %v366 = vadd.f32 0.0, %v365
  %v367 = vpop.f32.mrb[0].mxu0
  %368 = vmatprep.mubr.f32.mxu0 0.0
  %369 = vmatmul.mubr.f32.gmra.mrb[0].mxu0 %v32
  %v370 = vpop.f32.mrb[0].mxu0
  %v371 = vadd.f32 0.0, %v370
  %v372 = vpop.f32.mrb[0].mxu0
  %373 = vmatprep.mubr.f32.mxu0 0.0
  %374 = vmatmul.mubr.f32.gmra.mrb[0].mxu0 %v33
  %v375 = vpop.f32.mrb[0].mxu0
  %v376 = vadd.f32 0.0, %v375
  %v377 = vpop.f32.mrb[0].mxu0
  %378 = vmatprep.mubr.f32.mxu0 0.0
  %379 = vmatmul.mubr.f32.gmra.mrb[0].mxu0 %v34
  %v380 = vpop.f32.mrb[0].mxu0
  %v381 = vadd.f32 0.0, %v380
  %v382 = vpop.f32.mrb[0].mxu0
  %383 = vmatprep.mubr.f32.mxu0 0.0
  %384 = vmatmul.mubr.f32.gmra.mrb[0].mxu0 %v35
  %v385 = vpop.f32.mrb[0].mxu0
  %v386 = vadd.f32 0.0, %v385
  %v387 = vpop.f32.mrb[0].mxu0
  %388 = vmatprep.mubr.f32.mxu0 0.0
  %389 = vmatmul.mubr.f32.gmra.mrb[0].mxu0 %v36
  %v390 = vpop.f32.mrb[0].mxu0
  %v391 = vadd.f32 0.0, %v390
  %v392 = vpop.f32.mrb[0].mxu0
  %393 = vmatprep.mubr.f32.mxu0 0.0
  %394 = vmatmul.mubr.f32.gmra.mrb[0].mxu0 %v37
  %v395 = vpop.f32.mrb[0].mxu0
  %v396 = vadd.f32 0.0, %v395
  %v397 = vpop.f32.mrb[0].mxu0
  %398 = vmatprep.mubr.f32.mxu0 0.0
  %399 = vmatmul.mubr.f32.gmra.mrb[0].mxu0 %v38
  %v400 = vpop.f32.mrb[0].mxu0
  %v401 = vadd.f32 0.0, %v400
  %v402 = vpop.f32.mrb[0].mxu0
  %403 = vmatprep.mubr.f32.mxu0 0.0
  %404 = vmatmul.mubr.f32.gmra.mrb[0].mxu0 %v39
  %v405 = vpop.f32.mrb[0].mxu0
  %v406 = vadd.f32 0.0, %v405
  %v407 = vpop.f32.mrb[0].mxu0
  %408 = vmatprep.mubr.f32.mxu0 0.0
  %409 = vmatmul.mubr.f32.gmra.mrb[0].mxu0 %v40
  %v410 = vpop.f32.mrb[0].mxu0
  %v411 = vadd.f32 0.0, %v410
  %v412 = vpop.f32.mrb[0].mxu0
  %413 = vmatprep.mubr.f32.mxu0 0.0
  %414 = vmatmul.mubr.f32.gmra.mrb[0].mxu0 %v41
  %v415 = vpop.f32.mrb[0].mxu0
  %v416 = vadd.f32 0.0, %v415
  %v417 = vpop.f32.mrb[0].mxu0
  %418 = vmatprep.mubr.f32.mxu0 0.0
  %419 = vmatmul.mubr.f32.gmra.mrb[0].mxu0 %v42
  %v420 = vpop.f32.mrb[0].mxu0
  %v421 = vadd.f32 0.0, %v420
  %v422 = vpop.f32.mrb[0].mxu0
  %423 = vmatprep.mubr.f32.mxu0 0.0
  %424 = vmatmul.mubr.f32.gmra.mrb[0].mxu0 %v43
  %v425 = vpop.f32.mrb[0].mxu0
  %v426 = vadd.f32 0.0, %v425
  %v427 = vpop.f32.mrb[0].mxu0
  %428 = vmatprep.mubr.f32.mxu0 0.0
  %429 = vmatmul.mubr.f32.gmra.mrb[0].mxu0 %v44
  %v430 = vpop.f32.mrb[0].mxu0
  %v431 = vadd.f32 0.0, %v430
  %v432 = vpop.f32.mrb[0].mxu0
  %433 = vmatprep.mubr.f32.mxu0 0.0
  %434 = vmatmul.mubr.f32.gmra.mrb[0].mxu0 %v45
  %v435 = vpop.f32.mrb[0].mxu0
  %v436 = vadd.f32 0.0, %v435
  %v437 = vpop.f32.mrb[0].mxu0
  %438 = vmatprep.mubr.f32.mxu0 0.0
  %439 = vmatmul.mubr.f32.gmra.mrb[0].mxu0 %v46
  %v440 = vpop.f32.mrb[0].mxu0
  %v441 = vadd.f32 0.0, %v440
  %v442 = vpop.f32.mrb[0].mxu0
  %443 = vmatprep.mubr.f32.mxu0 0.0
  %444 = vmatmul.mubr.f32.gmra.mrb[0].mxu0 %v47
  %v445 = vpop.f32.mrb[0].mxu0
  %v446 = vadd.f32 0.0, %v445
  %v447 = vpop.f32.mrb[0].mxu0
  %448 = vmatprep.mubr.f32.mxu0 0.0
  %449 = vmatmul.mubr.f32.gmra.mrb[0].mxu0 %v48
  %v450 = vpop.f32.mrb[0].mxu0
  %v451 = vadd.f32 0.0, %v450
  %v452 = vpop.f32.mrb[0].mxu0
  %453 = vmatprep.mubr.f32.mxu0 0.0
  %454 = vmatmul.mubr.f32.gmra.mrb[0].mxu0 %v49
  %v455 = vpop.f32.mrb[0].mxu0
  %v456 = vadd.f32 0.0, %v455
  %v457 = vpop.f32.mrb[0].mxu0
  %458 = vmatprep.mubr.f32.mxu0 0.0
  %459 = vmatmul.mubr.f32.gmra.mrb[0].mxu0 %v50
  %v460 = vpop.f32.mrb[0].mxu0
  %v461 = vadd.f32 0.0, %v460
  %v462 = vpop.f32.mrb[0].mxu0
  %463 = vmatprep.mubr.f32.mxu0 0.0
  %464 = vmatmul.mubr.f32.gmra.mrb[0].mxu0 %v51
  %v465 = vpop.f32.mrb[0].mxu0
  %v466 = vadd.f32 0.0, %v465
  %v467 = vpop.f32.mrb[0].mxu0
  %468 = vmatprep.mubr.f32.mxu0 0.0
  %469 = vmatmul.mubr.f32.gmra.mrb[0].mxu0 %v52
  %v470 = vpop.f32.mrb[0].mxu0
  %v471 = vadd.f32 0.0, %v470
  %v472 = vpop.f32.mrb[0].mxu0
  %473 = vmatprep.mubr.f32.mxu0 0.0
  %474 = vmatmul.mubr.f32.gmra.mrb[0].mxu0 %v53
  %v475 = vpop.f32.mrb[0].mxu0
  %v476 = vadd.f32 0.0, %v475
  %v477 = vpop.f32.mrb[0].mxu0
  %478 = vmatprep.mubr.f32.mxu0 0.0
  %479 = vmatmul.mubr.f32.gmra.mrb[0].mxu0 %v54
  %v480 = vpop.f32.mrb[0].mxu0
  %v481 = vadd.f32 0.0, %v480
  %v482 = vpop.f32.mrb[0].mxu0
  %483 = vmatprep.mubr.f32.mxu0 0.0
  %484 = vmatmul.mubr.f32.gmra.mrb[0].mxu0 %v55
  %v485 = vpop.f32.mrb[0].mxu0
  %v486 = vadd.f32 0.0, %v485
  %v487 = vpop.f32.mrb[0].mxu0
  %488 = vmatprep.mubr.f32.mxu0 0.0
  %489 = vmatmul.mubr.f32.gmra.mrb[0].mxu0 %v56
  %v490 = vpop.f32.mrb[0].mxu0
  %v491 = vadd.f32 0.0, %v490
  %v492 = vpop.f32.mrb[0].mxu0
  %493 = vmatprep.mubr.f32.mxu0 0.0
  %494 = vmatmul.mubr.f32.gmra.mrb[0].mxu0 %v57
  %v495 = vpop.f32.mrb[0].mxu0
  %v496 = vadd.f32 0.0, %v495
  %v497 = vpop.f32.mrb[0].mxu0
  %498 = vmatprep.mubr.f32.mxu0 0.0
  %499 = vmatmul.mubr.f32.gmra.mrb[0].mxu0 %v58
  %v500 = vpop.f32.mrb[0].mxu0
  %v501 = vadd.f32 0.0, %v500
  %v502 = vpop.f32.mrb[0].mxu0
  %503 = vmatprep.mubr.f32.mxu0 0.0
  %504 = vmatmul.mubr.f32.gmra.mrb[0].mxu0 %v59
  %v505 = vpop.f32.mrb[0].mxu0
  %v506 = vadd.f32 0.0, %v505
  %v507 = vpop.f32.mrb[0].mxu0
  %508 = vmatprep.mubr.f32.mxu0 0.0
  %509 = vmatmul.mubr.f32.gmra.mrb[0].mxu0 %v60
  %v510 = vpop.f32.mrb[0].mxu0
  %v511 = vadd.f32 0.0, %v510
  %v512 = vpop.f32.mrb[0].mxu0
  %513 = vmatprep.mubr.f32.mxu0 0.0
  %514 = vmatmul.mubr.f32.gmra.mrb[0].mxu0 %v61
  %v515 = vpop.f32.mrb[0].mxu0
  %v516 = vadd.f32 0.0, %v515
  %v517 = vpop.f32.mrb[0].mxu0
  %518 = vmatprep.mubr.f32.mxu0 0.0
  %519 = vmatmul.mubr.f32.gmra.mrb[0].mxu0 %v62
  %v520 = vpop.f32.mrb[0].mxu0
  %v521 = vadd.f32 0.0, %v520
  %v522 = vpop.f32.mrb[0].mxu0
  %523 = vmatprep.mubr.f32.mxu0 0.0
  %524 = vmatmul.mubr.f32.gmra.mrb[0].mxu0 %v63
  %v525 = vpop.f32.mrb[0].mxu0
  %v526 = vadd.f32 0.0, %v525
  %v527 = vpop.f32.mrb[0].mxu0
  %528 = vmatprep.mubr.f32.mxu0 0.0
  %529 = vmatmul.mubr.f32.gmra.mrb[0].mxu0 %v64
  %v530 = vpop.f32.mrb[0].mxu0
  %v531 = vadd.f32 0.0, %v530
  %v532 = vpop.f32.mrb[0].mxu0
  %533 = vmatprep.mubr.f32.mxu0 0.0
  %534 = vmatmul.mubr.f32.gmra.mrb[0].mxu0 %v65
  %v535 = vpop.f32.mrb[0].mxu0
  %v536 = vadd.f32 0.0, %v535
  %v537 = vpop.f32.mrb[0].mxu0
  %538 = vmatprep.mubr.f32.mxu0 0.0
  %539 = vmatmul.mubr.f32.gmra.mrb[0].mxu0 %v66
  %v540 = vpop.f32.mrb[0].mxu0
  %v541 = vadd.f32 0.0, %v540
  %v542 = vpop.f32.mrb[0].mxu0
  %543 = vmatprep.mubr.f32.mxu0 0.0
  %544 = vmatmul.mubr.f32.gmra.mrb[0].mxu0 %v67
  %v545 = vpop.f32.mrb[0].mxu0
  %v546 = vadd.f32 0.0, %v545
  %v547 = vpop.f32.mrb[0].mxu0
  %548 = vmatprep.mubr.f32.mxu0 0.0
  %549 = vmatmul.mubr.f32.gmra.mrb[0].mxu0 %v68
  %v550 = vpop.f32.mrb[0].mxu0
  %v551 = vadd.f32 0.0, %v550
  %v552 = vpop.f32.mrb[0].mxu0
  %553 = vmatprep.mubr.f32.mxu0 0.0
  %554 = vmatmul.mubr.f32.gmra.mrb[0].mxu0 %v69
  %v555 = vpop.f32.mrb[0].mxu0
  %v556 = vadd.f32 0.0, %v555
  %v557 = vpop.f32.mrb[0].mxu0
  %558 = vmatprep.mubr.f32.mxu0 0.0
  %559 = vmatmul.mubr.f32.gmra.mrb[0].mxu0 %v70
  %v560 = vpop.f32.mrb[0].mxu0
  %v561 = vadd.f32 0.0, %v560
  %v562 = vpop.f32.mrb[0].mxu0
  %563 = vmatprep.mubr.f32.mxu0 0.0
  %564 = vmatmul.mubr.f32.gmra.mrb[0].mxu0 %v71
  %v565 = vpop.f32.mrb[0].mxu0
  %v566 = vadd.f32 0.0, %v565
  %v567 = vpop.f32.mrb[0].mxu0
  %568 = vmatprep.mubr.f32.mxu0 0.0
  %569 = vmatmul.mubr.f32.gmra.mrb[0].mxu0 %v72
  %v570 = vpop.f32.mrb[0].mxu0
  %v571 = vadd.f32 0.0, %v570
  %v572 = vpop.f32.mrb[0].mxu0
  %573 = vmatprep.mubr.f32.mxu0 0.0
  %574 = vmatmul.mubr.f32.gmra.mrb[0].mxu0 %v73
  %v575 = vpop.f32.mrb[0].mxu0
  %v576 = vadd.f32 0.0, %v575
  %v577 = vpop.f32.mrb[0].mxu0
  %578 = vmatprep.mubr.f32.mxu0 0.0
  %579 = vmatmul.mubr.f32.gmra.mrb[0].mxu0 %v74
  %v580 = vpop.f32.mrb[0].mxu0
  %v581 = vadd.f32 0.0, %v580
  %v582 = vpop.f32.mrb[0].mxu0
  %583 = vmatprep.mubr.f32.mxu0 0.0
  %584 = vmatmul.mubr.f32.gmra.mrb[0].mxu0 %v75
  %v585 = vpop.f32.mrb[0].mxu0
  %v586 = vadd.f32 0.0, %v585
  %v587 = vpop.f32.mrb[0].mxu0
  %588 = vmatprep.mubr.f32.mxu0 0.0
  %589 = vmatmul.mubr.f32.gmra.mrb[0].mxu0 %v76
  %v590 = vpop.f32.mrb[0].mxu0
  %v591 = vadd.f32 0.0, %v590
  %v592 = vpop.f32.mrb[0].mxu0
  %593 = vmatprep.mubr.f32.mxu0 0.0
  %594 = vmatmul.mubr.f32.gmra.mrb[0].mxu0 %v77
  %v595 = vpop.f32.mrb[0].mxu0
  %v596 = vadd.f32 0.0, %v595
  %v597 = vpop.f32.mrb[0].mxu0
  %598 = vmatprep.mubr.f32.mxu0 0.0
  %599 = vmatmul.mubr.f32.gmra.mrb[0].mxu0 %v78
  %v600 = vpop.f32.mrb[0].mxu0
  %v601 = vadd.f32 0.0, %v600
  %v602 = vpop.f32.mrb[0].mxu0
  %603 = vmatprep.mubr.f32.mxu0 0.0
  %604 = vmatmul.mubr.f32.gmra.mrb[0].mxu0 %v79
  %v605 = vpop.f32.mrb[0].mxu0
  %v606 = vadd.f32 0.0, %v605
  %v607 = vpop.f32.mrb[0].mxu0
  %608 = vmatprep.mubr.f32.mxu0 0.0
  %609 = vmatmul.mubr.f32.gmra.mrb[0].mxu0 %v80
  %v610 = vpop.f32.mrb[0].mxu0
  %v611 = vadd.f32 0.0, %v610
  %v612 = vpop.f32.mrb[0].mxu0
  %613 = vmatprep.mubr.f32.mxu0 0.0
  %614 = vmatmul.mubr.f32.gmra.mrb[0].mxu0 %v81
  %v615 = vpop.f32.mrb[0].mxu0
  %v616 = vadd.f32 0.0, %v615
  %v617 = vpop.f32.mrb[0].mxu0
  %618 = vmatprep.mubr.f32.mxu0 0.0
  %619 = vmatmul.mubr.f32.gmra.mrb[0].mxu0 %v82
  %v620 = vpop.f32.mrb[0].mxu0
  %v621 = vadd.f32 0.0, %v620
  %v622 = vpop.f32.mrb[0].mxu0
  %623 = vmatprep.mubr.f32.mxu0 0.0
  %624 = vmatmul.mubr.f32.gmra.mrb[0].mxu0 %v83
  %v625 = vpop.f32.mrb[0].mxu0
  %v626 = vadd.f32 0.0, %v625
  %v627 = vpop.f32.mrb[0].mxu0
  %628 = vmatprep.mubr.f32.mxu0 0.0
  %629 = vmatmul.mubr.f32.gmra.mrb[0].mxu0 %v84
  %v630 = vpop.f32.mrb[0].mxu0
  %v631 = vadd.f32 0.0, %v630
  %v632 = vpop.f32.mrb[0].mxu0
  %633 = vmatprep.mubr.f32.mxu0 0.0
  %634 = vmatmul.mubr.f32.gmra.mrb[0].mxu0 %v85
  %v635 = vpop.f32.mrb[0].mxu0
  %v636 = vadd.f32 0.0, %v635
  %v637 = vpop.f32.mrb[0].mxu0
  %638 = vmatprep.mubr.f32.mxu0 0.0
  %639 = vmatmul.mubr.f32.gmra.mrb[0].mxu0 %v86
  %v640 = vpop.f32.mrb[0].mxu0
  %v641 = vadd.f32 0.0, %v640
  %v642 = vpop.f32.mrb[0].mxu0
  %643 = vmatprep.mubr.f32.mxu0 0.0
  %644 = vmatmul.mubr.f32.gmra.mrb[0].mxu0 %v87
  %v645 = vpop.f32.mrb[0].mxu0
  %v646 = vadd.f32 0.0, %v645
  %v647 = vpop.f32.mrb[0].mxu0
  %648 = vmatprep.mubr.f32.mxu0 0.0
  %649 = vmatmul.mubr.f32.gmra.mrb[0].mxu0 %v88
  %v650 = vpop.f32.mrb[0].mxu0
  %v651 = vadd.f32 0.0, %v650
  %v652 = vpop.f32.mrb[0].mxu0
  %653 = vmatprep.mubr.f32.mxu0 0.0
  %654 = vmatmul.mubr.f32.gmra.mrb[0].mxu0 %v89
  %v655 = vpop.f32.mrb[0].mxu0
  %v656 = vadd.f32 0.0, %v655
  %v657 = vpop.f32.mrb[0].mxu0
  %658 = vmatprep.mubr.f32.mxu0 0.0
  %659 = vmatmul.mubr.f32.gmra.mrb[0].mxu0 %v90
  %v660 = vpop.f32.mrb[0].mxu0
  %v661 = vadd.f32 0.0, %v660
  %v662 = vpop.f32.mrb[0].mxu0
  %663 = vmatprep.mubr.f32.mxu0 0.0
  %664 = vmatmul.mubr.f32.gmra.mrb[0].mxu0 %v91
  %v665 = vpop.f32.mrb[0].mxu0
  %v666 = vadd.f32 0.0, %v665
  %v667 = vpop.f32.mrb[0].mxu0
  %668 = vmatprep.mubr.f32.mxu0 0.0
  %669 = vmatmul.mubr.f32.gmra.mrb[0].mxu0 %v92
  %v670 = vpop.f32.mrb[0].mxu0
  %v671 = vadd.f32 0.0, %v670
  %v672 = vpop.f32.mrb[0].mxu0
  %673 = vmatprep.mubr.f32.mxu0 0.0
  %674 = vmatmul.mubr.f32.gmra.mrb[0].mxu0 %v93
  %v675 = vpop.f32.mrb[0].mxu0
  %v676 = vadd.f32 0.0, %v675
  %v677 = vpop.f32.mrb[0].mxu0
  %678 = vmatprep.mubr.f32.mxu0 0.0
  %679 = vmatmul.mubr.f32.gmra.mrb[0].mxu0 %v94
  %v680 = vpop.f32.mrb[0].mxu0
  %v681 = vadd.f32 0.0, %v680
  %v682 = vpop.f32.mrb[0].mxu0
  %683 = vmatprep.mubr.f32.mxu0 0.0
  %684 = vmatmul.mubr.f32.gmra.mrb[0].mxu0 %v95
  %v685 = vpop.f32.mrb[0].mxu0
  %v686 = vadd.f32 0.0, %v685
  %v687 = vpop.f32.mrb[0].mxu0
  %688 = vmatprep.mubr.f32.mxu0 0.0
  %689 = vmatmul.mubr.f32.gmra.mrb[0].mxu0 %v96
  %v690 = vpop.f32.mrb[0].mxu0
  %v691 = vadd.f32 0.0, %v690
  %v692 = vpop.f32.mrb[0].mxu0
  %693 = vmatprep.mubr.f32.mxu0 0.0
  %694 = vmatmul.mubr.f32.gmra.mrb[0].mxu0 %v97
  %v695 = vpop.f32.mrb[0].mxu0
  %v696 = vadd.f32 0.0, %v695
  %v697 = vpop.f32.mrb[0].mxu0
  %698 = vmatprep.mubr.f32.mxu0 0.0
  %699 = vmatmul.mubr.f32.gmra.mrb[0].mxu0 %v98
  %v700 = vpop.f32.mrb[0].mxu0
  %v701 = vadd.f32 0.0, %v700
  %v702 = vpop.f32.mrb[0].mxu0
  %703 = vmatprep.mubr.f32.mxu0 0.0
  %704 = vmatmul.mubr.f32.gmra.mrb[0].mxu0 %v99
  %v705 = vpop.f32.mrb[0].mxu0
  %v706 = vadd.f32 0.0, %v705
  %v707 = vpop.f32.mrb[0].mxu0
  %708 = vmatprep.mubr.f32.mxu0 0.0
  %709 = vmatmul.mubr.f32.gmra.mrb[0].mxu0 %v100
  %v710 = vpop.f32.mrb[0].mxu0
  %v711 = vadd.f32 0.0, %v710
  %v712 = vpop.f32.mrb[0].mxu0
  %713 = vmatprep.mubr.f32.mxu0 0.0
  %714 = vmatmul.mubr.f32.gmra.mrb[0].mxu0 %v101
  %v715 = vpop.f32.mrb[0].mxu0
  %v716 = vadd.f32 0.0, %v715
  %v717 = vpop.f32.mrb[0].mxu0
  %718 = vmatprep.mubr.f32.mxu0 0.0
  %719 = vmatmul.mubr.f32.gmra.mrb[0].mxu0 %v102
  %v720 = vpop.f32.mrb[0].mxu0
  %v721 = vadd.f32 0.0, %v720
  %v722 = vpop.f32.mrb[0].mxu0
  %723 = vmatprep.mubr.f32.mxu0 0.0
  %724 = vmatmul.mubr.f32.gmra.mrb[0].mxu0 %v103
  %v725 = vpop.f32.mrb[0].mxu0
  %v726 = vadd.f32 0.0, %v725
  %v727 = vpop.f32.mrb[0].mxu0
  %728 = vmatprep.mubr.f32.mxu0 0.0
  %729 = vmatmul.mubr.f32.gmra.mrb[0].mxu0 %v104
  %v730 = vpop.f32.mrb[0].mxu0
  %v731 = vadd.f32 0.0, %v730
  %v732 = vpop.f32.mrb[0].mxu0
  %733 = vmatprep.mubr.f32.mxu0 0.0
  %734 = vmatmul.mubr.f32.gmra.mrb[0].mxu0 %v105
  %v735 = vpop.f32.mrb[0].mxu0
  %v736 = vadd.f32 0.0, %v735
  %v737 = vpop.f32.mrb[0].mxu0
  %738 = vmatprep.mubr.f32.mxu0 0.0
  %739 = vmatmul.mubr.f32.gmra.mrb[0].mxu0 %v106
  %v740 = vpop.f32.mrb[0].mxu0
  %v741 = vadd.f32 0.0, %v740
  %v742 = vpop.f32.mrb[0].mxu0
  %743 = vmatprep.mubr.f32.mxu0 0.0
  %744 = vmatmul.mubr.f32.gmra.mrb[0].mxu0 %v107
  %v745 = vpop.f32.mrb[0].mxu0
  %v746 = vadd.f32 0.0, %v745
  %v747 = vpop.f32.mrb[0].mxu0
  %748 = vmatprep.mubr.f32.mxu0 0.0
  %749 = vmatmul.mubr.f32.gmra.mrb[0].mxu0 %v108
  %v750 = vpop.f32.mrb[0].mxu0
  %v751 = vadd.f32 0.0, %v750
  %v752 = vpop.f32.mrb[0].mxu0
  %753 = vmatprep.mubr.f32.mxu0 0.0
  %754 = vmatmul.mubr.f32.gmra.mrb[0].mxu0 %v109
  %v755 = vpop.f32.mrb[0].mxu0
  %v756 = vadd.f32 0.0, %v755
  %v757 = vpop.f32.mrb[0].mxu0
  %758 = vmatprep.mubr.f32.mxu0 0.0
  %759 = vmatmul.mubr.f32.gmra.mrb[0].mxu0 %v110
  %v760 = vpop.f32.mrb[0].mxu0
  %v761 = vadd.f32 0.0, %v760
  %v762 = vpop.f32.mrb[0].mxu0
  %763 = vmatprep.mubr.f32.mxu0 0.0
  %764 = vmatmul.mubr.f32.gmra.mrb[0].mxu0 %v111
  %v765 = vpop.f32.mrb[0].mxu0
  %v766 = vadd.f32 0.0, %v765
  %v767 = vpop.f32.mrb[0].mxu0
  %768 = vmatprep.mubr.f32.mxu0 0.0
  %769 = vmatmul.mubr.f32.gmra.mrb[0].mxu0 %v112
  %v770 = vpop.f32.mrb[0].mxu0
  %v771 = vadd.f32 0.0, %v770
  %v772 = vpop.f32.mrb[0].mxu0
  %773 = vmatprep.mubr.f32.mxu0 0.0
  %774 = vmatmul.mubr.f32.gmra.mrb[0].mxu0 %v113
  %v775 = vpop.f32.mrb[0].mxu0
  %v776 = vadd.f32 0.0, %v775
  %v777 = vpop.f32.mrb[0].mxu0
  %778 = vmatprep.mubr.f32.mxu0 0.0
  %779 = vmatmul.mubr.f32.gmra.mrb[0].mxu0 %v114
  %v780 = vpop.f32.mrb[0].mxu0
  %v781 = vadd.f32 0.0, %v780
  %v782 = vpop.f32.mrb[0].mxu0
  %783 = vmatprep.mubr.f32.mxu0 0.0
  %784 = vmatmul.mubr.f32.gmra.mrb[0].mxu0 %v115
  %v785 = vpop.f32.mrb[0].mxu0
  %v786 = vadd.f32 0.0, %v785
  %v787 = vpop.f32.mrb[0].mxu0
  %788 = vmatprep.mubr.f32.mxu0 0.0
  %789 = vmatmul.mubr.f32.gmra.mrb[0].mxu0 %v116
  %v790 = vpop.f32.mrb[0].mxu0
  %v791 = vadd.f32 0.0, %v790
  %v792 = vpop.f32.mrb[0].mxu0
  %793 = vmatprep.mubr.f32.mxu0 0.0
  %794 = vmatmul.mubr.f32.gmra.mrb[0].mxu0 %v117
  %v795 = vpop.f32.mrb[0].mxu0
  %v796 = vadd.f32 0.0, %v795
  %v797 = vpop.f32.mrb[0].mxu0
  %798 = vmatprep.mubr.f32.mxu0 0.0
  %799 = vmatmul.mubr.f32.gmra.mrb[0].mxu0 %v118
  %v800 = vpop.f32.mrb[0].mxu0
  %v801 = vadd.f32 0.0, %v800
  %v802 = vpop.f32.mrb[0].mxu0
  %803 = vmatprep.mubr.f32.mxu0 0.0
  %804 = vmatmul.mubr.f32.gmra.mrb[0].mxu0 %v119
  %v805 = vpop.f32.mrb[0].mxu0
  %v806 = vadd.f32 0.0, %v805
  %v807 = vpop.f32.mrb[0].mxu0
  %808 = vmatprep.mubr.f32.mxu0 0.0
  %809 = vmatmul.mubr.f32.gmra.mrb[0].mxu0 %v120
  %v810 = vpop.f32.mrb[0].mxu0
  %v811 = vadd.f32 0.0, %v810
  %v812 = vpop.f32.mrb[0].mxu0
  %813 = vmatprep.mubr.f32.mxu0 0.0
  %814 = vmatmul.mubr.f32.gmra.mrb[0].mxu0 %v121
  %v815 = vpop.f32.mrb[0].mxu0
  %v816 = vadd.f32 0.0, %v815
  %v817 = vpop.f32.mrb[0].mxu0
  %818 = vmatprep.mubr.f32.mxu0 0.0
  %819 = vmatmul.mubr.f32.gmra.mrb[0].mxu0 %v122
  %v820 = vpop.f32.mrb[0].mxu0
  %v821 = vadd.f32 0.0, %v820
  %v822 = vpop.f32.mrb[0].mxu0
  %823 = vmatprep.mubr.f32.mxu0 0.0
  %824 = vmatmul.mubr.f32.gmra.mrb[0].mxu0 %v123
  %v825 = vpop.f32.mrb[0].mxu0
  %v826 = vadd.f32 0.0, %v825
  %v827 = vpop.f32.mrb[0].mxu0
  %828 = vmatprep.mubr.f32.mxu0 0.0
  %829 = vmatmul.mubr.f32.gmra.mrb[0].mxu0 %v124
  %v830 = vpop.f32.mrb[0].mxu0
  %v831 = vadd.f32 0.0, %v830
  %v832 = vpop.f32.mrb[0].mxu0
  %833 = vmatprep.mubr.f32.mxu0 0.0
  %834 = vmatmul.mubr.f32.gmra.mrb[0].mxu0 %v125
  %v835 = vpop.f32.mrb[0].mxu0
  %v836 = vadd.f32 0.0, %v835
  %v837 = vpop.f32.mrb[0].mxu0
  %838 = vmatprep.mubr.f32.mxu0 0.0
  %839 = vmatmul.mubr.f32.gmra.mrb[0].mxu0 %v126
  %v840 = vpop.f32.mrb[0].mxu0
  %v841 = vadd.f32 0.0, %v840
  %v842 = vpop.f32.mrb[0].mxu0
  %843 = vmatprep.mubr.f32.mxu0 0.0
  %844 = vmatmul.mubr.f32.gmra.mrb[0].mxu0 %v127
  %v845 = vpop.f32.mrb[0].mxu0
  %v846 = vadd.f32 0.0, %v845
  %v847 = vpop.f32.mrb[0].mxu0
  %848 = vmatprep.mubr.f32.mxu0 0.0
  %849 = vmatmul.mubr.f32.gmra.mrb[0].mxu0 %v128
  %v850 = vpop.f32.mrb[0].mxu0
  %v851 = vadd.f32 0.0, %v850
  %v852 = vpop.f32.mrb[0].mxu0
  %853 = vmatprep.mubr.f32.mxu0 0.0
  %854 = vmatmul.mubr.f32.gmra.mrb[0].mxu0 %v129
  %v855 = vpop.f32.mrb[0].mxu0
  %v856 = vadd.f32 0.0, %v855
  %v857 = vpop.f32.mrb[0].mxu0
  %858 = vmatprep.mubr.f32.mxu0 0.0
  %859 = vmatmul.mubr.f32.gmra.mrb[0].mxu0 %v130
  %v860 = vpop.f32.mrb[0].mxu0
  %v861 = vadd.f32 0.0, %v860
  %v862 = vpop.f32.mrb[0].mxu0
  %863 = vmatprep.mubr.f32.mxu0 0.0
  %864 = vmatmul.mubr.f32.gmra.mrb[0].mxu0 %v131
  %v865 = vpop.f32.mrb[0].mxu0
  %v866 = vadd.f32 0.0, %v865
  %v867 = vpop.f32.mrb[0].mxu0
  %868 = vmatprep.mubr.f32.mxu0 0.0
  %869 = vmatmul.mubr.f32.gmra.mrb[0].mxu0 %v132
  %v870 = vpop.f32.mrb[0].mxu0
  %v871 = vadd.f32 0.0, %v870
  %v872 = vpop.f32.mrb[0].mxu0
  %873 = vmatprep.mubr.f32.mxu0 0.0
  %874 = vmatmul.mubr.f32.gmra.mrb[0].mxu0 %v133
  %v875 = vpop.f32.mrb[0].mxu0
  %v876 = vadd.f32 0.0, %v875
  %v877 = vpop.f32.mrb[0].mxu0
  %878 = vmatprep.mubr.f32.mxu0 0.0
  %879 = vmatmul.mubr.f32.gmra.mrb[0].mxu0 %v134
  %v880 = vpop.f32.mrb[0].mxu0
  %v881 = vadd.f32 0.0, %v880
  %v882 = vpop.f32.mrb[0].mxu0
  %883 = vmatprep.mubr.f32.mxu0 0.0
  %884 = vmatmul.mubr.f32.gmra.mrb[0].mxu0 %v135
  %v885 = vpop.f32.mrb[0].mxu0
  %v886 = vadd.f32 0.0, %v885
  %v887 = vpop.f32.mrb[0].mxu0
  %888 = vmatprep.mubr.f32.mxu0 0.0
  %889 = vmatmul.mubr.f32.gmra.mrb[0].mxu0 %v136
  %v890 = vpop.f32.mrb[0].mxu0
  %v891 = vadd.f32 0.0, %v890
  %v892 = vpop.f32.mrb[0].mxu0
  %893 = vmatprep.mubr.f32.mxu0 0.0
  %894 = vmatmul.mubr.f32.gmra.mrb[0].mxu0 %v137
  %v895 = vpop.f32.mrb[0].mxu0
  %v896 = vadd.f32 0.0, %v895
  %v897 = vpop.f32.mrb[0].mxu0
  %898 = vmatprep.mubr.f32.mxu0 0.0
  %899 = vmatmul.mubr.f32.gmra.mrb[0].mxu0 %v138
  %v900 = vpop.f32.mrb[0].mxu0
  %v901 = vadd.f32 0.0, %v900
  %v902 = vpop.f32.mrb[0].mxu0
  %903 = vmatprep.mubr.f32.mxu0 0.0
  %904 = vmatmul.mubr.f32.gmra.mrb[0].mxu0 %v139
  %v905 = vpop.f32.mrb[0].mxu0
  %v906 = vadd.f32 0.0, %v905
  %v907 = vpop.f32.mrb[0].mxu0
  %908 = vmatprep.mubr.f32.mxu0 0.0
  %909 = vmatmul.mubr.f32.gmra.mrb[0].mxu0 %v140
  %v910 = vpop.f32.mrb[0].mxu0
  %v911 = vadd.f32 0.0, %v910
  %v912 = vpop.f32.mrb[0].mxu0
  %913 = vmatprep.mubr.f32.mxu0 0.0
  %914 = vmatmul.mubr.f32.gmra.mrb[0].mxu0 %v141
  %v915 = vpop.f32.mrb[0].mxu0
  %v916 = vadd.f32 0.0, %v915
  %v917 = vpop.f32.mrb[0].mxu0
  %918 = vmatprep.mubr.f32.mxu0 0.0
  %919 = vmatmul.mubr.f32.gmra.mrb[0].mxu0 %v142
  %v920 = vpop.f32.mrb[0].mxu0
  %v921 = vadd.f32 0.0, %v920
  %v922 = vpop.f32.mrb[0].mxu0
  %923 = vmatprep.mubr.f32.mxu0 0.0
  %924 = vmatmul.mubr.f32.gmra.mrb[0].mxu0 %v143
  %v925 = vpop.f32.mrb[0].mxu0
  %v926 = vadd.f32 0.0, %v925
  %v927 = vpop.f32.mrb[0].mxu0
  %928 = vmatprep.mubr.f32.mxu0 0.0
  %929 = vmatmul.mubr.f32.gmra.mrb[0].mxu0 %v144
  %v930 = vpop.f32.mrb[0].mxu0
  %v931 = vadd.f32 0.0, %v930
  %v932 = vpop.f32.mrb[0].mxu0
  %933 = vmatprep.mubr.f32.mxu0 0.0
  %934 = vmatmul.mubr.f32.gmra.mrb[0].mxu0 %v145
  %v935 = vpop.f32.mrb[0].mxu0
  %v936 = vadd.f32 0.0, %v935
  %v937 = vpop.f32.mrb[0].mxu0
  %938 = vmatprep.mubr.f32.mxu0 0.0
  %939 = vmatmul.mubr.f32.gmra.mrb[0].mxu0 %v146
  %v940 = vpop.f32.mrb[0].mxu0
  %v941 = vadd.f32 0.0, %v940
  %v942 = vpop.f32.mrb[0].mxu0
  %943 = vmatprep.mubr.f32.mxu0 0.0
  %944 = vmatmul.mubr.f32.gmra.mrb[0].mxu0 %v147
  %v945 = vpop.f32.mrb[0].mxu0
  %v946 = vadd.f32 0.0, %v945
  %v947 = vpop.f32.mrb[0].mxu0
  %948 = vmatprep.mubr.f32.mxu0 0.0
  %949 = vmatmul.mubr.f32.gmra.mrb[0].mxu0 %v148
  %v950 = vpop.f32.mrb[0].mxu0
  %v951 = vadd.f32 0.0, %v950
  %v952 = vpop.f32.mrb[0].mxu0
  %953 = vmatprep.mubr.f32.mxu0 0.0
  %954 = vmatmul.mubr.f32.gmra.mrb[0].mxu0 %v149
  %v955 = vpop.f32.mrb[0].mxu0
  %v956 = vadd.f32 0.0, %v955
  %v957 = vpop.f32.mrb[0].mxu0
  %958 = vmatprep.mubr.f32.mxu0 0.0
  %959 = vmatmul.mubr.f32.gmra.mrb[0].mxu0 %v150
  %v960 = vpop.f32.mrb[0].mxu0
  %v961 = vadd.f32 0.0, %v960
  %v962 = vpop.f32.mrb[0].mxu0
  %963 = vmatprep.mubr.f32.mxu0 0.0
  %964 = vmatmul.mubr.f32.gmra.mrb[0].mxu0 %v151
  %v965 = vpop.f32.mrb[0].mxu0
  %v966 = vadd.f32 0.0, %v965
  %v967 = vpop.f32.mrb[0].mxu0
  %968 = vmatprep.mubr.f32.mxu0 0.0
  %969 = vmatmul.mubr.f32.gmra.mrb[0].mxu0 %v152
  %v970 = vpop.f32.mrb[0].mxu0
  %v971 = vadd.f32 0.0, %v970
  %v972 = vpop.f32.mrb[0].mxu0
  %973 = vmatprep.mubr.f32.mxu0 0.0
  %974 = vmatmul.mubr.f32.gmra.mrb[0].mxu0 %v153
  %v975 = vpop.f32.mrb[0].mxu0
  %v976 = vadd.f32 0.0, %v975
  %v977 = vpop.f32.mrb[0].mxu0
  %978 = vmatprep.mubr.f32.mxu0 0.0
  %979 = vmatmul.mubr.f32.gmra.mrb[0].mxu0 %v154
  %v980 = vpop.f32.mrb[0].mxu0
  %v981 = vadd.f32 0.0, %v980
  %v982 = vpop.f32.mrb[0].mxu0
  %983 = vmatprep.mubr.f32.mxu0 0.0
  %984 = vmatmul.mubr.f32.gmra.mrb[0].mxu0 %v155
  %v985 = vpop.f32.mrb[0].mxu0
  %v986 = vadd.f32 0.0, %v985
  %v987 = vpop.f32.mrb[0].mxu0
  %988 = vmatprep.mubr.f32.mxu0 0.0
  %989 = vmatmul.mubr.f32.gmra.mrb[0].mxu0 %v156
  %v990 = vpop.f32.mrb[0].mxu0
  %v991 = vadd.f32 0.0, %v990
  %v992 = vpop.f32.mrb[0].mxu0
  %993 = vmatprep.mubr.f32.mxu0 0.0
  %994 = vmatmul.mubr.f32.gmra.mrb[0].mxu0 %v157
  %v995 = vpop.f32.mrb[0].mxu0
  %v996 = vadd.f32 0.0, %v995
  %v997 = vpop.f32.mrb[0].mxu0
  %998 = vmatprep.mubr.f32.mxu0 0.0
  %999 = vmatmul.mubr.f32.gmra.mrb[0].mxu0 %v158
  %v1000 = vpop.f32.mrb[0].mxu0
  %v1001 = vadd.f32 0.0, %v1000
  %v1002 = vpop.f32.mrb[0].mxu0
  %1003 = vmatprep.mubr.f32.mxu0 0.0
  %1004 = vmatmul.mubr.f32.gmra.mrb[0].mxu0 %v159
  %v1005 = vpop.f32.mrb[0].mxu0
  %v1006 = vadd.f32 0.0, %v1005
  %v1007 = vpop.f32.mrb[0].mxu0
  %1008 = vmatprep.mubr.f32.mxu0 0.0
  %1009 = vmatmul.mubr.f32.gmra.mrb[0].mxu0 %v160
  %v1010 = vpop.f32.mrb[0].mxu0
  %v1011 = vadd.f32 0.0, %v1010
  %v1012 = vpop.f32.mrb[0].mxu0
  %1013 = vmatprep.mubr.f32.mxu0 0.0
  %1014 = vmatmul.mubr.f32.gmra.mrb[0].mxu0 %v161
  %v1015 = vpop.f32.mrb[0].mxu0
  %v1016 = vadd.f32 0.0, %v1015
  %v1017 = vpop.f32.mrb[0].mxu0
  %1018 = vmatprep.mubr.f32.mxu0 0.0
  %1019 = vmatmul.mubr.f32.gmra.mrb[0].mxu0 %v162
  %v1020 = vpop.f32.mrb[0].mxu0
  %v1021 = vadd.f32 0.0, %v1020
  %v1022 = vpop.f32.mrb[0].mxu0
  %1023 = vmatprep.mubr.f32.mxu0 0.0
  %1024 = vmatmul.mubr.f32.gmra.mrb[0].mxu0 %v163
  %v1025 = vpop.f32.mrb[0].mxu0
  %v1026 = vadd.f32 0.0, %v1025
  %v1027 = vpop.f32.mrb[0].mxu0
  %1028 = vmatprep.mubr.f32.mxu0 0.0
  %1029 = vmatmul.mubr.f32.gmra.mrb[0].mxu0 %v164
  %v1030 = vpop.f32.mrb[0].mxu0
  %v1031 = vadd.f32 0.0, %v1030
  %v1032 = vpop.f32.mrb[0].mxu0
  %1033 = vmatprep.mubr.f32.mxu0 0.0
  %1034 = vmatmul.mubr.f32.gmra.mrb[0].mxu0 %v165
  %v1035 = vpop.f32.mrb[0].mxu0
  %v1036 = vadd.f32 0.0, %v1035
  %v1037 = vpop.f32.mrb[0].mxu0
  %1038 = vmatprep.mubr.f32.mxu0 0.0
  %1039 = vmatmul.mubr.f32.gmra.mrb[0].mxu0 %v166
  %v1040 = vpop.f32.mrb[0].mxu0
  %v1041 = vadd.f32 0.0, %v1040
  %v1042 = vpop.f32.mrb[0].mxu0
  %1043 = vmatprep.mubr.f32.mxu0 0.0
  %1044 = vmatmul.mubr.f32.gmra.mrb[0].mxu0 %v167
  %v1045 = vpop.f32.mrb[0].mxu0
  %v1046 = vadd.f32 0.0, %v1045
  %v1047 = vpop.f32.mrb[0].mxu0
  %1048 = vmatprep.mubr.f32.mxu0 0.0
  %1049 = vmatmul.mubr.f32.gmra.mrb[0].mxu0 %v168
  %v1050 = vpop.f32.mrb[0].mxu0
  %v1051 = vadd.f32 0.0, %v1050
  %v1052 = vpop.f32.mrb[0].mxu0
  %1053 = vmatprep.mubr.f32.mxu0 0.0
  %1054 = vmatmul.mubr.f32.gmra.mrb[0].mxu0 %v169
  %v1055 = vpop.f32.mrb[0].mxu0
  %v1056 = vadd.f32 0.0, %v1055
  %v1057 = vpop.f32.mrb[0].mxu0
  %1058 = vmatprep.mubr.f32.mxu0 0.0
  %1059 = vmatmul.mubr.f32.gmra.mrb[0].mxu0 %v170
  %v1060 = vpop.f32.mrb[0].mxu0
  %v1061 = vadd.f32 0.0, %v1060
  %v1062 = vpop.f32.mrb[0].mxu0
  %1063 = vmatprep.mubr.f32.mxu0 0.0
  %1064 = vmatmul.mubr.f32.gmra.mrb[0].mxu0 %v171
  %v1065 = vpop.f32.mrb[0].mxu0
  %v1066 = vadd.f32 0.0, %v1065
  %v1067 = vpop.f32.mrb[0].mxu0
  %1068 = vmatprep.mubr.f32.mxu0 0.0
  %1069 = vmatmul.mubr.f32.gmra.mrb[0].mxu0 %v172
  %v1070 = vpop.f32.mrb[0].mxu0
  %v1071 = vadd.f32 0.0, %v1070
  %v1072 = vpop.f32.mrb[0].mxu0
  %1073 = vmatprep.mubr.f32.mxu0 0.0
  %1074 = vmatmul.mubr.f32.gmra.mrb[0].mxu0 %v173
  %v1075 = vpop.f32.mrb[0].mxu0
  %v1076 = vadd.f32 0.0, %v1075
  %v1077 = vpop.f32.mrb[0].mxu0
  %1078 = vmatprep.mubr.f32.mxu0 0.0
  %1079 = vmatmul.mubr.f32.gmra.mrb[0].mxu0 %v174
  %v1080 = vpop.f32.mrb[0].mxu0
  %v1081 = vadd.f32 0.0, %v1080
  %v1082 = vpop.f32.mrb[0].mxu0
  %1083 = vmatprep.mubr.f32.mxu0 0.0
  %1084 = vmatmul.mubr.f32.gmra.mrb[0].mxu0 %v175
  %v1085 = vpop.f32.mrb[0].mxu0
  %v1086 = vadd.f32 0.0, %v1085
  %v1087 = vpop.f32.mrb[0].mxu0
  %1088 = vmatprep.mubr.f32.mxu0 0.0
  %1089 = vmatmul.mubr.f32.gmra.mrb[0].mxu0 %v176
  %v1090 = vpop.f32.mrb[0].mxu0
  %v1091 = vadd.f32 0.0, %v1090
  %v1092 = vpop.f32.mrb[0].mxu0
  %1093 = vmatprep.mubr.f32.mxu0 0.0
  %1094 = vmatmul.mubr.f32.gmra.mrb[0].mxu0 %v177
  %v1095 = vpop.f32.mrb[0].mxu0
  %v1096 = vadd.f32 0.0, %v1095
  %v1097 = vpop.f32.mrb[0].mxu0
  %1098 = vmatprep.mubr.f32.mxu0 0.0
  %1099 = vmatmul.mubr.f32.gmra.mrb[0].mxu0 %v178
  %v1100 = vpop.f32.mrb[0].mxu0
  %v1101 = vadd.f32 0.0, %v1100
  %v1102 = vpop.f32.mrb[0].mxu0
  %1103 = vmatprep.mubr.f32.mxu0 0.0
  %1104 = vmatmul.mubr.f32.gmra.mrb[0].mxu0 %v179
  %v1105 = vpop.f32.mrb[0].mxu0
  %v1106 = vadd.f32 0.0, %v1105
  %v1107 = vpop.f32.mrb[0].mxu0
  %1108 = vmatprep.mubr.f32.mxu0 0.0
  %1109 = vmatmul.mubr.f32.gmra.mrb[0].mxu0 %v180
  %v1110 = vpop.f32.mrb[0].mxu0
  %v1111 = vadd.f32 0.0, %v1110
  %v1112 = vpop.f32.mrb[0].mxu0
  %1113 = vmatprep.mubr.f32.mxu0 0.0
  %1114 = vmatmul.mubr.f32.gmra.mrb[0].mxu0 %v181
  %v1115 = vpop.f32.mrb[0].mxu0
  %v1116 = vadd.f32 0.0, %v1115
  %v1117 = vpop.f32.mrb[0].mxu0
  %1118 = vmatprep.mubr.f32.mxu0 0.0
  %1119 = vmatmul.mubr.f32.gmra.mrb[0].mxu0 %v182
  %v1120 = vpop.f32.mrb[0].mxu0
  %v1121 = vadd.f32 0.0, %v1120
  %v1122 = vpop.f32.mrb[0].mxu0
  %1123 = vmatprep.mubr.f32.mxu0 0.0
  %1124 = vmatmul.mubr.f32.gmra.mrb[0].mxu0 %v183
  %v1125 = vpop.f32.mrb[0].mxu0
  %v1126 = vadd.f32 0.0, %v1125
  %v1127 = vpop.f32.mrb[0].mxu0
  %1128 = vmatprep.mubr.f32.mxu0 0.0
  %1129 = vmatmul.mubr.f32.gmra.mrb[0].mxu0 %v184
  %v1130 = vpop.f32.mrb[0].mxu0
  %v1131 = vadd.f32 0.0, %v1130
  %v1132 = vpop.f32.mrb[0].mxu0
  %1133 = vmatprep.mubr.f32.mxu0 0.0
  %1134 = vmatmul.mubr.f32.gmra.mrb[0].mxu0 %v185
  %v1135 = vpop.f32.mrb[0].mxu0
  %v1136 = vadd.f32 0.0, %v1135
  %v1137 = vpop.f32.mrb[0].mxu0
  %1138 = vmatprep.mubr.f32.mxu0 0.0
  %1139 = vmatmul.mubr.f32.gmra.mrb[0].mxu0 %v186
  %v1140 = vpop.f32.mrb[0].mxu0
  %v1141 = vadd.f32 0.0, %v1140
  %v1142 = vpop.f32.mrb[0].mxu0
  %1143 = vmatprep.mubr.f32.mxu0 0.0
  %1144 = vmatmul.mubr.f32.gmra.mrb[0].mxu0 %v187
  %v1145 = vpop.f32.mrb[0].mxu0
  %v1146 = vadd.f32 0.0, %v1145
  %v1147 = vpop.f32.mrb[0].mxu0
  %1148 = vmatprep.mubr.f32.mxu0 0.0
  %1149 = vmatmul.mubr.f32.gmra.mrb[0].mxu0 %v188
  %v1150 = vpop.f32.mrb[0].mxu0
  %v1151 = vadd.f32 0.0, %v1150
  %v1152 = vpop.f32.mrb[0].mxu0
  %1153 = vmatprep.mubr.f32.mxu0 0.0
  %1154 = vmatmul.mubr.f32.gmra.mrb[0].mxu0 %v189
  %v1155 = vpop.f32.mrb[0].mxu0
  %v1156 = vadd.f32 0.0, %v1155
  %v1157 = vpop.f32.mrb[0].mxu0
  %1158 = vmatprep.mubr.f32.mxu0 0.0
  %1159 = vmatmul.mubr.f32.gmra.mrb[0].mxu0 %v190
  %v1160 = vpop.f32.mrb[0].mxu0
  %v1161 = vadd.f32 0.0, %v1160
  %v1162 = vpop.f32.mrb[0].mxu0
  %1163 = vmatprep.mubr.f32.mxu0 0.0
  %1164 = vmatmul.mubr.f32.gmra.mrb[0].mxu0 %v191
  %v1165 = vpop.f32.mrb[0].mxu0
  %v1166 = vadd.f32 0.0, %v1165
  %v1167 = vpop.f32.mrb[0].mxu0
  %1168 = vmatprep.mubr.f32.mxu0 0.0
  %1169 = vmatmul.mubr.f32.gmra.mrb[0].mxu0 %v192
  %v1170 = vpop.f32.mrb[0].mxu0
  %v1171 = vadd.f32 0.0, %v1170
  %v1172 = vpop.f32.mrb[0].mxu0
  %1173 = vmatprep.mubr.f32.mxu0 0.0
  %1174 = vmatmul.mubr.f32.gmra.mrb[0].mxu0 %v193
  %v1175 = vpop.f32.mrb[0].mxu0
  %v1176 = vadd.f32 0.0, %v1175
  %v1177 = vpop.f32.mrb[0].mxu0
  %1178 = vmatprep.mubr.f32.mxu0 0.0
  %1179 = vmatmul.mubr.f32.gmra.mrb[0].mxu0 %v194
  %v1180 = vpop.f32.mrb[0].mxu0
  %v1181 = vadd.f32 0.0, %v1180
  %v1182 = vpop.f32.mrb[0].mxu0
  %1183 = vmatprep.mubr.f32.mxu0 0.0
  %1184 = vmatmul.mubr.f32.gmra.mrb[0].mxu0 %v195
  %v1185 = vpop.f32.mrb[0].mxu0
  %v1186 = vadd.f32 0.0, %v1185
  %v1187 = vpop.f32.mrb[0].mxu0
  %1188 = vmatprep.mubr.f32.mxu0 0.0
  %1189 = vmatmul.mubr.f32.gmra.mrb[0].mxu0 %v196
  %v1190 = vpop.f32.mrb[0].mxu0
  %v1191 = vadd.f32 0.0, %v1190
  %v1192 = vpop.f32.mrb[0].mxu0
  %1193 = vmatprep.mubr.f32.mxu0 0.0
  %1194 = vmatmul.mubr.f32.gmra.mrb[0].mxu0 %v197
  %v1195 = vpop.f32.mrb[0].mxu0
  %v1196 = vadd.f32 0.0, %v1195
  %v1197 = vpop.f32.mrb[0].mxu0
  %1198 = vmatprep.mubr.f32.mxu0 0.0
  %1199 = vmatmul.mubr.f32.gmra.mrb[0].mxu0 %v198
  %v1200 = vpop.f32.mrb[0].mxu0
  %v1201 = vadd.f32 0.0, %v1200
  %v1202 = vpop.f32.mrb[0].mxu0
  %1203 = vmatprep.mubr.f32.mxu0 0.0
  %1204 = vmatmul.mubr.f32.gmra.mrb[0].mxu0 %v199
  %v1205 = vpop.f32.mrb[0].mxu0
  %v1206 = vadd.f32 0.0, %v1205
  %v1207 = vpop.f32.mrb[0].mxu0
  %1208 = vmatprep.mubr.f32.mxu0 0.0
  %1209 = vmatmul.mubr.f32.gmra.mrb[0].mxu0 %v200
  %v1210 = vpop.f32.mrb[0].mxu0
  %v1211 = vadd.f32 0.0, %v1210
  %v1212 = vpop.f32.mrb[0].mxu0
  %1213 = vmatprep.mubr.f32.mxu0 0.0
  %1214 = vmatmul.mubr.f32.gmra.mrb[0].mxu0 %v201
  %v1215 = vpop.f32.mrb[0].mxu0
  %v1216 = vadd.f32 0.0, %v1215
  %v1217 = vpop.f32.mrb[0].mxu0
  %1218 = vmatprep.mubr.f32.mxu0 0.0
  %1219 = vmatmul.mubr.f32.gmra.mrb[0].mxu0 %v202
  %v1220 = vpop.f32.mrb[0].mxu0
  %v1221 = vadd.f32 0.0, %v1220
  %v1222 = vpop.f32.mrb[0].mxu0
  %1223 = vmatprep.mubr.f32.mxu0 0.0
  %1224 = vmatmul.mubr.f32.gmra.mrb[0].mxu0 %v203
  %v1225 = vpop.f32.mrb[0].mxu0
  %v1226 = vadd.f32 0.0, %v1225
  %v1227 = vpop.f32.mrb[0].mxu0
  %1228 = vmatprep.mubr.f32.mxu0 0.0
  %1229 = vmatmul.mubr.f32.gmra.mrb[0].mxu0 %v204
  %v1230 = vpop.f32.mrb[0].mxu0
  %v1231 = vadd.f32 0.0, %v1230
  %v1232 = vpop.f32.mrb[0].mxu0
  %1233 = vmatprep.mubr.f32.mxu0 0.0
  %1234 = vmatmul.mubr.f32.gmra.mrb[0].mxu0 %v205
  %v1235 = vpop.f32.mrb[0].mxu0
  %v1236 = vadd.f32 0.0, %v1235
  %v1237 = vpop.f32.mrb[0].mxu0
  %1238 = vmatprep.mubr.f32.mxu0 0.0
  %1239 = vmatmul.mubr.f32.gmra.mrb[0].mxu0 %v206
  %v1240 = vpop.f32.mrb[0].mxu0
  %v1241 = vadd.f32 0.0, %v1240
  %v1242 = vpop.f32.mrb[0].mxu0
  %1243 = vmatprep.mubr.f32.mxu0 0.0
  %1244 = vmatmul.mubr.f32.gmra.mrb[0].mxu0 %v207
  %v1245 = vpop.f32.mrb[0].mxu0
  %v1246 = vadd.f32 0.0, %v1245
  %v1247 = vpop.f32.mrb[0].mxu0
  %1248 = vmatprep.mubr.f32.mxu0 0.0
  %1249 = vmatmul.mubr.f32.gmra.mrb[0].mxu0 %v208
  %v1250 = vpop.f32.mrb[0].mxu0
  %v1251 = vadd.f32 0.0, %v1250
  %v1252 = vpop.f32.mrb[0].mxu0
  %1253 = vmatprep.mubr.f32.mxu0 0.0
  %1254 = vmatmul.mubr.f32.gmra.mrb[0].mxu0 %v209
  %v1255 = vpop.f32.mrb[0].mxu0
  %v1256 = vadd.f32 0.0, %v1255
  %v1257 = vpop.f32.mrb[0].mxu0
  %1258 = vmatprep.mubr.f32.mxu0 0.0
  %1259 = vmatmul.mubr.f32.gmra.mrb[0].mxu0 %v210
  %v1260 = vpop.f32.mrb[0].mxu0
  %v1261 = vadd.f32 0.0, %v1260
  %v1262 = vpop.f32.mrb[0].mxu0
  %1263 = vmatprep.mubr.f32.mxu0 0.0
  %1264 = vmatmul.mubr.f32.gmra.mrb[0].mxu0 %v211
  %v1265 = vpop.f32.mrb[0].mxu0
  %v1266 = vadd.f32 0.0, %v1265
  %v1267 = vpop.f32.mrb[0].mxu0
  %1268 = vmatprep.mubr.f32.mxu0 0.0
  %1269 = vmatmul.mubr.f32.gmra.mrb[0].mxu0 %v212
  %v1270 = vpop.f32.mrb[0].mxu0
  %v1271 = vadd.f32 0.0, %v1270
  %v1272 = vpop.f32.mrb[0].mxu0
  %1273 = vdwg.mxu0
  %v1274 = vld [vmem:[%s2] sm:$0x1]
  %v1276 = vlaneseq
  %v1277 = vshrl.u32 %v1276, 7
  %v1278 = vsub.s32 0, %v1277
  %v1279 = vrot.slane %v1274, %v1278
  %v1281 = vmul.f32 %v296, %v1279
  %v1282 = vmul.f32 %v301, %v1279
  %v1283 = vmul.f32 %v306, %v1279
  %v1284 = vmul.f32 %v311, %v1279
  %v1285 = vmul.f32 %v316, %v1279
  %v1286 = vmul.f32 %v321, %v1279
  %v1287 = vmul.f32 %v326, %v1279
  %v1288 = vmul.f32 %v331, %v1279
  %v1289 = vmul.f32 %v336, %v1279
  %v1290 = vmul.f32 %v341, %v1279
  %v1291 = vmul.f32 %v346, %v1279
  %v1292 = vmul.f32 %v351, %v1279
  %v1293 = vmul.f32 %v356, %v1279
  %v1294 = vmul.f32 %v361, %v1279
  %v1295 = vmul.f32 %v366, %v1279
  %v1296 = vmul.f32 %v371, %v1279
  %v1297 = vmul.f32 %v376, %v1279
  %v1298 = vmul.f32 %v381, %v1279
  %v1299 = vmul.f32 %v386, %v1279
  %v1300 = vmul.f32 %v391, %v1279
  %v1301 = vmul.f32 %v396, %v1279
  %v1302 = vmul.f32 %v401, %v1279
  %v1303 = vmul.f32 %v406, %v1279
  %v1304 = vmul.f32 %v411, %v1279
  %v1305 = vmul.f32 %v416, %v1279
  %v1306 = vmul.f32 %v421, %v1279
  %v1307 = vmul.f32 %v426, %v1279
  %v1308 = vmul.f32 %v431, %v1279
  %v1309 = vmul.f32 %v436, %v1279
  %v1310 = vmul.f32 %v441, %v1279
  %v1311 = vmul.f32 %v446, %v1279
  %v1312 = vmul.f32 %v451, %v1279
  %v1313 = vmul.f32 %v456, %v1279
  %v1314 = vmul.f32 %v461, %v1279
  %v1315 = vmul.f32 %v466, %v1279
  %v1316 = vmul.f32 %v471, %v1279
  %v1317 = vmul.f32 %v476, %v1279
  %v1318 = vmul.f32 %v481, %v1279
  %v1319 = vmul.f32 %v486, %v1279
  %v1320 = vmul.f32 %v491, %v1279
  %v1321 = vmul.f32 %v496, %v1279
  %v1322 = vmul.f32 %v501, %v1279
  %v1323 = vmul.f32 %v506, %v1279
  %v1324 = vmul.f32 %v511, %v1279
  %v1325 = vmul.f32 %v516, %v1279
  %v1326 = vmul.f32 %v521, %v1279
  %v1327 = vmul.f32 %v526, %v1279
  %v1328 = vmul.f32 %v531, %v1279
  %v1329 = vmul.f32 %v536, %v1279
  %v1330 = vmul.f32 %v541, %v1279
  %v1331 = vmul.f32 %v546, %v1279
  %v1332 = vmul.f32 %v551, %v1279
  %v1333 = vmul.f32 %v556, %v1279
  %v1334 = vmul.f32 %v561, %v1279
  %v1335 = vmul.f32 %v566, %v1279
  %v1336 = vmul.f32 %v571, %v1279
  %v1337 = vmul.f32 %v576, %v1279
  %v1338 = vmul.f32 %v581, %v1279
  %v1339 = vmul.f32 %v586, %v1279
  %v1340 = vmul.f32 %v591, %v1279
  %v1341 = vmul.f32 %v596, %v1279
  %v1342 = vmul.f32 %v601, %v1279
  %v1343 = vmul.f32 %v606, %v1279
  %v1344 = vmul.f32 %v611, %v1279
  %v1345 = vmul.f32 %v616, %v1279
  %v1346 = vmul.f32 %v621, %v1279
  %v1347 = vmul.f32 %v626, %v1279
  %v1348 = vmul.f32 %v631, %v1279
  %v1349 = vmul.f32 %v636, %v1279
  %v1350 = vmul.f32 %v641, %v1279
  %v1351 = vmul.f32 %v646, %v1279
  %v1352 = vmul.f32 %v651, %v1279
  %v1353 = vmul.f32 %v656, %v1279
  %v1354 = vmul.f32 %v661, %v1279
  %v1355 = vmul.f32 %v666, %v1279
  %v1356 = vmul.f32 %v671, %v1279
  %v1357 = vmul.f32 %v676, %v1279
  %v1358 = vmul.f32 %v681, %v1279
  %v1359 = vmul.f32 %v686, %v1279
  %v1360 = vmul.f32 %v691, %v1279
  %v1361 = vmul.f32 %v696, %v1279
  %v1362 = vmul.f32 %v701, %v1279
  %v1363 = vmul.f32 %v706, %v1279
  %v1364 = vmul.f32 %v711, %v1279
  %v1365 = vmul.f32 %v716, %v1279
  %v1366 = vmul.f32 %v721, %v1279
  %v1367 = vmul.f32 %v726, %v1279
  %v1368 = vmul.f32 %v731, %v1279
  %v1369 = vmul.f32 %v736, %v1279
  %v1370 = vmul.f32 %v741, %v1279
  %v1371 = vmul.f32 %v746, %v1279
  %v1372 = vmul.f32 %v751, %v1279
  %v1373 = vmul.f32 %v756, %v1279
  %v1374 = vmul.f32 %v761, %v1279
  %v1375 = vmul.f32 %v766, %v1279
  %v1376 = vmul.f32 %v771, %v1279
  %v1377 = vmul.f32 %v776, %v1279
  %v1378 = vmul.f32 %v781, %v1279
  %v1379 = vmul.f32 %v786, %v1279
  %v1380 = vmul.f32 %v791, %v1279
  %v1381 = vmul.f32 %v796, %v1279
  %v1382 = vmul.f32 %v801, %v1279
  %v1383 = vmul.f32 %v806, %v1279
  %v1384 = vmul.f32 %v811, %v1279
  %v1385 = vmul.f32 %v816, %v1279
  %v1386 = vmul.f32 %v821, %v1279
  %v1387 = vmul.f32 %v826, %v1279
  %v1388 = vmul.f32 %v831, %v1279
  %v1389 = vmul.f32 %v836, %v1279
  %v1390 = vmul.f32 %v841, %v1279
  %v1391 = vmul.f32 %v846, %v1279
  %v1392 = vmul.f32 %v851, %v1279
  %v1393 = vmul.f32 %v856, %v1279
  %v1394 = vmul.f32 %v861, %v1279
  %v1395 = vmul.f32 %v866, %v1279
  %v1396 = vmul.f32 %v871, %v1279
  %v1397 = vmul.f32 %v876, %v1279
  %v1398 = vmul.f32 %v881, %v1279
  %v1399 = vmul.f32 %v886, %v1279
  %v1400 = vmul.f32 %v891, %v1279
  %v1401 = vmul.f32 %v896, %v1279
  %v1402 = vmul.f32 %v901, %v1279
  %v1403 = vmul.f32 %v906, %v1279
  %v1404 = vmul.f32 %v911, %v1279
  %v1405 = vmul.f32 %v916, %v1279
  %v1406 = vmul.f32 %v921, %v1279
  %v1407 = vmul.f32 %v926, %v1279
  %v1408 = vmul.f32 %v931, %v1279
  %v1409 = vmul.f32 %v936, %v1279
  %v1410 = vmul.f32 %v941, %v1279
  %v1411 = vmul.f32 %v946, %v1279
  %v1412 = vmul.f32 %v951, %v1279
  %v1413 = vmul.f32 %v956, %v1279
  %v1414 = vmul.f32 %v961, %v1279
  %v1415 = vmul.f32 %v966, %v1279
  %v1416 = vmul.f32 %v971, %v1279
  %v1417 = vmul.f32 %v976, %v1279
  %v1418 = vmul.f32 %v981, %v1279
  %v1419 = vmul.f32 %v986, %v1279
  %v1420 = vmul.f32 %v991, %v1279
  %v1421 = vmul.f32 %v996, %v1279
  %v1422 = vmul.f32 %v1001, %v1279
  %v1423 = vmul.f32 %v1006, %v1279
  %v1424 = vmul.f32 %v1011, %v1279
  %v1425 = vmul.f32 %v1016, %v1279
  %v1426 = vmul.f32 %v1021, %v1279
  %v1427 = vmul.f32 %v1026, %v1279
  %v1428 = vmul.f32 %v1031, %v1279
  %v1429 = vmul.f32 %v1036, %v1279
  %v1430 = vmul.f32 %v1041, %v1279
  %v1431 = vmul.f32 %v1046, %v1279
  %v1432 = vmul.f32 %v1051, %v1279
  %v1433 = vmul.f32 %v1056, %v1279
  %v1434 = vmul.f32 %v1061, %v1279
  %v1435 = vmul.f32 %v1066, %v1279
  %v1436 = vmul.f32 %v1071, %v1279
  %v1437 = vmul.f32 %v1076, %v1279
  %v1438 = vmul.f32 %v1081, %v1279
  %v1439 = vmul.f32 %v1086, %v1279
  %v1440 = vmul.f32 %v1091, %v1279
  %v1441 = vmul.f32 %v1096, %v1279
  %v1442 = vmul.f32 %v1101, %v1279
  %v1443 = vmul.f32 %v1106, %v1279
  %v1444 = vmul.f32 %v1111, %v1279
  %v1445 = vmul.f32 %v1116, %v1279
  %v1446 = vmul.f32 %v1121, %v1279
  %v1447 = vmul.f32 %v1126, %v1279
  %v1448 = vmul.f32 %v1131, %v1279
  %v1449 = vmul.f32 %v1136, %v1279
  %v1450 = vmul.f32 %v1141, %v1279
  %v1451 = vmul.f32 %v1146, %v1279
  %v1452 = vmul.f32 %v1151, %v1279
  %v1453 = vmul.f32 %v1156, %v1279
  %v1454 = vmul.f32 %v1161, %v1279
  %v1455 = vmul.f32 %v1166, %v1279
  %v1456 = vmul.f32 %v1171, %v1279
  %v1457 = vmul.f32 %v1176, %v1279
  %v1458 = vmul.f32 %v1181, %v1279
  %v1459 = vmul.f32 %v1186, %v1279
  %v1460 = vmul.f32 %v1191, %v1279
  %v1461 = vmul.f32 %v1196, %v1279
  %v1462 = vmul.f32 %v1201, %v1279
  %v1463 = vmul.f32 %v1206, %v1279
  %v1464 = vmul.f32 %v1211, %v1279
  %v1465 = vmul.f32 %v1216, %v1279
  %v1466 = vmul.f32 %v1221, %v1279
  %v1467 = vmul.f32 %v1226, %v1279
  %v1468 = vmul.f32 %v1231, %v1279
  %v1469 = vmul.f32 %v1236, %v1279
  %v1470 = vmul.f32 %v1241, %v1279
  %v1471 = vmul.f32 %v1246, %v1279
  %v1472 = vmul.f32 %v1251, %v1279
  %v1473 = vmul.f32 %v1256, %v1279
  %v1474 = vmul.f32 %v1261, %v1279
  %v1475 = vmul.f32 %v1266, %v1279
  %v1476 = vmul.f32 %v1271, %v1279
  %v1477 = vld [vmem:[%s3] sm:$0x1]
  %v1479 = vlaneseq
  %v1480 = vshrl.u32 %v1479, 7
  %v1481 = vsub.s32 0, %v1480
  %v1482 = vrot.slane %v1477, %v1481
  %v1484 = vadd.f32 %v1281, %v1482
  %v1485 = vadd.f32 %v1282, %v1482
  %v1486 = vadd.f32 %v1283, %v1482
  %v1487 = vadd.f32 %v1284, %v1482
  %v1488 = vadd.f32 %v1285, %v1482
  %v1489 = vadd.f32 %v1286, %v1482
  %v1490 = vadd.f32 %v1287, %v1482
  %v1491 = vadd.f32 %v1288, %v1482
  %v1492 = vadd.f32 %v1289, %v1482
  %v1493 = vadd.f32 %v1290, %v1482
  %v1494 = vadd.f32 %v1291, %v1482
  %v1495 = vadd.f32 %v1292, %v1482
  %v1496 = vadd.f32 %v1293, %v1482
  %v1497 = vadd.f32 %v1294, %v1482
  %v1498 = vadd.f32 %v1295, %v1482
  %v1499 = vadd.f32 %v1296, %v1482
  %v1500 = vadd.f32 %v1297, %v1482
  %v1501 = vadd.f32 %v1298, %v1482
  %v1502 = vadd.f32 %v1299, %v1482
  %v1503 = vadd.f32 %v1300, %v1482
  %v1504 = vadd.f32 %v1301, %v1482
  %v1505 = vadd.f32 %v1302, %v1482
  %v1506 = vadd.f32 %v1303, %v1482
  %v1507 = vadd.f32 %v1304, %v1482
  %v1508 = vadd.f32 %v1305, %v1482
  %v1509 = vadd.f32 %v1306, %v1482
  %v1510 = vadd.f32 %v1307, %v1482
  %v1511 = vadd.f32 %v1308, %v1482
  %v1512 = vadd.f32 %v1309, %v1482
  %v1513 = vadd.f32 %v1310, %v1482
  %v1514 = vadd.f32 %v1311, %v1482
  %v1515 = vadd.f32 %v1312, %v1482
  %v1516 = vadd.f32 %v1313, %v1482
  %v1517 = vadd.f32 %v1314, %v1482
  %v1518 = vadd.f32 %v1315, %v1482
  %v1519 = vadd.f32 %v1316, %v1482
  %v1520 = vadd.f32 %v1317, %v1482
  %v1521 = vadd.f32 %v1318, %v1482
  %v1522 = vadd.f32 %v1319, %v1482
  %v1523 = vadd.f32 %v1320, %v1482
  %v1524 = vadd.f32 %v1321, %v1482
  %v1525 = vadd.f32 %v1322, %v1482
  %v1526 = vadd.f32 %v1323, %v1482
  %v1527 = vadd.f32 %v1324, %v1482
  %v1528 = vadd.f32 %v1325, %v1482
  %v1529 = vadd.f32 %v1326, %v1482
  %v1530 = vadd.f32 %v1327, %v1482
  %v1531 = vadd.f32 %v1328, %v1482
  %v1532 = vadd.f32 %v1329, %v1482
  %v1533 = vadd.f32 %v1330, %v1482
  %v1534 = vadd.f32 %v1331, %v1482
  %v1535 = vadd.f32 %v1332, %v1482
  %v1536 = vadd.f32 %v1333, %v1482
  %v1537 = vadd.f32 %v1334, %v1482
  %v1538 = vadd.f32 %v1335, %v1482
  %v1539 = vadd.f32 %v1336, %v1482
  %v1540 = vadd.f32 %v1337, %v1482
  %v1541 = vadd.f32 %v1338, %v1482
  %v1542 = vadd.f32 %v1339, %v1482
  %v1543 = vadd.f32 %v1340, %v1482
  %v1544 = vadd.f32 %v1341, %v1482
  %v1545 = vadd.f32 %v1342, %v1482
  %v1546 = vadd.f32 %v1343, %v1482
  %v1547 = vadd.f32 %v1344, %v1482
  %v1548 = vadd.f32 %v1345, %v1482
  %v1549 = vadd.f32 %v1346, %v1482
  %v1550 = vadd.f32 %v1347, %v1482
  %v1551 = vadd.f32 %v1348, %v1482
  %v1552 = vadd.f32 %v1349, %v1482
  %v1553 = vadd.f32 %v1350, %v1482
  %v1554 = vadd.f32 %v1351, %v1482
  %v1555 = vadd.f32 %v1352, %v1482
  %v1556 = vadd.f32 %v1353, %v1482
  %v1557 = vadd.f32 %v1354, %v1482
  %v1558 = vadd.f32 %v1355, %v1482
  %v1559 = vadd.f32 %v1356, %v1482
  %v1560 = vadd.f32 %v1357, %v1482
  %v1561 = vadd.f32 %v1358, %v1482
  %v1562 = vadd.f32 %v1359, %v1482
  %v1563 = vadd.f32 %v1360, %v1482
  %v1564 = vadd.f32 %v1361, %v1482
  %v1565 = vadd.f32 %v1362, %v1482
  %v1566 = vadd.f32 %v1363, %v1482
  %v1567 = vadd.f32 %v1364, %v1482
  %v1568 = vadd.f32 %v1365, %v1482
  %v1569 = vadd.f32 %v1366, %v1482
  %v1570 = vadd.f32 %v1367, %v1482
  %v1571 = vadd.f32 %v1368, %v1482
  %v1572 = vadd.f32 %v1369, %v1482
  %v1573 = vadd.f32 %v1370, %v1482
  %v1574 = vadd.f32 %v1371, %v1482
  %v1575 = vadd.f32 %v1372, %v1482
  %v1576 = vadd.f32 %v1373, %v1482
  %v1577 = vadd.f32 %v1374, %v1482
  %v1578 = vadd.f32 %v1375, %v1482
  %v1579 = vadd.f32 %v1376, %v1482
  %v1580 = vadd.f32 %v1377, %v1482
  %v1581 = vadd.f32 %v1378, %v1482
  %v1582 = vadd.f32 %v1379, %v1482
  %v1583 = vadd.f32 %v1380, %v1482
  %v1584 = vadd.f32 %v1381, %v1482
  %v1585 = vadd.f32 %v1382, %v1482
  %v1586 = vadd.f32 %v1383, %v1482
  %v1587 = vadd.f32 %v1384, %v1482
  %v1588 = vadd.f32 %v1385, %v1482
  %v1589 = vadd.f32 %v1386, %v1482
  %v1590 = vadd.f32 %v1387, %v1482
  %v1591 = vadd.f32 %v1388, %v1482
  %v1592 = vadd.f32 %v1389, %v1482
  %v1593 = vadd.f32 %v1390, %v1482
  %v1594 = vadd.f32 %v1391, %v1482
  %v1595 = vadd.f32 %v1392, %v1482
  %v1596 = vadd.f32 %v1393, %v1482
  %v1597 = vadd.f32 %v1394, %v1482
  %v1598 = vadd.f32 %v1395, %v1482
  %v1599 = vadd.f32 %v1396, %v1482
  %v1600 = vadd.f32 %v1397, %v1482
  %v1601 = vadd.f32 %v1398, %v1482
  %v1602 = vadd.f32 %v1399, %v1482
  %v1603 = vadd.f32 %v1400, %v1482
  %v1604 = vadd.f32 %v1401, %v1482
  %v1605 = vadd.f32 %v1402, %v1482
  %v1606 = vadd.f32 %v1403, %v1482
  %v1607 = vadd.f32 %v1404, %v1482
  %v1608 = vadd.f32 %v1405, %v1482
  %v1609 = vadd.f32 %v1406, %v1482
  %v1610 = vadd.f32 %v1407, %v1482
  %v1611 = vadd.f32 %v1408, %v1482
  %v1612 = vadd.f32 %v1409, %v1482
  %v1613 = vadd.f32 %v1410, %v1482
  %v1614 = vadd.f32 %v1411, %v1482
  %v1615 = vadd.f32 %v1412, %v1482
  %v1616 = vadd.f32 %v1413, %v1482
  %v1617 = vadd.f32 %v1414, %v1482
  %v1618 = vadd.f32 %v1415, %v1482
  %v1619 = vadd.f32 %v1416, %v1482
  %v1620 = vadd.f32 %v1417, %v1482
  %v1621 = vadd.f32 %v1418, %v1482
  %v1622 = vadd.f32 %v1419, %v1482
  %v1623 = vadd.f32 %v1420, %v1482
  %v1624 = vadd.f32 %v1421, %v1482
  %v1625 = vadd.f32 %v1422, %v1482
  %v1626 = vadd.f32 %v1423, %v1482
  %v1627 = vadd.f32 %v1424, %v1482
  %v1628 = vadd.f32 %v1425, %v1482
  %v1629 = vadd.f32 %v1426, %v1482
  %v1630 = vadd.f32 %v1427, %v1482
  %v1631 = vadd.f32 %v1428, %v1482
  %v1632 = vadd.f32 %v1429, %v1482
  %v1633 = vadd.f32 %v1430, %v1482
  %v1634 = vadd.f32 %v1431, %v1482
  %v1635 = vadd.f32 %v1432, %v1482
  %v1636 = vadd.f32 %v1433, %v1482
  %v1637 = vadd.f32 %v1434, %v1482
  %v1638 = vadd.f32 %v1435, %v1482
  %v1639 = vadd.f32 %v1436, %v1482
  %v1640 = vadd.f32 %v1437, %v1482
  %v1641 = vadd.f32 %v1438, %v1482
  %v1642 = vadd.f32 %v1439, %v1482
  %v1643 = vadd.f32 %v1440, %v1482
  %v1644 = vadd.f32 %v1441, %v1482
  %v1645 = vadd.f32 %v1442, %v1482
  %v1646 = vadd.f32 %v1443, %v1482
  %v1647 = vadd.f32 %v1444, %v1482
  %v1648 = vadd.f32 %v1445, %v1482
  %v1649 = vadd.f32 %v1446, %v1482
  %v1650 = vadd.f32 %v1447, %v1482
  %v1651 = vadd.f32 %v1448, %v1482
  %v1652 = vadd.f32 %v1449, %v1482
  %v1653 = vadd.f32 %v1450, %v1482
  %v1654 = vadd.f32 %v1451, %v1482
  %v1655 = vadd.f32 %v1452, %v1482
  %v1656 = vadd.f32 %v1453, %v1482
  %v1657 = vadd.f32 %v1454, %v1482
  %v1658 = vadd.f32 %v1455, %v1482
  %v1659 = vadd.f32 %v1456, %v1482
  %v1660 = vadd.f32 %v1457, %v1482
  %v1661 = vadd.f32 %v1458, %v1482
  %v1662 = vadd.f32 %v1459, %v1482
  %v1663 = vadd.f32 %v1460, %v1482
  %v1664 = vadd.f32 %v1461, %v1482
  %v1665 = vadd.f32 %v1462, %v1482
  %v1666 = vadd.f32 %v1463, %v1482
  %v1667 = vadd.f32 %v1464, %v1482
  %v1668 = vadd.f32 %v1465, %v1482
  %v1669 = vadd.f32 %v1466, %v1482
  %v1670 = vadd.f32 %v1467, %v1482
  %v1671 = vadd.f32 %v1468, %v1482
  %v1672 = vadd.f32 %v1469, %v1482
  %v1673 = vadd.f32 %v1470, %v1482
  %v1674 = vadd.f32 %v1471, %v1482
  %v1675 = vadd.f32 %v1472, %v1482
  %v1676 = vadd.f32 %v1473, %v1482
  %v1677 = vadd.f32 %v1474, %v1482
  %v1678 = vadd.f32 %v1475, %v1482
  %v1679 = vadd.f32 %v1476, %v1482
  %v1680 = vmax.f32 %v1484, 0.0
  %v1681 = vmax.f32 %v1485, 0.0
  %v1682 = vmax.f32 %v1486, 0.0
  %v1683 = vmax.f32 %v1487, 0.0
  %v1684 = vmax.f32 %v1488, 0.0
  %v1685 = vmax.f32 %v1489, 0.0
  %v1686 = vmax.f32 %v1490, 0.0
  %v1687 = vmax.f32 %v1491, 0.0
  %v1688 = vmax.f32 %v1492, 0.0
  %v1689 = vmax.f32 %v1493, 0.0
  %v1690 = vmax.f32 %v1494, 0.0
  %v1691 = vmax.f32 %v1495, 0.0
  %v1692 = vmax.f32 %v1496, 0.0
  %v1693 = vmax.f32 %v1497, 0.0
  %v1694 = vmax.f32 %v1498, 0.0
  %v1695 = vmax.f32 %v1499, 0.0
  %v1696 = vmax.f32 %v1500, 0.0
  %v1697 = vmax.f32 %v1501, 0.0
  %v1698 = vmax.f32 %v1502, 0.0
  %v1699 = vmax.f32 %v1503, 0.0
  %v1700 = vmax.f32 %v1504, 0.0
  %v1701 = vmax.f32 %v1505, 0.0
  %v1702 = vmax.f32 %v1506, 0.0
  %v1703 = vmax.f32 %v1507, 0.0
  %v1704 = vmax.f32 %v1508, 0.0
  %v1705 = vmax.f32 %v1509, 0.0
  %v1706 = vmax.f32 %v1510, 0.0
  %v1707 = vmax.f32 %v1511, 0.0
  %v1708 = vmax.f32 %v1512, 0.0
  %v1709 = vmax.f32 %v1513, 0.0
  %v1710 = vmax.f32 %v1514, 0.0
  %v1711 = vmax.f32 %v1515, 0.0
  %v1712 = vmax.f32 %v1516, 0.0
  %v1713 = vmax.f32 %v1517, 0.0
  %v1714 = vmax.f32 %v1518, 0.0
  %v1715 = vmax.f32 %v1519, 0.0
  %v1716 = vmax.f32 %v1520, 0.0
  %v1717 = vmax.f32 %v1521, 0.0
  %v1718 = vmax.f32 %v1522, 0.0
  %v1719 = vmax.f32 %v1523, 0.0
  %v1720 = vmax.f32 %v1524, 0.0
  %v1721 = vmax.f32 %v1525, 0.0
  %v1722 = vmax.f32 %v1526, 0.0
  %v1723 = vmax.f32 %v1527, 0.0
  %v1724 = vmax.f32 %v1528, 0.0
  %v1725 = vmax.f32 %v1529, 0.0
  %v1726 = vmax.f32 %v1530, 0.0
  %v1727 = vmax.f32 %v1531, 0.0
  %v1728 = vmax.f32 %v1532, 0.0
  %v1729 = vmax.f32 %v1533, 0.0
  %v1730 = vmax.f32 %v1534, 0.0
  %v1731 = vmax.f32 %v1535, 0.0
  %v1732 = vmax.f32 %v1536, 0.0
  %v1733 = vmax.f32 %v1537, 0.0
  %v1734 = vmax.f32 %v1538, 0.0
  %v1735 = vmax.f32 %v1539, 0.0
  %v1736 = vmax.f32 %v1540, 0.0
  %v1737 = vmax.f32 %v1541, 0.0
  %v1738 = vmax.f32 %v1542, 0.0
  %v1739 = vmax.f32 %v1543, 0.0
  %v1740 = vmax.f32 %v1544, 0.0
  %v1741 = vmax.f32 %v1545, 0.0
  %v1742 = vmax.f32 %v1546, 0.0
  %v1743 = vmax.f32 %v1547, 0.0
  %v1744 = vmax.f32 %v1548, 0.0
  %v1745 = vmax.f32 %v1549, 0.0
  %v1746 = vmax.f32 %v1550, 0.0
  %v1747 = vmax.f32 %v1551, 0.0
  %v1748 = vmax.f32 %v1552, 0.0
  %v1749 = vmax.f32 %v1553, 0.0
  %v1750 = vmax.f32 %v1554, 0.0
  %v1751 = vmax.f32 %v1555, 0.0
  %v1752 = vmax.f32 %v1556, 0.0
  %v1753 = vmax.f32 %v1557, 0.0
  %v1754 = vmax.f32 %v1558, 0.0
  %v1755 = vmax.f32 %v1559, 0.0
  %v1756 = vmax.f32 %v1560, 0.0
  %v1757 = vmax.f32 %v1561, 0.0
  %v1758 = vmax.f32 %v1562, 0.0
  %v1759 = vmax.f32 %v1563, 0.0
  %v1760 = vmax.f32 %v1564, 0.0
  %v1761 = vmax.f32 %v1565, 0.0
  %v1762 = vmax.f32 %v1566, 0.0
  %v1763 = vmax.f32 %v1567, 0.0
  %v1764 = vmax.f32 %v1568, 0.0
  %v1765 = vmax.f32 %v1569, 0.0
  %v1766 = vmax.f32 %v1570, 0.0
  %v1767 = vmax.f32 %v1571, 0.0
  %v1768 = vmax.f32 %v1572, 0.0
  %v1769 = vmax.f32 %v1573, 0.0
  %v1770 = vmax.f32 %v1574, 0.0
  %v1771 = vmax.f32 %v1575, 0.0
  %v1772 = vmax.f32 %v1576, 0.0
  %v1773 = vmax.f32 %v1577, 0.0
  %v1774 = vmax.f32 %v1578, 0.0
  %v1775 = vmax.f32 %v1579, 0.0
  %v1776 = vmax.f32 %v1580, 0.0
  %v1777 = vmax.f32 %v1581, 0.0
  %v1778 = vmax.f32 %v1582, 0.0
  %v1779 = vmax.f32 %v1583, 0.0
  %v1780 = vmax.f32 %v1584, 0.0
  %v1781 = vmax.f32 %v1585, 0.0
  %v1782 = vmax.f32 %v1586, 0.0
  %v1783 = vmax.f32 %v1587, 0.0
  %v1784 = vmax.f32 %v1588, 0.0
  %v1785 = vmax.f32 %v1589, 0.0
  %v1786 = vmax.f32 %v1590, 0.0
  %v1787 = vmax.f32 %v1591, 0.0
  %v1788 = vmax.f32 %v1592, 0.0
  %v1789 = vmax.f32 %v1593, 0.0
  %v1790 = vmax.f32 %v1594, 0.0
  %v1791 = vmax.f32 %v1595, 0.0
  %v1792 = vmax.f32 %v1596, 0.0
  %v1793 = vmax.f32 %v1597, 0.0
  %v1794 = vmax.f32 %v1598, 0.0
  %v1795 = vmax.f32 %v1599, 0.0
  %v1796 = vmax.f32 %v1600, 0.0
  %v1797 = vmax.f32 %v1601, 0.0
  %v1798 = vmax.f32 %v1602, 0.0
  %v1799 = vmax.f32 %v1603, 0.0
  %v1800 = vmax.f32 %v1604, 0.0
  %v1801 = vmax.f32 %v1605, 0.0
  %v1802 = vmax.f32 %v1606, 0.0
  %v1803 = vmax.f32 %v1607, 0.0
  %v1804 = vmax.f32 %v1608, 0.0
  %v1805 = vmax.f32 %v1609, 0.0
  %v1806 = vmax.f32 %v1610, 0.0
  %v1807 = vmax.f32 %v1611, 0.0
  %v1808 = vmax.f32 %v1612, 0.0
  %v1809 = vmax.f32 %v1613, 0.0
  %v1810 = vmax.f32 %v1614, 0.0
  %v1811 = vmax.f32 %v1615, 0.0
  %v1812 = vmax.f32 %v1616, 0.0
  %v1813 = vmax.f32 %v1617, 0.0
  %v1814 = vmax.f32 %v1618, 0.0
  %v1815 = vmax.f32 %v1619, 0.0
  %v1816 = vmax.f32 %v1620, 0.0
  %v1817 = vmax.f32 %v1621, 0.0
  %v1818 = vmax.f32 %v1622, 0.0
  %v1819 = vmax.f32 %v1623, 0.0
  %v1820 = vmax.f32 %v1624, 0.0
  %v1821 = vmax.f32 %v1625, 0.0
  %v1822 = vmax.f32 %v1626, 0.0
  %v1823 = vmax.f32 %v1627, 0.0
  %v1824 = vmax.f32 %v1628, 0.0
  %v1825 = vmax.f32 %v1629, 0.0
  %v1826 = vmax.f32 %v1630, 0.0
  %v1827 = vmax.f32 %v1631, 0.0
  %v1828 = vmax.f32 %v1632, 0.0
  %v1829 = vmax.f32 %v1633, 0.0
  %v1830 = vmax.f32 %v1634, 0.0
  %v1831 = vmax.f32 %v1635, 0.0
  %v1832 = vmax.f32 %v1636, 0.0
  %v1833 = vmax.f32 %v1637, 0.0
  %v1834 = vmax.f32 %v1638, 0.0
  %v1835 = vmax.f32 %v1639, 0.0
  %v1836 = vmax.f32 %v1640, 0.0
  %v1837 = vmax.f32 %v1641, 0.0
  %v1838 = vmax.f32 %v1642, 0.0
  %v1839 = vmax.f32 %v1643, 0.0
  %v1840 = vmax.f32 %v1644, 0.0
  %v1841 = vmax.f32 %v1645, 0.0
  %v1842 = vmax.f32 %v1646, 0.0
  %v1843 = vmax.f32 %v1647, 0.0
  %v1844 = vmax.f32 %v1648, 0.0
  %v1845 = vmax.f32 %v1649, 0.0
  %v1846 = vmax.f32 %v1650, 0.0
  %v1847 = vmax.f32 %v1651, 0.0
  %v1848 = vmax.f32 %v1652, 0.0
  %v1849 = vmax.f32 %v1653, 0.0
  %v1850 = vmax.f32 %v1654, 0.0
  %v1851 = vmax.f32 %v1655, 0.0
  %v1852 = vmax.f32 %v1656, 0.0
  %v1853 = vmax.f32 %v1657, 0.0
  %v1854 = vmax.f32 %v1658, 0.0
  %v1855 = vmax.f32 %v1659, 0.0
  %v1856 = vmax.f32 %v1660, 0.0
  %v1857 = vmax.f32 %v1661, 0.0
  %v1858 = vmax.f32 %v1662, 0.0
  %v1859 = vmax.f32 %v1663, 0.0
  %v1860 = vmax.f32 %v1664, 0.0
  %v1861 = vmax.f32 %v1665, 0.0
  %v1862 = vmax.f32 %v1666, 0.0
  %v1863 = vmax.f32 %v1667, 0.0
  %v1864 = vmax.f32 %v1668, 0.0
  %v1865 = vmax.f32 %v1669, 0.0
  %v1866 = vmax.f32 %v1670, 0.0
  %v1867 = vmax.f32 %v1671, 0.0
  %v1868 = vmax.f32 %v1672, 0.0
  %v1869 = vmax.f32 %v1673, 0.0
  %v1870 = vmax.f32 %v1674, 0.0
  %v1871 = vmax.f32 %v1675, 0.0
  %v1872 = vmax.f32 %v1676, 0.0
  %v1873 = vmax.f32 %v1677, 0.0
  %v1874 = vmax.f32 %v1678, 0.0
  %v1875 = vmax.f32 %v1679, 0.0
  %v1876 = vmin.f32 %v1680, 6.0
  %v1877 = vmin.f32 %v1681, 6.0
  %v1878 = vmin.f32 %v1682, 6.0
  %v1879 = vmin.f32 %v1683, 6.0
  %v1880 = vmin.f32 %v1684, 6.0
  %v1881 = vmin.f32 %v1685, 6.0
  %v1882 = vmin.f32 %v1686, 6.0
  %v1883 = vmin.f32 %v1687, 6.0
  %v1884 = vmin.f32 %v1688, 6.0
  %v1885 = vmin.f32 %v1689, 6.0
  %v1886 = vmin.f32 %v1690, 6.0
  %v1887 = vmin.f32 %v1691, 6.0
  %v1888 = vmin.f32 %v1692, 6.0
  %v1889 = vmin.f32 %v1693, 6.0
  %v1890 = vmin.f32 %v1694, 6.0
  %v1891 = vmin.f32 %v1695, 6.0
  %v1892 = vmin.f32 %v1696, 6.0
  %v1893 = vmin.f32 %v1697, 6.0
  %v1894 = vmin.f32 %v1698, 6.0
  %v1895 = vmin.f32 %v1699, 6.0
  %v1896 = vmin.f32 %v1700, 6.0
  %v1897 = vmin.f32 %v1701, 6.0
  %v1898 = vmin.f32 %v1702, 6.0
  %v1899 = vmin.f32 %v1703, 6.0
  %v1900 = vmin.f32 %v1704, 6.0
  %v1901 = vmin.f32 %v1705, 6.0
  %v1902 = vmin.f32 %v1706, 6.0
  %v1903 = vmin.f32 %v1707, 6.0
  %v1904 = vmin.f32 %v1708, 6.0
  %v1905 = vmin.f32 %v1709, 6.0
  %v1906 = vmin.f32 %v1710, 6.0
  %v1907 = vmin.f32 %v1711, 6.0
  %v1908 = vmin.f32 %v1712, 6.0
  %v1909 = vmin.f32 %v1713, 6.0
  %v1910 = vmin.f32 %v1714, 6.0
  %v1911 = vmin.f32 %v1715, 6.0
  %v1912 = vmin.f32 %v1716, 6.0
  %v1913 = vmin.f32 %v1717, 6.0
  %v1914 = vmin.f32 %v1718, 6.0
  %v1915 = vmin.f32 %v1719, 6.0
  %v1916 = vmin.f32 %v1720, 6.0
  %v1917 = vmin.f32 %v1721, 6.0
  %v1918 = vmin.f32 %v1722, 6.0
  %v1919 = vmin.f32 %v1723, 6.0
  %v1920 = vmin.f32 %v1724, 6.0
  %v1921 = vmin.f32 %v1725, 6.0
  %v1922 = vmin.f32 %v1726, 6.0
  %v1923 = vmin.f32 %v1727, 6.0
  %v1924 = vmin.f32 %v1728, 6.0
  %v1925 = vmin.f32 %v1729, 6.0
  %v1926 = vmin.f32 %v1730, 6.0
  %v1927 = vmin.f32 %v1731, 6.0
  %v1928 = vmin.f32 %v1732, 6.0
  %v1929 = vmin.f32 %v1733, 6.0
  %v1930 = vmin.f32 %v1734, 6.0
  %v1931 = vmin.f32 %v1735, 6.0
  %v1932 = vmin.f32 %v1736, 6.0
  %v1933 = vmin.f32 %v1737, 6.0
  %v1934 = vmin.f32 %v1738, 6.0
  %v1935 = vmin.f32 %v1739, 6.0
  %v1936 = vmin.f32 %v1740, 6.0
  %v1937 = vmin.f32 %v1741, 6.0
  %v1938 = vmin.f32 %v1742, 6.0
  %v1939 = vmin.f32 %v1743, 6.0
  %v1940 = vmin.f32 %v1744, 6.0
  %v1941 = vmin.f32 %v1745, 6.0
  %v1942 = vmin.f32 %v1746, 6.0
  %v1943 = vmin.f32 %v1747, 6.0
  %v1944 = vmin.f32 %v1748, 6.0
  %v1945 = vmin.f32 %v1749, 6.0
  %v1946 = vmin.f32 %v1750, 6.0
  %v1947 = vmin.f32 %v1751, 6.0
  %v1948 = vmin.f32 %v1752, 6.0
  %v1949 = vmin.f32 %v1753, 6.0
  %v1950 = vmin.f32 %v1754, 6.0
  %v1951 = vmin.f32 %v1755, 6.0
  %v1952 = vmin.f32 %v1756, 6.0
  %v1953 = vmin.f32 %v1757, 6.0
  %v1954 = vmin.f32 %v1758, 6.0
  %v1955 = vmin.f32 %v1759, 6.0
  %v1956 = vmin.f32 %v1760, 6.0
  %v1957 = vmin.f32 %v1761, 6.0
  %v1958 = vmin.f32 %v1762, 6.0
  %v1959 = vmin.f32 %v1763, 6.0
  %v1960 = vmin.f32 %v1764, 6.0
  %v1961 = vmin.f32 %v1765, 6.0
  %v1962 = vmin.f32 %v1766, 6.0
  %v1963 = vmin.f32 %v1767, 6.0
  %v1964 = vmin.f32 %v1768, 6.0
  %v1965 = vmin.f32 %v1769, 6.0
  %v1966 = vmin.f32 %v1770, 6.0
  %v1967 = vmin.f32 %v1771, 6.0
  %v1968 = vmin.f32 %v1772, 6.0
  %v1969 = vmin.f32 %v1773, 6.0
  %v1970 = vmin.f32 %v1774, 6.0
  %v1971 = vmin.f32 %v1775, 6.0
  %v1972 = vmin.f32 %v1776, 6.0
  %v1973 = vmin.f32 %v1777, 6.0
  %v1974 = vmin.f32 %v1778, 6.0
  %v1975 = vmin.f32 %v1779, 6.0
  %v1976 = vmin.f32 %v1780, 6.0
  %v1977 = vmin.f32 %v1781, 6.0
  %v1978 = vmin.f32 %v1782, 6.0
  %v1979 = vmin.f32 %v1783, 6.0
  %v1980 = vmin.f32 %v1784, 6.0
  %v1981 = vmin.f32 %v1785, 6.0
  %v1982 = vmin.f32 %v1786, 6.0
  %v1983 = vmin.f32 %v1787, 6.0
  %v1984 = vmin.f32 %v1788, 6.0
  %v1985 = vmin.f32 %v1789, 6.0
  %v1986 = vmin.f32 %v1790, 6.0
  %v1987 = vmin.f32 %v1791, 6.0
  %v1988 = vmin.f32 %v1792, 6.0
  %v1989 = vmin.f32 %v1793, 6.0
  %v1990 = vmin.f32 %v1794, 6.0
  %v1991 = vmin.f32 %v1795, 6.0
  %v1992 = vmin.f32 %v1796, 6.0
  %v1993 = vmin.f32 %v1797, 6.0
  %v1994 = vmin.f32 %v1798, 6.0
  %v1995 = vmin.f32 %v1799, 6.0
  %v1996 = vmin.f32 %v1800, 6.0
  %v1997 = vmin.f32 %v1801, 6.0
  %v1998 = vmin.f32 %v1802, 6.0
  %v1999 = vmin.f32 %v1803, 6.0
  %v2000 = vmin.f32 %v1804, 6.0
  %v2001 = vmin.f32 %v1805, 6.0
  %v2002 = vmin.f32 %v1806, 6.0
  %v2003 = vmin.f32 %v1807, 6.0
  %v2004 = vmin.f32 %v1808, 6.0
  %v2005 = vmin.f32 %v1809, 6.0
  %v2006 = vmin.f32 %v1810, 6.0
  %v2007 = vmin.f32 %v1811, 6.0
  %v2008 = vmin.f32 %v1812, 6.0
  %v2009 = vmin.f32 %v1813, 6.0
  %v2010 = vmin.f32 %v1814, 6.0
  %v2011 = vmin.f32 %v1815, 6.0
  %v2012 = vmin.f32 %v1816, 6.0
  %v2013 = vmin.f32 %v1817, 6.0
  %v2014 = vmin.f32 %v1818, 6.0
  %v2015 = vmin.f32 %v1819, 6.0
  %v2016 = vmin.f32 %v1820, 6.0
  %v2017 = vmin.f32 %v1821, 6.0
  %v2018 = vmin.f32 %v1822, 6.0
  %v2019 = vmin.f32 %v1823, 6.0
  %v2020 = vmin.f32 %v1824, 6.0
  %v2021 = vmin.f32 %v1825, 6.0
  %v2022 = vmin.f32 %v1826, 6.0
  %v2023 = vmin.f32 %v1827, 6.0
  %v2024 = vmin.f32 %v1828, 6.0
  %v2025 = vmin.f32 %v1829, 6.0
  %v2026 = vmin.f32 %v1830, 6.0
  %v2027 = vmin.f32 %v1831, 6.0
  %v2028 = vmin.f32 %v1832, 6.0
  %v2029 = vmin.f32 %v1833, 6.0
  %v2030 = vmin.f32 %v1834, 6.0
  %v2031 = vmin.f32 %v1835, 6.0
  %v2032 = vmin.f32 %v1836, 6.0
  %v2033 = vmin.f32 %v1837, 6.0
  %v2034 = vmin.f32 %v1838, 6.0
  %v2035 = vmin.f32 %v1839, 6.0
  %v2036 = vmin.f32 %v1840, 6.0
  %v2037 = vmin.f32 %v1841, 6.0
  %v2038 = vmin.f32 %v1842, 6.0
  %v2039 = vmin.f32 %v1843, 6.0
  %v2040 = vmin.f32 %v1844, 6.0
  %v2041 = vmin.f32 %v1845, 6.0
  %v2042 = vmin.f32 %v1846, 6.0
  %v2043 = vmin.f32 %v1847, 6.0
  %v2044 = vmin.f32 %v1848, 6.0
  %v2045 = vmin.f32 %v1849, 6.0
  %v2046 = vmin.f32 %v1850, 6.0
  %v2047 = vmin.f32 %v1851, 6.0
  %v2048 = vmin.f32 %v1852, 6.0
  %v2049 = vmin.f32 %v1853, 6.0
  %v2050 = vmin.f32 %v1854, 6.0
  %v2051 = vmin.f32 %v1855, 6.0
  %v2052 = vmin.f32 %v1856, 6.0
  %v2053 = vmin.f32 %v1857, 6.0
  %v2054 = vmin.f32 %v1858, 6.0
  %v2055 = vmin.f32 %v1859, 6.0
  %v2056 = vmin.f32 %v1860, 6.0
  %v2057 = vmin.f32 %v1861, 6.0
  %v2058 = vmin.f32 %v1862, 6.0
  %v2059 = vmin.f32 %v1863, 6.0
  %v2060 = vmin.f32 %v1864, 6.0
  %v2061 = vmin.f32 %v1865, 6.0
  %v2062 = vmin.f32 %v1866, 6.0
  %v2063 = vmin.f32 %v1867, 6.0
  %v2064 = vmin.f32 %v1868, 6.0
  %v2065 = vmin.f32 %v1869, 6.0
  %v2066 = vmin.f32 %v1870, 6.0
  %v2067 = vmin.f32 %v1871, 6.0
  %v2068 = vmin.f32 %v1872, 6.0
  %v2069 = vmin.f32 %v1873, 6.0
  %v2070 = vmin.f32 %v1874, 6.0
  %v2071 = vmin.f32 %v1875, 6.0
  %vm2072 = vcmask 130048
  %2073 = vst.msk [vmem:[%s4] sm:$0xff] %vm2072, %v1876
  %2074 = vst.msk [vmem:[%s4 + $0x8] sm:$0xff] %vm2072, %v1877
  %2075 = vst.msk [vmem:[%s4 + $0x10] sm:$0xff] %vm2072, %v1878
  %2076 = vst.msk [vmem:[%s4 + $0x18] sm:$0xff] %vm2072, %v1879
  %2077 = vst.msk [vmem:[%s4 + $0x20] sm:$0xff] %vm2072, %v1880
  %2078 = vst.msk [vmem:[%s4 + $0x28] sm:$0xff] %vm2072, %v1881
  %2079 = vst.msk [vmem:[%s4 + $0x30] sm:$0xff] %vm2072, %v1882
  %2080 = vst.msk [vmem:[%s4 + $0x38] sm:$0xff] %vm2072, %v1883
  %2081 = vst.msk [vmem:[%s4 + $0x40] sm:$0xff] %vm2072, %v1884
  %2082 = vst.msk [vmem:[%s4 + $0x48] sm:$0xff] %vm2072, %v1885
  %2083 = vst.msk [vmem:[%s4 + $0x50] sm:$0xff] %vm2072, %v1886
  %2084 = vst.msk [vmem:[%s4 + $0x58] sm:$0xff] %vm2072, %v1887
  %2085 = vst.msk [vmem:[%s4 + $0x60] sm:$0xff] %vm2072, %v1888
  %2086 = vst.msk [vmem:[%s4 + $0x68] sm:$0xff] %vm2072, %v1889
  %2087 = vst.msk [vmem:[%s4 + $0x70] sm:$0xff] %vm2072, %v1890
  %2088 = vst.msk [vmem:[%s4 + $0x78] sm:$0xff] %vm2072, %v1891
  %2089 = vst.msk [vmem:[%s4 + $0x80] sm:$0xff] %vm2072, %v1892
  %2090 = vst.msk [vmem:[%s4 + $0x88] sm:$0xff] %vm2072, %v1893
  %2091 = vst.msk [vmem:[%s4 + $0x90] sm:$0xff] %vm2072, %v1894
  %2092 = vst.msk [vmem:[%s4 + $0x98] sm:$0xff] %vm2072, %v1895
  %2093 = vst.msk [vmem:[%s4 + $0xa0] sm:$0xff] %vm2072, %v1896
  %2094 = vst.msk [vmem:[%s4 + $0xa8] sm:$0xff] %vm2072, %v1897
  %2095 = vst.msk [vmem:[%s4 + $0xb0] sm:$0xff] %vm2072, %v1898
  %2096 = vst.msk [vmem:[%s4 + $0xb8] sm:$0xff] %vm2072, %v1899
  %2097 = vst.msk [vmem:[%s4 + $0xc0] sm:$0xff] %vm2072, %v1900
  %2098 = vst.msk [vmem:[%s4 + $0xc8] sm:$0xff] %vm2072, %v1901
  %2099 = vst.msk [vmem:[%s4 + $0xd0] sm:$0xff] %vm2072, %v1902
  %2100 = vst.msk [vmem:[%s4 + $0xd8] sm:$0xff] %vm2072, %v1903
  %2101 = vst.msk [vmem:[%s4 + $0xe0] sm:$0xff] %vm2072, %v1904
  %2102 = vst.msk [vmem:[%s4 + $0xe8] sm:$0xff] %vm2072, %v1905
  %2103 = vst.msk [vmem:[%s4 + $0xf0] sm:$0xff] %vm2072, %v1906
  %2104 = vst.msk [vmem:[%s4 + $0xf8] sm:$0xff] %vm2072, %v1907
  %2105 = vst.msk [vmem:[%s4 + $0x100] sm:$0xff] %vm2072, %v1908
  %2106 = vst.msk [vmem:[%s4 + $0x108] sm:$0xff] %vm2072, %v1909
  %2107 = vst.msk [vmem:[%s4 + $0x110] sm:$0xff] %vm2072, %v1910
  %2108 = vst.msk [vmem:[%s4 + $0x118] sm:$0xff] %vm2072, %v1911
  %2109 = vst.msk [vmem:[%s4 + $0x120] sm:$0xff] %vm2072, %v1912
  %2110 = vst.msk [vmem:[%s4 + $0x128] sm:$0xff] %vm2072, %v1913
  %2111 = vst.msk [vmem:[%s4 + $0x130] sm:$0xff] %vm2072, %v1914
  %2112 = vst.msk [vmem:[%s4 + $0x138] sm:$0xff] %vm2072, %v1915
  %2113 = vst.msk [vmem:[%s4 + $0x140] sm:$0xff] %vm2072, %v1916
  %2114 = vst.msk [vmem:[%s4 + $0x148] sm:$0xff] %vm2072, %v1917
  %2115 = vst.msk [vmem:[%s4 + $0x150] sm:$0xff] %vm2072, %v1918
  %2116 = vst.msk [vmem:[%s4 + $0x158] sm:$0xff] %vm2072, %v1919
  %2117 = vst.msk [vmem:[%s4 + $0x160] sm:$0xff] %vm2072, %v1920
  %2118 = vst.msk [vmem:[%s4 + $0x168] sm:$0xff] %vm2072, %v1921
  %2119 = vst.msk [vmem:[%s4 + $0x170] sm:$0xff] %vm2072, %v1922
  %2120 = vst.msk [vmem:[%s4 + $0x178] sm:$0xff] %vm2072, %v1923
  %2121 = vst.msk [vmem:[%s4 + $0x180] sm:$0xff] %vm2072, %v1924
  %2122 = vst.msk [vmem:[%s4 + $0x188] sm:$0xff] %vm2072, %v1925
  %2123 = vst.msk [vmem:[%s4 + $0x190] sm:$0xff] %vm2072, %v1926
  %2124 = vst.msk [vmem:[%s4 + $0x198] sm:$0xff] %vm2072, %v1927
  %2125 = vst.msk [vmem:[%s4 + $0x1a0] sm:$0xff] %vm2072, %v1928
  %2126 = vst.msk [vmem:[%s4 + $0x1a8] sm:$0xff] %vm2072, %v1929
  %2127 = vst.msk [vmem:[%s4 + $0x1b0] sm:$0xff] %vm2072, %v1930
  %2128 = vst.msk [vmem:[%s4 + $0x1b8] sm:$0xff] %vm2072, %v1931
  %2129 = vst.msk [vmem:[%s4 + $0x1c0] sm:$0xff] %vm2072, %v1932
  %2130 = vst.msk [vmem:[%s4 + $0x1c8] sm:$0xff] %vm2072, %v1933
  %2131 = vst.msk [vmem:[%s4 + $0x1d0] sm:$0xff] %vm2072, %v1934
  %2132 = vst.msk [vmem:[%s4 + $0x1d8] sm:$0xff] %vm2072, %v1935
  %2133 = vst.msk [vmem:[%s4 + $0x1e0] sm:$0xff] %vm2072, %v1936
  %2134 = vst.msk [vmem:[%s4 + $0x1e8] sm:$0xff] %vm2072, %v1937
  %2135 = vst.msk [vmem:[%s4 + $0x1f0] sm:$0xff] %vm2072, %v1938
  %2136 = vst.msk [vmem:[%s4 + $0x1f8] sm:$0xff] %vm2072, %v1939
  %2137 = vst.msk [vmem:[%s4 + $0x200] sm:$0xff] %vm2072, %v1940
  %2138 = vst.msk [vmem:[%s4 + $0x208] sm:$0xff] %vm2072, %v1941
  %2139 = vst.msk [vmem:[%s4 + $0x210] sm:$0xff] %vm2072, %v1942
  %2140 = vst.msk [vmem:[%s4 + $0x218] sm:$0xff] %vm2072, %v1943
  %2141 = vst.msk [vmem:[%s4 + $0x220] sm:$0xff] %vm2072, %v1944
  %2142 = vst.msk [vmem:[%s4 + $0x228] sm:$0xff] %vm2072, %v1945
  %2143 = vst.msk [vmem:[%s4 + $0x230] sm:$0xff] %vm2072, %v1946
  %2144 = vst.msk [vmem:[%s4 + $0x238] sm:$0xff] %vm2072, %v1947
  %2145 = vst.msk [vmem:[%s4 + $0x240] sm:$0xff] %vm2072, %v1948
  %2146 = vst.msk [vmem:[%s4 + $0x248] sm:$0xff] %vm2072, %v1949
  %2147 = vst.msk [vmem:[%s4 + $0x250] sm:$0xff] %vm2072, %v1950
  %2148 = vst.msk [vmem:[%s4 + $0x258] sm:$0xff] %vm2072, %v1951
  %2149 = vst.msk [vmem:[%s4 + $0x260] sm:$0xff] %vm2072, %v1952
  %2150 = vst.msk [vmem:[%s4 + $0x268] sm:$0xff] %vm2072, %v1953
  %2151 = vst.msk [vmem:[%s4 + $0x270] sm:$0xff] %vm2072, %v1954
  %2152 = vst.msk [vmem:[%s4 + $0x278] sm:$0xff] %vm2072, %v1955
  %2153 = vst.msk [vmem:[%s4 + $0x280] sm:$0xff] %vm2072, %v1956
  %2154 = vst.msk [vmem:[%s4 + $0x288] sm:$0xff] %vm2072, %v1957
  %2155 = vst.msk [vmem:[%s4 + $0x290] sm:$0xff] %vm2072, %v1958
  %2156 = vst.msk [vmem:[%s4 + $0x298] sm:$0xff] %vm2072, %v1959
  %2157 = vst.msk [vmem:[%s4 + $0x2a0] sm:$0xff] %vm2072, %v1960
  %2158 = vst.msk [vmem:[%s4 + $0x2a8] sm:$0xff] %vm2072, %v1961
  %2159 = vst.msk [vmem:[%s4 + $0x2b0] sm:$0xff] %vm2072, %v1962
  %2160 = vst.msk [vmem:[%s4 + $0x2b8] sm:$0xff] %vm2072, %v1963
  %2161 = vst.msk [vmem:[%s4 + $0x2c0] sm:$0xff] %vm2072, %v1964
  %2162 = vst.msk [vmem:[%s4 + $0x2c8] sm:$0xff] %vm2072, %v1965
  %2163 = vst.msk [vmem:[%s4 + $0x2d0] sm:$0xff] %vm2072, %v1966
  %2164 = vst.msk [vmem:[%s4 + $0x2d8] sm:$0xff] %vm2072, %v1967
  %2165 = vst.msk [vmem:[%s4 + $0x2e0] sm:$0xff] %vm2072, %v1968
  %2166 = vst.msk [vmem:[%s4 + $0x2e8] sm:$0xff] %vm2072, %v1969
  %2167 = vst.msk [vmem:[%s4 + $0x2f0] sm:$0xff] %vm2072, %v1970
  %2168 = vst.msk [vmem:[%s4 + $0x2f8] sm:$0xff] %vm2072, %v1971
  %2169 = vst.msk [vmem:[%s4 + $0x300] sm:$0xff] %vm2072, %v1972
  %2170 = vst.msk [vmem:[%s4 + $0x308] sm:$0xff] %vm2072, %v1973
  %2171 = vst.msk [vmem:[%s4 + $0x310] sm:$0xff] %vm2072, %v1974
  %2172 = vst.msk [vmem:[%s4 + $0x318] sm:$0xff] %vm2072, %v1975
  %2173 = vst.msk [vmem:[%s4 + $0x320] sm:$0xff] %vm2072, %v1976
  %2174 = vst.msk [vmem:[%s4 + $0x328] sm:$0xff] %vm2072, %v1977
  %2175 = vst.msk [vmem:[%s4 + $0x330] sm:$0xff] %vm2072, %v1978
  %2176 = vst.msk [vmem:[%s4 + $0x338] sm:$0xff] %vm2072, %v1979
  %2177 = vst.msk [vmem:[%s4 + $0x340] sm:$0xff] %vm2072, %v1980
  %2178 = vst.msk [vmem:[%s4 + $0x348] sm:$0xff] %vm2072, %v1981
  %2179 = vst.msk [vmem:[%s4 + $0x350] sm:$0xff] %vm2072, %v1982
  %2180 = vst.msk [vmem:[%s4 + $0x358] sm:$0xff] %vm2072, %v1983
  %2181 = vst.msk [vmem:[%s4 + $0x360] sm:$0xff] %vm2072, %v1984
  %2182 = vst.msk [vmem:[%s4 + $0x368] sm:$0xff] %vm2072, %v1985
  %2183 = vst.msk [vmem:[%s4 + $0x370] sm:$0xff] %vm2072, %v1986
  %2184 = vst.msk [vmem:[%s4 + $0x378] sm:$0xff] %vm2072, %v1987
  %2185 = vst.msk [vmem:[%s4 + $0x380] sm:$0xff] %vm2072, %v1988
  %2186 = vst.msk [vmem:[%s4 + $0x388] sm:$0xff] %vm2072, %v1989
  %2187 = vst.msk [vmem:[%s4 + $0x390] sm:$0xff] %vm2072, %v1990
  %2188 = vst.msk [vmem:[%s4 + $0x398] sm:$0xff] %vm2072, %v1991
  %2189 = vst.msk [vmem:[%s4 + $0x3a0] sm:$0xff] %vm2072, %v1992
  %2190 = vst.msk [vmem:[%s4 + $0x3a8] sm:$0xff] %vm2072, %v1993
  %2191 = vst.msk [vmem:[%s4 + $0x3b0] sm:$0xff] %vm2072, %v1994
  %2192 = vst.msk [vmem:[%s4 + $0x3b8] sm:$0xff] %vm2072, %v1995
  %2193 = vst.msk [vmem:[%s4 + $0x3c0] sm:$0xff] %vm2072, %v1996
  %2194 = vst.msk [vmem:[%s4 + $0x3c8] sm:$0xff] %vm2072, %v1997
  %2195 = vst.msk [vmem:[%s4 + $0x3d0] sm:$0xff] %vm2072, %v1998
  %2196 = vst.msk [vmem:[%s4 + $0x3d8] sm:$0xff] %vm2072, %v1999
  %2197 = vst.msk [vmem:[%s4 + $0x3e0] sm:$0xff] %vm2072, %v2000
  %2198 = vst.msk [vmem:[%s4 + $0x3e8] sm:$0xff] %vm2072, %v2001
  %2199 = vst.msk [vmem:[%s4 + $0x3f0] sm:$0xff] %vm2072, %v2002
  %2200 = vst.msk [vmem:[%s4 + $0x3f8] sm:$0xff] %vm2072, %v2003
  %2201 = vst.msk [vmem:[%s4 + $0x400] sm:$0xff] %vm2072, %v2004
  %2202 = vst.msk [vmem:[%s4 + $0x408] sm:$0xff] %vm2072, %v2005
  %2203 = vst.msk [vmem:[%s4 + $0x410] sm:$0xff] %vm2072, %v2006
  %2204 = vst.msk [vmem:[%s4 + $0x418] sm:$0xff] %vm2072, %v2007
  %2205 = vst.msk [vmem:[%s4 + $0x420] sm:$0xff] %vm2072, %v2008
  %2206 = vst.msk [vmem:[%s4 + $0x428] sm:$0xff] %vm2072, %v2009
  %2207 = vst.msk [vmem:[%s4 + $0x430] sm:$0xff] %vm2072, %v2010
  %2208 = vst.msk [vmem:[%s4 + $0x438] sm:$0xff] %vm2072, %v2011
  %2209 = vst.msk [vmem:[%s4 + $0x440] sm:$0xff] %vm2072, %v2012
  %2210 = vst.msk [vmem:[%s4 + $0x448] sm:$0xff] %vm2072, %v2013
  %2211 = vst.msk [vmem:[%s4 + $0x450] sm:$0xff] %vm2072, %v2014
  %2212 = vst.msk [vmem:[%s4 + $0x458] sm:$0xff] %vm2072, %v2015
  %2213 = vst.msk [vmem:[%s4 + $0x460] sm:$0xff] %vm2072, %v2016
  %2214 = vst.msk [vmem:[%s4 + $0x468] sm:$0xff] %vm2072, %v2017
  %2215 = vst.msk [vmem:[%s4 + $0x470] sm:$0xff] %vm2072, %v2018
  %2216 = vst.msk [vmem:[%s4 + $0x478] sm:$0xff] %vm2072, %v2019
  %2217 = vst.msk [vmem:[%s4 + $0x480] sm:$0xff] %vm2072, %v2020
  %2218 = vst.msk [vmem:[%s4 + $0x488] sm:$0xff] %vm2072, %v2021
  %2219 = vst.msk [vmem:[%s4 + $0x490] sm:$0xff] %vm2072, %v2022
  %2220 = vst.msk [vmem:[%s4 + $0x498] sm:$0xff] %vm2072, %v2023
  %2221 = vst.msk [vmem:[%s4 + $0x4a0] sm:$0xff] %vm2072, %v2024
  %2222 = vst.msk [vmem:[%s4 + $0x4a8] sm:$0xff] %vm2072, %v2025
  %2223 = vst.msk [vmem:[%s4 + $0x4b0] sm:$0xff] %vm2072, %v2026
  %2224 = vst.msk [vmem:[%s4 + $0x4b8] sm:$0xff] %vm2072, %v2027
  %2225 = vst.msk [vmem:[%s4 + $0x4c0] sm:$0xff] %vm2072, %v2028
  %2226 = vst.msk [vmem:[%s4 + $0x4c8] sm:$0xff] %vm2072, %v2029
  %2227 = vst.msk [vmem:[%s4 + $0x4d0] sm:$0xff] %vm2072, %v2030
  %2228 = vst.msk [vmem:[%s4 + $0x4d8] sm:$0xff] %vm2072, %v2031
  %2229 = vst.msk [vmem:[%s4 + $0x4e0] sm:$0xff] %vm2072, %v2032
  %2230 = vst.msk [vmem:[%s4 + $0x4e8] sm:$0xff] %vm2072, %v2033
  %2231 = vst.msk [vmem:[%s4 + $0x4f0] sm:$0xff] %vm2072, %v2034
  %2232 = vst.msk [vmem:[%s4 + $0x4f8] sm:$0xff] %vm2072, %v2035
  %2233 = vst.msk [vmem:[%s4 + $0x500] sm:$0xff] %vm2072, %v2036
  %2234 = vst.msk [vmem:[%s4 + $0x508] sm:$0xff] %vm2072, %v2037
  %2235 = vst.msk [vmem:[%s4 + $0x510] sm:$0xff] %vm2072, %v2038
  %2236 = vst.msk [vmem:[%s4 + $0x518] sm:$0xff] %vm2072, %v2039
  %2237 = vst.msk [vmem:[%s4 + $0x520] sm:$0xff] %vm2072, %v2040
  %2238 = vst.msk [vmem:[%s4 + $0x528] sm:$0xff] %vm2072, %v2041
  %2239 = vst.msk [vmem:[%s4 + $0x530] sm:$0xff] %vm2072, %v2042
  %2240 = vst.msk [vmem:[%s4 + $0x538] sm:$0xff] %vm2072, %v2043
  %2241 = vst.msk [vmem:[%s4 + $0x540] sm:$0xff] %vm2072, %v2044
  %2242 = vst.msk [vmem:[%s4 + $0x548] sm:$0xff] %vm2072, %v2045
  %2243 = vst.msk [vmem:[%s4 + $0x550] sm:$0xff] %vm2072, %v2046
  %2244 = vst.msk [vmem:[%s4 + $0x558] sm:$0xff] %vm2072, %v2047
  %2245 = vst.msk [vmem:[%s4 + $0x560] sm:$0xff] %vm2072, %v2048
  %2246 = vst.msk [vmem:[%s4 + $0x568] sm:$0xff] %vm2072, %v2049
  %2247 = vst.msk [vmem:[%s4 + $0x570] sm:$0xff] %vm2072, %v2050
  %2248 = vst.msk [vmem:[%s4 + $0x578] sm:$0xff] %vm2072, %v2051
  %2249 = vst.msk [vmem:[%s4 + $0x580] sm:$0xff] %vm2072, %v2052
  %2250 = vst.msk [vmem:[%s4 + $0x588] sm:$0xff] %vm2072, %v2053
  %2251 = vst.msk [vmem:[%s4 + $0x590] sm:$0xff] %vm2072, %v2054
  %2252 = vst.msk [vmem:[%s4 + $0x598] sm:$0xff] %vm2072, %v2055
  %2253 = vst.msk [vmem:[%s4 + $0x5a0] sm:$0xff] %vm2072, %v2056
  %2254 = vst.msk [vmem:[%s4 + $0x5a8] sm:$0xff] %vm2072, %v2057
  %2255 = vst.msk [vmem:[%s4 + $0x5b0] sm:$0xff] %vm2072, %v2058
  %2256 = vst.msk [vmem:[%s4 + $0x5b8] sm:$0xff] %vm2072, %v2059
  %2257 = vst.msk [vmem:[%s4 + $0x5c0] sm:$0xff] %vm2072, %v2060
  %2258 = vst.msk [vmem:[%s4 + $0x5c8] sm:$0xff] %vm2072, %v2061
  %2259 = vst.msk [vmem:[%s4 + $0x5d0] sm:$0xff] %vm2072, %v2062
  %2260 = vst.msk [vmem:[%s4 + $0x5d8] sm:$0xff] %vm2072, %v2063
  %2261 = vst.msk [vmem:[%s4 + $0x5e0] sm:$0xff] %vm2072, %v2064
  %2262 = vst.msk [vmem:[%s4 + $0x5e8] sm:$0xff] %vm2072, %v2065
  %2263 = vst.msk [vmem:[%s4 + $0x5f0] sm:$0xff] %vm2072, %v2066
  %2264 = vst.msk [vmem:[%s4 + $0x5f8] sm:$0xff] %vm2072, %v2067
  %2265 = vst.msk [vmem:[%s4 + $0x600] sm:$0xff] %vm2072, %v2068
  %2266 = vst.msk [vmem:[%s4 + $0x608] sm:$0xff] %vm2072, %v2069
  %2267 = vst.msk [vmem:[%s4 + $0x610] sm:$0xff] %vm2072, %v2070
  %2268 = vst.msk [vmem:[%s4 + $0x618] sm:$0xff] %vm2072, %v2071
  // Predicated region
  $region18: #{encoder_forward.7} parent=0 // pred_check
    _
  $region19: #{encoder_forward.7} parent=0 // pred_check_branch
    %2270 = sbr.rel (0) target = $region21
  $region20: #{encoder_forward.7} parent=0 // pred_region
    _
  $region21: #{encoder_forward.7} parent=0 // pred_fallthru
    _
  // Predicated region
  $region22: #{encoder_forward.7} parent=0 // pred_check
    _
  $region23: #{encoder_forward.7} parent=0 // pred_check_branch
    %2272 = sbr.rel (0) target = $region25
  $region24: #{encoder_forward.7} parent=0 // pred_region
    _
  $region25: #{encoder_forward.7} parent=0 // pred_fallthru
    _

// kernel: encoder_forward.8
$region0: #{encoder_forward.8}
  #allocation0 [shape = 'u32[]', space=smem, size = 0x4, offset = 0x4, fixed_abs, tag = 'smem constant byte address 0x4 - core index']
  #allocation1 [shape = 'u32[144,128]{1,0:T(1,128)}', space=vmem, size = 0x12000, scoped, tag = 'internal scratch']
  %s0 = inlined_call_operand.vmem [shape: f32[392,256], index: 0, kind: input, shape index: {}]
  %s1 = inlined_call_operand.vmem [shape: f32[256,16], index: 1, kind: input, shape index: {}]
  %s2 = inlined_call_operand.vmem [shape: f32[1,16], index: 2, kind: input, shape index: {}]
  %s3 = inlined_call_operand.vmem [shape: f32[1,16], index: 3, kind: input, shape index: {}]
  %s4 = inlined_call_operand.vmem [shape: f32[392,16], index: 4, kind: output, shape index: {}]
  %s5 = sld [smem:[#allocation0]]
  $region26: #{encoder_forward.8} parent=0
    _
  %s7 = ssub.s32 1, %s5
  %s8 = scalar_select 0, %s7, %s5
  // Predicated region
  $region2: #{encoder_forward.8} parent=0 // pred_check
    _
  $region3: #{encoder_forward.8} parent=0 // pred_check_branch
    %10 = sbr.rel (0) target = $region5
  $region4: #{encoder_forward.8} parent=0 // pred_region
    _
  $region5: #{encoder_forward.8} parent=0 // pred_fallthru
    _
  // Predicated region
  $region6: #{encoder_forward.8} parent=0 // pred_check
    _
  $region7: #{encoder_forward.8} parent=0 // pred_check_branch
    %12 = sbr.rel (0) target = $region9
  $region8: #{encoder_forward.8} parent=0 // pred_region
    _
  $region9: #{encoder_forward.8} parent=0 // pred_fallthru
    _
  // Predicated region
  $region10: #{encoder_forward.8} parent=0 // pred_check
    _
  $region11: #{encoder_forward.8} parent=0 // pred_check_branch
    %14 = sbr.rel (0) target = $region13
  $region12: #{encoder_forward.8} parent=0 // pred_region
    _
  $region13: #{encoder_forward.8} parent=0 // pred_fallthru
    _
  // Predicated region
  $region14: #{encoder_forward.8} parent=0 // pred_check
    _
  $region15: #{encoder_forward.8} parent=0 // pred_check_branch
    %16 = sbr.rel (0) target = $region17
  $region16: #{encoder_forward.8} parent=0 // pred_region
    _
  $region17: #{encoder_forward.8} parent=0 // pred_fallthru
    _
  %v17 = vld [vmem:[%s0] sm:$0xff]
  %v18 = vld [vmem:[%s0 + $0x8] sm:$0xff]
  %v19 = vld [vmem:[%s0 + $0x10] sm:$0xff]
  %v20 = vld [vmem:[%s0 + $0x18] sm:$0xff]
  %v21 = vld [vmem:[%s0 + $0x20] sm:$0xff]
  %v22 = vld [vmem:[%s0 + $0x28] sm:$0xff]
  %v23 = vld [vmem:[%s0 + $0x30] sm:$0xff]
  %v24 = vld [vmem:[%s0 + $0x38] sm:$0xff]
  %v25 = vld [vmem:[%s0 + $0x40] sm:$0xff]
  %v26 = vld [vmem:[%s0 + $0x48] sm:$0xff]
  %v27 = vld [vmem:[%s0 + $0x50] sm:$0xff]
  %v28 = vld [vmem:[%s0 + $0x58] sm:$0xff]
  %v29 = vld [vmem:[%s0 + $0x60] sm:$0xff]
  %v30 = vld [vmem:[%s0 + $0x68] sm:$0xff]
  %v31 = vld [vmem:[%s0 + $0x70] sm:$0xff]
  %v32 = vld [vmem:[%s0 + $0x78] sm:$0xff]
  %v33 = vld [vmem:[%s0 + $0x80] sm:$0xff]
  %v34 = vld [vmem:[%s0 + $0x88] sm:$0xff]
  %v35 = vld [vmem:[%s0 + $0x90] sm:$0xff]
  %v36 = vld [vmem:[%s0 + $0x98] sm:$0xff]
  %v37 = vld [vmem:[%s0 + $0xa0] sm:$0xff]
  %v38 = vld [vmem:[%s0 + $0xa8] sm:$0xff]
  %v39 = vld [vmem:[%s0 + $0xb0] sm:$0xff]
  %v40 = vld [vmem:[%s0 + $0xb8] sm:$0xff]
  %v41 = vld [vmem:[%s0 + $0xc0] sm:$0xff]
  %v42 = vld [vmem:[%s0 + $0xc8] sm:$0xff]
  %v43 = vld [vmem:[%s0 + $0xd0] sm:$0xff]
  %v44 = vld [vmem:[%s0 + $0xd8] sm:$0xff]
  %v45 = vld [vmem:[%s0 + $0xe0] sm:$0xff]
  %v46 = vld [vmem:[%s0 + $0xe8] sm:$0xff]
  %v47 = vld [vmem:[%s0 + $0xf0] sm:$0xff]
  %v48 = vld [vmem:[%s0 + $0xf8] sm:$0xff]
  %v49 = vld [vmem:[%s0 + $0x100] sm:$0xff]
  %v50 = vld [vmem:[%s0 + $0x108] sm:$0xff]
  %v51 = vld [vmem:[%s0 + $0x110] sm:$0xff]
  %v52 = vld [vmem:[%s0 + $0x118] sm:$0xff]
  %v53 = vld [vmem:[%s0 + $0x120] sm:$0xff]
  %v54 = vld [vmem:[%s0 + $0x128] sm:$0xff]
  %v55 = vld [vmem:[%s0 + $0x130] sm:$0xff]
  %v56 = vld [vmem:[%s0 + $0x138] sm:$0xff]
  %v57 = vld [vmem:[%s0 + $0x140] sm:$0xff]
  %v58 = vld [vmem:[%s0 + $0x148] sm:$0xff]
  %v59 = vld [vmem:[%s0 + $0x150] sm:$0xff]
  %v60 = vld [vmem:[%s0 + $0x158] sm:$0xff]
  %v61 = vld [vmem:[%s0 + $0x160] sm:$0xff]
  %v62 = vld [vmem:[%s0 + $0x168] sm:$0xff]
  %v63 = vld [vmem:[%s0 + $0x170] sm:$0xff]
  %v64 = vld [vmem:[%s0 + $0x178] sm:$0xff]
  %v65 = vld [vmem:[%s0 + $0x180] sm:$0xff]
  %v66 = vld [vmem:[%s0 + $0x188] sm:$0xff]
  %v67 = vld [vmem:[%s0 + $0x190] sm:$0xff]
  %v68 = vld [vmem:[%s0 + $0x198] sm:$0xff]
  %v69 = vld [vmem:[%s0 + $0x1a0] sm:$0xff]
  %v70 = vld [vmem:[%s0 + $0x1a8] sm:$0xff]
  %v71 = vld [vmem:[%s0 + $0x1b0] sm:$0xff]
  %v72 = vld [vmem:[%s0 + $0x1b8] sm:$0xff]
  %v73 = vld [vmem:[%s0 + $0x1c0] sm:$0xff]
  %v74 = vld [vmem:[%s0 + $0x1c8] sm:$0xff]
  %v75 = vld [vmem:[%s0 + $0x1d0] sm:$0xff]
  %v76 = vld [vmem:[%s0 + $0x1d8] sm:$0xff]
  %v77 = vld [vmem:[%s0 + $0x1e0] sm:$0xff]
  %v78 = vld [vmem:[%s0 + $0x1e8] sm:$0xff]
  %v79 = vld [vmem:[%s0 + $0x1f0] sm:$0xff]
  %v80 = vld [vmem:[%s0 + $0x1f8] sm:$0xff]
  %v81 = vld [vmem:[%s0 + $0x200] sm:$0xff]
  %v82 = vld [vmem:[%s0 + $0x208] sm:$0xff]
  %v83 = vld [vmem:[%s0 + $0x210] sm:$0xff]
  %v84 = vld [vmem:[%s0 + $0x218] sm:$0xff]
  %v85 = vld [vmem:[%s0 + $0x220] sm:$0xff]
  %v86 = vld [vmem:[%s0 + $0x228] sm:$0xff]
  %v87 = vld [vmem:[%s0 + $0x230] sm:$0xff]
  %v88 = vld [vmem:[%s0 + $0x238] sm:$0xff]
  %v89 = vld [vmem:[%s0 + $0x240] sm:$0xff]
  %v90 = vld [vmem:[%s0 + $0x248] sm:$0xff]
  %v91 = vld [vmem:[%s0 + $0x250] sm:$0xff]
  %v92 = vld [vmem:[%s0 + $0x258] sm:$0xff]
  %v93 = vld [vmem:[%s0 + $0x260] sm:$0xff]
  %v94 = vld [vmem:[%s0 + $0x268] sm:$0xff]
  %v95 = vld [vmem:[%s0 + $0x270] sm:$0xff]
  %v96 = vld [vmem:[%s0 + $0x278] sm:$0xff]
  %v97 = vld [vmem:[%s0 + $0x280] sm:$0xff]
  %v98 = vld [vmem:[%s0 + $0x288] sm:$0xff]
  %v99 = vld [vmem:[%s0 + $0x290] sm:$0xff]
  %v100 = vld [vmem:[%s0 + $0x298] sm:$0xff]
  %v101 = vld [vmem:[%s0 + $0x2a0] sm:$0xff]
  %v102 = vld [vmem:[%s0 + $0x2a8] sm:$0xff]
  %v103 = vld [vmem:[%s0 + $0x2b0] sm:$0xff]
  %v104 = vld [vmem:[%s0 + $0x2b8] sm:$0xff]
  %v105 = vld [vmem:[%s0 + $0x2c0] sm:$0xff]
  %v106 = vld [vmem:[%s0 + $0x2c8] sm:$0xff]
  %v107 = vld [vmem:[%s0 + $0x2d0] sm:$0xff]
  %v108 = vld [vmem:[%s0 + $0x2d8] sm:$0xff]
  %v109 = vld [vmem:[%s0 + $0x2e0] sm:$0xff]
  %v110 = vld [vmem:[%s0 + $0x2e8] sm:$0xff]
  %v111 = vld [vmem:[%s0 + $0x2f0] sm:$0xff]
  %v112 = vld [vmem:[%s0 + $0x2f8] sm:$0xff]
  %v113 = vld [vmem:[%s0 + $0x300] sm:$0xff]
  %v114 = vld [vmem:[%s0 + $0x308] sm:$0xff]
  %v115 = vld [vmem:[%s1] sm:$0xff]
  %v116 = vld [vmem:[%s1 + $0x8] sm:$0xff]
  %v117 = vld [vmem:[%s1 + $0x10] sm:$0xff]
  %v118 = vld [vmem:[%s1 + $0x18] sm:$0xff]
  %v119 = vld [vmem:[%s1 + $0x20] sm:$0xff]
  %v120 = vld [vmem:[%s1 + $0x28] sm:$0xff]
  %v121 = vld [vmem:[%s1 + $0x30] sm:$0xff]
  %v122 = vld [vmem:[%s1 + $0x38] sm:$0xff]
  %v123 = vld [vmem:[%s1 + $0x40] sm:$0xff]
  %v124 = vld [vmem:[%s1 + $0x48] sm:$0xff]
  %v125 = vld [vmem:[%s1 + $0x50] sm:$0xff]
  %v126 = vld [vmem:[%s1 + $0x58] sm:$0xff]
  %v127 = vld [vmem:[%s1 + $0x60] sm:$0xff]
  %v128 = vld [vmem:[%s1 + $0x68] sm:$0xff]
  %v129 = vld [vmem:[%s1 + $0x70] sm:$0xff]
  %v130 = vld [vmem:[%s1 + $0x78] sm:$0xff]
  %v131 = vld [vmem:[%s1 + $0x80] sm:$0xff]
  %v132 = vld [vmem:[%s1 + $0x88] sm:$0xff]
  %v133 = vld [vmem:[%s1 + $0x90] sm:$0xff]
  %v134 = vld [vmem:[%s1 + $0x98] sm:$0xff]
  %v135 = vld [vmem:[%s1 + $0xa0] sm:$0xff]
  %v136 = vld [vmem:[%s1 + $0xa8] sm:$0xff]
  %v137 = vld [vmem:[%s1 + $0xb0] sm:$0xff]
  %v138 = vld [vmem:[%s1 + $0xb8] sm:$0xff]
  %v139 = vld [vmem:[%s1 + $0xc0] sm:$0xff]
  %v140 = vld [vmem:[%s1 + $0xc8] sm:$0xff]
  %v141 = vld [vmem:[%s1 + $0xd0] sm:$0xff]
  %v142 = vld [vmem:[%s1 + $0xd8] sm:$0xff]
  %v143 = vld [vmem:[%s1 + $0xe0] sm:$0xff]
  %v144 = vld [vmem:[%s1 + $0xe8] sm:$0xff]
  %v145 = vld [vmem:[%s1 + $0xf0] sm:$0xff]
  %v146 = vld [vmem:[%s1 + $0xf8] sm:$0xff]
  %147 = vmatprep.subr.mxu0 0.0
  %148 = vmatpush1.msra.mxu0 %v115
  %149 = vmatprep.subr.mxu0 0.0
  %150 = vmatpush1.msra.mxu0 %v116
  %151 = vmatprep.subr.mxu0 0.0
  %152 = vmatpush1.msra.mxu0 %v117
  %153 = vmatprep.subr.mxu0 0.0
  %154 = vmatpush1.msra.mxu0 %v118
  %155 = vmatprep.subr.mxu0 0.0
  %156 = vmatpush1.msra.mxu0 %v119
  %157 = vmatprep.subr.mxu0 0.0
  %158 = vmatpush1.msra.mxu0 %v120
  %159 = vmatprep.subr.mxu0 0.0
  %160 = vmatpush1.msra.mxu0 %v121
  %161 = vmatprep.subr.mxu0 0.0
  %162 = vmatpush1.msra.mxu0 %v122
  %163 = vmatprep.subr.mxu0 0.0
  %164 = vmatpush1.msra.mxu0 %v123
  %165 = vmatprep.subr.mxu0 0.0
  %166 = vmatpush1.msra.mxu0 %v124
  %167 = vmatprep.subr.mxu0 0.0
  %168 = vmatpush1.msra.mxu0 %v125
  %169 = vmatprep.subr.mxu0 0.0
  %170 = vmatpush1.msra.mxu0 %v126
  %171 = vmatprep.subr.mxu0 0.0
  %172 = vmatpush1.msra.mxu0 %v127
  %173 = vmatprep.subr.mxu0 0.0
  %174 = vmatpush1.msra.mxu0 %v128
  %175 = vmatprep.subr.mxu0 0.0
  %176 = vmatpush1.msra.mxu0 %v129
  %177 = vmatprep.subr.mxu0 0.0
  %178 = vmatpush1.msra.mxu0 %v130
  %179 = vmatprep.subr.mxu0 0.0
  %180 = vmatpush1.msra.mxu0 %v131
  %181 = vmatprep.subr.mxu0 0.0
  %182 = vmatpush1.msra.mxu0 %v132
  %183 = vmatprep.subr.mxu0 0.0
  %184 = vmatpush1.msra.mxu0 %v133
  %185 = vmatprep.subr.mxu0 0.0
  %186 = vmatpush1.msra.mxu0 %v134
  %187 = vmatprep.subr.mxu0 0.0
  %188 = vmatpush1.msra.mxu0 %v135
  %189 = vmatprep.subr.mxu0 0.0
  %190 = vmatpush1.msra.mxu0 %v136
  %191 = vmatprep.subr.mxu0 0.0
  %192 = vmatpush1.msra.mxu0 %v137
  %193 = vmatprep.subr.mxu0 0.0
  %194 = vmatpush1.msra.mxu0 %v138
  %195 = vmatprep.subr.mxu0 0.0
  %196 = vmatpush1.msra.mxu0 %v139
  %197 = vmatprep.subr.mxu0 0.0
  %198 = vmatpush1.msra.mxu0 %v140
  %199 = vmatprep.subr.mxu0 0.0
  %200 = vmatpush1.msra.mxu0 %v141
  %201 = vmatprep.subr.mxu0 0.0
  %202 = vmatpush1.msra.mxu0 %v142
  %203 = vmatprep.subr.mxu0 0.0
  %204 = vmatpush1.msra.mxu0 %v143
  %205 = vmatprep.subr.mxu0 0.0
  %206 = vmatpush1.msra.mxu0 %v144
  %207 = vmatprep.subr.mxu0 0.0
  %208 = vmatpush1.msra.mxu0 %v145
  %209 = vmatprep.subr.mxu0 0.0
  %210 = vmatpush1.msra.mxu0 %v146
  %211 = vmatprep.mubr.f32.mxu0 %v18
  %212 = vmatmul.mubr.f32.gmra.mrb[0].mxu0 %v17
  %v213 = vpop.f32.mrb[0].mxu0
  %v214 = vadd.f32 0.0, %v213
  %v215 = vpop.f32.mrb[0].mxu0
  %216 = vmatprep.mubr.f32.mxu0 %v20
  %217 = vmatmul.mubr.f32.gmra.mrb[0].mxu0 %v19
  %v218 = vpop.f32.mrb[0].mxu0
  %v219 = vadd.f32 0.0, %v218
  %v220 = vpop.f32.mrb[0].mxu0
  %221 = vmatprep.mubr.f32.mxu0 %v22
  %222 = vmatmul.mubr.f32.gmra.mrb[0].mxu0 %v21
  %v223 = vpop.f32.mrb[0].mxu0
  %v224 = vadd.f32 0.0, %v223
  %v225 = vpop.f32.mrb[0].mxu0
  %226 = vmatprep.mubr.f32.mxu0 %v24
  %227 = vmatmul.mubr.f32.gmra.mrb[0].mxu0 %v23
  %v228 = vpop.f32.mrb[0].mxu0
  %v229 = vadd.f32 0.0, %v228
  %v230 = vpop.f32.mrb[0].mxu0
  %231 = vmatprep.mubr.f32.mxu0 %v26
  %232 = vmatmul.mubr.f32.gmra.mrb[0].mxu0 %v25
  %v233 = vpop.f32.mrb[0].mxu0
  %v234 = vadd.f32 0.0, %v233
  %v235 = vpop.f32.mrb[0].mxu0
  %236 = vmatprep.mubr.f32.mxu0 %v28
  %237 = vmatmul.mubr.f32.gmra.mrb[0].mxu0 %v27
  %v238 = vpop.f32.mrb[0].mxu0
  %v239 = vadd.f32 0.0, %v238
  %v240 = vpop.f32.mrb[0].mxu0
  %241 = vmatprep.mubr.f32.mxu0 %v30
  %242 = vmatmul.mubr.f32.gmra.mrb[0].mxu0 %v29
  %v243 = vpop.f32.mrb[0].mxu0
  %v244 = vadd.f32 0.0, %v243
  %v245 = vpop.f32.mrb[0].mxu0
  %246 = vmatprep.mubr.f32.mxu0 %v32
  %247 = vmatmul.mubr.f32.gmra.mrb[0].mxu0 %v31
  %v248 = vpop.f32.mrb[0].mxu0
  %v249 = vadd.f32 0.0, %v248
  %v250 = vpop.f32.mrb[0].mxu0
  %251 = vmatprep.mubr.f32.mxu0 %v34
  %252 = vmatmul.mubr.f32.gmra.mrb[0].mxu0 %v33
  %v253 = vpop.f32.mrb[0].mxu0
  %v254 = vadd.f32 0.0, %v253
  %v255 = vpop.f32.mrb[0].mxu0
  %256 = vmatprep.mubr.f32.mxu0 %v36
  %257 = vmatmul.mubr.f32.gmra.mrb[0].mxu0 %v35
  %v258 = vpop.f32.mrb[0].mxu0
  %v259 = vadd.f32 0.0, %v258
  %v260 = vpop.f32.mrb[0].mxu0
  %261 = vmatprep.mubr.f32.mxu0 %v38
  %262 = vmatmul.mubr.f32.gmra.mrb[0].mxu0 %v37
  %v263 = vpop.f32.mrb[0].mxu0
  %v264 = vadd.f32 0.0, %v263
  %v265 = vpop.f32.mrb[0].mxu0
  %266 = vmatprep.mubr.f32.mxu0 %v40
  %267 = vmatmul.mubr.f32.gmra.mrb[0].mxu0 %v39
  %v268 = vpop.f32.mrb[0].mxu0
  %v269 = vadd.f32 0.0, %v268
  %v270 = vpop.f32.mrb[0].mxu0
  %271 = vmatprep.mubr.f32.mxu0 %v42
  %272 = vmatmul.mubr.f32.gmra.mrb[0].mxu0 %v41
  %v273 = vpop.f32.mrb[0].mxu0
  %v274 = vadd.f32 0.0, %v273
  %v275 = vpop.f32.mrb[0].mxu0
  %276 = vmatprep.mubr.f32.mxu0 %v44
  %277 = vmatmul.mubr.f32.gmra.mrb[0].mxu0 %v43
  %v278 = vpop.f32.mrb[0].mxu0
  %v279 = vadd.f32 0.0, %v278
  %v280 = vpop.f32.mrb[0].mxu0
  %281 = vmatprep.mubr.f32.mxu0 %v46
  %282 = vmatmul.mubr.f32.gmra.mrb[0].mxu0 %v45
  %v283 = vpop.f32.mrb[0].mxu0
  %v284 = vadd.f32 0.0, %v283
  %v285 = vpop.f32.mrb[0].mxu0
  %286 = vmatprep.mubr.f32.mxu0 %v48
  %287 = vmatmul.mubr.f32.gmra.mrb[0].mxu0 %v47
  %v288 = vpop.f32.mrb[0].mxu0
  %v289 = vadd.f32 0.0, %v288
  %v290 = vpop.f32.mrb[0].mxu0
  %291 = vmatprep.mubr.f32.mxu0 %v50
  %292 = vmatmul.mubr.f32.gmra.mrb[0].mxu0 %v49
  %v293 = vpop.f32.mrb[0].mxu0
  %v294 = vadd.f32 0.0, %v293
  %v295 = vpop.f32.mrb[0].mxu0
  %296 = vmatprep.mubr.f32.mxu0 %v52
  %297 = vmatmul.mubr.f32.gmra.mrb[0].mxu0 %v51
  %v298 = vpop.f32.mrb[0].mxu0
  %v299 = vadd.f32 0.0, %v298
  %v300 = vpop.f32.mrb[0].mxu0
  %301 = vmatprep.mubr.f32.mxu0 %v54
  %302 = vmatmul.mubr.f32.gmra.mrb[0].mxu0 %v53
  %v303 = vpop.f32.mrb[0].mxu0
  %v304 = vadd.f32 0.0, %v303
  %v305 = vpop.f32.mrb[0].mxu0
  %306 = vmatprep.mubr.f32.mxu0 %v56
  %307 = vmatmul.mubr.f32.gmra.mrb[0].mxu0 %v55
  %v308 = vpop.f32.mrb[0].mxu0
  %v309 = vadd.f32 0.0, %v308
  %v310 = vpop.f32.mrb[0].mxu0
  %311 = vmatprep.mubr.f32.mxu0 %v58
  %312 = vmatmul.mubr.f32.gmra.mrb[0].mxu0 %v57
  %v313 = vpop.f32.mrb[0].mxu0
  %v314 = vadd.f32 0.0, %v313
  %v315 = vpop.f32.mrb[0].mxu0
  %316 = vmatprep.mubr.f32.mxu0 %v60
  %317 = vmatmul.mubr.f32.gmra.mrb[0].mxu0 %v59
  %v318 = vpop.f32.mrb[0].mxu0
  %v319 = vadd.f32 0.0, %v318
  %v320 = vpop.f32.mrb[0].mxu0
  %321 = vmatprep.mubr.f32.mxu0 %v62
  %322 = vmatmul.mubr.f32.gmra.mrb[0].mxu0 %v61
  %v323 = vpop.f32.mrb[0].mxu0
  %v324 = vadd.f32 0.0, %v323
  %v325 = vpop.f32.mrb[0].mxu0
  %326 = vmatprep.mubr.f32.mxu0 %v64
  %327 = vmatmul.mubr.f32.gmra.mrb[0].mxu0 %v63
  %v328 = vpop.f32.mrb[0].mxu0
  %v329 = vadd.f32 0.0, %v328
  %v330 = vpop.f32.mrb[0].mxu0
  %331 = vmatprep.mubr.f32.mxu0 %v66
  %332 = vmatmul.mubr.f32.gmra.mrb[0].mxu0 %v65
  %v333 = vpop.f32.mrb[0].mxu0
  %v334 = vadd.f32 0.0, %v333
  %v335 = vpop.f32.mrb[0].mxu0
  %336 = vmatprep.mubr.f32.mxu0 %v68
  %337 = vmatmul.mubr.f32.gmra.mrb[0].mxu0 %v67
  %v338 = vpop.f32.mrb[0].mxu0
  %v339 = vadd.f32 0.0, %v338
  %v340 = vpop.f32.mrb[0].mxu0
  %341 = vmatprep.mubr.f32.mxu0 %v70
  %342 = vmatmul.mubr.f32.gmra.mrb[0].mxu0 %v69
  %v343 = vpop.f32.mrb[0].mxu0
  %v344 = vadd.f32 0.0, %v343
  %v345 = vpop.f32.mrb[0].mxu0
  %346 = vmatprep.mubr.f32.mxu0 %v72
  %347 = vmatmul.mubr.f32.gmra.mrb[0].mxu0 %v71
  %v348 = vpop.f32.mrb[0].mxu0
  %v349 = vadd.f32 0.0, %v348
  %v350 = vpop.f32.mrb[0].mxu0
  %351 = vmatprep.mubr.f32.mxu0 %v74
  %352 = vmatmul.mubr.f32.gmra.mrb[0].mxu0 %v73
  %v353 = vpop.f32.mrb[0].mxu0
  %v354 = vadd.f32 0.0, %v353
  %v355 = vpop.f32.mrb[0].mxu0
  %356 = vmatprep.mubr.f32.mxu0 %v76
  %357 = vmatmul.mubr.f32.gmra.mrb[0].mxu0 %v75
  %v358 = vpop.f32.mrb[0].mxu0
  %v359 = vadd.f32 0.0, %v358
  %v360 = vpop.f32.mrb[0].mxu0
  %361 = vmatprep.mubr.f32.mxu0 %v78
  %362 = vmatmul.mubr.f32.gmra.mrb[0].mxu0 %v77
  %v363 = vpop.f32.mrb[0].mxu0
  %v364 = vadd.f32 0.0, %v363
  %v365 = vpop.f32.mrb[0].mxu0
  %366 = vmatprep.mubr.f32.mxu0 %v80
  %367 = vmatmul.mubr.f32.gmra.mrb[0].mxu0 %v79
  %v368 = vpop.f32.mrb[0].mxu0
  %v369 = vadd.f32 0.0, %v368
  %v370 = vpop.f32.mrb[0].mxu0
  %371 = vmatprep.mubr.f32.mxu0 %v82
  %372 = vmatmul.mubr.f32.gmra.mrb[0].mxu0 %v81
  %v373 = vpop.f32.mrb[0].mxu0
  %v374 = vadd.f32 0.0, %v373
  %v375 = vpop.f32.mrb[0].mxu0
  %376 = vmatprep.mubr.f32.mxu0 %v84
  %377 = vmatmul.mubr.f32.gmra.mrb[0].mxu0 %v83
  %v378 = vpop.f32.mrb[0].mxu0
  %v379 = vadd.f32 0.0, %v378
  %v380 = vpop.f32.mrb[0].mxu0
  %381 = vmatprep.mubr.f32.mxu0 %v86
  %382 = vmatmul.mubr.f32.gmra.mrb[0].mxu0 %v85
  %v383 = vpop.f32.mrb[0].mxu0
  %v384 = vadd.f32 0.0, %v383
  %v385 = vpop.f32.mrb[0].mxu0
  %386 = vmatprep.mubr.f32.mxu0 %v88
  %387 = vmatmul.mubr.f32.gmra.mrb[0].mxu0 %v87
  %v388 = vpop.f32.mrb[0].mxu0
  %v389 = vadd.f32 0.0, %v388
  %v390 = vpop.f32.mrb[0].mxu0
  %391 = vmatprep.mubr.f32.mxu0 %v90
  %392 = vmatmul.mubr.f32.gmra.mrb[0].mxu0 %v89
  %v393 = vpop.f32.mrb[0].mxu0
  %v394 = vadd.f32 0.0, %v393
  %v395 = vpop.f32.mrb[0].mxu0
  %396 = vmatprep.mubr.f32.mxu0 %v92
  %397 = vmatmul.mubr.f32.gmra.mrb[0].mxu0 %v91
  %v398 = vpop.f32.mrb[0].mxu0
  %v399 = vadd.f32 0.0, %v398
  %v400 = vpop.f32.mrb[0].mxu0
  %401 = vmatprep.mubr.f32.mxu0 %v94
  %402 = vmatmul.mubr.f32.gmra.mrb[0].mxu0 %v93
  %v403 = vpop.f32.mrb[0].mxu0
  %v404 = vadd.f32 0.0, %v403
  %v405 = vpop.f32.mrb[0].mxu0
  %406 = vmatprep.mubr.f32.mxu0 %v96
  %407 = vmatmul.mubr.f32.gmra.mrb[0].mxu0 %v95
  %v408 = vpop.f32.mrb[0].mxu0
  %v409 = vadd.f32 0.0, %v408
  %v410 = vpop.f32.mrb[0].mxu0
  %411 = vmatprep.mubr.f32.mxu0 %v98
  %412 = vmatmul.mubr.f32.gmra.mrb[0].mxu0 %v97
  %v413 = vpop.f32.mrb[0].mxu0
  %v414 = vadd.f32 0.0, %v413
  %v415 = vpop.f32.mrb[0].mxu0
  %416 = vmatprep.mubr.f32.mxu0 %v100
  %417 = vmatmul.mubr.f32.gmra.mrb[0].mxu0 %v99
  %v418 = vpop.f32.mrb[0].mxu0
  %v419 = vadd.f32 0.0, %v418
  %v420 = vpop.f32.mrb[0].mxu0
  %421 = vmatprep.mubr.f32.mxu0 %v102
  %422 = vmatmul.mubr.f32.gmra.mrb[0].mxu0 %v101
  %v423 = vpop.f32.mrb[0].mxu0
  %v424 = vadd.f32 0.0, %v423
  %v425 = vpop.f32.mrb[0].mxu0
  %426 = vmatprep.mubr.f32.mxu0 %v104
  %427 = vmatmul.mubr.f32.gmra.mrb[0].mxu0 %v103
  %v428 = vpop.f32.mrb[0].mxu0
  %v429 = vadd.f32 0.0, %v428
  %v430 = vpop.f32.mrb[0].mxu0
  %431 = vmatprep.mubr.f32.mxu0 %v106
  %432 = vmatmul.mubr.f32.gmra.mrb[0].mxu0 %v105
  %v433 = vpop.f32.mrb[0].mxu0
  %v434 = vadd.f32 0.0, %v433
  %v435 = vpop.f32.mrb[0].mxu0
  %436 = vmatprep.mubr.f32.mxu0 %v108
  %437 = vmatmul.mubr.f32.gmra.mrb[0].mxu0 %v107
  %v438 = vpop.f32.mrb[0].mxu0
  %v439 = vadd.f32 0.0, %v438
  %v440 = vpop.f32.mrb[0].mxu0
  %441 = vmatprep.mubr.f32.mxu0 %v110
  %442 = vmatmul.mubr.f32.gmra.mrb[0].mxu0 %v109
  %v443 = vpop.f32.mrb[0].mxu0
  %v444 = vadd.f32 0.0, %v443
  %v445 = vpop.f32.mrb[0].mxu0
  %446 = vmatprep.mubr.f32.mxu0 %v112
  %447 = vmatmul.mubr.f32.gmra.mrb[0].mxu0 %v111
  %v448 = vpop.f32.mrb[0].mxu0
  %v449 = vadd.f32 0.0, %v448
  %v450 = vpop.f32.mrb[0].mxu0
  %451 = vmatprep.mubr.f32.mxu0 %v114
  %452 = vmatmul.mubr.f32.gmra.mrb[0].mxu0 %v113
  %v453 = vpop.f32.mrb[0].mxu0
  %v454 = vadd.f32 0.0, %v453
  %v455 = vpop.f32.mrb[0].mxu0
  %456 = vdwg.mxu0
  %v457 = vld [vmem:[%s2] sm:$0x1]
  %v459 = vlaneseq
  %v460 = vshrl.u32 %v459, 7
  %v461 = vsub.s32 0, %v460
  %v462 = vrot.slane %v457, %v461
  %v464 = vmul.f32 %v214, %v462
  %v465 = vmul.f32 %v219, %v462
  %v466 = vmul.f32 %v224, %v462
  %v467 = vmul.f32 %v229, %v462
  %v468 = vmul.f32 %v234, %v462
  %v469 = vmul.f32 %v239, %v462
  %v470 = vmul.f32 %v244, %v462
  %v471 = vmul.f32 %v249, %v462
  %v472 = vmul.f32 %v254, %v462
  %v473 = vmul.f32 %v259, %v462
  %v474 = vmul.f32 %v264, %v462
  %v475 = vmul.f32 %v269, %v462
  %v476 = vmul.f32 %v274, %v462
  %v477 = vmul.f32 %v279, %v462
  %v478 = vmul.f32 %v284, %v462
  %v479 = vmul.f32 %v289, %v462
  %v480 = vmul.f32 %v294, %v462
  %v481 = vmul.f32 %v299, %v462
  %v482 = vmul.f32 %v304, %v462
  %v483 = vmul.f32 %v309, %v462
  %v484 = vmul.f32 %v314, %v462
  %v485 = vmul.f32 %v319, %v462
  %v486 = vmul.f32 %v324, %v462
  %v487 = vmul.f32 %v329, %v462
  %v488 = vmul.f32 %v334, %v462
  %v489 = vmul.f32 %v339, %v462
  %v490 = vmul.f32 %v344, %v462
  %v491 = vmul.f32 %v349, %v462
  %v492 = vmul.f32 %v354, %v462
  %v493 = vmul.f32 %v359, %v462
  %v494 = vmul.f32 %v364, %v462
  %v495 = vmul.f32 %v369, %v462
  %v496 = vmul.f32 %v374, %v462
  %v497 = vmul.f32 %v379, %v462
  %v498 = vmul.f32 %v384, %v462
  %v499 = vmul.f32 %v389, %v462
  %v500 = vmul.f32 %v394, %v462
  %v501 = vmul.f32 %v399, %v462
  %v502 = vmul.f32 %v404, %v462
  %v503 = vmul.f32 %v409, %v462
  %v504 = vmul.f32 %v414, %v462
  %v505 = vmul.f32 %v419, %v462
  %v506 = vmul.f32 %v424, %v462
  %v507 = vmul.f32 %v429, %v462
  %v508 = vmul.f32 %v434, %v462
  %v509 = vmul.f32 %v439, %v462
  %v510 = vmul.f32 %v444, %v462
  %v511 = vmul.f32 %v449, %v462
  %v512 = vmul.f32 %v454, %v462
  %v513 = vld [vmem:[%s3] sm:$0x1]
  %v515 = vlaneseq
  %v516 = vshrl.u32 %v515, 7
  %v517 = vsub.s32 0, %v516
  %v518 = vrot.slane %v513, %v517
  %v520 = vadd.f32 %v464, %v518
  %v521 = vadd.f32 %v465, %v518
  %v522 = vadd.f32 %v466, %v518
  %v523 = vadd.f32 %v467, %v518
  %v524 = vadd.f32 %v468, %v518
  %v525 = vadd.f32 %v469, %v518
  %v526 = vadd.f32 %v470, %v518
  %v527 = vadd.f32 %v471, %v518
  %v528 = vadd.f32 %v472, %v518
  %v529 = vadd.f32 %v473, %v518
  %v530 = vadd.f32 %v474, %v518
  %v531 = vadd.f32 %v475, %v518
  %v532 = vadd.f32 %v476, %v518
  %v533 = vadd.f32 %v477, %v518
  %v534 = vadd.f32 %v478, %v518
  %v535 = vadd.f32 %v479, %v518
  %v536 = vadd.f32 %v480, %v518
  %v537 = vadd.f32 %v481, %v518
  %v538 = vadd.f32 %v482, %v518
  %v539 = vadd.f32 %v483, %v518
  %v540 = vadd.f32 %v484, %v518
  %v541 = vadd.f32 %v485, %v518
  %v542 = vadd.f32 %v486, %v518
  %v543 = vadd.f32 %v487, %v518
  %v544 = vadd.f32 %v488, %v518
  %v545 = vadd.f32 %v489, %v518
  %v546 = vadd.f32 %v490, %v518
  %v547 = vadd.f32 %v491, %v518
  %v548 = vadd.f32 %v492, %v518
  %v549 = vadd.f32 %v493, %v518
  %v550 = vadd.f32 %v494, %v518
  %v551 = vadd.f32 %v495, %v518
  %v552 = vadd.f32 %v496, %v518
  %v553 = vadd.f32 %v497, %v518
  %v554 = vadd.f32 %v498, %v518
  %v555 = vadd.f32 %v499, %v518
  %v556 = vadd.f32 %v500, %v518
  %v557 = vadd.f32 %v501, %v518
  %v558 = vadd.f32 %v502, %v518
  %v559 = vadd.f32 %v503, %v518
  %v560 = vadd.f32 %v504, %v518
  %v561 = vadd.f32 %v505, %v518
  %v562 = vadd.f32 %v506, %v518
  %v563 = vadd.f32 %v507, %v518
  %v564 = vadd.f32 %v508, %v518
  %v565 = vadd.f32 %v509, %v518
  %v566 = vadd.f32 %v510, %v518
  %v567 = vadd.f32 %v511, %v518
  %v568 = vadd.f32 %v512, %v518
  %v569 = vmax.f32 %v520, 0.0
  %v570 = vmax.f32 %v521, 0.0
  %v571 = vmax.f32 %v522, 0.0
  %v572 = vmax.f32 %v523, 0.0
  %v573 = vmax.f32 %v524, 0.0
  %v574 = vmax.f32 %v525, 0.0
  %v575 = vmax.f32 %v526, 0.0
  %v576 = vmax.f32 %v527, 0.0
  %v577 = vmax.f32 %v528, 0.0
  %v578 = vmax.f32 %v529, 0.0
  %v579 = vmax.f32 %v530, 0.0
  %v580 = vmax.f32 %v531, 0.0
  %v581 = vmax.f32 %v532, 0.0
  %v582 = vmax.f32 %v533, 0.0
  %v583 = vmax.f32 %v534, 0.0
  %v584 = vmax.f32 %v535, 0.0
  %v585 = vmax.f32 %v536, 0.0
  %v586 = vmax.f32 %v537, 0.0
  %v587 = vmax.f32 %v538, 0.0
  %v588 = vmax.f32 %v539, 0.0
  %v589 = vmax.f32 %v540, 0.0
  %v590 = vmax.f32 %v541, 0.0
  %v591 = vmax.f32 %v542, 0.0
  %v592 = vmax.f32 %v543, 0.0
  %v593 = vmax.f32 %v544, 0.0
  %v594 = vmax.f32 %v545, 0.0
  %v595 = vmax.f32 %v546, 0.0
  %v596 = vmax.f32 %v547, 0.0
  %v597 = vmax.f32 %v548, 0.0
  %v598 = vmax.f32 %v549, 0.0
  %v599 = vmax.f32 %v550, 0.0
  %v600 = vmax.f32 %v551, 0.0
  %v601 = vmax.f32 %v552, 0.0
  %v602 = vmax.f32 %v553, 0.0
  %v603 = vmax.f32 %v554, 0.0
  %v604 = vmax.f32 %v555, 0.0
  %v605 = vmax.f32 %v556, 0.0
  %v606 = vmax.f32 %v557, 0.0
  %v607 = vmax.f32 %v558, 0.0
  %v608 = vmax.f32 %v559, 0.0
  %v609 = vmax.f32 %v560, 0.0
  %v610 = vmax.f32 %v561, 0.0
  %v611 = vmax.f32 %v562, 0.0
  %v612 = vmax.f32 %v563, 0.0
  %v613 = vmax.f32 %v564, 0.0
  %v614 = vmax.f32 %v565, 0.0
  %v615 = vmax.f32 %v566, 0.0
  %v616 = vmax.f32 %v567, 0.0
  %v617 = vmax.f32 %v568, 0.0
  %v618 = vmin.f32 %v569, 6.0
  %v619 = vmin.f32 %v570, 6.0
  %v620 = vmin.f32 %v571, 6.0
  %v621 = vmin.f32 %v572, 6.0
  %v622 = vmin.f32 %v573, 6.0
  %v623 = vmin.f32 %v574, 6.0
  %v624 = vmin.f32 %v575, 6.0
  %v625 = vmin.f32 %v576, 6.0
  %v626 = vmin.f32 %v577, 6.0
  %v627 = vmin.f32 %v578, 6.0
  %v628 = vmin.f32 %v579, 6.0
  %v629 = vmin.f32 %v580, 6.0
  %v630 = vmin.f32 %v581, 6.0
  %v631 = vmin.f32 %v582, 6.0
  %v632 = vmin.f32 %v583, 6.0
  %v633 = vmin.f32 %v584, 6.0
  %v634 = vmin.f32 %v585, 6.0
  %v635 = vmin.f32 %v586, 6.0
  %v636 = vmin.f32 %v587, 6.0
  %v637 = vmin.f32 %v588, 6.0
  %v638 = vmin.f32 %v589, 6.0
  %v639 = vmin.f32 %v590, 6.0
  %v640 = vmin.f32 %v591, 6.0
  %v641 = vmin.f32 %v592, 6.0
  %v642 = vmin.f32 %v593, 6.0
  %v643 = vmin.f32 %v594, 6.0
  %v644 = vmin.f32 %v595, 6.0
  %v645 = vmin.f32 %v596, 6.0
  %v646 = vmin.f32 %v597, 6.0
  %v647 = vmin.f32 %v598, 6.0
  %v648 = vmin.f32 %v599, 6.0
  %v649 = vmin.f32 %v600, 6.0
  %v650 = vmin.f32 %v601, 6.0
  %v651 = vmin.f32 %v602, 6.0
  %v652 = vmin.f32 %v603, 6.0
  %v653 = vmin.f32 %v604, 6.0
  %v654 = vmin.f32 %v605, 6.0
  %v655 = vmin.f32 %v606, 6.0
  %v656 = vmin.f32 %v607, 6.0
  %v657 = vmin.f32 %v608, 6.0
  %v658 = vmin.f32 %v609, 6.0
  %v659 = vmin.f32 %v610, 6.0
  %v660 = vmin.f32 %v611, 6.0
  %v661 = vmin.f32 %v612, 6.0
  %v662 = vmin.f32 %v613, 6.0
  %v663 = vmin.f32 %v614, 6.0
  %v664 = vmin.f32 %v615, 6.0
  %v665 = vmin.f32 %v616, 6.0
  %v666 = vmin.f32 %v617, 6.0
  %vm667 = vcmask 130048
  %668 = vst.msk [vmem:[%s4] sm:$0xff] %vm667, %v618
  %669 = vst.msk [vmem:[%s4 + $0x8] sm:$0xff] %vm667, %v619
  %670 = vst.msk [vmem:[%s4 + $0x10] sm:$0xff] %vm667, %v620
  %671 = vst.msk [vmem:[%s4 + $0x18] sm:$0xff] %vm667, %v621
  %672 = vst.msk [vmem:[%s4 + $0x20] sm:$0xff] %vm667, %v622
  %673 = vst.msk [vmem:[%s4 + $0x28] sm:$0xff] %vm667, %v623
  %674 = vst.msk [vmem:[%s4 + $0x30] sm:$0xff] %vm667, %v624
  %675 = vst.msk [vmem:[%s4 + $0x38] sm:$0xff] %vm667, %v625
  %676 = vst.msk [vmem:[%s4 + $0x40] sm:$0xff] %vm667, %v626
  %677 = vst.msk [vmem:[%s4 + $0x48] sm:$0xff] %vm667, %v627
  %678 = vst.msk [vmem:[%s4 + $0x50] sm:$0xff] %vm667, %v628
  %679 = vst.msk [vmem:[%s4 + $0x58] sm:$0xff] %vm667, %v629
  %680 = vst.msk [vmem:[%s4 + $0x60] sm:$0xff] %vm667, %v630
  %681 = vst.msk [vmem:[%s4 + $0x68] sm:$0xff] %vm667, %v631
  %682 = vst.msk [vmem:[%s4 + $0x70] sm:$0xff] %vm667, %v632
  %683 = vst.msk [vmem:[%s4 + $0x78] sm:$0xff] %vm667, %v633
  %684 = vst.msk [vmem:[%s4 + $0x80] sm:$0xff] %vm667, %v634
  %685 = vst.msk [vmem:[%s4 + $0x88] sm:$0xff] %vm667, %v635
  %686 = vst.msk [vmem:[%s4 + $0x90] sm:$0xff] %vm667, %v636
  %687 = vst.msk [vmem:[%s4 + $0x98] sm:$0xff] %vm667, %v637
  %688 = vst.msk [vmem:[%s4 + $0xa0] sm:$0xff] %vm667, %v638
  %689 = vst.msk [vmem:[%s4 + $0xa8] sm:$0xff] %vm667, %v639
  %690 = vst.msk [vmem:[%s4 + $0xb0] sm:$0xff] %vm667, %v640
  %691 = vst.msk [vmem:[%s4 + $0xb8] sm:$0xff] %vm667, %v641
  %692 = vst.msk [vmem:[%s4 + $0xc0] sm:$0xff] %vm667, %v642
  %693 = vst.msk [vmem:[%s4 + $0xc8] sm:$0xff] %vm667, %v643
  %694 = vst.msk [vmem:[%s4 + $0xd0] sm:$0xff] %vm667, %v644
  %695 = vst.msk [vmem:[%s4 + $0xd8] sm:$0xff] %vm667, %v645
  %696 = vst.msk [vmem:[%s4 + $0xe0] sm:$0xff] %vm667, %v646
  %697 = vst.msk [vmem:[%s4 + $0xe8] sm:$0xff] %vm667, %v647
  %698 = vst.msk [vmem:[%s4 + $0xf0] sm:$0xff] %vm667, %v648
  %699 = vst.msk [vmem:[%s4 + $0xf8] sm:$0xff] %vm667, %v649
  %700 = vst.msk [vmem:[%s4 + $0x100] sm:$0xff] %vm667, %v650
  %701 = vst.msk [vmem:[%s4 + $0x108] sm:$0xff] %vm667, %v651
  %702 = vst.msk [vmem:[%s4 + $0x110] sm:$0xff] %vm667, %v652
  %703 = vst.msk [vmem:[%s4 + $0x118] sm:$0xff] %vm667, %v653
  %704 = vst.msk [vmem:[%s4 + $0x120] sm:$0xff] %vm667, %v654
  %705 = vst.msk [vmem:[%s4 + $0x128] sm:$0xff] %vm667, %v655
  %706 = vst.msk [vmem:[%s4 + $0x130] sm:$0xff] %vm667, %v656
  %707 = vst.msk [vmem:[%s4 + $0x138] sm:$0xff] %vm667, %v657
  %708 = vst.msk [vmem:[%s4 + $0x140] sm:$0xff] %vm667, %v658
  %709 = vst.msk [vmem:[%s4 + $0x148] sm:$0xff] %vm667, %v659
  %710 = vst.msk [vmem:[%s4 + $0x150] sm:$0xff] %vm667, %v660
  %711 = vst.msk [vmem:[%s4 + $0x158] sm:$0xff] %vm667, %v661
  %712 = vst.msk [vmem:[%s4 + $0x160] sm:$0xff] %vm667, %v662
  %713 = vst.msk [vmem:[%s4 + $0x168] sm:$0xff] %vm667, %v663
  %714 = vst.msk [vmem:[%s4 + $0x170] sm:$0xff] %vm667, %v664
  %715 = vst.msk [vmem:[%s4 + $0x178] sm:$0xff] %vm667, %v665
  %716 = vst.msk [vmem:[%s4 + $0x180] sm:$0xff] %vm667, %v666
  // Predicated region
  $region18: #{encoder_forward.8} parent=0 // pred_check
    _
  $region19: #{encoder_forward.8} parent=0 // pred_check_branch
    %718 = sbr.rel (0) target = $region21
  $region20: #{encoder_forward.8} parent=0 // pred_region
    _
  $region21: #{encoder_forward.8} parent=0 // pred_fallthru
    _
  // Predicated region
  $region22: #{encoder_forward.8} parent=0 // pred_check
    _
  $region23: #{encoder_forward.8} parent=0 // pred_check_branch
    %720 = sbr.rel (0) target = $region25
  $region24: #{encoder_forward.8} parent=0 // pred_region
    _
  $region25: #{encoder_forward.8} parent=0 // pred_fallthru
    _

// kernel: encoder_forward.9
$region0: #{encoder_forward.9}
  #allocation0 [shape = 'u32[]', space=smem, size = 0x4, offset = 0x4, fixed_abs, tag = 'smem constant byte address 0x4 - core index']
  #allocation1 [shape = 'u32[144,128]{1,0:T(1,128)}', space=vmem, size = 0x12000, scoped, tag = 'internal scratch']
  %s0 = inlined_call_operand.vmem [shape: f32[128,256], index: 0, kind: input, shape index: {}]
  %s1 = inlined_call_operand.vmem [shape: f32[256,32], index: 1, kind: input, shape index: {}]
  %s2 = inlined_call_operand.vmem [shape: f32[1,32], index: 2, kind: input, shape index: {}]
  %s3 = inlined_call_operand.vmem [shape: f32[1,32], index: 3, kind: input, shape index: {}]
  %s4 = inlined_call_operand.vmem [shape: f32[128,32], index: 4, kind: output, shape index: {}]
  %s5 = sld [smem:[#allocation0]]
  $region26: #{encoder_forward.9} parent=0
    _
  %s7 = ssub.s32 1, %s5
  %s8 = scalar_select 0, %s7, %s5
  // Predicated region
  $region2: #{encoder_forward.9} parent=0 // pred_check
    _
  $region3: #{encoder_forward.9} parent=0 // pred_check_branch
    %10 = sbr.rel (0) target = $region5
  $region4: #{encoder_forward.9} parent=0 // pred_region
    _
  $region5: #{encoder_forward.9} parent=0 // pred_fallthru
    _
  // Predicated region
  $region6: #{encoder_forward.9} parent=0 // pred_check
    _
  $region7: #{encoder_forward.9} parent=0 // pred_check_branch
    %12 = sbr.rel (0) target = $region9
  $region8: #{encoder_forward.9} parent=0 // pred_region
    _
  $region9: #{encoder_forward.9} parent=0 // pred_fallthru
    _
  // Predicated region
  $region10: #{encoder_forward.9} parent=0 // pred_check
    _
  $region11: #{encoder_forward.9} parent=0 // pred_check_branch
    %14 = sbr.rel (0) target = $region13
  $region12: #{encoder_forward.9} parent=0 // pred_region
    _
  $region13: #{encoder_forward.9} parent=0 // pred_fallthru
    _
  // Predicated region
  $region14: #{encoder_forward.9} parent=0 // pred_check
    _
  $region15: #{encoder_forward.9} parent=0 // pred_check_branch
    %16 = sbr.rel (0) target = $region17
  $region16: #{encoder_forward.9} parent=0 // pred_region
    _
  $region17: #{encoder_forward.9} parent=0 // pred_fallthru
    _
  %v17 = vld [vmem:[%s0] sm:$0xff]
  %v18 = vld [vmem:[%s0 + $0x8] sm:$0xff]
  %v19 = vld [vmem:[%s0 + $0x10] sm:$0xff]
  %v20 = vld [vmem:[%s0 + $0x18] sm:$0xff]
  %v21 = vld [vmem:[%s0 + $0x20] sm:$0xff]
  %v22 = vld [vmem:[%s0 + $0x28] sm:$0xff]
  %v23 = vld [vmem:[%s0 + $0x30] sm:$0xff]
  %v24 = vld [vmem:[%s0 + $0x38] sm:$0xff]
  %v25 = vld [vmem:[%s0 + $0x40] sm:$0xff]
  %v26 = vld [vmem:[%s0 + $0x48] sm:$0xff]
  %v27 = vld [vmem:[%s0 + $0x50] sm:$0xff]
  %v28 = vld [vmem:[%s0 + $0x58] sm:$0xff]
  %v29 = vld [vmem:[%s0 + $0x60] sm:$0xff]
  %v30 = vld [vmem:[%s0 + $0x68] sm:$0xff]
  %v31 = vld [vmem:[%s0 + $0x70] sm:$0xff]
  %v32 = vld [vmem:[%s0 + $0x78] sm:$0xff]
  %v33 = vld [vmem:[%s0 + $0x80] sm:$0xff]
  %v34 = vld [vmem:[%s0 + $0x88] sm:$0xff]
  %v35 = vld [vmem:[%s0 + $0x90] sm:$0xff]
  %v36 = vld [vmem:[%s0 + $0x98] sm:$0xff]
  %v37 = vld [vmem:[%s0 + $0xa0] sm:$0xff]
  %v38 = vld [vmem:[%s0 + $0xa8] sm:$0xff]
  %v39 = vld [vmem:[%s0 + $0xb0] sm:$0xff]
  %v40 = vld [vmem:[%s0 + $0xb8] sm:$0xff]
  %v41 = vld [vmem:[%s0 + $0xc0] sm:$0xff]
  %v42 = vld [vmem:[%s0 + $0xc8] sm:$0xff]
  %v43 = vld [vmem:[%s0 + $0xd0] sm:$0xff]
  %v44 = vld [vmem:[%s0 + $0xd8] sm:$0xff]
  %v45 = vld [vmem:[%s0 + $0xe0] sm:$0xff]
  %v46 = vld [vmem:[%s0 + $0xe8] sm:$0xff]
  %v47 = vld [vmem:[%s0 + $0xf0] sm:$0xff]
  %v48 = vld [vmem:[%s0 + $0xf8] sm:$0xff]
  %v49 = vld [vmem:[%s1] sm:$0xff]
  %v50 = vld [vmem:[%s1 + $0x8] sm:$0xff]
  %v51 = vld [vmem:[%s1 + $0x10] sm:$0xff]
  %v52 = vld [vmem:[%s1 + $0x18] sm:$0xff]
  %v53 = vld [vmem:[%s1 + $0x20] sm:$0xff]
  %v54 = vld [vmem:[%s1 + $0x28] sm:$0xff]
  %v55 = vld [vmem:[%s1 + $0x30] sm:$0xff]
  %v56 = vld [vmem:[%s1 + $0x38] sm:$0xff]
  %v57 = vld [vmem:[%s1 + $0x40] sm:$0xff]
  %v58 = vld [vmem:[%s1 + $0x48] sm:$0xff]
  %v59 = vld [vmem:[%s1 + $0x50] sm:$0xff]
  %v60 = vld [vmem:[%s1 + $0x58] sm:$0xff]
  %v61 = vld [vmem:[%s1 + $0x60] sm:$0xff]
  %v62 = vld [vmem:[%s1 + $0x68] sm:$0xff]
  %v63 = vld [vmem:[%s1 + $0x70] sm:$0xff]
  %v64 = vld [vmem:[%s1 + $0x78] sm:$0xff]
  %v65 = vld [vmem:[%s1 + $0x80] sm:$0xff]
  %v66 = vld [vmem:[%s1 + $0x88] sm:$0xff]
  %v67 = vld [vmem:[%s1 + $0x90] sm:$0xff]
  %v68 = vld [vmem:[%s1 + $0x98] sm:$0xff]
  %v69 = vld [vmem:[%s1 + $0xa0] sm:$0xff]
  %v70 = vld [vmem:[%s1 + $0xa8] sm:$0xff]
  %v71 = vld [vmem:[%s1 + $0xb0] sm:$0xff]
  %v72 = vld [vmem:[%s1 + $0xb8] sm:$0xff]
  %v73 = vld [vmem:[%s1 + $0xc0] sm:$0xff]
  %v74 = vld [vmem:[%s1 + $0xc8] sm:$0xff]
  %v75 = vld [vmem:[%s1 + $0xd0] sm:$0xff]
  %v76 = vld [vmem:[%s1 + $0xd8] sm:$0xff]
  %v77 = vld [vmem:[%s1 + $0xe0] sm:$0xff]
  %v78 = vld [vmem:[%s1 + $0xe8] sm:$0xff]
  %v79 = vld [vmem:[%s1 + $0xf0] sm:$0xff]
  %v80 = vld [vmem:[%s1 + $0xf8] sm:$0xff]
  %81 = vmatprep.subr.mxu0 0.0
  %82 = vmatpush1.msra.mxu0 %v49
  %83 = vmatprep.subr.mxu0 0.0
  %84 = vmatpush1.msra.mxu0 %v50
  %85 = vmatprep.subr.mxu0 0.0
  %86 = vmatpush1.msra.mxu0 %v51
  %87 = vmatprep.subr.mxu0 0.0
  %88 = vmatpush1.msra.mxu0 %v52
  %89 = vmatprep.subr.mxu0 0.0
  %90 = vmatpush1.msra.mxu0 %v53
  %91 = vmatprep.subr.mxu0 0.0
  %92 = vmatpush1.msra.mxu0 %v54
  %93 = vmatprep.subr.mxu0 0.0
  %94 = vmatpush1.msra.mxu0 %v55
  %95 = vmatprep.subr.mxu0 0.0
  %96 = vmatpush1.msra.mxu0 %v56
  %97 = vmatprep.subr.mxu0 0.0
  %98 = vmatpush1.msra.mxu0 %v57
  %99 = vmatprep.subr.mxu0 0.0
  %100 = vmatpush1.msra.mxu0 %v58
  %101 = vmatprep.subr.mxu0 0.0
  %102 = vmatpush1.msra.mxu0 %v59
  %103 = vmatprep.subr.mxu0 0.0
  %104 = vmatpush1.msra.mxu0 %v60
  %105 = vmatprep.subr.mxu0 0.0
  %106 = vmatpush1.msra.mxu0 %v61
  %107 = vmatprep.subr.mxu0 0.0
  %108 = vmatpush1.msra.mxu0 %v62
  %109 = vmatprep.subr.mxu0 0.0
  %110 = vmatpush1.msra.mxu0 %v63
  %111 = vmatprep.subr.mxu0 0.0
  %112 = vmatpush1.msra.mxu0 %v64
  %113 = vmatprep.subr.mxu0 0.0
  %114 = vmatpush1.msra.mxu0 %v65
  %115 = vmatprep.subr.mxu0 0.0
  %116 = vmatpush1.msra.mxu0 %v66
  %117 = vmatprep.subr.mxu0 0.0
  %118 = vmatpush1.msra.mxu0 %v67
  %119 = vmatprep.subr.mxu0 0.0
  %120 = vmatpush1.msra.mxu0 %v68
  %121 = vmatprep.subr.mxu0 0.0
  %122 = vmatpush1.msra.mxu0 %v69
  %123 = vmatprep.subr.mxu0 0.0
  %124 = vmatpush1.msra.mxu0 %v70
  %125 = vmatprep.subr.mxu0 0.0
  %126 = vmatpush1.msra.mxu0 %v71
  %127 = vmatprep.subr.mxu0 0.0
  %128 = vmatpush1.msra.mxu0 %v72
  %129 = vmatprep.subr.mxu0 0.0
  %130 = vmatpush1.msra.mxu0 %v73
  %131 = vmatprep.subr.mxu0 0.0
  %132 = vmatpush1.msra.mxu0 %v74
  %133 = vmatprep.subr.mxu0 0.0
  %134 = vmatpush1.msra.mxu0 %v75
  %135 = vmatprep.subr.mxu0 0.0
  %136 = vmatpush1.msra.mxu0 %v76
  %137 = vmatprep.subr.mxu0 0.0
  %138 = vmatpush1.msra.mxu0 %v77
  %139 = vmatprep.subr.mxu0 0.0
  %140 = vmatpush1.msra.mxu0 %v78
  %141 = vmatprep.subr.mxu0 0.0
  %142 = vmatpush1.msra.mxu0 %v79
  %143 = vmatprep.subr.mxu0 0.0
  %144 = vmatpush1.msra.mxu0 %v80
  %145 = vmatprep.mubr.f32.mxu0 %v18
  %146 = vmatmul.mubr.f32.gmra.mrb[0].mxu0 %v17
  %v147 = vpop.f32.mrb[0].mxu0
  %v148 = vadd.f32 0.0, %v147
  %v149 = vpop.f32.mrb[0].mxu0
  %150 = vmatprep.mubr.f32.mxu0 %v20
  %151 = vmatmul.mubr.f32.gmra.mrb[0].mxu0 %v19
  %v152 = vpop.f32.mrb[0].mxu0
  %v153 = vadd.f32 0.0, %v152
  %v154 = vpop.f32.mrb[0].mxu0
  %155 = vmatprep.mubr.f32.mxu0 %v22
  %156 = vmatmul.mubr.f32.gmra.mrb[0].mxu0 %v21
  %v157 = vpop.f32.mrb[0].mxu0
  %v158 = vadd.f32 0.0, %v157
  %v159 = vpop.f32.mrb[0].mxu0
  %160 = vmatprep.mubr.f32.mxu0 %v24
  %161 = vmatmul.mubr.f32.gmra.mrb[0].mxu0 %v23
  %v162 = vpop.f32.mrb[0].mxu0
  %v163 = vadd.f32 0.0, %v162
  %v164 = vpop.f32.mrb[0].mxu0
  %165 = vmatprep.mubr.f32.mxu0 %v26
  %166 = vmatmul.mubr.f32.gmra.mrb[0].mxu0 %v25
  %v167 = vpop.f32.mrb[0].mxu0
  %v168 = vadd.f32 0.0, %v167
  %v169 = vpop.f32.mrb[0].mxu0
  %170 = vmatprep.mubr.f32.mxu0 %v28
  %171 = vmatmul.mubr.f32.gmra.mrb[0].mxu0 %v27
  %v172 = vpop.f32.mrb[0].mxu0
  %v173 = vadd.f32 0.0, %v172
  %v174 = vpop.f32.mrb[0].mxu0
  %175 = vmatprep.mubr.f32.mxu0 %v30
  %176 = vmatmul.mubr.f32.gmra.mrb[0].mxu0 %v29
  %v177 = vpop.f32.mrb[0].mxu0
  %v178 = vadd.f32 0.0, %v177
  %v179 = vpop.f32.mrb[0].mxu0
  %180 = vmatprep.mubr.f32.mxu0 %v32
  %181 = vmatmul.mubr.f32.gmra.mrb[0].mxu0 %v31
  %v182 = vpop.f32.mrb[0].mxu0
  %v183 = vadd.f32 0.0, %v182
  %v184 = vpop.f32.mrb[0].mxu0
  %185 = vmatprep.mubr.f32.mxu0 %v34
  %186 = vmatmul.mubr.f32.gmra.mrb[0].mxu0 %v33
  %v187 = vpop.f32.mrb[0].mxu0
  %v188 = vadd.f32 0.0, %v187
  %v189 = vpop.f32.mrb[0].mxu0
  %190 = vmatprep.mubr.f32.mxu0 %v36
  %191 = vmatmul.mubr.f32.gmra.mrb[0].mxu0 %v35
  %v192 = vpop.f32.mrb[0].mxu0
  %v193 = vadd.f32 0.0, %v192
  %v194 = vpop.f32.mrb[0].mxu0
  %195 = vmatprep.mubr.f32.mxu0 %v38
  %196 = vmatmul.mubr.f32.gmra.mrb[0].mxu0 %v37
  %v197 = vpop.f32.mrb[0].mxu0
  %v198 = vadd.f32 0.0, %v197
  %v199 = vpop.f32.mrb[0].mxu0
  %200 = vmatprep.mubr.f32.mxu0 %v40
  %201 = vmatmul.mubr.f32.gmra.mrb[0].mxu0 %v39
  %v202 = vpop.f32.mrb[0].mxu0
  %v203 = vadd.f32 0.0, %v202
  %v204 = vpop.f32.mrb[0].mxu0
  %205 = vmatprep.mubr.f32.mxu0 %v42
  %206 = vmatmul.mubr.f32.gmra.mrb[0].mxu0 %v41
  %v207 = vpop.f32.mrb[0].mxu0
  %v208 = vadd.f32 0.0, %v207
  %v209 = vpop.f32.mrb[0].mxu0
  %210 = vmatprep.mubr.f32.mxu0 %v44
  %211 = vmatmul.mubr.f32.gmra.mrb[0].mxu0 %v43
  %v212 = vpop.f32.mrb[0].mxu0
  %v213 = vadd.f32 0.0, %v212
  %v214 = vpop.f32.mrb[0].mxu0
  %215 = vmatprep.mubr.f32.mxu0 %v46
  %216 = vmatmul.mubr.f32.gmra.mrb[0].mxu0 %v45
  %v217 = vpop.f32.mrb[0].mxu0
  %v218 = vadd.f32 0.0, %v217
  %v219 = vpop.f32.mrb[0].mxu0
  %220 = vmatprep.mubr.f32.mxu0 %v48
  %221 = vmatmul.mubr.f32.gmra.mrb[0].mxu0 %v47
  %v222 = vpop.f32.mrb[0].mxu0
  %v223 = vadd.f32 0.0, %v222
  %v224 = vpop.f32.mrb[0].mxu0
  %225 = vdwg.mxu0
  %v226 = vld [vmem:[%s2] sm:$0x1]
  %v228 = vlaneseq
  %v229 = vshrl.u32 %v228, 7
  %v230 = vsub.s32 0, %v229
  %v231 = vrot.slane %v226, %v230
  %v233 = vmul.f32 %v148, %v231
  %v234 = vmul.f32 %v153, %v231
  %v235 = vmul.f32 %v158, %v231
  %v236 = vmul.f32 %v163, %v231
  %v237 = vmul.f32 %v168, %v231
  %v238 = vmul.f32 %v173, %v231
  %v239 = vmul.f32 %v178, %v231
  %v240 = vmul.f32 %v183, %v231
  %v241 = vmul.f32 %v188, %v231
  %v242 = vmul.f32 %v193, %v231
  %v243 = vmul.f32 %v198, %v231
  %v244 = vmul.f32 %v203, %v231
  %v245 = vmul.f32 %v208, %v231
  %v246 = vmul.f32 %v213, %v231
  %v247 = vmul.f32 %v218, %v231
  %v248 = vmul.f32 %v223, %v231
  %v249 = vld [vmem:[%s3] sm:$0x1]
  %v251 = vlaneseq
  %v252 = vshrl.u32 %v251, 7
  %v253 = vsub.s32 0, %v252
  %v254 = vrot.slane %v249, %v253
  %v256 = vadd.f32 %v233, %v254
  %v257 = vadd.f32 %v234, %v254
  %v258 = vadd.f32 %v235, %v254
  %v259 = vadd.f32 %v236, %v254
  %v260 = vadd.f32 %v237, %v254
  %v261 = vadd.f32 %v238, %v254
  %v262 = vadd.f32 %v239, %v254
  %v263 = vadd.f32 %v240, %v254
  %v264 = vadd.f32 %v241, %v254
  %v265 = vadd.f32 %v242, %v254
  %v266 = vadd.f32 %v243, %v254
  %v267 = vadd.f32 %v244, %v254
  %v268 = vadd.f32 %v245, %v254
  %v269 = vadd.f32 %v246, %v254
  %v270 = vadd.f32 %v247, %v254
  %v271 = vadd.f32 %v248, %v254
  %v272 = vmax.f32 %v256, 0.0
  %v273 = vmax.f32 %v257, 0.0
  %v274 = vmax.f32 %v258, 0.0
  %v275 = vmax.f32 %v259, 0.0
  %v276 = vmax.f32 %v260, 0.0
  %v277 = vmax.f32 %v261, 0.0
  %v278 = vmax.f32 %v262, 0.0
  %v279 = vmax.f32 %v263, 0.0
  %v280 = vmax.f32 %v264, 0.0
  %v281 = vmax.f32 %v265, 0.0
  %v282 = vmax.f32 %v266, 0.0
  %v283 = vmax.f32 %v267, 0.0
  %v284 = vmax.f32 %v268, 0.0
  %v285 = vmax.f32 %v269, 0.0
  %v286 = vmax.f32 %v270, 0.0
  %v287 = vmax.f32 %v271, 0.0
  %v288 = vmin.f32 %v272, 6.0
  %v289 = vmin.f32 %v273, 6.0
  %v290 = vmin.f32 %v274, 6.0
  %v291 = vmin.f32 %v275, 6.0
  %v292 = vmin.f32 %v276, 6.0
  %v293 = vmin.f32 %v277, 6.0
  %v294 = vmin.f32 %v278, 6.0
  %v295 = vmin.f32 %v279, 6.0
  %v296 = vmin.f32 %v280, 6.0
  %v297 = vmin.f32 %v281, 6.0
  %v298 = vmin.f32 %v282, 6.0
  %v299 = vmin.f32 %v283, 6.0
  %v300 = vmin.f32 %v284, 6.0
  %v301 = vmin.f32 %v285, 6.0
  %v302 = vmin.f32 %v286, 6.0
  %v303 = vmin.f32 %v287, 6.0
  %vm304 = vcmask 261120
  %305 = vst.msk [vmem:[%s4] sm:$0xff] %vm304, %v288
  %306 = vst.msk [vmem:[%s4 + $0x8] sm:$0xff] %vm304, %v289
  %307 = vst.msk [vmem:[%s4 + $0x10] sm:$0xff] %vm304, %v290
  %308 = vst.msk [vmem:[%s4 + $0x18] sm:$0xff] %vm304, %v291
  %309 = vst.msk [vmem:[%s4 + $0x20] sm:$0xff] %vm304, %v292
  %310 = vst.msk [vmem:[%s4 + $0x28] sm:$0xff] %vm304, %v293
  %311 = vst.msk [vmem:[%s4 + $0x30] sm:$0xff] %vm304, %v294
  %312 = vst.msk [vmem:[%s4 + $0x38] sm:$0xff] %vm304, %v295
  %313 = vst.msk [vmem:[%s4 + $0x40] sm:$0xff] %vm304, %v296
  %314 = vst.msk [vmem:[%s4 + $0x48] sm:$0xff] %vm304, %v297
  %315 = vst.msk [vmem:[%s4 + $0x50] sm:$0xff] %vm304, %v298
  %316 = vst.msk [vmem:[%s4 + $0x58] sm:$0xff] %vm304, %v299
  %317 = vst.msk [vmem:[%s4 + $0x60] sm:$0xff] %vm304, %v300
  %318 = vst.msk [vmem:[%s4 + $0x68] sm:$0xff] %vm304, %v301
  %319 = vst.msk [vmem:[%s4 + $0x70] sm:$0xff] %vm304, %v302
  %320 = vst.msk [vmem:[%s4 + $0x78] sm:$0xff] %vm304, %v303
  // Predicated region
  $region18: #{encoder_forward.9} parent=0 // pred_check
    _
  $region19: #{encoder_forward.9} parent=0 // pred_check_branch
    %322 = sbr.rel (0) target = $region21
  $region20: #{encoder_forward.9} parent=0 // pred_region
    _
  $region21: #{encoder_forward.9} parent=0 // pred_fallthru
    _
  // Predicated region
  $region22: #{encoder_forward.9} parent=0 // pred_check
    _
  $region23: #{encoder_forward.9} parent=0 // pred_check_branch
    %324 = sbr.rel (0) target = $region25
  $region24: #{encoder_forward.9} parent=0 // pred_region
    _
  $region25: #{encoder_forward.9} parent=0 // pred_fallthru
    _

// kernel: encoder_forward.10
$region0: #{encoder_forward.10}
  #allocation0 [shape = 'u32[]', space=smem, size = 0x4, offset = 0x4, fixed_abs, tag = 'smem constant byte address 0x4 - core index']
  #allocation1 [shape = 'u32[144,128]{1,0:T(1,128)}', space=vmem, size = 0x12000, scoped, tag = 'internal scratch']
  %s0 = inlined_call_operand.vmem [shape: f32[32,512], index: 0, kind: input, shape index: {}]
  %s1 = inlined_call_operand.vmem [shape: f32[512,16], index: 1, kind: input, shape index: {}]
  %s2 = inlined_call_operand.vmem [shape: f32[1,16], index: 2, kind: input, shape index: {}]
  %s3 = inlined_call_operand.vmem [shape: f32[1,16], index: 3, kind: input, shape index: {}]
  %s4 = inlined_call_operand.vmem [shape: f32[32,16], index: 4, kind: output, shape index: {}]
  %s5 = sld [smem:[#allocation0]]
  $region26: #{encoder_forward.10} parent=0
    _
  %s7 = ssub.s32 1, %s5
  %s8 = scalar_select 0, %s7, %s5
  // Predicated region
  $region2: #{encoder_forward.10} parent=0 // pred_check
    _
  $region3: #{encoder_forward.10} parent=0 // pred_check_branch
    %10 = sbr.rel (0) target = $region5
  $region4: #{encoder_forward.10} parent=0 // pred_region
    _
  $region5: #{encoder_forward.10} parent=0 // pred_fallthru
    _
  // Predicated region
  $region6: #{encoder_forward.10} parent=0 // pred_check
    _
  $region7: #{encoder_forward.10} parent=0 // pred_check_branch
    %12 = sbr.rel (0) target = $region9
  $region8: #{encoder_forward.10} parent=0 // pred_region
    _
  $region9: #{encoder_forward.10} parent=0 // pred_fallthru
    _
  // Predicated region
  $region10: #{encoder_forward.10} parent=0 // pred_check
    _
  $region11: #{encoder_forward.10} parent=0 // pred_check_branch
    %14 = sbr.rel (0) target = $region13
  $region12: #{encoder_forward.10} parent=0 // pred_region
    _
  $region13: #{encoder_forward.10} parent=0 // pred_fallthru
    _
  // Predicated region
  $region14: #{encoder_forward.10} parent=0 // pred_check
    _
  $region15: #{encoder_forward.10} parent=0 // pred_check_branch
    %16 = sbr.rel (0) target = $region17
  $region16: #{encoder_forward.10} parent=0 // pred_region
    _
  $region17: #{encoder_forward.10} parent=0 // pred_fallthru
    _
  %v17 = vld [vmem:[%s0] sm:$0xff]
  %v18 = vld [vmem:[%s0 + $0x8] sm:$0xff]
  %v19 = vld [vmem:[%s0 + $0x10] sm:$0xff]
  %v20 = vld [vmem:[%s0 + $0x18] sm:$0xff]
  %v21 = vld [vmem:[%s0 + $0x20] sm:$0xff]
  %v22 = vld [vmem:[%s0 + $0x28] sm:$0xff]
  %v23 = vld [vmem:[%s0 + $0x30] sm:$0xff]
  %v24 = vld [vmem:[%s0 + $0x38] sm:$0xff]
  %v25 = vld [vmem:[%s0 + $0x40] sm:$0xff]
  %v26 = vld [vmem:[%s0 + $0x48] sm:$0xff]
  %v27 = vld [vmem:[%s0 + $0x50] sm:$0xff]
  %v28 = vld [vmem:[%s0 + $0x58] sm:$0xff]
  %v29 = vld [vmem:[%s0 + $0x60] sm:$0xff]
  %v30 = vld [vmem:[%s0 + $0x68] sm:$0xff]
  %v31 = vld [vmem:[%s0 + $0x70] sm:$0xff]
  %v32 = vld [vmem:[%s0 + $0x78] sm:$0xff]
  %v33 = vld [vmem:[%s1] sm:$0xff]
  %v34 = vld [vmem:[%s1 + $0x8] sm:$0xff]
  %v35 = vld [vmem:[%s1 + $0x10] sm:$0xff]
  %v36 = vld [vmem:[%s1 + $0x18] sm:$0xff]
  %v37 = vld [vmem:[%s1 + $0x20] sm:$0xff]
  %v38 = vld [vmem:[%s1 + $0x28] sm:$0xff]
  %v39 = vld [vmem:[%s1 + $0x30] sm:$0xff]
  %v40 = vld [vmem:[%s1 + $0x38] sm:$0xff]
  %v41 = vld [vmem:[%s1 + $0x40] sm:$0xff]
  %v42 = vld [vmem:[%s1 + $0x48] sm:$0xff]
  %v43 = vld [vmem:[%s1 + $0x50] sm:$0xff]
  %v44 = vld [vmem:[%s1 + $0x58] sm:$0xff]
  %v45 = vld [vmem:[%s1 + $0x60] sm:$0xff]
  %v46 = vld [vmem:[%s1 + $0x68] sm:$0xff]
  %v47 = vld [vmem:[%s1 + $0x70] sm:$0xff]
  %v48 = vld [vmem:[%s1 + $0x78] sm:$0xff]
  %v49 = vld [vmem:[%s1 + $0x80] sm:$0xff]
  %v50 = vld [vmem:[%s1 + $0x88] sm:$0xff]
  %v51 = vld [vmem:[%s1 + $0x90] sm:$0xff]
  %v52 = vld [vmem:[%s1 + $0x98] sm:$0xff]
  %v53 = vld [vmem:[%s1 + $0xa0] sm:$0xff]
  %v54 = vld [vmem:[%s1 + $0xa8] sm:$0xff]
  %v55 = vld [vmem:[%s1 + $0xb0] sm:$0xff]
  %v56 = vld [vmem:[%s1 + $0xb8] sm:$0xff]
  %v57 = vld [vmem:[%s1 + $0xc0] sm:$0xff]
  %v58 = vld [vmem:[%s1 + $0xc8] sm:$0xff]
  %v59 = vld [vmem:[%s1 + $0xd0] sm:$0xff]
  %v60 = vld [vmem:[%s1 + $0xd8] sm:$0xff]
  %v61 = vld [vmem:[%s1 + $0xe0] sm:$0xff]
  %v62 = vld [vmem:[%s1 + $0xe8] sm:$0xff]
  %v63 = vld [vmem:[%s1 + $0xf0] sm:$0xff]
  %v64 = vld [vmem:[%s1 + $0xf8] sm:$0xff]
  %v65 = vld [vmem:[%s1 + $0x100] sm:$0xff]
  %v66 = vld [vmem:[%s1 + $0x108] sm:$0xff]
  %v67 = vld [vmem:[%s1 + $0x110] sm:$0xff]
  %v68 = vld [vmem:[%s1 + $0x118] sm:$0xff]
  %v69 = vld [vmem:[%s1 + $0x120] sm:$0xff]
  %v70 = vld [vmem:[%s1 + $0x128] sm:$0xff]
  %v71 = vld [vmem:[%s1 + $0x130] sm:$0xff]
  %v72 = vld [vmem:[%s1 + $0x138] sm:$0xff]
  %v73 = vld [vmem:[%s1 + $0x140] sm:$0xff]
  %v74 = vld [vmem:[%s1 + $0x148] sm:$0xff]
  %v75 = vld [vmem:[%s1 + $0x150] sm:$0xff]
  %v76 = vld [vmem:[%s1 + $0x158] sm:$0xff]
  %v77 = vld [vmem:[%s1 + $0x160] sm:$0xff]
  %v78 = vld [vmem:[%s1 + $0x168] sm:$0xff]
  %v79 = vld [vmem:[%s1 + $0x170] sm:$0xff]
  %v80 = vld [vmem:[%s1 + $0x178] sm:$0xff]
  %v81 = vld [vmem:[%s1 + $0x180] sm:$0xff]
  %v82 = vld [vmem:[%s1 + $0x188] sm:$0xff]
  %v83 = vld [vmem:[%s1 + $0x190] sm:$0xff]
  %v84 = vld [vmem:[%s1 + $0x198] sm:$0xff]
  %v85 = vld [vmem:[%s1 + $0x1a0] sm:$0xff]
  %v86 = vld [vmem:[%s1 + $0x1a8] sm:$0xff]
  %v87 = vld [vmem:[%s1 + $0x1b0] sm:$0xff]
  %v88 = vld [vmem:[%s1 + $0x1b8] sm:$0xff]
  %v89 = vld [vmem:[%s1 + $0x1c0] sm:$0xff]
  %v90 = vld [vmem:[%s1 + $0x1c8] sm:$0xff]
  %v91 = vld [vmem:[%s1 + $0x1d0] sm:$0xff]
  %v92 = vld [vmem:[%s1 + $0x1d8] sm:$0xff]
  %v93 = vld [vmem:[%s1 + $0x1e0] sm:$0xff]
  %v94 = vld [vmem:[%s1 + $0x1e8] sm:$0xff]
  %v95 = vld [vmem:[%s1 + $0x1f0] sm:$0xff]
  %v96 = vld [vmem:[%s1 + $0x1f8] sm:$0xff]
  %97 = vmatprep.subr.mxu0 0.0
  %98 = vmatpush1.msra.mxu0 %v33
  %99 = vmatprep.subr.mxu0 0.0
  %100 = vmatpush1.msra.mxu0 %v34
  %101 = vmatprep.subr.mxu0 0.0
  %102 = vmatpush1.msra.mxu0 %v35
  %103 = vmatprep.subr.mxu0 0.0
  %104 = vmatpush1.msra.mxu0 %v36
  %105 = vmatprep.subr.mxu0 0.0
  %106 = vmatpush1.msra.mxu0 %v37
  %107 = vmatprep.subr.mxu0 0.0
  %108 = vmatpush1.msra.mxu0 %v38
  %109 = vmatprep.subr.mxu0 0.0
  %110 = vmatpush1.msra.mxu0 %v39
  %111 = vmatprep.subr.mxu0 0.0
  %112 = vmatpush1.msra.mxu0 %v40
  %113 = vmatprep.subr.mxu0 0.0
  %114 = vmatpush1.msra.mxu0 %v41
  %115 = vmatprep.subr.mxu0 0.0
  %116 = vmatpush1.msra.mxu0 %v42
  %117 = vmatprep.subr.mxu0 0.0
  %118 = vmatpush1.msra.mxu0 %v43
  %119 = vmatprep.subr.mxu0 0.0
  %120 = vmatpush1.msra.mxu0 %v44
  %121 = vmatprep.subr.mxu0 0.0
  %122 = vmatpush1.msra.mxu0 %v45
  %123 = vmatprep.subr.mxu0 0.0
  %124 = vmatpush1.msra.mxu0 %v46
  %125 = vmatprep.subr.mxu0 0.0
  %126 = vmatpush1.msra.mxu0 %v47
  %127 = vmatprep.subr.mxu0 0.0
  %128 = vmatpush1.msra.mxu0 %v48
  %129 = vmatprep.subr.mxu0 0.0
  %130 = vmatpush1.msra.mxu0 %v49
  %131 = vmatprep.subr.mxu0 0.0
  %132 = vmatpush1.msra.mxu0 %v50
  %133 = vmatprep.subr.mxu0 0.0
  %134 = vmatpush1.msra.mxu0 %v51
  %135 = vmatprep.subr.mxu0 0.0
  %136 = vmatpush1.msra.mxu0 %v52
  %137 = vmatprep.subr.mxu0 0.0
  %138 = vmatpush1.msra.mxu0 %v53
  %139 = vmatprep.subr.mxu0 0.0
  %140 = vmatpush1.msra.mxu0 %v54
  %141 = vmatprep.subr.mxu0 0.0
  %142 = vmatpush1.msra.mxu0 %v55
  %143 = vmatprep.subr.mxu0 0.0
  %144 = vmatpush1.msra.mxu0 %v56
  %145 = vmatprep.subr.mxu0 0.0
  %146 = vmatpush1.msra.mxu0 %v57
  %147 = vmatprep.subr.mxu0 0.0
  %148 = vmatpush1.msra.mxu0 %v58
  %149 = vmatprep.subr.mxu0 0.0
  %150 = vmatpush1.msra.mxu0 %v59
  %151 = vmatprep.subr.mxu0 0.0
  %152 = vmatpush1.msra.mxu0 %v60
  %153 = vmatprep.subr.mxu0 0.0
  %154 = vmatpush1.msra.mxu0 %v61
  %155 = vmatprep.subr.mxu0 0.0
  %156 = vmatpush1.msra.mxu0 %v62
  %157 = vmatprep.subr.mxu0 0.0
  %158 = vmatpush1.msra.mxu0 %v63
  %159 = vmatprep.subr.mxu0 0.0
  %160 = vmatpush1.msra.mxu0 %v64
  %161 = vmatprep.mubr.f32.mxu0 %v18
  %162 = vmatmul.mubr.f32.gmra.mrb[0].mxu0 %v17
  %v163 = vpop.f32.mrb[0].mxu0
  %v164 = vadd.f32 0.0, %v163
  %v165 = vpop.f32.mrb[0].mxu0
  %166 = vmatprep.mubr.f32.mxu0 %v22
  %167 = vmatmul.mubr.f32.gmra.mrb[0].mxu0 %v21
  %v168 = vpop.f32.mrb[0].mxu0
  %v169 = vadd.f32 0.0, %v168
  %v170 = vpop.f32.mrb[0].mxu0
  %171 = vmatprep.mubr.f32.mxu0 %v26
  %172 = vmatmul.mubr.f32.gmra.mrb[0].mxu0 %v25
  %v173 = vpop.f32.mrb[0].mxu0
  %v174 = vadd.f32 0.0, %v173
  %v175 = vpop.f32.mrb[0].mxu0
  %176 = vmatprep.mubr.f32.mxu0 %v30
  %177 = vmatmul.mubr.f32.gmra.mrb[0].mxu0 %v29
  %v178 = vpop.f32.mrb[0].mxu0
  %v179 = vadd.f32 0.0, %v178
  %v180 = vpop.f32.mrb[0].mxu0
  %181 = vdwg.mxu0
  %182 = vmatprep.subr.mxu0 0.0
  %183 = vmatpush1.msra.mxu0 %v65
  %184 = vmatprep.subr.mxu0 0.0
  %185 = vmatpush1.msra.mxu0 %v66
  %186 = vmatprep.subr.mxu0 0.0
  %187 = vmatpush1.msra.mxu0 %v67
  %188 = vmatprep.subr.mxu0 0.0
  %189 = vmatpush1.msra.mxu0 %v68
  %190 = vmatprep.subr.mxu0 0.0
  %191 = vmatpush1.msra.mxu0 %v69
  %192 = vmatprep.subr.mxu0 0.0
  %193 = vmatpush1.msra.mxu0 %v70
  %194 = vmatprep.subr.mxu0 0.0
  %195 = vmatpush1.msra.mxu0 %v71
  %196 = vmatprep.subr.mxu0 0.0
  %197 = vmatpush1.msra.mxu0 %v72
  %198 = vmatprep.subr.mxu0 0.0
  %199 = vmatpush1.msra.mxu0 %v73
  %200 = vmatprep.subr.mxu0 0.0
  %201 = vmatpush1.msra.mxu0 %v74
  %202 = vmatprep.subr.mxu0 0.0
  %203 = vmatpush1.msra.mxu0 %v75
  %204 = vmatprep.subr.mxu0 0.0
  %205 = vmatpush1.msra.mxu0 %v76
  %206 = vmatprep.subr.mxu0 0.0
  %207 = vmatpush1.msra.mxu0 %v77
  %208 = vmatprep.subr.mxu0 0.0
  %209 = vmatpush1.msra.mxu0 %v78
  %210 = vmatprep.subr.mxu0 0.0
  %211 = vmatpush1.msra.mxu0 %v79
  %212 = vmatprep.subr.mxu0 0.0
  %213 = vmatpush1.msra.mxu0 %v80
  %214 = vmatprep.subr.mxu0 0.0
  %215 = vmatpush1.msra.mxu0 %v81
  %216 = vmatprep.subr.mxu0 0.0
  %217 = vmatpush1.msra.mxu0 %v82
  %218 = vmatprep.subr.mxu0 0.0
  %219 = vmatpush1.msra.mxu0 %v83
  %220 = vmatprep.subr.mxu0 0.0
  %221 = vmatpush1.msra.mxu0 %v84
  %222 = vmatprep.subr.mxu0 0.0
  %223 = vmatpush1.msra.mxu0 %v85
  %224 = vmatprep.subr.mxu0 0.0
  %225 = vmatpush1.msra.mxu0 %v86
  %226 = vmatprep.subr.mxu0 0.0
  %227 = vmatpush1.msra.mxu0 %v87
  %228 = vmatprep.subr.mxu0 0.0
  %229 = vmatpush1.msra.mxu0 %v88
  %230 = vmatprep.subr.mxu0 0.0
  %231 = vmatpush1.msra.mxu0 %v89
  %232 = vmatprep.subr.mxu0 0.0
  %233 = vmatpush1.msra.mxu0 %v90
  %234 = vmatprep.subr.mxu0 0.0
  %235 = vmatpush1.msra.mxu0 %v91
  %236 = vmatprep.subr.mxu0 0.0
  %237 = vmatpush1.msra.mxu0 %v92
  %238 = vmatprep.subr.mxu0 0.0
  %239 = vmatpush1.msra.mxu0 %v93
  %240 = vmatprep.subr.mxu0 0.0
  %241 = vmatpush1.msra.mxu0 %v94
  %242 = vmatprep.subr.mxu0 0.0
  %243 = vmatpush1.msra.mxu0 %v95
  %244 = vmatprep.subr.mxu0 0.0
  %245 = vmatpush1.msra.mxu0 %v96
  %246 = vmatprep.mubr.f32.mxu0 %v20
  %247 = vmatmul.mubr.f32.gmra.mrb[0].mxu0 %v19
  %v248 = vpop.f32.mrb[0].mxu0
  %v249 = vadd.f32 %v164, %v248
  %v250 = vpop.f32.mrb[0].mxu0
  %251 = vmatprep.mubr.f32.mxu0 %v24
  %252 = vmatmul.mubr.f32.gmra.mrb[0].mxu0 %v23
  %v253 = vpop.f32.mrb[0].mxu0
  %v254 = vadd.f32 %v169, %v253
  %v255 = vpop.f32.mrb[0].mxu0
  %256 = vmatprep.mubr.f32.mxu0 %v28
  %257 = vmatmul.mubr.f32.gmra.mrb[0].mxu0 %v27
  %v258 = vpop.f32.mrb[0].mxu0
  %v259 = vadd.f32 %v174, %v258
  %v260 = vpop.f32.mrb[0].mxu0
  %261 = vmatprep.mubr.f32.mxu0 %v32
  %262 = vmatmul.mubr.f32.gmra.mrb[0].mxu0 %v31
  %v263 = vpop.f32.mrb[0].mxu0
  %v264 = vadd.f32 %v179, %v263
  %v265 = vpop.f32.mrb[0].mxu0
  %266 = vdwg.mxu0
  %v267 = vld [vmem:[%s2] sm:$0x1]
  %v269 = vlaneseq
  %v270 = vshrl.u32 %v269, 7
  %v271 = vsub.s32 0, %v270
  %v272 = vrot.slane %v267, %v271
  %v274 = vmul.f32 %v249, %v272
  %v275 = vmul.f32 %v254, %v272
  %v276 = vmul.f32 %v259, %v272
  %v277 = vmul.f32 %v264, %v272
  %v278 = vld [vmem:[%s3] sm:$0x1]
  %v280 = vlaneseq
  %v281 = vshrl.u32 %v280, 7
  %v282 = vsub.s32 0, %v281
  %v283 = vrot.slane %v278, %v282
  %v285 = vadd.f32 %v274, %v283
  %v286 = vadd.f32 %v275, %v283
  %v287 = vadd.f32 %v276, %v283
  %v288 = vadd.f32 %v277, %v283
  %v289 = vmax.f32 %v285, 0.0
  %v290 = vmax.f32 %v286, 0.0
  %v291 = vmax.f32 %v287, 0.0
  %v292 = vmax.f32 %v288, 0.0
  %v293 = vmin.f32 %v289, 6.0
  %v294 = vmin.f32 %v290, 6.0
  %v295 = vmin.f32 %v291, 6.0
  %v296 = vmin.f32 %v292, 6.0
  %vm297 = vcmask 130048
  %298 = vst.msk [vmem:[%s4] sm:$0xff] %vm297, %v293
  %299 = vst.msk [vmem:[%s4 + $0x8] sm:$0xff] %vm297, %v294
  %300 = vst.msk [vmem:[%s4 + $0x10] sm:$0xff] %vm297, %v295
  %301 = vst.msk [vmem:[%s4 + $0x18] sm:$0xff] %vm297, %v296
  // Predicated region
  $region18: #{encoder_forward.10} parent=0 // pred_check
    _
  $region19: #{encoder_forward.10} parent=0 // pred_check_branch
    %303 = sbr.rel (0) target = $region21
  $region20: #{encoder_forward.10} parent=0 // pred_region
    _
  $region21: #{encoder_forward.10} parent=0 // pred_fallthru
    _
  // Predicated region
  $region22: #{encoder_forward.10} parent=0 // pred_check
    _
  $region23: #{encoder_forward.10} parent=0 // pred_check_branch
    %305 = sbr.rel (0) target = $region25
  $region24: #{encoder_forward.10} parent=0 // pred_region
    _
  $region25: #{encoder_forward.10} parent=0 // pred_fallthru
    _

// kernel: encoder_forward.11
$region0: #{encoder_forward.11}
  #allocation0 [shape = 'u32[]', space=smem, size = 0x4, offset = 0x4, fixed_abs, tag = 'smem constant byte address 0x4 - core index']
  #allocation1 [shape = 'u32[144,128]{1,0:T(1,128)}', space=vmem, size = 0x12000, scoped, tag = 'internal scratch']
  %s0 = inlined_call_operand.vmem [shape: f32[8,256], index: 0, kind: input, shape index: {}]
  %s1 = inlined_call_operand.vmem [shape: f32[256,1024], index: 1, kind: input, shape index: {}]
  %s2 = inlined_call_operand.vmem [shape: f32[1,1024], index: 2, kind: input, shape index: {}]
  %s3 = inlined_call_operand.vmem [shape: f32[1024,128], index: 3, kind: input, shape index: {}]
  %s4 = inlined_call_operand.vmem [shape: f32[1,128], index: 4, kind: input, shape index: {}]
  %s5 = inlined_call_operand.vmem [shape: f32[8,128], index: 5, kind: output, shape index: {}]
  %s6 = sld [smem:[#allocation0]]
  $region30: #{encoder_forward.11} parent=0
    _
  %s8 = ssub.s32 1, %s6
  %s9 = scalar_select 0, %s8, %s6
  // Predicated region
  $region2: #{encoder_forward.11} parent=0 // pred_check
    _
  $region3: #{encoder_forward.11} parent=0 // pred_check_branch
    %11 = sbr.rel (0) target = $region5
  $region4: #{encoder_forward.11} parent=0 // pred_region
    _
  $region5: #{encoder_forward.11} parent=0 // pred_fallthru
    _
  // Predicated region
  $region6: #{encoder_forward.11} parent=0 // pred_check
    _
  $region7: #{encoder_forward.11} parent=0 // pred_check_branch
    %13 = sbr.rel (0) target = $region9
  $region8: #{encoder_forward.11} parent=0 // pred_region
    _
  $region9: #{encoder_forward.11} parent=0 // pred_fallthru
    _
  // Predicated region
  $region10: #{encoder_forward.11} parent=0 // pred_check
    _
  $region11: #{encoder_forward.11} parent=0 // pred_check_branch
    %15 = sbr.rel (0) target = $region13
  $region12: #{encoder_forward.11} parent=0 // pred_region
    _
  $region13: #{encoder_forward.11} parent=0 // pred_fallthru
    _
  // Predicated region
  $region14: #{encoder_forward.11} parent=0 // pred_check
    _
  $region15: #{encoder_forward.11} parent=0 // pred_check_branch
    %17 = sbr.rel (0) target = $region17
  $region16: #{encoder_forward.11} parent=0 // pred_region
    _
  $region17: #{encoder_forward.11} parent=0 // pred_fallthru
    _
  // Predicated region
  $region18: #{encoder_forward.11} parent=0 // pred_check
    _
  $region19: #{encoder_forward.11} parent=0 // pred_check_branch
    %19 = sbr.rel (0) target = $region21
  $region20: #{encoder_forward.11} parent=0 // pred_region
    _
  $region21: #{encoder_forward.11} parent=0 // pred_fallthru
    _
  %v20 = vld [vmem:[%s0] sm:$0xff]
  %v21 = vld [vmem:[%s0 + $0x8] sm:$0xff]
  %v22 = vld [vmem:[%s1] sm:$0xff]
  %v23 = vld [vmem:[%s1 + $0x8] sm:$0xff]
  %v24 = vld [vmem:[%s1 + $0x10] sm:$0xff]
  %v25 = vld [vmem:[%s1 + $0x18] sm:$0xff]
  %v26 = vld [vmem:[%s1 + $0x20] sm:$0xff]
  %v27 = vld [vmem:[%s1 + $0x28] sm:$0xff]
  %v28 = vld [vmem:[%s1 + $0x30] sm:$0xff]
  %v29 = vld [vmem:[%s1 + $0x38] sm:$0xff]
  %v30 = vld [vmem:[%s1 + $0x40] sm:$0xff]
  %v31 = vld [vmem:[%s1 + $0x48] sm:$0xff]
  %v32 = vld [vmem:[%s1 + $0x50] sm:$0xff]
  %v33 = vld [vmem:[%s1 + $0x58] sm:$0xff]
  %v34 = vld [vmem:[%s1 + $0x60] sm:$0xff]
  %v35 = vld [vmem:[%s1 + $0x68] sm:$0xff]
  %v36 = vld [vmem:[%s1 + $0x70] sm:$0xff]
  %v37 = vld [vmem:[%s1 + $0x78] sm:$0xff]
  %v38 = vld [vmem:[%s1 + $0x80] sm:$0xff]
  %v39 = vld [vmem:[%s1 + $0x88] sm:$0xff]
  %v40 = vld [vmem:[%s1 + $0x90] sm:$0xff]
  %v41 = vld [vmem:[%s1 + $0x98] sm:$0xff]
  %v42 = vld [vmem:[%s1 + $0xa0] sm:$0xff]
  %v43 = vld [vmem:[%s1 + $0xa8] sm:$0xff]
  %v44 = vld [vmem:[%s1 + $0xb0] sm:$0xff]
  %v45 = vld [vmem:[%s1 + $0xb8] sm:$0xff]
  %v46 = vld [vmem:[%s1 + $0xc0] sm:$0xff]
  %v47 = vld [vmem:[%s1 + $0xc8] sm:$0xff]
  %v48 = vld [vmem:[%s1 + $0xd0] sm:$0xff]
  %v49 = vld [vmem:[%s1 + $0xd8] sm:$0xff]
  %v50 = vld [vmem:[%s1 + $0xe0] sm:$0xff]
  %v51 = vld [vmem:[%s1 + $0xe8] sm:$0xff]
  %v52 = vld [vmem:[%s1 + $0xf0] sm:$0xff]
  %v53 = vld [vmem:[%s1 + $0xf8] sm:$0xff]
  %v54 = vld [vmem:[%s1 + $0x100] sm:$0xff]
  %v55 = vld [vmem:[%s1 + $0x108] sm:$0xff]
  %v56 = vld [vmem:[%s1 + $0x110] sm:$0xff]
  %v57 = vld [vmem:[%s1 + $0x118] sm:$0xff]
  %v58 = vld [vmem:[%s1 + $0x120] sm:$0xff]
  %v59 = vld [vmem:[%s1 + $0x128] sm:$0xff]
  %v60 = vld [vmem:[%s1 + $0x130] sm:$0xff]
  %v61 = vld [vmem:[%s1 + $0x138] sm:$0xff]
  %v62 = vld [vmem:[%s1 + $0x140] sm:$0xff]
  %v63 = vld [vmem:[%s1 + $0x148] sm:$0xff]
  %v64 = vld [vmem:[%s1 + $0x150] sm:$0xff]
  %v65 = vld [vmem:[%s1 + $0x158] sm:$0xff]
  %v66 = vld [vmem:[%s1 + $0x160] sm:$0xff]
  %v67 = vld [vmem:[%s1 + $0x168] sm:$0xff]
  %v68 = vld [vmem:[%s1 + $0x170] sm:$0xff]
  %v69 = vld [vmem:[%s1 + $0x178] sm:$0xff]
  %v70 = vld [vmem:[%s1 + $0x180] sm:$0xff]
  %v71 = vld [vmem:[%s1 + $0x188] sm:$0xff]
  %v72 = vld [vmem:[%s1 + $0x190] sm:$0xff]
  %v73 = vld [vmem:[%s1 + $0x198] sm:$0xff]
  %v74 = vld [vmem:[%s1 + $0x1a0] sm:$0xff]
  %v75 = vld [vmem:[%s1 + $0x1a8] sm:$0xff]
  %v76 = vld [vmem:[%s1 + $0x1b0] sm:$0xff]
  %v77 = vld [vmem:[%s1 + $0x1b8] sm:$0xff]
  %v78 = vld [vmem:[%s1 + $0x1c0] sm:$0xff]
  %v79 = vld [vmem:[%s1 + $0x1c8] sm:$0xff]
  %v80 = vld [vmem:[%s1 + $0x1d0] sm:$0xff]
  %v81 = vld [vmem:[%s1 + $0x1d8] sm:$0xff]
  %v82 = vld [vmem:[%s1 + $0x1e0] sm:$0xff]
  %v83 = vld [vmem:[%s1 + $0x1e8] sm:$0xff]
  %v84 = vld [vmem:[%s1 + $0x1f0] sm:$0xff]
  %v85 = vld [vmem:[%s1 + $0x1f8] sm:$0xff]
  %v86 = vld [vmem:[%s1 + $0x200] sm:$0xff]
  %v87 = vld [vmem:[%s1 + $0x208] sm:$0xff]
  %v88 = vld [vmem:[%s1 + $0x210] sm:$0xff]
  %v89 = vld [vmem:[%s1 + $0x218] sm:$0xff]
  %v90 = vld [vmem:[%s1 + $0x220] sm:$0xff]
  %v91 = vld [vmem:[%s1 + $0x228] sm:$0xff]
  %v92 = vld [vmem:[%s1 + $0x230] sm:$0xff]
  %v93 = vld [vmem:[%s1 + $0x238] sm:$0xff]
  %v94 = vld [vmem:[%s1 + $0x240] sm:$0xff]
  %v95 = vld [vmem:[%s1 + $0x248] sm:$0xff]
  %v96 = vld [vmem:[%s1 + $0x250] sm:$0xff]
  %v97 = vld [vmem:[%s1 + $0x258] sm:$0xff]
  %v98 = vld [vmem:[%s1 + $0x260] sm:$0xff]
  %v99 = vld [vmem:[%s1 + $0x268] sm:$0xff]
  %v100 = vld [vmem:[%s1 + $0x270] sm:$0xff]
  %v101 = vld [vmem:[%s1 + $0x278] sm:$0xff]
  %v102 = vld [vmem:[%s1 + $0x280] sm:$0xff]
  %v103 = vld [vmem:[%s1 + $0x288] sm:$0xff]
  %v104 = vld [vmem:[%s1 + $0x290] sm:$0xff]
  %v105 = vld [vmem:[%s1 + $0x298] sm:$0xff]
  %v106 = vld [vmem:[%s1 + $0x2a0] sm:$0xff]
  %v107 = vld [vmem:[%s1 + $0x2a8] sm:$0xff]
  %v108 = vld [vmem:[%s1 + $0x2b0] sm:$0xff]
  %v109 = vld [vmem:[%s1 + $0x2b8] sm:$0xff]
  %v110 = vld [vmem:[%s1 + $0x2c0] sm:$0xff]
  %v111 = vld [vmem:[%s1 + $0x2c8] sm:$0xff]
  %v112 = vld [vmem:[%s1 + $0x2d0] sm:$0xff]
  %v113 = vld [vmem:[%s1 + $0x2d8] sm:$0xff]
  %v114 = vld [vmem:[%s1 + $0x2e0] sm:$0xff]
  %v115 = vld [vmem:[%s1 + $0x2e8] sm:$0xff]
  %v116 = vld [vmem:[%s1 + $0x2f0] sm:$0xff]
  %v117 = vld [vmem:[%s1 + $0x2f8] sm:$0xff]
  %v118 = vld [vmem:[%s1 + $0x300] sm:$0xff]
  %v119 = vld [vmem:[%s1 + $0x308] sm:$0xff]
  %v120 = vld [vmem:[%s1 + $0x310] sm:$0xff]
  %v121 = vld [vmem:[%s1 + $0x318] sm:$0xff]
  %v122 = vld [vmem:[%s1 + $0x320] sm:$0xff]
  %v123 = vld [vmem:[%s1 + $0x328] sm:$0xff]
  %v124 = vld [vmem:[%s1 + $0x330] sm:$0xff]
  %v125 = vld [vmem:[%s1 + $0x338] sm:$0xff]
  %v126 = vld [vmem:[%s1 + $0x340] sm:$0xff]
  %v127 = vld [vmem:[%s1 + $0x348] sm:$0xff]
  %v128 = vld [vmem:[%s1 + $0x350] sm:$0xff]
  %v129 = vld [vmem:[%s1 + $0x358] sm:$0xff]
  %v130 = vld [vmem:[%s1 + $0x360] sm:$0xff]
  %v131 = vld [vmem:[%s1 + $0x368] sm:$0xff]
  %v132 = vld [vmem:[%s1 + $0x370] sm:$0xff]
  %v133 = vld [vmem:[%s1 + $0x378] sm:$0xff]
  %v134 = vld [vmem:[%s1 + $0x380] sm:$0xff]
  %v135 = vld [vmem:[%s1 + $0x388] sm:$0xff]
  %v136 = vld [vmem:[%s1 + $0x390] sm:$0xff]
  %v137 = vld [vmem:[%s1 + $0x398] sm:$0xff]
  %v138 = vld [vmem:[%s1 + $0x3a0] sm:$0xff]
  %v139 = vld [vmem:[%s1 + $0x3a8] sm:$0xff]
  %v140 = vld [vmem:[%s1 + $0x3b0] sm:$0xff]
  %v141 = vld [vmem:[%s1 + $0x3b8] sm:$0xff]
  %v142 = vld [vmem:[%s1 + $0x3c0] sm:$0xff]
  %v143 = vld [vmem:[%s1 + $0x3c8] sm:$0xff]
  %v144 = vld [vmem:[%s1 + $0x3d0] sm:$0xff]
  %v145 = vld [vmem:[%s1 + $0x3d8] sm:$0xff]
  %v146 = vld [vmem:[%s1 + $0x3e0] sm:$0xff]
  %v147 = vld [vmem:[%s1 + $0x3e8] sm:$0xff]
  %v148 = vld [vmem:[%s1 + $0x3f0] sm:$0xff]
  %v149 = vld [vmem:[%s1 + $0x3f8] sm:$0xff]
  %v150 = vld [vmem:[%s1 + $0x400] sm:$0xff]
  %v151 = vld [vmem:[%s1 + $0x408] sm:$0xff]
  %v152 = vld [vmem:[%s1 + $0x410] sm:$0xff]
  %v153 = vld [vmem:[%s1 + $0x418] sm:$0xff]
  %v154 = vld [vmem:[%s1 + $0x420] sm:$0xff]
  %v155 = vld [vmem:[%s1 + $0x428] sm:$0xff]
  %v156 = vld [vmem:[%s1 + $0x430] sm:$0xff]
  %v157 = vld [vmem:[%s1 + $0x438] sm:$0xff]
  %v158 = vld [vmem:[%s1 + $0x440] sm:$0xff]
  %v159 = vld [vmem:[%s1 + $0x448] sm:$0xff]
  %v160 = vld [vmem:[%s1 + $0x450] sm:$0xff]
  %v161 = vld [vmem:[%s1 + $0x458] sm:$0xff]
  %v162 = vld [vmem:[%s1 + $0x460] sm:$0xff]
  %v163 = vld [vmem:[%s1 + $0x468] sm:$0xff]
  %v164 = vld [vmem:[%s1 + $0x470] sm:$0xff]
  %v165 = vld [vmem:[%s1 + $0x478] sm:$0xff]
  %v166 = vld [vmem:[%s1 + $0x480] sm:$0xff]
  %v167 = vld [vmem:[%s1 + $0x488] sm:$0xff]
  %v168 = vld [vmem:[%s1 + $0x490] sm:$0xff]
  %v169 = vld [vmem:[%s1 + $0x498] sm:$0xff]
  %v170 = vld [vmem:[%s1 + $0x4a0] sm:$0xff]
  %v171 = vld [vmem:[%s1 + $0x4a8] sm:$0xff]
  %v172 = vld [vmem:[%s1 + $0x4b0] sm:$0xff]
  %v173 = vld [vmem:[%s1 + $0x4b8] sm:$0xff]
  %v174 = vld [vmem:[%s1 + $0x4c0] sm:$0xff]
  %v175 = vld [vmem:[%s1 + $0x4c8] sm:$0xff]
  %v176 = vld [vmem:[%s1 + $0x4d0] sm:$0xff]
  %v177 = vld [vmem:[%s1 + $0x4d8] sm:$0xff]
  %v178 = vld [vmem:[%s1 + $0x4e0] sm:$0xff]
  %v179 = vld [vmem:[%s1 + $0x4e8] sm:$0xff]
  %v180 = vld [vmem:[%s1 + $0x4f0] sm:$0xff]
  %v181 = vld [vmem:[%s1 + $0x4f8] sm:$0xff]
  %v182 = vld [vmem:[%s1 + $0x500] sm:$0xff]
  %v183 = vld [vmem:[%s1 + $0x508] sm:$0xff]
  %v184 = vld [vmem:[%s1 + $0x510] sm:$0xff]
  %v185 = vld [vmem:[%s1 + $0x518] sm:$0xff]
  %v186 = vld [vmem:[%s1 + $0x520] sm:$0xff]
  %v187 = vld [vmem:[%s1 + $0x528] sm:$0xff]
  %v188 = vld [vmem:[%s1 + $0x530] sm:$0xff]
  %v189 = vld [vmem:[%s1 + $0x538] sm:$0xff]
  %v190 = vld [vmem:[%s1 + $0x540] sm:$0xff]
  %v191 = vld [vmem:[%s1 + $0x548] sm:$0xff]
  %v192 = vld [vmem:[%s1 + $0x550] sm:$0xff]
  %v193 = vld [vmem:[%s1 + $0x558] sm:$0xff]
  %v194 = vld [vmem:[%s1 + $0x560] sm:$0xff]
  %v195 = vld [vmem:[%s1 + $0x568] sm:$0xff]
  %v196 = vld [vmem:[%s1 + $0x570] sm:$0xff]
  %v197 = vld [vmem:[%s1 + $0x578] sm:$0xff]
  %v198 = vld [vmem:[%s1 + $0x580] sm:$0xff]
  %v199 = vld [vmem:[%s1 + $0x588] sm:$0xff]
  %v200 = vld [vmem:[%s1 + $0x590] sm:$0xff]
  %v201 = vld [vmem:[%s1 + $0x598] sm:$0xff]
  %v202 = vld [vmem:[%s1 + $0x5a0] sm:$0xff]
  %v203 = vld [vmem:[%s1 + $0x5a8] sm:$0xff]
  %v204 = vld [vmem:[%s1 + $0x5b0] sm:$0xff]
  %v205 = vld [vmem:[%s1 + $0x5b8] sm:$0xff]
  %v206 = vld [vmem:[%s1 + $0x5c0] sm:$0xff]
  %v207 = vld [vmem:[%s1 + $0x5c8] sm:$0xff]
  %v208 = vld [vmem:[%s1 + $0x5d0] sm:$0xff]
  %v209 = vld [vmem:[%s1 + $0x5d8] sm:$0xff]
  %v210 = vld [vmem:[%s1 + $0x5e0] sm:$0xff]
  %v211 = vld [vmem:[%s1 + $0x5e8] sm:$0xff]
  %v212 = vld [vmem:[%s1 + $0x5f0] sm:$0xff]
  %v213 = vld [vmem:[%s1 + $0x5f8] sm:$0xff]
  %v214 = vld [vmem:[%s1 + $0x600] sm:$0xff]
  %v215 = vld [vmem:[%s1 + $0x608] sm:$0xff]
  %v216 = vld [vmem:[%s1 + $0x610] sm:$0xff]
  %v217 = vld [vmem:[%s1 + $0x618] sm:$0xff]
  %v218 = vld [vmem:[%s1 + $0x620] sm:$0xff]
  %v219 = vld [vmem:[%s1 + $0x628] sm:$0xff]
  %v220 = vld [vmem:[%s1 + $0x630] sm:$0xff]
  %v221 = vld [vmem:[%s1 + $0x638] sm:$0xff]
  %v222 = vld [vmem:[%s1 + $0x640] sm:$0xff]
  %v223 = vld [vmem:[%s1 + $0x648] sm:$0xff]
  %v224 = vld [vmem:[%s1 + $0x650] sm:$0xff]
  %v225 = vld [vmem:[%s1 + $0x658] sm:$0xff]
  %v226 = vld [vmem:[%s1 + $0x660] sm:$0xff]
  %v227 = vld [vmem:[%s1 + $0x668] sm:$0xff]
  %v228 = vld [vmem:[%s1 + $0x670] sm:$0xff]
  %v229 = vld [vmem:[%s1 + $0x678] sm:$0xff]
  %v230 = vld [vmem:[%s1 + $0x680] sm:$0xff]
  %v231 = vld [vmem:[%s1 + $0x688] sm:$0xff]
  %v232 = vld [vmem:[%s1 + $0x690] sm:$0xff]
  %v233 = vld [vmem:[%s1 + $0x698] sm:$0xff]
  %v234 = vld [vmem:[%s1 + $0x6a0] sm:$0xff]
  %v235 = vld [vmem:[%s1 + $0x6a8] sm:$0xff]
  %v236 = vld [vmem:[%s1 + $0x6b0] sm:$0xff]
  %v237 = vld [vmem:[%s1 + $0x6b8] sm:$0xff]
  %v238 = vld [vmem:[%s1 + $0x6c0] sm:$0xff]
  %v239 = vld [vmem:[%s1 + $0x6c8] sm:$0xff]
  %v240 = vld [vmem:[%s1 + $0x6d0] sm:$0xff]
  %v241 = vld [vmem:[%s1 + $0x6d8] sm:$0xff]
  %v242 = vld [vmem:[%s1 + $0x6e0] sm:$0xff]
  %v243 = vld [vmem:[%s1 + $0x6e8] sm:$0xff]
  %v244 = vld [vmem:[%s1 + $0x6f0] sm:$0xff]
  %v245 = vld [vmem:[%s1 + $0x6f8] sm:$0xff]
  %v246 = vld [vmem:[%s1 + $0x700] sm:$0xff]
  %v247 = vld [vmem:[%s1 + $0x708] sm:$0xff]
  %v248 = vld [vmem:[%s1 + $0x710] sm:$0xff]
  %v249 = vld [vmem:[%s1 + $0x718] sm:$0xff]
  %v250 = vld [vmem:[%s1 + $0x720] sm:$0xff]
  %v251 = vld [vmem:[%s1 + $0x728] sm:$0xff]
  %v252 = vld [vmem:[%s1 + $0x730] sm:$0xff]
  %v253 = vld [vmem:[%s1 + $0x738] sm:$0xff]
  %v254 = vld [vmem:[%s1 + $0x740] sm:$0xff]
  %v255 = vld [vmem:[%s1 + $0x748] sm:$0xff]
  %v256 = vld [vmem:[%s1 + $0x750] sm:$0xff]
  %v257 = vld [vmem:[%s1 + $0x758] sm:$0xff]
  %v258 = vld [vmem:[%s1 + $0x760] sm:$0xff]
  %v259 = vld [vmem:[%s1 + $0x768] sm:$0xff]
  %v260 = vld [vmem:[%s1 + $0x770] sm:$0xff]
  %v261 = vld [vmem:[%s1 + $0x778] sm:$0xff]
  %v262 = vld [vmem:[%s1 + $0x780] sm:$0xff]
  %v263 = vld [vmem:[%s1 + $0x788] sm:$0xff]
  %v264 = vld [vmem:[%s1 + $0x790] sm:$0xff]
  %v265 = vld [vmem:[%s1 + $0x798] sm:$0xff]
  %v266 = vld [vmem:[%s1 + $0x7a0] sm:$0xff]
  %v267 = vld [vmem:[%s1 + $0x7a8] sm:$0xff]
  %v268 = vld [vmem:[%s1 + $0x7b0] sm:$0xff]
  %v269 = vld [vmem:[%s1 + $0x7b8] sm:$0xff]
  %v270 = vld [vmem:[%s1 + $0x7c0] sm:$0xff]
  %v271 = vld [vmem:[%s1 + $0x7c8] sm:$0xff]
  %v272 = vld [vmem:[%s1 + $0x7d0] sm:$0xff]
  %v273 = vld [vmem:[%s1 + $0x7d8] sm:$0xff]
  %v274 = vld [vmem:[%s1 + $0x7e0] sm:$0xff]
  %v275 = vld [vmem:[%s1 + $0x7e8] sm:$0xff]
  %v276 = vld [vmem:[%s1 + $0x7f0] sm:$0xff]
  %v277 = vld [vmem:[%s1 + $0x7f8] sm:$0xff]
  %v278 = vld [vmem:[%s2] sm:$0xff]
  %v280 = vlaneseq
  %v281 = vshrl.u32 %v280, 7
  %v282 = vsub.s32 0, %v281
  %v283 = vrot.slane %v278, %v282
  %v284 = vlaneseq
  %v285 = vshrl.u32 %v284, 7
  %v286 = vsub.s32 1, %v285
  %v287 = vrot.slane %v278, %v286
  %v288 = vlaneseq
  %v289 = vshrl.u32 %v288, 7
  %v290 = vsub.s32 2, %v289
  %v291 = vrot.slane %v278, %v290
  %v292 = vlaneseq
  %v293 = vshrl.u32 %v292, 7
  %v294 = vsub.s32 3, %v293
  %v295 = vrot.slane %v278, %v294
  %v296 = vlaneseq
  %v297 = vshrl.u32 %v296, 7
  %v298 = vsub.s32 4, %v297
  %v299 = vrot.slane %v278, %v298
  %v300 = vlaneseq
  %v301 = vshrl.u32 %v300, 7
  %v302 = vsub.s32 5, %v301
  %v303 = vrot.slane %v278, %v302
  %v304 = vlaneseq
  %v305 = vshrl.u32 %v304, 7
  %v306 = vsub.s32 6, %v305
  %v307 = vrot.slane %v278, %v306
  %v308 = vlaneseq
  %v309 = vshrl.u32 %v308, 7
  %v310 = vsub.s32 7, %v309
  %v311 = vrot.slane %v278, %v310
  %320 = vmatprep.subr.mxu0 %v23
  %321 = vmatpush1.msra.mxu0 %v22
  %322 = vmatprep.subr.mxu0 %v31
  %323 = vmatpush1.msra.mxu0 %v30
  %324 = vmatprep.subr.mxu0 %v39
  %325 = vmatpush1.msra.mxu0 %v38
  %326 = vmatprep.subr.mxu0 %v47
  %327 = vmatpush1.msra.mxu0 %v46
  %328 = vmatprep.subr.mxu0 %v55
  %329 = vmatpush1.msra.mxu0 %v54
  %330 = vmatprep.subr.mxu0 %v63
  %331 = vmatpush1.msra.mxu0 %v62
  %332 = vmatprep.subr.mxu0 %v71
  %333 = vmatpush1.msra.mxu0 %v70
  %334 = vmatprep.subr.mxu0 %v79
  %335 = vmatpush1.msra.mxu0 %v78
  %336 = vmatprep.subr.mxu0 %v87
  %337 = vmatpush1.msra.mxu0 %v86
  %338 = vmatprep.subr.mxu0 %v95
  %339 = vmatpush1.msra.mxu0 %v94
  %340 = vmatprep.subr.mxu0 %v103
  %341 = vmatpush1.msra.mxu0 %v102
  %342 = vmatprep.subr.mxu0 %v111
  %343 = vmatpush1.msra.mxu0 %v110
  %344 = vmatprep.subr.mxu0 %v119
  %345 = vmatpush1.msra.mxu0 %v118
  %346 = vmatprep.subr.mxu0 %v127
  %347 = vmatpush1.msra.mxu0 %v126
  %348 = vmatprep.subr.mxu0 %v135
  %349 = vmatpush1.msra.mxu0 %v134
  %350 = vmatprep.subr.mxu0 %v143
  %351 = vmatpush1.msra.mxu0 %v142
  %352 = vmatprep.subr.mxu0 %v151
  %353 = vmatpush1.msra.mxu0 %v150
  %354 = vmatprep.subr.mxu0 %v159
  %355 = vmatpush1.msra.mxu0 %v158
  %356 = vmatprep.subr.mxu0 %v167
  %357 = vmatpush1.msra.mxu0 %v166
  %358 = vmatprep.subr.mxu0 %v175
  %359 = vmatpush1.msra.mxu0 %v174
  %360 = vmatprep.subr.mxu0 %v183
  %361 = vmatpush1.msra.mxu0 %v182
  %362 = vmatprep.subr.mxu0 %v191
  %363 = vmatpush1.msra.mxu0 %v190
  %364 = vmatprep.subr.mxu0 %v199
  %365 = vmatpush1.msra.mxu0 %v198
  %366 = vmatprep.subr.mxu0 %v207
  %367 = vmatpush1.msra.mxu0 %v206
  %368 = vmatprep.subr.mxu0 %v215
  %369 = vmatpush1.msra.mxu0 %v214
  %370 = vmatprep.subr.mxu0 %v223
  %371 = vmatpush1.msra.mxu0 %v222
  %372 = vmatprep.subr.mxu0 %v231
  %373 = vmatpush1.msra.mxu0 %v230
  %374 = vmatprep.subr.mxu0 %v239
  %375 = vmatpush1.msra.mxu0 %v238
  %376 = vmatprep.subr.mxu0 %v247
  %377 = vmatpush1.msra.mxu0 %v246
  %378 = vmatprep.subr.mxu0 %v255
  %379 = vmatpush1.msra.mxu0 %v254
  %380 = vmatprep.subr.mxu0 %v263
  %381 = vmatpush1.msra.mxu0 %v262
  %382 = vmatprep.subr.mxu0 %v271
  %383 = vmatpush1.msra.mxu0 %v270
  %384 = vmatprep.mubr.f32.mxu0 %v21
  %385 = vmatmul.mubr.f32.gmra.mrb[0].mxu0 %v20
  %v386 = vpop.f32.mrb[0].mxu0
  %v387 = vadd.f32 %v283, %v386
  %v388 = vpop.f32.mrb[0].mxu0
  %v389 = vadd.f32 %v287, %v388
  %390 = vdwg.mxu0
  %391 = vmatprep.subr.mxu0 %v25
  %392 = vmatpush1.msra.mxu0 %v24
  %393 = vmatprep.subr.mxu0 %v33
  %394 = vmatpush1.msra.mxu0 %v32
  %395 = vmatprep.subr.mxu0 %v41
  %396 = vmatpush1.msra.mxu0 %v40
  %397 = vmatprep.subr.mxu0 %v49
  %398 = vmatpush1.msra.mxu0 %v48
  %399 = vmatprep.subr.mxu0 %v57
  %400 = vmatpush1.msra.mxu0 %v56
  %401 = vmatprep.subr.mxu0 %v65
  %402 = vmatpush1.msra.mxu0 %v64
  %403 = vmatprep.subr.mxu0 %v73
  %404 = vmatpush1.msra.mxu0 %v72
  %405 = vmatprep.subr.mxu0 %v81
  %406 = vmatpush1.msra.mxu0 %v80
  %407 = vmatprep.subr.mxu0 %v89
  %408 = vmatpush1.msra.mxu0 %v88
  %409 = vmatprep.subr.mxu0 %v97
  %410 = vmatpush1.msra.mxu0 %v96
  %411 = vmatprep.subr.mxu0 %v105
  %412 = vmatpush1.msra.mxu0 %v104
  %413 = vmatprep.subr.mxu0 %v113
  %414 = vmatpush1.msra.mxu0 %v112
  %415 = vmatprep.subr.mxu0 %v121
  %416 = vmatpush1.msra.mxu0 %v120
  %417 = vmatprep.subr.mxu0 %v129
  %418 = vmatpush1.msra.mxu0 %v128
  %419 = vmatprep.subr.mxu0 %v137
  %420 = vmatpush1.msra.mxu0 %v136
  %421 = vmatprep.subr.mxu0 %v145
  %422 = vmatpush1.msra.mxu0 %v144
  %423 = vmatprep.subr.mxu0 %v153
  %424 = vmatpush1.msra.mxu0 %v152
  %425 = vmatprep.subr.mxu0 %v161
  %426 = vmatpush1.msra.mxu0 %v160
  %427 = vmatprep.subr.mxu0 %v169
  %428 = vmatpush1.msra.mxu0 %v168
  %429 = vmatprep.subr.mxu0 %v177
  %430 = vmatpush1.msra.mxu0 %v176
  %431 = vmatprep.subr.mxu0 %v185
  %432 = vmatpush1.msra.mxu0 %v184
  %433 = vmatprep.subr.mxu0 %v193
  %434 = vmatpush1.msra.mxu0 %v192
  %435 = vmatprep.subr.mxu0 %v201
  %436 = vmatpush1.msra.mxu0 %v200
  %437 = vmatprep.subr.mxu0 %v209
  %438 = vmatpush1.msra.mxu0 %v208
  %439 = vmatprep.subr.mxu0 %v217
  %440 = vmatpush1.msra.mxu0 %v216
  %441 = vmatprep.subr.mxu0 %v225
  %442 = vmatpush1.msra.mxu0 %v224
  %443 = vmatprep.subr.mxu0 %v233
  %444 = vmatpush1.msra.mxu0 %v232
  %445 = vmatprep.subr.mxu0 %v241
  %446 = vmatpush1.msra.mxu0 %v240
  %447 = vmatprep.subr.mxu0 %v249
  %448 = vmatpush1.msra.mxu0 %v248
  %449 = vmatprep.subr.mxu0 %v257
  %450 = vmatpush1.msra.mxu0 %v256
  %451 = vmatprep.subr.mxu0 %v265
  %452 = vmatpush1.msra.mxu0 %v264
  %453 = vmatprep.subr.mxu0 %v273
  %454 = vmatpush1.msra.mxu0 %v272
  %455 = vmatprep.mubr.f32.mxu0 %v21
  %456 = vmatmul.mubr.f32.gmra.mrb[0].mxu0 %v20
  %v457 = vpop.f32.mrb[0].mxu0
  %v458 = vadd.f32 %v291, %v457
  %v459 = vpop.f32.mrb[0].mxu0
  %v460 = vadd.f32 %v295, %v459
  %461 = vdwg.mxu0
  %462 = vmatprep.subr.mxu0 %v27
  %463 = vmatpush1.msra.mxu0 %v26
  %464 = vmatprep.subr.mxu0 %v35
  %465 = vmatpush1.msra.mxu0 %v34
  %466 = vmatprep.subr.mxu0 %v43
  %467 = vmatpush1.msra.mxu0 %v42
  %468 = vmatprep.subr.mxu0 %v51
  %469 = vmatpush1.msra.mxu0 %v50
  %470 = vmatprep.subr.mxu0 %v59
  %471 = vmatpush1.msra.mxu0 %v58
  %472 = vmatprep.subr.mxu0 %v67
  %473 = vmatpush1.msra.mxu0 %v66
  %474 = vmatprep.subr.mxu0 %v75
  %475 = vmatpush1.msra.mxu0 %v74
  %476 = vmatprep.subr.mxu0 %v83
  %477 = vmatpush1.msra.mxu0 %v82
  %478 = vmatprep.subr.mxu0 %v91
  %479 = vmatpush1.msra.mxu0 %v90
  %480 = vmatprep.subr.mxu0 %v99
  %481 = vmatpush1.msra.mxu0 %v98
  %482 = vmatprep.subr.mxu0 %v107
  %483 = vmatpush1.msra.mxu0 %v106
  %484 = vmatprep.subr.mxu0 %v115
  %485 = vmatpush1.msra.mxu0 %v114
  %486 = vmatprep.subr.mxu0 %v123
  %487 = vmatpush1.msra.mxu0 %v122
  %488 = vmatprep.subr.mxu0 %v131
  %489 = vmatpush1.msra.mxu0 %v130
  %490 = vmatprep.subr.mxu0 %v139
  %491 = vmatpush1.msra.mxu0 %v138
  %492 = vmatprep.subr.mxu0 %v147
  %493 = vmatpush1.msra.mxu0 %v146
  %494 = vmatprep.subr.mxu0 %v155
  %495 = vmatpush1.msra.mxu0 %v154
  %496 = vmatprep.subr.mxu0 %v163
  %497 = vmatpush1.msra.mxu0 %v162
  %498 = vmatprep.subr.mxu0 %v171
  %499 = vmatpush1.msra.mxu0 %v170
  %500 = vmatprep.subr.mxu0 %v179
  %501 = vmatpush1.msra.mxu0 %v178
  %502 = vmatprep.subr.mxu0 %v187
  %503 = vmatpush1.msra.mxu0 %v186
  %504 = vmatprep.subr.mxu0 %v195
  %505 = vmatpush1.msra.mxu0 %v194
  %506 = vmatprep.subr.mxu0 %v203
  %507 = vmatpush1.msra.mxu0 %v202
  %508 = vmatprep.subr.mxu0 %v211
  %509 = vmatpush1.msra.mxu0 %v210
  %510 = vmatprep.subr.mxu0 %v219
  %511 = vmatpush1.msra.mxu0 %v218
  %512 = vmatprep.subr.mxu0 %v227
  %513 = vmatpush1.msra.mxu0 %v226
  %514 = vmatprep.subr.mxu0 %v235
  %515 = vmatpush1.msra.mxu0 %v234
  %516 = vmatprep.subr.mxu0 %v243
  %517 = vmatpush1.msra.mxu0 %v242
  %518 = vmatprep.subr.mxu0 %v251
  %519 = vmatpush1.msra.mxu0 %v250
  %520 = vmatprep.subr.mxu0 %v259
  %521 = vmatpush1.msra.mxu0 %v258
  %522 = vmatprep.subr.mxu0 %v267
  %523 = vmatpush1.msra.mxu0 %v266
  %524 = vmatprep.subr.mxu0 %v275
  %525 = vmatpush1.msra.mxu0 %v274
  %526 = vmatprep.mubr.f32.mxu0 %v21
  %527 = vmatmul.mubr.f32.gmra.mrb[0].mxu0 %v20
  %v528 = vpop.f32.mrb[0].mxu0
  %v529 = vadd.f32 %v299, %v528
  %v530 = vpop.f32.mrb[0].mxu0
  %v531 = vadd.f32 %v303, %v530
  %532 = vdwg.mxu0
  %533 = vmatprep.subr.mxu0 %v29
  %534 = vmatpush1.msra.mxu0 %v28
  %535 = vmatprep.subr.mxu0 %v37
  %536 = vmatpush1.msra.mxu0 %v36
  %537 = vmatprep.subr.mxu0 %v45
  %538 = vmatpush1.msra.mxu0 %v44
  %539 = vmatprep.subr.mxu0 %v53
  %540 = vmatpush1.msra.mxu0 %v52
  %541 = vmatprep.subr.mxu0 %v61
  %542 = vmatpush1.msra.mxu0 %v60
  %543 = vmatprep.subr.mxu0 %v69
  %544 = vmatpush1.msra.mxu0 %v68
  %545 = vmatprep.subr.mxu0 %v77
  %546 = vmatpush1.msra.mxu0 %v76
  %547 = vmatprep.subr.mxu0 %v85
  %548 = vmatpush1.msra.mxu0 %v84
  %549 = vmatprep.subr.mxu0 %v93
  %550 = vmatpush1.msra.mxu0 %v92
  %551 = vmatprep.subr.mxu0 %v101
  %552 = vmatpush1.msra.mxu0 %v100
  %553 = vmatprep.subr.mxu0 %v109
  %554 = vmatpush1.msra.mxu0 %v108
  %555 = vmatprep.subr.mxu0 %v117
  %556 = vmatpush1.msra.mxu0 %v116
  %557 = vmatprep.subr.mxu0 %v125
  %558 = vmatpush1.msra.mxu0 %v124
  %559 = vmatprep.subr.mxu0 %v133
  %560 = vmatpush1.msra.mxu0 %v132
  %561 = vmatprep.subr.mxu0 %v141
  %562 = vmatpush1.msra.mxu0 %v140
  %563 = vmatprep.subr.mxu0 %v149
  %564 = vmatpush1.msra.mxu0 %v148
  %565 = vmatprep.subr.mxu0 %v157
  %566 = vmatpush1.msra.mxu0 %v156
  %567 = vmatprep.subr.mxu0 %v165
  %568 = vmatpush1.msra.mxu0 %v164
  %569 = vmatprep.subr.mxu0 %v173
  %570 = vmatpush1.msra.mxu0 %v172
  %571 = vmatprep.subr.mxu0 %v181
  %572 = vmatpush1.msra.mxu0 %v180
  %573 = vmatprep.subr.mxu0 %v189
  %574 = vmatpush1.msra.mxu0 %v188
  %575 = vmatprep.subr.mxu0 %v197
  %576 = vmatpush1.msra.mxu0 %v196
  %577 = vmatprep.subr.mxu0 %v205
  %578 = vmatpush1.msra.mxu0 %v204
  %579 = vmatprep.subr.mxu0 %v213
  %580 = vmatpush1.msra.mxu0 %v212
  %581 = vmatprep.subr.mxu0 %v221
  %582 = vmatpush1.msra.mxu0 %v220
  %583 = vmatprep.subr.mxu0 %v229
  %584 = vmatpush1.msra.mxu0 %v228
  %585 = vmatprep.subr.mxu0 %v237
  %586 = vmatpush1.msra.mxu0 %v236
  %587 = vmatprep.subr.mxu0 %v245
  %588 = vmatpush1.msra.mxu0 %v244
  %589 = vmatprep.subr.mxu0 %v253
  %590 = vmatpush1.msra.mxu0 %v252
  %591 = vmatprep.subr.mxu0 %v261
  %592 = vmatpush1.msra.mxu0 %v260
  %593 = vmatprep.subr.mxu0 %v269
  %594 = vmatpush1.msra.mxu0 %v268
  %595 = vmatprep.subr.mxu0 %v277
  %596 = vmatpush1.msra.mxu0 %v276
  %597 = vmatprep.mubr.f32.mxu0 %v21
  %598 = vmatmul.mubr.f32.gmra.mrb[0].mxu0 %v20
  %v599 = vpop.f32.mrb[0].mxu0
  %v600 = vadd.f32 %v307, %v599
  %v601 = vpop.f32.mrb[0].mxu0
  %v602 = vadd.f32 %v311, %v601
  %603 = vdwg.mxu0
  %v604 = vmax.f32 %v387, 0.0
  %v605 = vmax.f32 %v389, 0.0
  %v606 = vmax.f32 %v458, 0.0
  %v607 = vmax.f32 %v460, 0.0
  %v608 = vmax.f32 %v529, 0.0
  %v609 = vmax.f32 %v531, 0.0
  %v610 = vmax.f32 %v600, 0.0
  %v611 = vmax.f32 %v602, 0.0
  %v612 = vld [vmem:[%s3] sm:$0xff]
  %v613 = vld [vmem:[%s3 + $0x8] sm:$0xff]
  %v614 = vld [vmem:[%s3 + $0x10] sm:$0xff]
  %v615 = vld [vmem:[%s3 + $0x18] sm:$0xff]
  %v616 = vld [vmem:[%s3 + $0x20] sm:$0xff]
  %v617 = vld [vmem:[%s3 + $0x28] sm:$0xff]
  %v618 = vld [vmem:[%s3 + $0x30] sm:$0xff]
  %v619 = vld [vmem:[%s3 + $0x38] sm:$0xff]
  %v620 = vld [vmem:[%s3 + $0x40] sm:$0xff]
  %v621 = vld [vmem:[%s3 + $0x48] sm:$0xff]
  %v622 = vld [vmem:[%s3 + $0x50] sm:$0xff]
  %v623 = vld [vmem:[%s3 + $0x58] sm:$0xff]
  %v624 = vld [vmem:[%s3 + $0x60] sm:$0xff]
  %v625 = vld [vmem:[%s3 + $0x68] sm:$0xff]
  %v626 = vld [vmem:[%s3 + $0x70] sm:$0xff]
  %v627 = vld [vmem:[%s3 + $0x78] sm:$0xff]
  %v628 = vld [vmem:[%s3 + $0x80] sm:$0xff]
  %v629 = vld [vmem:[%s3 + $0x88] sm:$0xff]
  %v630 = vld [vmem:[%s3 + $0x90] sm:$0xff]
  %v631 = vld [vmem:[%s3 + $0x98] sm:$0xff]
  %v632 = vld [vmem:[%s3 + $0xa0] sm:$0xff]
  %v633 = vld [vmem:[%s3 + $0xa8] sm:$0xff]
  %v634 = vld [vmem:[%s3 + $0xb0] sm:$0xff]
  %v635 = vld [vmem:[%s3 + $0xb8] sm:$0xff]
  %v636 = vld [vmem:[%s3 + $0xc0] sm:$0xff]
  %v637 = vld [vmem:[%s3 + $0xc8] sm:$0xff]
  %v638 = vld [vmem:[%s3 + $0xd0] sm:$0xff]
  %v639 = vld [vmem:[%s3 + $0xd8] sm:$0xff]
  %v640 = vld [vmem:[%s3 + $0xe0] sm:$0xff]
  %v641 = vld [vmem:[%s3 + $0xe8] sm:$0xff]
  %v642 = vld [vmem:[%s3 + $0xf0] sm:$0xff]
  %v643 = vld [vmem:[%s3 + $0xf8] sm:$0xff]
  %v644 = vld [vmem:[%s3 + $0x100] sm:$0xff]
  %v645 = vld [vmem:[%s3 + $0x108] sm:$0xff]
  %v646 = vld [vmem:[%s3 + $0x110] sm:$0xff]
  %v647 = vld [vmem:[%s3 + $0x118] sm:$0xff]
  %v648 = vld [vmem:[%s3 + $0x120] sm:$0xff]
  %v649 = vld [vmem:[%s3 + $0x128] sm:$0xff]
  %v650 = vld [vmem:[%s3 + $0x130] sm:$0xff]
  %v651 = vld [vmem:[%s3 + $0x138] sm:$0xff]
  %v652 = vld [vmem:[%s3 + $0x140] sm:$0xff]
  %v653 = vld [vmem:[%s3 + $0x148] sm:$0xff]
  %v654 = vld [vmem:[%s3 + $0x150] sm:$0xff]
  %v655 = vld [vmem:[%s3 + $0x158] sm:$0xff]
  %v656 = vld [vmem:[%s3 + $0x160] sm:$0xff]
  %v657 = vld [vmem:[%s3 + $0x168] sm:$0xff]
  %v658 = vld [vmem:[%s3 + $0x170] sm:$0xff]
  %v659 = vld [vmem:[%s3 + $0x178] sm:$0xff]
  %v660 = vld [vmem:[%s3 + $0x180] sm:$0xff]
  %v661 = vld [vmem:[%s3 + $0x188] sm:$0xff]
  %v662 = vld [vmem:[%s3 + $0x190] sm:$0xff]
  %v663 = vld [vmem:[%s3 + $0x198] sm:$0xff]
  %v664 = vld [vmem:[%s3 + $0x1a0] sm:$0xff]
  %v665 = vld [vmem:[%s3 + $0x1a8] sm:$0xff]
  %v666 = vld [vmem:[%s3 + $0x1b0] sm:$0xff]
  %v667 = vld [vmem:[%s3 + $0x1b8] sm:$0xff]
  %v668 = vld [vmem:[%s3 + $0x1c0] sm:$0xff]
  %v669 = vld [vmem:[%s3 + $0x1c8] sm:$0xff]
  %v670 = vld [vmem:[%s3 + $0x1d0] sm:$0xff]
  %v671 = vld [vmem:[%s3 + $0x1d8] sm:$0xff]
  %v672 = vld [vmem:[%s3 + $0x1e0] sm:$0xff]
  %v673 = vld [vmem:[%s3 + $0x1e8] sm:$0xff]
  %v674 = vld [vmem:[%s3 + $0x1f0] sm:$0xff]
  %v675 = vld [vmem:[%s3 + $0x1f8] sm:$0xff]
  %v676 = vld [vmem:[%s3 + $0x200] sm:$0xff]
  %v677 = vld [vmem:[%s3 + $0x208] sm:$0xff]
  %v678 = vld [vmem:[%s3 + $0x210] sm:$0xff]
  %v679 = vld [vmem:[%s3 + $0x218] sm:$0xff]
  %v680 = vld [vmem:[%s3 + $0x220] sm:$0xff]
  %v681 = vld [vmem:[%s3 + $0x228] sm:$0xff]
  %v682 = vld [vmem:[%s3 + $0x230] sm:$0xff]
  %v683 = vld [vmem:[%s3 + $0x238] sm:$0xff]
  %v684 = vld [vmem:[%s3 + $0x240] sm:$0xff]
  %v685 = vld [vmem:[%s3 + $0x248] sm:$0xff]
  %v686 = vld [vmem:[%s3 + $0x250] sm:$0xff]
  %v687 = vld [vmem:[%s3 + $0x258] sm:$0xff]
  %v688 = vld [vmem:[%s3 + $0x260] sm:$0xff]
  %v689 = vld [vmem:[%s3 + $0x268] sm:$0xff]
  %v690 = vld [vmem:[%s3 + $0x270] sm:$0xff]
  %v691 = vld [vmem:[%s3 + $0x278] sm:$0xff]
  %v692 = vld [vmem:[%s3 + $0x280] sm:$0xff]
  %v693 = vld [vmem:[%s3 + $0x288] sm:$0xff]
  %v694 = vld [vmem:[%s3 + $0x290] sm:$0xff]
  %v695 = vld [vmem:[%s3 + $0x298] sm:$0xff]
  %v696 = vld [vmem:[%s3 + $0x2a0] sm:$0xff]
  %v697 = vld [vmem:[%s3 + $0x2a8] sm:$0xff]
  %v698 = vld [vmem:[%s3 + $0x2b0] sm:$0xff]
  %v699 = vld [vmem:[%s3 + $0x2b8] sm:$0xff]
  %v700 = vld [vmem:[%s3 + $0x2c0] sm:$0xff]
  %v701 = vld [vmem:[%s3 + $0x2c8] sm:$0xff]
  %v702 = vld [vmem:[%s3 + $0x2d0] sm:$0xff]
  %v703 = vld [vmem:[%s3 + $0x2d8] sm:$0xff]
  %v704 = vld [vmem:[%s3 + $0x2e0] sm:$0xff]
  %v705 = vld [vmem:[%s3 + $0x2e8] sm:$0xff]
  %v706 = vld [vmem:[%s3 + $0x2f0] sm:$0xff]
  %v707 = vld [vmem:[%s3 + $0x2f8] sm:$0xff]
  %v708 = vld [vmem:[%s3 + $0x300] sm:$0xff]
  %v709 = vld [vmem:[%s3 + $0x308] sm:$0xff]
  %v710 = vld [vmem:[%s3 + $0x310] sm:$0xff]
  %v711 = vld [vmem:[%s3 + $0x318] sm:$0xff]
  %v712 = vld [vmem:[%s3 + $0x320] sm:$0xff]
  %v713 = vld [vmem:[%s3 + $0x328] sm:$0xff]
  %v714 = vld [vmem:[%s3 + $0x330] sm:$0xff]
  %v715 = vld [vmem:[%s3 + $0x338] sm:$0xff]
  %v716 = vld [vmem:[%s3 + $0x340] sm:$0xff]
  %v717 = vld [vmem:[%s3 + $0x348] sm:$0xff]
  %v718 = vld [vmem:[%s3 + $0x350] sm:$0xff]
  %v719 = vld [vmem:[%s3 + $0x358] sm:$0xff]
  %v720 = vld [vmem:[%s3 + $0x360] sm:$0xff]
  %v721 = vld [vmem:[%s3 + $0x368] sm:$0xff]
  %v722 = vld [vmem:[%s3 + $0x370] sm:$0xff]
  %v723 = vld [vmem:[%s3 + $0x378] sm:$0xff]
  %v724 = vld [vmem:[%s3 + $0x380] sm:$0xff]
  %v725 = vld [vmem:[%s3 + $0x388] sm:$0xff]
  %v726 = vld [vmem:[%s3 + $0x390] sm:$0xff]
  %v727 = vld [vmem:[%s3 + $0x398] sm:$0xff]
  %v728 = vld [vmem:[%s3 + $0x3a0] sm:$0xff]
  %v729 = vld [vmem:[%s3 + $0x3a8] sm:$0xff]
  %v730 = vld [vmem:[%s3 + $0x3b0] sm:$0xff]
  %v731 = vld [vmem:[%s3 + $0x3b8] sm:$0xff]
  %v732 = vld [vmem:[%s3 + $0x3c0] sm:$0xff]
  %v733 = vld [vmem:[%s3 + $0x3c8] sm:$0xff]
  %v734 = vld [vmem:[%s3 + $0x3d0] sm:$0xff]
  %v735 = vld [vmem:[%s3 + $0x3d8] sm:$0xff]
  %v736 = vld [vmem:[%s3 + $0x3e0] sm:$0xff]
  %v737 = vld [vmem:[%s3 + $0x3e8] sm:$0xff]
  %v738 = vld [vmem:[%s3 + $0x3f0] sm:$0xff]
  %v739 = vld [vmem:[%s3 + $0x3f8] sm:$0xff]
  %v740 = vld [vmem:[%s4] sm:$0x1]
  %v742 = vlaneseq
  %v743 = vshrl.u32 %v742, 7
  %v744 = vsub.s32 0, %v743
  %v745 = vrot.slane %v740, %v744
  %747 = vmatprep.subr.mxu0 0.0
  %748 = vmatpush1.msra.mxu0 %v612
  %749 = vmatprep.subr.mxu0 0.0
  %750 = vmatpush1.msra.mxu0 %v613
  %751 = vmatprep.subr.mxu0 0.0
  %752 = vmatpush1.msra.mxu0 %v614
  %753 = vmatprep.subr.mxu0 0.0
  %754 = vmatpush1.msra.mxu0 %v615
  %755 = vmatprep.subr.mxu0 0.0
  %756 = vmatpush1.msra.mxu0 %v616
  %757 = vmatprep.subr.mxu0 0.0
  %758 = vmatpush1.msra.mxu0 %v617
  %759 = vmatprep.subr.mxu0 0.0
  %760 = vmatpush1.msra.mxu0 %v618
  %761 = vmatprep.subr.mxu0 0.0
  %762 = vmatpush1.msra.mxu0 %v619
  %763 = vmatprep.subr.mxu0 0.0
  %764 = vmatpush1.msra.mxu0 %v620
  %765 = vmatprep.subr.mxu0 0.0
  %766 = vmatpush1.msra.mxu0 %v621
  %767 = vmatprep.subr.mxu0 0.0
  %768 = vmatpush1.msra.mxu0 %v622
  %769 = vmatprep.subr.mxu0 0.0
  %770 = vmatpush1.msra.mxu0 %v623
  %771 = vmatprep.subr.mxu0 0.0
  %772 = vmatpush1.msra.mxu0 %v624
  %773 = vmatprep.subr.mxu0 0.0
  %774 = vmatpush1.msra.mxu0 %v625
  %775 = vmatprep.subr.mxu0 0.0
  %776 = vmatpush1.msra.mxu0 %v626
  %777 = vmatprep.subr.mxu0 0.0
  %778 = vmatpush1.msra.mxu0 %v627
  %779 = vmatprep.subr.mxu0 0.0
  %780 = vmatpush1.msra.mxu0 %v628
  %781 = vmatprep.subr.mxu0 0.0
  %782 = vmatpush1.msra.mxu0 %v629
  %783 = vmatprep.subr.mxu0 0.0
  %784 = vmatpush1.msra.mxu0 %v630
  %785 = vmatprep.subr.mxu0 0.0
  %786 = vmatpush1.msra.mxu0 %v631
  %787 = vmatprep.subr.mxu0 0.0
  %788 = vmatpush1.msra.mxu0 %v632
  %789 = vmatprep.subr.mxu0 0.0
  %790 = vmatpush1.msra.mxu0 %v633
  %791 = vmatprep.subr.mxu0 0.0
  %792 = vmatpush1.msra.mxu0 %v634
  %793 = vmatprep.subr.mxu0 0.0
  %794 = vmatpush1.msra.mxu0 %v635
  %795 = vmatprep.subr.mxu0 0.0
  %796 = vmatpush1.msra.mxu0 %v636
  %797 = vmatprep.subr.mxu0 0.0
  %798 = vmatpush1.msra.mxu0 %v637
  %799 = vmatprep.subr.mxu0 0.0
  %800 = vmatpush1.msra.mxu0 %v638
  %801 = vmatprep.subr.mxu0 0.0
  %802 = vmatpush1.msra.mxu0 %v639
  %803 = vmatprep.subr.mxu0 0.0
  %804 = vmatpush1.msra.mxu0 %v640
  %805 = vmatprep.subr.mxu0 0.0
  %806 = vmatpush1.msra.mxu0 %v641
  %807 = vmatprep.subr.mxu0 0.0
  %808 = vmatpush1.msra.mxu0 %v642
  %809 = vmatprep.subr.mxu0 0.0
  %810 = vmatpush1.msra.mxu0 %v643
  %811 = vmatprep.mubr.f32.mxu0 %v605
  %812 = vmatmul.mubr.f32.gmra.mrb[0].mxu0 %v604
  %v813 = vpop.f32.mrb[0].mxu0
  %v814 = vadd.f32 %v745, %v813
  %v815 = vpop.f32.mrb[0].mxu0
  %816 = vdwg.mxu0
  %817 = vmatprep.subr.mxu0 0.0
  %818 = vmatpush1.msra.mxu0 %v644
  %819 = vmatprep.subr.mxu0 0.0
  %820 = vmatpush1.msra.mxu0 %v645
  %821 = vmatprep.subr.mxu0 0.0
  %822 = vmatpush1.msra.mxu0 %v646
  %823 = vmatprep.subr.mxu0 0.0
  %824 = vmatpush1.msra.mxu0 %v647
  %825 = vmatprep.subr.mxu0 0.0
  %826 = vmatpush1.msra.mxu0 %v648
  %827 = vmatprep.subr.mxu0 0.0
  %828 = vmatpush1.msra.mxu0 %v649
  %829 = vmatprep.subr.mxu0 0.0
  %830 = vmatpush1.msra.mxu0 %v650
  %831 = vmatprep.subr.mxu0 0.0
  %832 = vmatpush1.msra.mxu0 %v651
  %833 = vmatprep.subr.mxu0 0.0
  %834 = vmatpush1.msra.mxu0 %v652
  %835 = vmatprep.subr.mxu0 0.0
  %836 = vmatpush1.msra.mxu0 %v653
  %837 = vmatprep.subr.mxu0 0.0
  %838 = vmatpush1.msra.mxu0 %v654
  %839 = vmatprep.subr.mxu0 0.0
  %840 = vmatpush1.msra.mxu0 %v655
  %841 = vmatprep.subr.mxu0 0.0
  %842 = vmatpush1.msra.mxu0 %v656
  %843 = vmatprep.subr.mxu0 0.0
  %844 = vmatpush1.msra.mxu0 %v657
  %845 = vmatprep.subr.mxu0 0.0
  %846 = vmatpush1.msra.mxu0 %v658
  %847 = vmatprep.subr.mxu0 0.0
  %848 = vmatpush1.msra.mxu0 %v659
  %849 = vmatprep.subr.mxu0 0.0
  %850 = vmatpush1.msra.mxu0 %v660
  %851 = vmatprep.subr.mxu0 0.0
  %852 = vmatpush1.msra.mxu0 %v661
  %853 = vmatprep.subr.mxu0 0.0
  %854 = vmatpush1.msra.mxu0 %v662
  %855 = vmatprep.subr.mxu0 0.0
  %856 = vmatpush1.msra.mxu0 %v663
  %857 = vmatprep.subr.mxu0 0.0
  %858 = vmatpush1.msra.mxu0 %v664
  %859 = vmatprep.subr.mxu0 0.0
  %860 = vmatpush1.msra.mxu0 %v665
  %861 = vmatprep.subr.mxu0 0.0
  %862 = vmatpush1.msra.mxu0 %v666
  %863 = vmatprep.subr.mxu0 0.0
  %864 = vmatpush1.msra.mxu0 %v667
  %865 = vmatprep.subr.mxu0 0.0
  %866 = vmatpush1.msra.mxu0 %v668
  %867 = vmatprep.subr.mxu0 0.0
  %868 = vmatpush1.msra.mxu0 %v669
  %869 = vmatprep.subr.mxu0 0.0
  %870 = vmatpush1.msra.mxu0 %v670
  %871 = vmatprep.subr.mxu0 0.0
  %872 = vmatpush1.msra.mxu0 %v671
  %873 = vmatprep.subr.mxu0 0.0
  %874 = vmatpush1.msra.mxu0 %v672
  %875 = vmatprep.subr.mxu0 0.0
  %876 = vmatpush1.msra.mxu0 %v673
  %877 = vmatprep.subr.mxu0 0.0
  %878 = vmatpush1.msra.mxu0 %v674
  %879 = vmatprep.subr.mxu0 0.0
  %880 = vmatpush1.msra.mxu0 %v675
  %881 = vmatprep.mubr.f32.mxu0 %v607
  %882 = vmatmul.mubr.f32.gmra.mrb[0].mxu0 %v606
  %v883 = vpop.f32.mrb[0].mxu0
  %v884 = vadd.f32 %v814, %v883
  %v885 = vpop.f32.mrb[0].mxu0
  %886 = vdwg.mxu0
  %887 = vmatprep.subr.mxu0 0.0
  %888 = vmatpush1.msra.mxu0 %v676
  %889 = vmatprep.subr.mxu0 0.0
  %890 = vmatpush1.msra.mxu0 %v677
  %891 = vmatprep.subr.mxu0 0.0
  %892 = vmatpush1.msra.mxu0 %v678
  %893 = vmatprep.subr.mxu0 0.0
  %894 = vmatpush1.msra.mxu0 %v679
  %895 = vmatprep.subr.mxu0 0.0
  %896 = vmatpush1.msra.mxu0 %v680
  %897 = vmatprep.subr.mxu0 0.0
  %898 = vmatpush1.msra.mxu0 %v681
  %899 = vmatprep.subr.mxu0 0.0
  %900 = vmatpush1.msra.mxu0 %v682
  %901 = vmatprep.subr.mxu0 0.0
  %902 = vmatpush1.msra.mxu0 %v683
  %903 = vmatprep.subr.mxu0 0.0
  %904 = vmatpush1.msra.mxu0 %v684
  %905 = vmatprep.subr.mxu0 0.0
  %906 = vmatpush1.msra.mxu0 %v685
  %907 = vmatprep.subr.mxu0 0.0
  %908 = vmatpush1.msra.mxu0 %v686
  %909 = vmatprep.subr.mxu0 0.0
  %910 = vmatpush1.msra.mxu0 %v687
  %911 = vmatprep.subr.mxu0 0.0
  %912 = vmatpush1.msra.mxu0 %v688
  %913 = vmatprep.subr.mxu0 0.0
  %914 = vmatpush1.msra.mxu0 %v689
  %915 = vmatprep.subr.mxu0 0.0
  %916 = vmatpush1.msra.mxu0 %v690
  %917 = vmatprep.subr.mxu0 0.0
  %918 = vmatpush1.msra.mxu0 %v691
  %919 = vmatprep.subr.mxu0 0.0
  %920 = vmatpush1.msra.mxu0 %v692
  %921 = vmatprep.subr.mxu0 0.0
  %922 = vmatpush1.msra.mxu0 %v693
  %923 = vmatprep.subr.mxu0 0.0
  %924 = vmatpush1.msra.mxu0 %v694
  %925 = vmatprep.subr.mxu0 0.0
  %926 = vmatpush1.msra.mxu0 %v695
  %927 = vmatprep.subr.mxu0 0.0
  %928 = vmatpush1.msra.mxu0 %v696
  %929 = vmatprep.subr.mxu0 0.0
  %930 = vmatpush1.msra.mxu0 %v697
  %931 = vmatprep.subr.mxu0 0.0
  %932 = vmatpush1.msra.mxu0 %v698
  %933 = vmatprep.subr.mxu0 0.0
  %934 = vmatpush1.msra.mxu0 %v699
  %935 = vmatprep.subr.mxu0 0.0
  %936 = vmatpush1.msra.mxu0 %v700
  %937 = vmatprep.subr.mxu0 0.0
  %938 = vmatpush1.msra.mxu0 %v701
  %939 = vmatprep.subr.mxu0 0.0
  %940 = vmatpush1.msra.mxu0 %v702
  %941 = vmatprep.subr.mxu0 0.0
  %942 = vmatpush1.msra.mxu0 %v703
  %943 = vmatprep.subr.mxu0 0.0
  %944 = vmatpush1.msra.mxu0 %v704
  %945 = vmatprep.subr.mxu0 0.0
  %946 = vmatpush1.msra.mxu0 %v705
  %947 = vmatprep.subr.mxu0 0.0
  %948 = vmatpush1.msra.mxu0 %v706
  %949 = vmatprep.subr.mxu0 0.0
  %950 = vmatpush1.msra.mxu0 %v707
  %951 = vmatprep.mubr.f32.mxu0 %v609
  %952 = vmatmul.mubr.f32.gmra.mrb[0].mxu0 %v608
  %v953 = vpop.f32.mrb[0].mxu0
  %v954 = vadd.f32 %v884, %v953
  %v955 = vpop.f32.mrb[0].mxu0
  %956 = vdwg.mxu0
  %957 = vmatprep.subr.mxu0 0.0
  %958 = vmatpush1.msra.mxu0 %v708
  %959 = vmatprep.subr.mxu0 0.0
  %960 = vmatpush1.msra.mxu0 %v709
  %961 = vmatprep.subr.mxu0 0.0
  %962 = vmatpush1.msra.mxu0 %v710
  %963 = vmatprep.subr.mxu0 0.0
  %964 = vmatpush1.msra.mxu0 %v711
  %965 = vmatprep.subr.mxu0 0.0
  %966 = vmatpush1.msra.mxu0 %v712
  %967 = vmatprep.subr.mxu0 0.0
  %968 = vmatpush1.msra.mxu0 %v713
  %969 = vmatprep.subr.mxu0 0.0
  %970 = vmatpush1.msra.mxu0 %v714
  %971 = vmatprep.subr.mxu0 0.0
  %972 = vmatpush1.msra.mxu0 %v715
  %973 = vmatprep.subr.mxu0 0.0
  %974 = vmatpush1.msra.mxu0 %v716
  %975 = vmatprep.subr.mxu0 0.0
  %976 = vmatpush1.msra.mxu0 %v717
  %977 = vmatprep.subr.mxu0 0.0
  %978 = vmatpush1.msra.mxu0 %v718
  %979 = vmatprep.subr.mxu0 0.0
  %980 = vmatpush1.msra.mxu0 %v719
  %981 = vmatprep.subr.mxu0 0.0
  %982 = vmatpush1.msra.mxu0 %v720
  %983 = vmatprep.subr.mxu0 0.0
  %984 = vmatpush1.msra.mxu0 %v721
  %985 = vmatprep.subr.mxu0 0.0
  %986 = vmatpush1.msra.mxu0 %v722
  %987 = vmatprep.subr.mxu0 0.0
  %988 = vmatpush1.msra.mxu0 %v723
  %989 = vmatprep.subr.mxu0 0.0
  %990 = vmatpush1.msra.mxu0 %v724
  %991 = vmatprep.subr.mxu0 0.0
  %992 = vmatpush1.msra.mxu0 %v725
  %993 = vmatprep.subr.mxu0 0.0
  %994 = vmatpush1.msra.mxu0 %v726
  %995 = vmatprep.subr.mxu0 0.0
  %996 = vmatpush1.msra.mxu0 %v727
  %997 = vmatprep.subr.mxu0 0.0
  %998 = vmatpush1.msra.mxu0 %v728
  %999 = vmatprep.subr.mxu0 0.0
  %1000 = vmatpush1.msra.mxu0 %v729
  %1001 = vmatprep.subr.mxu0 0.0
  %1002 = vmatpush1.msra.mxu0 %v730
  %1003 = vmatprep.subr.mxu0 0.0
  %1004 = vmatpush1.msra.mxu0 %v731
  %1005 = vmatprep.subr.mxu0 0.0
  %1006 = vmatpush1.msra.mxu0 %v732
  %1007 = vmatprep.subr.mxu0 0.0
  %1008 = vmatpush1.msra.mxu0 %v733
  %1009 = vmatprep.subr.mxu0 0.0
  %1010 = vmatpush1.msra.mxu0 %v734
  %1011 = vmatprep.subr.mxu0 0.0
  %1012 = vmatpush1.msra.mxu0 %v735
  %1013 = vmatprep.subr.mxu0 0.0
  %1014 = vmatpush1.msra.mxu0 %v736
  %1015 = vmatprep.subr.mxu0 0.0
  %1016 = vmatpush1.msra.mxu0 %v737
  %1017 = vmatprep.subr.mxu0 0.0
  %1018 = vmatpush1.msra.mxu0 %v738
  %1019 = vmatprep.subr.mxu0 0.0
  %1020 = vmatpush1.msra.mxu0 %v739
  %1021 = vmatprep.mubr.f32.mxu0 %v611
  %1022 = vmatmul.mubr.f32.gmra.mrb[0].mxu0 %v610
  %v1023 = vpop.f32.mrb[0].mxu0
  %v1024 = vadd.f32 %v954, %v1023
  %v1025 = vpop.f32.mrb[0].mxu0
  %1026 = vdwg.mxu0
  %1027 = vmax.xlane.f32.xlu0 %v1024
  %v1028 = vpop.xlane.xlu0 %1027
  %v1029 = vsub.f32 %v1024, %v1028
  %v1030 = vmul.f32 %v1029, 1.442695
  %v1031 = vpow.pop %v1030
  %1032 = vadd.xlane.f32.xlu0 %v1031
  %v1033 = vpop.xlane.xlu0 %1032
  %v1034 = vrcp.pop %v1033
  %v1035 = vmul.f32 %v1031, %v1034
  %1036 = vst [vmem:[%s5] sm:$0xff] %v1035
  // Predicated region
  $region22: #{encoder_forward.11} parent=0 // pred_check
    _
  $region23: #{encoder_forward.11} parent=0 // pred_check_branch
    %1038 = sbr.rel (0) target = $region25
  $region24: #{encoder_forward.11} parent=0 // pred_region
    _
  $region25: #{encoder_forward.11} parent=0 // pred_fallthru
    _
  // Predicated region
  $region26: #{encoder_forward.11} parent=0 // pred_check
    _
  $region27: #{encoder_forward.11} parent=0 // pred_check_branch
    %1040 = sbr.rel (0) target = $region29
  $region28: #{encoder_forward.11} parent=0 // pred_region
    _
  $region29: #{encoder_forward.11} parent=0 // pred_fallthru
    _

</llo_original>
